<compile_context>
chip_gen: v7x
topology: tpu7x:2x2x1
jax: 0.10.0
libtpu: 0.0.40
codegen_flags: <defaults>
</compile_context>

<pallas_src>
import functools
import math

import jax
import jax.numpy as jnp
from jax import lax
from jax.experimental import pallas as pl
from jax.experimental.pallas import tpu as pltpu

_EPS = 1e-5

# Tile caps: double-buffered input tiles + f32 accumulator stay at a few MiB,
# well inside v7x's 64 MiB VMEM (and the v5e/v6e scoped-VMEM defaults).
_TOK_TILE = 256     # token (sublane) tile cap, multiple of 8 when tiling
_LANE_TILE = 512    # output-column tile cap, multiple of 128 when tiling
_K_TILE = 512       # contraction tile cap, multiple of 128 when tiling


def _pick_tile(dim, cap, align):
    """Largest tile <= cap that evenly divides `dim`; `align`-aligned when tiling."""
    if dim <= cap:
        return dim
    t = (cap // align) * align
    while t >= align:
        if dim % t == 0:
            return t
        t -= align
    return dim  # no aligned divisor -> fall back to the full (untiled) dim


# --------------------- fused LayerNorm + modulate + linear -------------------

def _ln_mod_linear_kernel(x_ref, scale_ref, shift_ref, w_ref, b_ref, o_ref,
                          *, act, eps):
    # x: (1, tt, Din); scale/shift: (1, 1, Din); w: (Din, tn); b: (1, tn)
    x = x_ref[0]
    mu = jnp.mean(x, axis=-1, keepdims=True)
    xc = x - mu
    var = jnp.mean(xc * xc, axis=-1, keepdims=True)
    xm = xc * lax.rsqrt(var + eps)
    xm = xm * (1.0 + scale_ref[0]) + shift_ref[0]
    y = jnp.dot(xm.astype(jnp.bfloat16), w_ref[...].astype(jnp.bfloat16),
                preferred_element_type=jnp.float32)
    y = y + b_ref[...]
    if act == "gelu":
        # TODO(synk): MLP source not provided; tanh-approx GELU used. Swap to
        # exact erf GELU if the reference MLP uses nn.GELU() default.
        y = jax.nn.gelu(y, approximate=True)
    elif act == "silu":
        y = y * jax.nn.sigmoid(y)
    o_ref[0] = y


def ln_mod_linear(x, scale, shift, w, b, *, act=None, eps=_EPS):
    """out = act( modulate(LayerNorm(x), scale, shift) @ w + b ).

    x: (B, T, Din); scale/shift: (B, Din); w: (Din, Dout); b: (Dout,).
    LN needs the full feature row, so Din stays untiled (fine for DiT-sized D);
    tokens and output columns are tiled.  LN/modulate recompute per output
    tile is free VPU work under the MXU-bound matmul.
    """
    B, T, Din = x.shape
    Dout = w.shape[1]
    tt = _pick_tile(T, _TOK_TILE, 8)
    tn = _pick_tile(Dout, _LANE_TILE, 128)
    grid = (B, T // tt, Dout // tn)
    return pl.pallas_call(
        functools.partial(_ln_mod_linear_kernel, act=act, eps=eps),
        out_shape=jax.ShapeDtypeStruct((B, T, Dout), jnp.float32),
        grid=grid,
        in_specs=[
            pl.BlockSpec((1, tt, Din), lambda b_, ti, ni: (b_, ti, 0)),
            pl.BlockSpec((1, 1, Din), lambda b_, ti, ni: (b_, 0, 0)),
            pl.BlockSpec((1, 1, Din), lambda b_, ti, ni: (b_, 0, 0)),
            pl.BlockSpec((Din, tn), lambda b_, ti, ni: (0, ni)),
            pl.BlockSpec((1, tn), lambda b_, ti, ni: (0, ni)),
        ],
        out_specs=pl.BlockSpec((1, tt, tn), lambda b_, ti, ni: (b_, ti, ni)),
        compiler_params=pltpu.CompilerParams(
            dimension_semantics=("parallel", "parallel", "parallel")),
    )(x, scale.reshape(B, 1, Din), shift.reshape(B, 1, Din), w,
      b.reshape(1, Dout))


# --------------------- K-tiled linear (+ fused epilogue) ---------------------

def _linear_kernel(x_ref, w_ref, b_ref, o_ref, acc_ref, *, act):
    @pl.when(pl.program_id(3) == 0)
    def _():
        acc_ref[...] = jnp.zeros(acc_ref.shape, acc_ref.dtype)

    acc_ref[...] += jnp.dot(x_ref[0].astype(jnp.bfloat16),
                            w_ref[...].astype(jnp.bfloat16),
                            preferred_element_type=jnp.float32)

    @pl.when(pl.program_id(3) == pl.num_programs(3) - 1)
    def _():
        y = acc_ref[...] + b_ref[...]
        if act == "gelu":
            y = jax.nn.gelu(y, approximate=True)
        elif act == "silu":
            y = y * jax.nn.sigmoid(y)
        o_ref[0] = y


def _linear_mod_add_kernel(x_ref, w_ref, b_ref, scale_ref, shift_ref, res_ref,
                           o_ref, acc_ref):
    @pl.when(pl.program_id(3) == 0)
    def _():
        acc_ref[...] = jnp.zeros(acc_ref.shape, acc_ref.dtype)

    acc_ref[...] += jnp.dot(x_ref[0].astype(jnp.bfloat16),
                            w_ref[...].astype(jnp.bfloat16),
                            preferred_element_type=jnp.float32)

    @pl.when(pl.program_id(3) == pl.num_programs(3) - 1)
    def _():
        y = acc_ref[...] + b_ref[...]
        y = y * (1.0 + scale_ref[0]) + shift_ref[0]     # DiT modulate
        o_ref[0] = y + res_ref[0]                       # residual add


def linear(x, w, b, *, act=None, scale=None, shift=None, resid=None):
    """K-tiled `x @ w + b`, optionally with a fused modulate+residual epilogue.

    x: (B, T, Din); w: (Din, Dout); b: (Dout,); scale/shift: (B, Dout);
    resid: (B, T, Dout).
    """
    B, T, Din = x.shape
    Dout = w.shape[1]
    tt = _pick_tile(T, _TOK_TILE, 8)
    tn = _pick_tile(Dout, _LANE_TILE, 128)
    tk = _pick_tile(Din, _K_TILE, 128)
    grid = (B, T // tt, Dout // tn, Din // tk)

    x_spec = pl.BlockSpec((1, tt, tk), lambda b_, ti, ni, ki: (b_, ti, ki))
    w_spec = pl.BlockSpec((tk, tn), lambda b_, ti, ni, ki: (ki, ni))
    b_spec = pl.BlockSpec((1, tn), lambda b_, ti, ni, ki: (0, ni))
    o_spec = pl.BlockSpec((1, tt, tn), lambda b_, ti, ni, ki: (b_, ti, ni))

    common = dict(
        out_shape=jax.ShapeDtypeStruct((B, T, Dout), jnp.float32),
        grid=grid,
        out_specs=o_spec,
        scratch_shapes=[pltpu.VMEM((tt, tn), jnp.float32)],
        compiler_params=pltpu.CompilerParams(
            dimension_semantics=("parallel", "parallel", "parallel", "arbitrary")),
    )

    if scale is None:
        return pl.pallas_call(
            functools.partial(_linear_kernel, act=act),
            in_specs=[x_spec, w_spec, b_spec], **common,
        )(x, w, b.reshape(1, Dout))

    ss_spec = pl.BlockSpec((1, 1, tn), lambda b_, ti, ni, ki: (b_, 0, ni))
    r_spec = pl.BlockSpec((1, tt, tn), lambda b_, ti, ni, ki: (b_, ti, ni))
    return pl.pallas_call(
        _linear_mod_add_kernel,
        in_specs=[x_spec, w_spec, b_spec, ss_spec, ss_spec, r_spec], **common,
    )(x, w, b.reshape(1, Dout), scale.reshape(B, 1, Dout),
      shift.reshape(B, 1, Dout), resid)


# ------------- q/k/v projection writing head-major layout directly ----------

def _head_proj_kernel(x_ref, w_ref, b_ref, o_ref, acc_ref):
    # grid (B, H, Tt, Kt); x: (1, tt, tk); w: (1, tk, dh); b: (1, 1, dh)
    @pl.when(pl.program_id(3) == 0)
    def _():
        acc_ref[...] = jnp.zeros(acc_ref.shape, acc_ref.dtype)

    acc_ref[...] += jnp.dot(x_ref[0].astype(jnp.bfloat16),
                            w_ref[0].astype(jnp.bfloat16),
                            preferred_element_type=jnp.float32)

    @pl.when(pl.program_id(3) == pl.num_programs(3) - 1)
    def _():
        o_ref[0] = acc_ref[...] + b_ref[0]


def qkv_head_proj(x, w_h, b_h, *, col):
    """Project column-slab `col` of x (B, T, n_cols*Din) with head-major
    weights w_h (H, Din, dh), writing output directly in (B*H, T, dh) layout:
    no head reshape/transpose round-trip through HBM."""
    B, T, C = x.shape
    H, Din, dh = w_h.shape
    tt = _pick_tile(T, _TOK_TILE, 8)
    tk = _pick_tile(Din, _K_TILE, 128)
    if C != Din and tk % 128 != 0:
        # Lane-offset blocks need 128-aligned K tiles; at small D fall back to
        # an explicit slice of the q/k/v columns.
        x = lax.slice_in_dim(x, col * Din, (col + 1) * Din, axis=2)
        C, col = Din, 0
    k0 = col * (Din // tk)
    grid = (B, H, T // tt, Din // tk)
    return pl.pallas_call(
        _head_proj_kernel,
        out_shape=jax.ShapeDtypeStruct((B * H, T, dh), jnp.float32),
        grid=grid,
        in_specs=[
            pl.BlockSpec((1, tt, tk), lambda b, h, ti, ki: (b, ti, k0 + ki)),
            pl.BlockSpec((1, tk, dh), lambda b, h, ti, ki: (h, ki, 0)),
            pl.BlockSpec((1, 1, dh), lambda b, h, ti, ki: (h, 0, 0)),
        ],
        out_specs=pl.BlockSpec((1, tt, dh),
                               lambda b, h, ti, ki: (b * H + h, ti, 0)),
        scratch_shapes=[pltpu.VMEM((tt, dh), jnp.float32)],
        compiler_params=pltpu.CompilerParams(
            dimension_semantics=("parallel", "parallel", "parallel", "arbitrary")),
    )(x, w_h, b_h)


# ---------------- attention output projection (heads = K axis) --------------

def _head_out_proj_kernel(x_ref, w_ref, b_ref, o_ref, acc_ref):
    # grid (B, Tt, Nt, H); x: (1, tt, dh); w: (1, dh, tn); b: (1, tn)
    @pl.when(pl.program_id(3) == 0)
    def _():
        acc_ref[...] = jnp.zeros(acc_ref.shape, acc_ref.dtype)

    acc_ref[...] += jnp.dot(x_ref[0].astype(jnp.bfloat16),
                            w_ref[0].astype(jnp.bfloat16),
                            preferred_element_type=jnp.float32)

    @pl.when(pl.program_id(3) == pl.num_programs(3) - 1)
    def _():
        o_ref[0] = acc_ref[...] + b_ref[...]


def attn_out_proj(o_h, w_oh, b_o):
    """(B*H, T, dh) x (H, dh, D) -> (B, T, D); heads are the reduction axis."""
    H, dh, Dout = w_oh.shape
    BH, T, _ = o_h.shape
    B = BH // H
    tt = _pick_tile(T, _TOK_TILE, 8)
    tn = _pick_tile(Dout, _LANE_TILE, 128)
    grid = (B, T // tt, Dout // tn, H)
    return pl.pallas_call(
        _head_out_proj_kernel,
        out_shape=jax.ShapeDtypeStruct((B, T, Dout), jnp.float32),
        grid=grid,
        in_specs=[
            pl.BlockSpec((1, tt, dh), lambda b, ti, ni, h: (b * H + h, ti, 0)),
            pl.BlockSpec((1, dh, tn), lambda b, ti, ni, h: (h, 0, ni)),
            pl.BlockSpec((1, tn), lambda b, ti, ni, h: (0, ni)),
        ],
        out_specs=pl.BlockSpec((1, tt, tn), lambda b, ti, ni, h: (b, ti, ni)),
        scratch_shapes=[pltpu.VMEM((tt, tn), jnp.float32)],
        compiler_params=pltpu.CompilerParams(
            dimension_semantics=("parallel", "parallel", "parallel", "arbitrary")),
    )(o_h, w_oh, b_o.reshape(1, Dout))


# ------------------------- flash attention (online softmax) -----------------

def _flash_attn_kernel(q_ref, k_ref, v_ref, o_ref, m_ref, l_ref, acc_ref,
                       *, scale):
    ki = pl.program_id(2)

    @pl.when(ki == 0)
    def _():
        m_ref[...] = jnp.full(m_ref.shape, -jnp.inf, m_ref.dtype)
        l_ref[...] = jnp.zeros(l_ref.shape, l_ref.dtype)
        acc_ref[...] = jnp.zeros(acc_ref.shape, acc_ref.dtype)

    q = (q_ref[0] * scale).astype(jnp.bfloat16)   # fold 1/sqrt(dh) into q: O(tq*dh)
    k = k_ref[0].astype(jnp.bfloat16)
    s = jnp.dot(q, k.T, preferred_element_type=jnp.float32)        # (tq, tkv)

    m_prev = m_ref[...]
    m_new = jnp.maximum(m_prev, jnp.max(s, axis=-1, keepdims=True))
    alpha = jnp.exp(m_prev - m_new)
    p = jnp.exp(s - m_new)
    l_ref[...] = alpha * l_ref[...] + jnp.sum(p, axis=-1, keepdims=True)
    acc_ref[...] = alpha * acc_ref[...] + jnp.dot(
        p.astype(jnp.bfloat16), v_ref[0].astype(jnp.bfloat16),
        preferred_element_type=jnp.float32)
    m_ref[...] = m_new

    @pl.when(ki == pl.num_programs(2) - 1)
    def _():
        o_ref[0] = acc_ref[...] * pl.reciprocal(l_ref[...], approx=True)


def flash_attention(q, k, v):
    """Online-softmax attention over (B*H, T, dh) tensors, kv-tiled."""
    BH, T, dh = q.shape
    tq = _pick_tile(T, _TOK_TILE, 8)
    tkv = _pick_tile(T, _TOK_TILE, 8)
    grid = (BH, T // tq, T // tkv)
    return pl.pallas_call(
        functools.partial(_flash_attn_kernel, scale=1.0 / math.sqrt(dh)),
        out_shape=jax.ShapeDtypeStruct((BH, T, dh), jnp.float32),
        grid=grid,
        in_specs=[
            pl.BlockSpec((1, tq, dh), lambda b, qi, ki: (b, qi, 0)),
            pl.BlockSpec((1, tkv, dh), lambda b, qi, ki: (b, ki, 0)),
            pl.BlockSpec((1, tkv, dh), lambda b, qi, ki: (b, ki, 0)),
        ],
        out_specs=pl.BlockSpec((1, tq, dh), lambda b, qi, ki: (b, qi, 0)),
        scratch_shapes=[pltpu.VMEM((tq, 1), jnp.float32),
                        pltpu.VMEM((tq, 1), jnp.float32),
                        pltpu.VMEM((tq, dh), jnp.float32)],
        compiler_params=pltpu.CompilerParams(
            dimension_semantics=("parallel", "parallel", "arbitrary")),
    )(q, k, v)


# ------------------------- final LayerNorm + modulation ---------------------

def _ln_mod_kernel(x_ref, scale_ref, shift_ref, o_ref, *, eps):
    x = x_ref[0]
    mu = jnp.mean(x, axis=-1, keepdims=True)
    xc = x - mu
    var = jnp.mean(xc * xc, axis=-1, keepdims=True)
    xh = xc * lax.rsqrt(var + eps)
    o_ref[0] = xh * (1.0 + scale_ref[0]) + shift_ref[0]


def ln_mod(x, scale, shift, *, eps=_EPS):
    B, T, D = x.shape
    tt = _pick_tile(T, _TOK_TILE, 8)
    grid = (B, T // tt)
    return pl.pallas_call(
        functools.partial(_ln_mod_kernel, eps=eps),
        out_shape=jax.ShapeDtypeStruct((B, T, D), jnp.float32),
        grid=grid,
        in_specs=[
            pl.BlockSpec((1, tt, D), lambda b, ti: (b, ti, 0)),
            pl.BlockSpec((1, 1, D), lambda b, ti: (b, 0, 0)),
            pl.BlockSpec((1, 1, D), lambda b, ti: (b, 0, 0)),
        ],
        out_specs=pl.BlockSpec((1, tt, D), lambda b, ti: (b, ti, 0)),
        compiler_params=pltpu.CompilerParams(
            dimension_semantics=("parallel", "parallel")),
    )(x, scale.reshape(B, 1, D), shift.reshape(B, 1, D))


# ------------------------------ model forward --------------------------------

def _mod_slices(t, idx):
    # t: (B, 4, 2, D); slot idx -> (shift, scale), each (B, D)
    return t[:, idx, 0, :], t[:, idx, 1, :]


def dit_block(x, c, y, p, n_heads):
    del n_heads  # head count is carried by the head-major attention weights
    B, n, D = x.shape
    x_resid, c_resid = x, c

    # ---- modulation tables: tiny (B, 8D) glue, intentionally left to XLA ----
    y_act = jax.nn.silu(y)
    t_i = (y_act @ p["img_mod"]["w"] + p["img_mod"]["b"]).reshape(B, 4, 2, D)
    t_c = (y_act @ p["ctx_mod"]["w"] + p["ctx_mod"]["b"]).reshape(B, 4, 2, D)

    # ---- fused LayerNorm + modulate(0) + fc_1 ----
    sh_i, sc_i = _mod_slices(t_i, 0)
    sh_c, sc_c = _mod_slices(t_c, 0)
    x1 = ln_mod_linear(x, sc_i, sh_i, p["i_fc_1"]["w"], p["i_fc_1"]["b"])  # (B, n, 3D)
    c1 = ln_mod_linear(c, sc_c, sh_c, p["c_fc_1"]["w"], p["c_fc_1"]["b"])  # (B, nc, 3D)

    # Single remaining XLA copy in the attention path: join image + context
    # tokens.  q/k/v channel slices, head splits and all (B,H,T,dh) transposes
    # are absorbed into the projection / attention BlockSpecs below.
    attn_in = jnp.concatenate([x1, c1], axis=1)                            # (B, T, 3D)

    ap = p["attn"]
    # nn.MultiheadAttention projects q/k/v internally, so this second
    # projection on top of fc_1's 3D-wide output matches the reference.
    qh = qkv_head_proj(attn_in, ap["wq_h"], ap["bq_h"], col=0)             # (B*H, T, dh)
    kh = qkv_head_proj(attn_in, ap["wk_h"], ap["bk_h"], col=1)
    vh = qkv_head_proj(attn_in, ap["wv_h"], ap["bv_h"], col=2)

    oh = flash_attention(qh, kh, vh)                                       # (B*H, T, dh)
    attn_out = attn_out_proj(oh, ap["wo_h"], ap["bo"])                     # (B, T, D)

    # ---- fc_2 + modulate(1) + residual, fused epilogue ----
    sh_i, sc_i = _mod_slices(t_i, 1)
    sh_c, sc_c = _mod_slices(t_c, 1)
    x3 = linear(attn_out[:, :n], p["i_fc_2"]["w"], p["i_fc_2"]["b"],
                scale=sc_i, shift=sh_i, resid=x_resid)
    c3 = linear(attn_out[:, n:], p["c_fc_2"]["w"], p["c_fc_2"]["b"],
                scale=sc_c, shift=sh_c, resid=c_resid)

    # ---- fused LayerNorm + modulate(2) + MLP-in (GELU) ----
    sh_i, sc_i = _mod_slices(t_i, 2)
    sh_c, sc_c = _mod_slices(t_c, 2)
    xh = ln_mod_linear(x3, sc_i, sh_i, p["i_mlp"]["w1"], p["i_mlp"]["b1"], act="gelu")
    ch = ln_mod_linear(c3, sc_c, sh_c, p["c_mlp"]["w1"], p["c_mlp"]["b1"], act="gelu")

    # ---- MLP-out + modulate(3) + residual (ORIGINAL residual, per reference) ----
    sh_i, sc_i = _mod_slices(t_i, 3)
    sh_c, sc_c = _mod_slices(t_c, 3)
    x_out = linear(xh, p["i_mlp"]["w2"], p["i_mlp"]["b2"],
                   scale=sc_i, shift=sh_i, resid=x_resid)
    c_out = linear(ch, p["c_mlp"]["w2"], p["c_mlp"]["b2"],
                   scale=sc_c, shift=sh_c, resid=c_resid)
    return x_out, c_out, y


def timestep_embedding(t, p, D):
    # TODO(synk): TimestepEmbedding source not provided; sinusoidal + 2-layer
    # SiLU MLP assumed.  Tiny (B, D) glue -> XLA on purpose.
    half = D // 2
    freqs = jnp.exp(-math.log(10000.0) * jnp.arange(half, dtype=jnp.float32) / half)
    args = t.astype(jnp.float32)[:, None] * freqs[None, :]
    emb = jnp.concatenate([jnp.cos(args), jnp.sin(args)], axis=-1)
    h = jax.nn.silu(emb @ p["w1"] + p["b1"])
    return h @ p["w2"] + p["b2"]


def dit_model(params, patched_images, encoder_hidden_states, cond, n_heads):
    D = patched_images.shape[-1]
    x = patched_images
    c = linear(encoder_hidden_states,
               params["first_cond_fc"]["w"], params["first_cond_fc"]["b"])
    y = timestep_embedding(cond, params["cond_embed"], D)
    for bp in params["blocks"]:
        x, c, y = dit_block(x, c, y, bp, n_heads)
    # Final LayerNorm + ModulationLayer fused into one elementwise kernel.
    mod = jax.nn.silu(y) @ params["final_mod"]["w"] + params["final_mod"]["b"]
    # TODO(synk): ModulationLayer source not provided; assuming (shift, scale)
    # ordering with x * (1 + scale) + shift.
    shift, scale = mod[:, :D], mod[:, D:]
    return ln_mod(x, scale, shift)


# ------------------------------ parameter init -------------------------------

def init_params(key, encoder_hidden_size, hidden_size, n_layers, n_heads):
    E, D, H = encoder_hidden_size, hidden_size, n_heads
    dh = D // H
    n_lin = 4 + 14 * n_layers
    keys = iter(jax.random.split(key, 2 * n_lin))

    def lin(din, dout):
        kw, kb = next(keys), next(keys)
        return {"w": jax.random.normal(kw, (din, dout), jnp.float32) / math.sqrt(din),
                "b": 0.01 * jax.random.normal(kb, (dout,), jnp.float32)}

    def mlp_params(d, dm):
        a, b = lin(d, dm), lin(dm, d)
        return {"w1": a["w"], "b1": a["b"], "w2": b["w"], "b2": b["b"]}

    def attn_params():
        # Stored head-major so the q/k/v/out projections can read/write the
        # (B*H, T, dh) layout directly (no runtime transposes).
        q, k, v, o = lin(D, D), lin(D, D), lin(D, D), lin(D, D)

        def in_head(wb):
            return (wb["w"].reshape(D, H, dh).transpose(1, 0, 2),   # (H, D, dh)
                    wb["b"].reshape(H, 1, dh))

        wq_h, bq_h = in_head(q)
        wk_h, bk_h = in_head(k)
        wv_h, bv_h = in_head(v)
        return {"wq_h": wq_h, "bq_h": bq_h, "wk_h": wk_h, "bk_h": bk_h,
                "wv_h": wv_h, "bv_h": bv_h,
                "wo_h": o["w"].reshape(H, dh, D), "bo": o["b"]}

    params = {
        "first_cond_fc": lin(E, D),
        "cond_embed": mlp_params(D, D),
        "final_mod": lin(D, 2 * D),
        "blocks": [],
    }
    for _ in range(n_layers):
        params["blocks"].append({
            "img_mod": lin(D, 8 * D),
            "ctx_mod": lin(D, 8 * D),
            "i_fc_1": lin(D, 3 * D),
            "c_fc_1": lin(D, 3 * D),
            "i_fc_2": lin(D, D),
            "c_fc_2": lin(D, D),
            "i_mlp": mlp_params(D, 4 * D),
            "c_mlp": mlp_params(D, 4 * D),
            "attn": attn_params(),
        })
    return params


# ----------------------------------- main ------------------------------------

if __name__ == "__main__":
    B, N_IMG, N_CROSS = 2, 16, 8
    ENC_HIDDEN, HIDDEN, N_HEADS, N_LAYERS = 24, 32, 4, 2

    key = jax.random.PRNGKey(0)
    kp, kx, kc, kt = jax.random.split(key, 4)

    params = init_params(kp, ENC_HIDDEN, HIDDEN, N_LAYERS, N_HEADS)
    patched_images = jax.random.normal(kx, (B, N_IMG, HIDDEN), jnp.float32)
    encoder_hidden_states = jax.random.normal(kc, (B, N_CROSS, ENC_HIDDEN), jnp.float32)
    cond = jax.random.uniform(kt, (B,), jnp.float32, 0.0, 1000.0)

    fwd = jax.jit(functools.partial(dit_model, n_heads=N_HEADS))
    out = jax.block_until_ready(fwd(params, patched_images, encoder_hidden_states, cond))

    assert out.shape == (B, N_IMG, HIDDEN), out.shape
    assert bool(jnp.all(jnp.isfinite(out)))
    print("KERNEL_OK")
</pallas_src>

<mosaic_0001>
module attributes {stable_mosaic.version = 11 : i64} {
  func.func @_linear_kernel(%arg0: i32, %arg1: i32, %arg2: i32, %arg3: i32, %arg4: memref<1x8x24xf32, #tpu.memory_space<vmem>>, %arg5: memref<24x32xf32, #tpu.memory_space<vmem>>, %arg6: memref<1x32xf32, #tpu.memory_space<vmem>>, %arg7: memref<1x8x32xf32, #tpu.memory_space<vmem>>, %arg8: memref<8x32xf32, #tpu.memory_space<vmem>>) attributes {dimension_semantics = [#tpu.dimension_semantics<parallel>, #tpu.dimension_semantics<parallel>, #tpu.dimension_semantics<parallel>, #tpu.dimension_semantics<arbitrary>], iteration_bounds = array<i64: 2, 1, 1, 1>, scalar_prefetch = 0 : i64, scratch_operands = 1 : i64, tpu.core_type = #tpu.core_type<tc>, window_params = [{transform_indices = @transform_0, window_bounds = array<i64: 1, 8, 24>}, {transform_indices = @transform_1, window_bounds = array<i64: 24, 32>}, {transform_indices = @transform_2, window_bounds = array<i64: 1, 32>}, {transform_indices = @transform_3, window_bounds = array<i64: 1, 8, 32>}]} {
    %c0_i32 = arith.constant 0 : i32
    %0 = arith.cmpi eq, %arg3, %c0_i32 : i32
    %1 = arith.extui %0 : i1 to i32
    %c0_i32_0 = arith.constant 0 : i32
    %2 = arith.cmpi ne, %1, %c0_i32_0 : i32
    scf.if %2 {
      %cst_11 = arith.constant 0.000000e+00 : f32
      %15 = vector.broadcast %cst_11 : f32 to vector<8x32xf32>
      %c0_12 = arith.constant 0 : index
      %c0_13 = arith.constant 0 : index
      %16 = vector.load %arg8[%c0_12, %c0_13] : memref<8x32xf32, #tpu.memory_space<vmem>>, vector<8x32xf32>
      tpu.vector_store %arg8[%c0_12, %c0_13], %15 {strides = array<i32>} : memref<8x32xf32, #tpu.memory_space<vmem>>, vector<8x32xf32>,
    } else {
    }
    %c0 = arith.constant 0 : index
    %c0_1 = arith.constant 0 : index
    %3 = vector.load %arg8[%c0, %c0_1] : memref<8x32xf32, #tpu.memory_space<vmem>>, vector<8x32xf32>
    %c0_2 = arith.constant 0 : index
    %c0_3 = arith.constant 0 : index
    %c0_4 = arith.constant 0 : index
    %4 = vector.load %arg4[%c0_2, %c0_3, %c0_4] : memref<1x8x24xf32, #tpu.memory_space<vmem>>, vector<1x8x24xf32>
    %5 = vector.shape_cast %4 : vector<1x8x24xf32> to vector<8x24xf32>
    %6 = arith.truncf %5 : vector<8x24xf32> to vector<8x24xbf16>
    %c0_5 = arith.constant 0 : index
    %c0_6 = arith.constant 0 : index
    %7 = vector.load %arg5[%c0_5, %c0_6] : memref<24x32xf32, #tpu.memory_space<vmem>>, vector<24x32xf32>
    %8 = arith.truncf %7 : vector<24x32xf32> to vector<24x32xbf16>
    %cst = arith.constant dense<0.000000e+00> : vector<8x32xf32>
    %9 = tpu.matmul %6, %8, %cst {dimension_numbers = #tpu.dot_dimension_numbers<[1], [0], [0], [1], [0, 0, 1, 1], [], []>} : vector<8x24xbf16>, vector<24x32xbf16>, vector<8x32xf32> -> vector<8x32xf32>
    %10 = arith.addf %3, %9 : vector<8x32xf32>
    %c0_7 = arith.constant 0 : index
    %c0_8 = arith.constant 0 : index
    %11 = vector.load %arg8[%c0_7, %c0_8] : memref<8x32xf32, #tpu.memory_space<vmem>>, vector<8x32xf32>
    tpu.vector_store %arg8[%c0_7, %c0_8], %10 {strides = array<i32>} : memref<8x32xf32, #tpu.memory_space<vmem>>, vector<8x32xf32>,
    %c0_i32_9 = arith.constant 0 : i32
    %12 = arith.cmpi eq, %arg3, %c0_i32_9 : i32
    %13 = arith.extui %12 : i1 to i32
    %c0_i32_10 = arith.constant 0 : i32
    %14 = arith.cmpi ne, %13, %c0_i32_10 : i32
    scf.if %14 {
      %c0_11 = arith.constant 0 : index
      %c0_12 = arith.constant 0 : index
      %15 = vector.load %arg8[%c0_11, %c0_12] : memref<8x32xf32, #tpu.memory_space<vmem>>, vector<8x32xf32>
      %c0_13 = arith.constant 0 : index
      %c0_14 = arith.constant 0 : index
      %16 = vector.load %arg6[%c0_13, %c0_14] : memref<1x32xf32, #tpu.memory_space<vmem>>, vector<1x32xf32>
      %17 = vector.broadcast %16 : vector<1x32xf32> to vector<8x32xf32>
      %18 = arith.addf %15, %17 : vector<8x32xf32>
      %c0_15 = arith.constant 0 : index
      %c0_16 = arith.constant 0 : index
      %c0_17 = arith.constant 0 : index
      %19 = vector.load %arg7[%c0_15, %c0_16, %c0_17] : memref<1x8x32xf32, #tpu.memory_space<vmem>>, vector<1x8x32xf32>
      %20 = vector.shape_cast %19 : vector<1x8x32xf32> to vector<8x32xf32>
      %21 = vector.shape_cast %18 : vector<8x32xf32> to vector<1x8x32xf32>
      tpu.vector_store %arg7[%c0_15, %c0_16, %c0_17], %21 {strides = array<i32>} : memref<1x8x32xf32, #tpu.memory_space<vmem>>, vector<1x8x32xf32>,
    } else {
    }
    return
  }
  func.func @transform_0(%arg0: i32, %arg1: i32, %arg2: i32, %arg3: i32) -> (i32, i32, i32) {
    %c0_i32 = arith.constant 0 : i32
    return %arg0, %arg1, %arg3 : i32, i32, i32
  }
  func.func @transform_1(%arg0: i32, %arg1: i32, %arg2: i32, %arg3: i32) -> (i32, i32) {
    %c0_i32 = arith.constant 0 : i32
    return %arg3, %arg2 : i32, i32
  }
  func.func @transform_2(%arg0: i32, %arg1: i32, %arg2: i32, %arg3: i32) -> (i32, i32) {
    %c0_i32 = arith.constant 0 : i32
    %c0_i32_0 = arith.constant 0 : i32
    return %c0_i32, %arg2 : i32, i32
  }
  func.func @transform_3(%arg0: i32, %arg1: i32, %arg2: i32, %arg3: i32) -> (i32, i32, i32) {
    %c0_i32 = arith.constant 0 : i32
    return %arg0, %arg1, %arg2 : i32, i32, i32
  }
}

module attributes {stable_mosaic.version = 11 : i64} {
  func.func @_ln_mod_linear_kernel(%arg0: i32, %arg1: i32, %arg2: i32, %arg3: memref<1x8x32xf32, #tpu.memory_space<vmem>>, %arg4: memref<1x1x32xf32, #tpu.memory_space<vmem>>, %arg5: memref<1x1x32xf32, #tpu.memory_space<vmem>>, %arg6: memref<32x96xf32, #tpu.memory_space<vmem>>, %arg7: memref<1x96xf32, #tpu.memory_space<vmem>>, %arg8: memref<1x8x96xf32, #tpu.memory_space<vmem>>) attributes {dimension_semantics = [#tpu.dimension_semantics<parallel>, #tpu.dimension_semantics<parallel>, #tpu.dimension_semantics<parallel>], iteration_bounds = array<i64: 2, 1, 1>, scalar_prefetch = 0 : i64, scratch_operands = 0 : i64, tpu.core_type = #tpu.core_type<tc>, window_params = [{transform_indices = @transform_0, window_bounds = array<i64: 1, 8, 32>}, {transform_indices = @transform_1, window_bounds = array<i64: 1, 1, 32>}, {transform_indices = @transform_2, window_bounds = array<i64: 1, 1, 32>}, {transform_indices = @transform_3, window_bounds = array<i64: 32, 96>}, {transform_indices = @transform_4, window_bounds = array<i64: 1, 96>}, {transform_indices = @transform_5, window_bounds = array<i64: 1, 8, 96>}]} {
    %c0 = arith.constant 0 : index
    %c0_0 = arith.constant 0 : index
    %c0_1 = arith.constant 0 : index
    %0 = vector.load %arg3[%c0, %c0_0, %c0_1] : memref<1x8x32xf32, #tpu.memory_space<vmem>>, vector<1x8x32xf32>
    %1 = vector.shape_cast %0 : vector<1x8x32xf32> to vector<8x32xf32>
    %cst = arith.constant dense<0.000000e+00> : vector<8xf32>
    %2 = vector.multi_reduction <add>, %1, %cst [1] : vector<8x32xf32> to vector<8xf32>
    %3 = vector.shape_cast %2 : vector<8xf32> to vector<8x1xf32>
    %cst_2 = arith.constant 3.200000e+01 : f32
    %4 = vector.broadcast %cst_2 : f32 to vector<8x1xf32>
    %5 = arith.divf %3, %4 : vector<8x1xf32>
    %6 = vector.broadcast %5 : vector<8x1xf32> to vector<8x32xf32>
    %7 = arith.subf %1, %6 : vector<8x32xf32>
    %8 = arith.mulf %7, %7 : vector<8x32xf32>
    %cst_3 = arith.constant dense<0.000000e+00> : vector<8xf32>
    %9 = vector.multi_reduction <add>, %8, %cst_3 [1] : vector<8x32xf32> to vector<8xf32>
    %10 = vector.shape_cast %9 : vector<8xf32> to vector<8x1xf32>
    %cst_4 = arith.constant 3.200000e+01 : f32
    %11 = vector.broadcast %cst_4 : f32 to vector<8x1xf32>
    %12 = arith.divf %10, %11 : vector<8x1xf32>
    %cst_5 = arith.constant 9.99999974E-6 : f32
    %13 = vector.broadcast %cst_5 : f32 to vector<8x1xf32>
    %14 = arith.addf %12, %13 : vector<8x1xf32>
    %15 = math.rsqrt %14 : vector<8x1xf32>
    %16 = vector.broadcast %15 : vector<8x1xf32> to vector<8x32xf32>
    %17 = arith.mulf %7, %16 : vector<8x32xf32>
    %c0_6 = arith.constant 0 : index
    %c0_7 = arith.constant 0 : index
    %c0_8 = arith.constant 0 : index
    %18 = vector.load %arg4[%c0_6, %c0_7, %c0_8] : memref<1x1x32xf32, #tpu.memory_space<vmem>>, vector<1x1x32xf32>
    %19 = vector.shape_cast %18 : vector<1x1x32xf32> to vector<1x32xf32>
    %cst_9 = arith.constant 1.000000e+00 : f32
    %20 = vector.broadcast %cst_9 : f32 to vector<1x32xf32>
    %21 = arith.addf %20, %19 : vector<1x32xf32>
    %22 = vector.broadcast %21 : vector<1x32xf32> to vector<8x32xf32>
    %23 = arith.mulf %17, %22 : vector<8x32xf32>
    %c0_10 = arith.constant 0 : index
    %c0_11 = arith.constant 0 : index
    %c0_12 = arith.constant 0 : index
    %24 = vector.load %arg5[%c0_10, %c0_11, %c0_12] : memref<1x1x32xf32, #tpu.memory_space<vmem>>, vector<1x1x32xf32>
    %25 = vector.shape_cast %24 : vector<1x1x32xf32> to vector<1x32xf32>
    %26 = vector.broadcast %25 : vector<1x32xf32> to vector<8x32xf32>
    %27 = arith.addf %23, %26 : vector<8x32xf32>
    %28 = arith.truncf %27 : vector<8x32xf32> to vector<8x32xbf16>
    %c0_13 = arith.constant 0 : index
    %c0_14 = arith.constant 0 : index
    %29 = vector.load %arg6[%c0_13, %c0_14] : memref<32x96xf32, #tpu.memory_space<vmem>>, vector<32x96xf32>
    %30 = arith.truncf %29 : vector<32x96xf32> to vector<32x96xbf16>
    %cst_15 = arith.constant dense<0.000000e+00> : vector<8x96xf32>
    %31 = tpu.matmul %28, %30, %cst_15 {dimension_numbers = #tpu.dot_dimension_numbers<[1], [0], [0], [1], [0, 0, 1, 1], [], []>} : vector<8x32xbf16>, vector<32x96xbf16>, vector<8x96xf32> -> vector<8x96xf32>
    %c0_16 = arith.constant 0 : index
    %c0_17 = arith.constant 0 : index
    %32 = vector.load %arg7[%c0_16, %c0_17] : memref<1x96xf32, #tpu.memory_space<vmem>>, vector<1x96xf32>
    %33 = vector.broadcast %32 : vector<1x96xf32> to vector<8x96xf32>
    %34 = arith.addf %31, %33 : vector<8x96xf32>
    %c0_18 = arith.constant 0 : index
    %c0_19 = arith.constant 0 : index
    %c0_20 = arith.constant 0 : index
    %35 = vector.load %arg8[%c0_18, %c0_19, %c0_20] : memref<1x8x96xf32, #tpu.memory_space<vmem>>, vector<1x8x96xf32>
    %36 = vector.shape_cast %35 : vector<1x8x96xf32> to vector<8x96xf32>
    %37 = vector.shape_cast %34 : vector<8x96xf32> to vector<1x8x96xf32>
    tpu.vector_store %arg8[%c0_18, %c0_19, %c0_20], %37 {strides = array<i32>} : memref<1x8x96xf32, #tpu.memory_space<vmem>>, vector<1x8x96xf32>,
    return
  }
  func.func @transform_0(%arg0: i32, %arg1: i32, %arg2: i32) -> (i32, i32, i32) {
    %c0_i32 = arith.constant 0 : i32
    %c0_i32_0 = arith.constant 0 : i32
    return %arg0, %arg1, %c0_i32 : i32, i32, i32
  }
  func.func @transform_1(%arg0: i32, %arg1: i32, %arg2: i32) -> (i32, i32, i32) {
    %c0_i32 = arith.constant 0 : i32
    %c0_i32_0 = arith.constant 0 : i32
    %c0_i32_1 = arith.constant 0 : i32
    return %arg0, %c0_i32, %c0_i32_0 : i32, i32, i32
  }
  func.func @transform_2(%arg0: i32, %arg1: i32, %arg2: i32) -> (i32, i32, i32) {
    %c0_i32 = arith.constant 0 : i32
    %c0_i32_0 = arith.constant 0 : i32
    %c0_i32_1 = arith.constant 0 : i32
    return %arg0, %c0_i32, %c0_i32_0 : i32, i32, i32
  }
  func.func @transform_3(%arg0: i32, %arg1: i32, %arg2: i32) -> (i32, i32) {
    %c0_i32 = arith.constant 0 : i32
    %c0_i32_0 = arith.constant 0 : i32
    return %c0_i32, %arg2 : i32, i32
  }
  func.func @transform_4(%arg0: i32, %arg1: i32, %arg2: i32) -> (i32, i32) {
    %c0_i32 = arith.constant 0 : i32
    %c0_i32_0 = arith.constant 0 : i32
    return %c0_i32, %arg2 : i32, i32
  }
  func.func @transform_5(%arg0: i32, %arg1: i32, %arg2: i32) -> (i32, i32, i32) {
    %c0_i32 = arith.constant 0 : i32
    return %arg0, %arg1, %arg2 : i32, i32, i32
  }
}

module attributes {stable_mosaic.version = 11 : i64} {
  func.func @_ln_mod_linear_kernel(%arg0: i32, %arg1: i32, %arg2: i32, %arg3: memref<1x16x32xf32, #tpu.memory_space<vmem>>, %arg4: memref<1x1x32xf32, #tpu.memory_space<vmem>>, %arg5: memref<1x1x32xf32, #tpu.memory_space<vmem>>, %arg6: memref<32x96xf32, #tpu.memory_space<vmem>>, %arg7: memref<1x96xf32, #tpu.memory_space<vmem>>, %arg8: memref<1x16x96xf32, #tpu.memory_space<vmem>>) attributes {dimension_semantics = [#tpu.dimension_semantics<parallel>, #tpu.dimension_semantics<parallel>, #tpu.dimension_semantics<parallel>], iteration_bounds = array<i64: 2, 1, 1>, scalar_prefetch = 0 : i64, scratch_operands = 0 : i64, tpu.core_type = #tpu.core_type<tc>, window_params = [{transform_indices = @transform_0, window_bounds = array<i64: 1, 16, 32>}, {transform_indices = @transform_1, window_bounds = array<i64: 1, 1, 32>}, {transform_indices = @transform_2, window_bounds = array<i64: 1, 1, 32>}, {transform_indices = @transform_3, window_bounds = array<i64: 32, 96>}, {transform_indices = @transform_4, window_bounds = array<i64: 1, 96>}, {transform_indices = @transform_5, window_bounds = array<i64: 1, 16, 96>}]} {
    %c0 = arith.constant 0 : index
    %c0_0 = arith.constant 0 : index
    %c0_1 = arith.constant 0 : index
    %0 = vector.load %arg3[%c0, %c0_0, %c0_1] : memref<1x16x32xf32, #tpu.memory_space<vmem>>, vector<1x16x32xf32>
    %1 = vector.shape_cast %0 : vector<1x16x32xf32> to vector<16x32xf32>
    %cst = arith.constant dense<0.000000e+00> : vector<16xf32>
    %2 = vector.multi_reduction <add>, %1, %cst [1] : vector<16x32xf32> to vector<16xf32>
    %3 = vector.shape_cast %2 : vector<16xf32> to vector<16x1xf32>
    %cst_2 = arith.constant 3.200000e+01 : f32
    %4 = vector.broadcast %cst_2 : f32 to vector<16x1xf32>
    %5 = arith.divf %3, %4 : vector<16x1xf32>
    %6 = vector.broadcast %5 : vector<16x1xf32> to vector<16x32xf32>
    %7 = arith.subf %1, %6 : vector<16x32xf32>
    %8 = arith.mulf %7, %7 : vector<16x32xf32>
    %cst_3 = arith.constant dense<0.000000e+00> : vector<16xf32>
    %9 = vector.multi_reduction <add>, %8, %cst_3 [1] : vector<16x32xf32> to vector<16xf32>
    %10 = vector.shape_cast %9 : vector<16xf32> to vector<16x1xf32>
    %cst_4 = arith.constant 3.200000e+01 : f32
    %11 = vector.broadcast %cst_4 : f32 to vector<16x1xf32>
    %12 = arith.divf %10, %11 : vector<16x1xf32>
    %cst_5 = arith.constant 9.99999974E-6 : f32
    %13 = vector.broadcast %cst_5 : f32 to vector<16x1xf32>
    %14 = arith.addf %12, %13 : vector<16x1xf32>
    %15 = math.rsqrt %14 : vector<16x1xf32>
    %16 = vector.broadcast %15 : vector<16x1xf32> to vector<16x32xf32>
    %17 = arith.mulf %7, %16 : vector<16x32xf32>
    %c0_6 = arith.constant 0 : index
    %c0_7 = arith.constant 0 : index
    %c0_8 = arith.constant 0 : index
    %18 = vector.load %arg4[%c0_6, %c0_7, %c0_8] : memref<1x1x32xf32, #tpu.memory_space<vmem>>, vector<1x1x32xf32>
    %19 = vector.shape_cast %18 : vector<1x1x32xf32> to vector<1x32xf32>
    %cst_9 = arith.constant 1.000000e+00 : f32
    %20 = vector.broadcast %cst_9 : f32 to vector<1x32xf32>
    %21 = arith.addf %20, %19 : vector<1x32xf32>
    %22 = vector.broadcast %21 : vector<1x32xf32> to vector<16x32xf32>
    %23 = arith.mulf %17, %22 : vector<16x32xf32>
    %c0_10 = arith.constant 0 : index
    %c0_11 = arith.constant 0 : index
    %c0_12 = arith.constant 0 : index
    %24 = vector.load %arg5[%c0_10, %c0_11, %c0_12] : memref<1x1x32xf32, #tpu.memory_space<vmem>>, vector<1x1x32xf32>
    %25 = vector.shape_cast %24 : vector<1x1x32xf32> to vector<1x32xf32>
    %26 = vector.broadcast %25 : vector<1x32xf32> to vector<16x32xf32>
    %27 = arith.addf %23, %26 : vector<16x32xf32>
    %28 = arith.truncf %27 : vector<16x32xf32> to vector<16x32xbf16>
    %c0_13 = arith.constant 0 : index
    %c0_14 = arith.constant 0 : index
    %29 = vector.load %arg6[%c0_13, %c0_14] : memref<32x96xf32, #tpu.memory_space<vmem>>, vector<32x96xf32>
    %30 = arith.truncf %29 : vector<32x96xf32> to vector<32x96xbf16>
    %cst_15 = arith.constant dense<0.000000e+00> : vector<16x96xf32>
    %31 = tpu.matmul %28, %30, %cst_15 {dimension_numbers = #tpu.dot_dimension_numbers<[1], [0], [0], [1], [0, 0, 1, 1], [], []>} : vector<16x32xbf16>, vector<32x96xbf16>, vector<16x96xf32> -> vector<16x96xf32>
    %c0_16 = arith.constant 0 : index
    %c0_17 = arith.constant 0 : index
    %32 = vector.load %arg7[%c0_16, %c0_17] : memref<1x96xf32, #tpu.memory_space<vmem>>, vector<1x96xf32>
    %33 = vector.broadcast %32 : vector<1x96xf32> to vector<16x96xf32>
    %34 = arith.addf %31, %33 : vector<16x96xf32>
    %c0_18 = arith.constant 0 : index
    %c0_19 = arith.constant 0 : index
    %c0_20 = arith.constant 0 : index
    %35 = vector.load %arg8[%c0_18, %c0_19, %c0_20] : memref<1x16x96xf32, #tpu.memory_space<vmem>>, vector<1x16x96xf32>
    %36 = vector.shape_cast %35 : vector<1x16x96xf32> to vector<16x96xf32>
    %37 = vector.shape_cast %34 : vector<16x96xf32> to vector<1x16x96xf32>
    tpu.vector_store %arg8[%c0_18, %c0_19, %c0_20], %37 {strides = array<i32>} : memref<1x16x96xf32, #tpu.memory_space<vmem>>, vector<1x16x96xf32>,
    return
  }
  func.func @transform_0(%arg0: i32, %arg1: i32, %arg2: i32) -> (i32, i32, i32) {
    %c0_i32 = arith.constant 0 : i32
    %c0_i32_0 = arith.constant 0 : i32
    return %arg0, %arg1, %c0_i32 : i32, i32, i32
  }
  func.func @transform_1(%arg0: i32, %arg1: i32, %arg2: i32) -> (i32, i32, i32) {
    %c0_i32 = arith.constant 0 : i32
    %c0_i32_0 = arith.constant 0 : i32
    %c0_i32_1 = arith.constant 0 : i32
    return %arg0, %c0_i32, %c0_i32_0 : i32, i32, i32
  }
  func.func @transform_2(%arg0: i32, %arg1: i32, %arg2: i32) -> (i32, i32, i32) {
    %c0_i32 = arith.constant 0 : i32
    %c0_i32_0 = arith.constant 0 : i32
    %c0_i32_1 = arith.constant 0 : i32
    return %arg0, %c0_i32, %c0_i32_0 : i32, i32, i32
  }
  func.func @transform_3(%arg0: i32, %arg1: i32, %arg2: i32) -> (i32, i32) {
    %c0_i32 = arith.constant 0 : i32
    %c0_i32_0 = arith.constant 0 : i32
    return %c0_i32, %arg2 : i32, i32
  }
  func.func @transform_4(%arg0: i32, %arg1: i32, %arg2: i32) -> (i32, i32) {
    %c0_i32 = arith.constant 0 : i32
    %c0_i32_0 = arith.constant 0 : i32
    return %c0_i32, %arg2 : i32, i32
  }
  func.func @transform_5(%arg0: i32, %arg1: i32, %arg2: i32) -> (i32, i32, i32) {
    %c0_i32 = arith.constant 0 : i32
    return %arg0, %arg1, %arg2 : i32, i32, i32
  }
}

module attributes {stable_mosaic.version = 11 : i64} {
  func.func @_head_proj_kernel(%arg0: i32, %arg1: i32, %arg2: i32, %arg3: i32, %arg4: memref<1x24x32xf32, #tpu.memory_space<vmem>>, %arg5: memref<1x32x8xf32, #tpu.memory_space<vmem>>, %arg6: memref<1x1x8xf32, #tpu.memory_space<vmem>>, %arg7: memref<1x24x8xf32, #tpu.memory_space<vmem>>, %arg8: memref<24x8xf32, #tpu.memory_space<vmem>>) attributes {dimension_semantics = [#tpu.dimension_semantics<parallel>, #tpu.dimension_semantics<parallel>, #tpu.dimension_semantics<parallel>, #tpu.dimension_semantics<arbitrary>], iteration_bounds = array<i64: 2, 4, 1, 1>, scalar_prefetch = 0 : i64, scratch_operands = 1 : i64, tpu.core_type = #tpu.core_type<tc>, window_params = [{transform_indices = @transform_0, window_bounds = array<i64: 1, 24, 32>}, {transform_indices = @transform_1, window_bounds = array<i64: 1, 32, 8>}, {transform_indices = @transform_2, window_bounds = array<i64: 1, 1, 8>}, {transform_indices = @transform_3, window_bounds = array<i64: 1, 24, 8>}]} {
    %c0_i32 = arith.constant 0 : i32
    %0 = arith.cmpi eq, %arg3, %c0_i32 : i32
    %1 = arith.extui %0 : i1 to i32
    %c0_i32_0 = arith.constant 0 : i32
    %2 = arith.cmpi ne, %1, %c0_i32_0 : i32
    scf.if %2 {
      %cst_12 = arith.constant 0.000000e+00 : f32
      %16 = vector.broadcast %cst_12 : f32 to vector<24x8xf32>
      %c0_13 = arith.constant 0 : index
      %c0_14 = arith.constant 0 : index
      %17 = vector.load %arg8[%c0_13, %c0_14] : memref<24x8xf32, #tpu.memory_space<vmem>>, vector<24x8xf32>
      tpu.vector_store %arg8[%c0_13, %c0_14], %16 {strides = array<i32>} : memref<24x8xf32, #tpu.memory_space<vmem>>, vector<24x8xf32>,
    } else {
    }
    %c0 = arith.constant 0 : index
    %c0_1 = arith.constant 0 : index
    %3 = vector.load %arg8[%c0, %c0_1] : memref<24x8xf32, #tpu.memory_space<vmem>>, vector<24x8xf32>
    %c0_2 = arith.constant 0 : index
    %c0_3 = arith.constant 0 : index
    %c0_4 = arith.constant 0 : index
    %4 = vector.load %arg4[%c0_2, %c0_3, %c0_4] : memref<1x24x32xf32, #tpu.memory_space<vmem>>, vector<1x24x32xf32>
    %5 = vector.shape_cast %4 : vector<1x24x32xf32> to vector<24x32xf32>
    %6 = arith.truncf %5 : vector<24x32xf32> to vector<24x32xbf16>
    %c0_5 = arith.constant 0 : index
    %c0_6 = arith.constant 0 : index
    %c0_7 = arith.constant 0 : index
    %7 = vector.load %arg5[%c0_5, %c0_6, %c0_7] : memref<1x32x8xf32, #tpu.memory_space<vmem>>, vector<1x32x8xf32>
    %8 = vector.shape_cast %7 : vector<1x32x8xf32> to vector<32x8xf32>
    %9 = arith.truncf %8 : vector<32x8xf32> to vector<32x8xbf16>
    %cst = arith.constant dense<0.000000e+00> : vector<24x8xf32>
    %10 = tpu.matmul %6, %9, %cst {dimension_numbers = #tpu.dot_dimension_numbers<[1], [0], [0], [1], [0, 0, 1, 1], [], []>} : vector<24x32xbf16>, vector<32x8xbf16>, vector<24x8xf32> -> vector<24x8xf32>
    %11 = arith.addf %3, %10 : vector<24x8xf32>
    %c0_8 = arith.constant 0 : index
    %c0_9 = arith.constant 0 : index
    %12 = vector.load %arg8[%c0_8, %c0_9] : memref<24x8xf32, #tpu.memory_space<vmem>>, vector<24x8xf32>
    tpu.vector_store %arg8[%c0_8, %c0_9], %11 {strides = array<i32>} : memref<24x8xf32, #tpu.memory_space<vmem>>, vector<24x8xf32>,
    %c0_i32_10 = arith.constant 0 : i32
    %13 = arith.cmpi eq, %arg3, %c0_i32_10 : i32
    %14 = arith.extui %13 : i1 to i32
    %c0_i32_11 = arith.constant 0 : i32
    %15 = arith.cmpi ne, %14, %c0_i32_11 : i32
    scf.if %15 {
      %c0_12 = arith.constant 0 : index
      %c0_13 = arith.constant 0 : index
      %16 = vector.load %arg8[%c0_12, %c0_13] : memref<24x8xf32, #tpu.memory_space<vmem>>, vector<24x8xf32>
      %c0_14 = arith.constant 0 : index
      %c0_15 = arith.constant 0 : index
      %c0_16 = arith.constant 0 : index
      %17 = vector.load %arg6[%c0_14, %c0_15, %c0_16] : memref<1x1x8xf32, #tpu.memory_space<vmem>>, vector<1x1x8xf32>
      %18 = vector.shape_cast %17 : vector<1x1x8xf32> to vector<1x8xf32>
      %19 = vector.broadcast %18 : vector<1x8xf32> to vector<24x8xf32>
      %20 = arith.addf %16, %19 : vector<24x8xf32>
      %c0_17 = arith.constant 0 : index
      %c0_18 = arith.constant 0 : index
      %c0_19 = arith.constant 0 : index
      %21 = vector.load %arg7[%c0_17, %c0_18, %c0_19] : memref<1x24x8xf32, #tpu.memory_space<vmem>>, vector<1x24x8xf32>
      %22 = vector.shape_cast %21 : vector<1x24x8xf32> to vector<24x8xf32>
      %23 = vector.shape_cast %20 : vector<24x8xf32> to vector<1x24x8xf32>
      tpu.vector_store %arg7[%c0_17, %c0_18, %c0_19], %23 {strides = array<i32>} : memref<1x24x8xf32, #tpu.memory_space<vmem>>, vector<1x24x8xf32>,
    } else {
    }
    return
  }
  func.func @transform_0(%arg0: i32, %arg1: i32, %arg2: i32, %arg3: i32) -> (i32, i32, i32) {
    %c0_i32 = arith.constant 0 : i32
    %0 = arith.addi %c0_i32, %arg3 : i32
    %c0_i32_0 = arith.constant 0 : i32
    return %arg0, %arg2, %0 : i32, i32, i32
  }
  func.func @transform_1(%arg0: i32, %arg1: i32, %arg2: i32, %arg3: i32) -> (i32, i32, i32) {
    %c0_i32 = arith.constant 0 : i32
    %c0_i32_0 = arith.constant 0 : i32
    return %arg1, %arg3, %c0_i32 : i32, i32, i32
  }
  func.func @transform_2(%arg0: i32, %arg1: i32, %arg2: i32, %arg3: i32) -> (i32, i32, i32) {
    %c0_i32 = arith.constant 0 : i32
    %c0_i32_0 = arith.constant 0 : i32
    %c0_i32_1 = arith.constant 0 : i32
    return %arg1, %c0_i32, %c0_i32_0 : i32, i32, i32
  }
  func.func @transform_3(%arg0: i32, %arg1: i32, %arg2: i32, %arg3: i32) -> (i32, i32, i32) {
    %c4_i32 = arith.constant 4 : i32
    %0 = arith.muli %arg0, %c4_i32 : i32
    %1 = arith.addi %0, %arg1 : i32
    %c0_i32 = arith.constant 0 : i32
    %c0_i32_0 = arith.constant 0 : i32
    return %1, %arg2, %c0_i32 : i32, i32, i32
  }
}

module attributes {stable_mosaic.version = 11 : i64} {
  func.func @_flash_attn_kernel(%arg0: i32, %arg1: i32, %arg2: i32, %arg3: memref<1x24x8xf32, #tpu.memory_space<vmem>>, %arg4: memref<1x24x8xf32, #tpu.memory_space<vmem>>, %arg5: memref<1x24x8xf32, #tpu.memory_space<vmem>>, %arg6: memref<1x24x8xf32, #tpu.memory_space<vmem>>, %arg7: memref<24x1xf32, #tpu.memory_space<vmem>>, %arg8: memref<24x1xf32, #tpu.memory_space<vmem>>, %arg9: memref<24x8xf32, #tpu.memory_space<vmem>>) attributes {dimension_semantics = [#tpu.dimension_semantics<parallel>, #tpu.dimension_semantics<parallel>, #tpu.dimension_semantics<arbitrary>], iteration_bounds = array<i64: 8, 1, 1>, scalar_prefetch = 0 : i64, scratch_operands = 3 : i64, tpu.core_type = #tpu.core_type<tc>, window_params = [{transform_indices = @transform_0, window_bounds = array<i64: 1, 24, 8>}, {transform_indices = @transform_1, window_bounds = array<i64: 1, 24, 8>}, {transform_indices = @transform_2, window_bounds = array<i64: 1, 24, 8>}, {transform_indices = @transform_3, window_bounds = array<i64: 1, 24, 8>}]} {
    %c0_i32 = arith.constant 0 : i32
    %0 = arith.cmpi eq, %arg2, %c0_i32 : i32
    %1 = arith.extui %0 : i1 to i32
    %c0_i32_0 = arith.constant 0 : i32
    %2 = arith.cmpi ne, %1, %c0_i32_0 : i32
    scf.if %2 {
      %cst_27 = arith.constant 0xFF800000 : f32
      %42 = vector.broadcast %cst_27 : f32 to vector<24x1xf32>
      %c0_28 = arith.constant 0 : index
      %c0_29 = arith.constant 0 : index
      %43 = vector.load %arg7[%c0_28, %c0_29] : memref<24x1xf32, #tpu.memory_space<vmem>>, vector<24x1xf32>
      tpu.vector_store %arg7[%c0_28, %c0_29], %42 {strides = array<i32>} : memref<24x1xf32, #tpu.memory_space<vmem>>, vector<24x1xf32>,
      %cst_30 = arith.constant 0.000000e+00 : f32
      %44 = vector.broadcast %cst_30 : f32 to vector<24x1xf32>
      %c0_31 = arith.constant 0 : index
      %c0_32 = arith.constant 0 : index
      %45 = vector.load %arg8[%c0_31, %c0_32] : memref<24x1xf32, #tpu.memory_space<vmem>>, vector<24x1xf32>
      tpu.vector_store %arg8[%c0_31, %c0_32], %44 {strides = array<i32>} : memref<24x1xf32, #tpu.memory_space<vmem>>, vector<24x1xf32>,
      %cst_33 = arith.constant 0.000000e+00 : f32
      %46 = vector.broadcast %cst_33 : f32 to vector<24x8xf32>
      %c0_34 = arith.constant 0 : index
      %c0_35 = arith.constant 0 : index
      %47 = vector.load %arg9[%c0_34, %c0_35] : memref<24x8xf32, #tpu.memory_space<vmem>>, vector<24x8xf32>
      tpu.vector_store %arg9[%c0_34, %c0_35], %46 {strides = array<i32>} : memref<24x8xf32, #tpu.memory_space<vmem>>, vector<24x8xf32>,
    } else {
    }
    %c0 = arith.constant 0 : index
    %c0_1 = arith.constant 0 : index
    %c0_2 = arith.constant 0 : index
    %3 = vector.load %arg3[%c0, %c0_1, %c0_2] : memref<1x24x8xf32, #tpu.memory_space<vmem>>, vector<1x24x8xf32>
    %4 = vector.shape_cast %3 : vector<1x24x8xf32> to vector<24x8xf32>
    %cst = arith.constant 0.353553385 : f32
    %5 = vector.broadcast %cst : f32 to vector<24x8xf32>
    %6 = arith.mulf %4, %5 : vector<24x8xf32>
    %7 = arith.truncf %6 : vector<24x8xf32> to vector<24x8xbf16>
    %c0_3 = arith.constant 0 : index
    %c0_4 = arith.constant 0 : index
    %c0_5 = arith.constant 0 : index
    %8 = vector.load %arg4[%c0_3, %c0_4, %c0_5] : memref<1x24x8xf32, #tpu.memory_space<vmem>>, vector<1x24x8xf32>
    %9 = vector.shape_cast %8 : vector<1x24x8xf32> to vector<24x8xf32>
    %10 = arith.truncf %9 : vector<24x8xf32> to vector<24x8xbf16>
    %11 = tpu.transpose %10, [1, 0] : vector<24x8xbf16> -> vector<8x24xbf16>
    %cst_6 = arith.constant dense<0.000000e+00> : vector<24x24xf32>
    %12 = tpu.matmul %7, %11, %cst_6 {dimension_numbers = #tpu.dot_dimension_numbers<[1], [0], [0], [1], [0, 0, 1, 1], [], []>} : vector<24x8xbf16>, vector<8x24xbf16>, vector<24x24xf32> -> vector<24x24xf32>
    %c0_7 = arith.constant 0 : index
    %c0_8 = arith.constant 0 : index
    %13 = vector.load %arg7[%c0_7, %c0_8] : memref<24x1xf32, #tpu.memory_space<vmem>>, vector<24x1xf32>
    %cst_9 = arith.constant dense<0xFF800000> : vector<24xf32>
    %14 = vector.multi_reduction <maximumf>, %12, %cst_9 [1] : vector<24x24xf32> to vector<24xf32>
    %15 = vector.shape_cast %14 : vector<24xf32> to vector<24x1xf32>
    %16 = arith.maximumf %13, %15 : vector<24x1xf32>
    %17 = arith.subf %13, %16 : vector<24x1xf32>
    %18 = math.exp %17 : vector<24x1xf32>
    %19 = vector.broadcast %16 : vector<24x1xf32> to vector<24x24xf32>
    %20 = arith.subf %12, %19 : vector<24x24xf32>
    %21 = math.exp %20 : vector<24x24xf32>
    %c0_10 = arith.constant 0 : index
    %c0_11 = arith.constant 0 : index
    %22 = vector.load %arg8[%c0_10, %c0_11] : memref<24x1xf32, #tpu.memory_space<vmem>>, vector<24x1xf32>
    %23 = arith.mulf %18, %22 : vector<24x1xf32>
    %cst_12 = arith.constant dense<0.000000e+00> : vector<24xf32>
    %24 = vector.multi_reduction <add>, %21, %cst_12 [1] : vector<24x24xf32> to vector<24xf32>
    %25 = vector.shape_cast %24 : vector<24xf32> to vector<24x1xf32>
    %26 = arith.addf %23, %25 : vector<24x1xf32>
    %c0_13 = arith.constant 0 : index
    %c0_14 = arith.constant 0 : index
    %27 = vector.load %arg8[%c0_13, %c0_14] : memref<24x1xf32, #tpu.memory_space<vmem>>, vector<24x1xf32>
    tpu.vector_store %arg8[%c0_13, %c0_14], %26 {strides = array<i32>} : memref<24x1xf32, #tpu.memory_space<vmem>>, vector<24x1xf32>,
    %c0_15 = arith.constant 0 : index
    %c0_16 = arith.constant 0 : index
    %28 = vector.load %arg9[%c0_15, %c0_16] : memref<24x8xf32, #tpu.memory_space<vmem>>, vector<24x8xf32>
    %29 = vector.broadcast %18 : vector<24x1xf32> to vector<24x8xf32>
    %30 = arith.mulf %29, %28 : vector<24x8xf32>
    %31 = arith.truncf %21 : vector<24x24xf32> to vector<24x24xbf16>
    %c0_17 = arith.constant 0 : index
    %c0_18 = arith.constant 0 : index
    %c0_19 = arith.constant 0 : index
    %32 = vector.load %arg5[%c0_17, %c0_18, %c0_19] : memref<1x24x8xf32, #tpu.memory_space<vmem>>, vector<1x24x8xf32>
    %33 = vector.shape_cast %32 : vector<1x24x8xf32> to vector<24x8xf32>
    %34 = arith.truncf %33 : vector<24x8xf32> to vector<24x8xbf16>
    %cst_20 = arith.constant dense<0.000000e+00> : vector<24x8xf32>
    %35 = tpu.matmul %31, %34, %cst_20 {dimension_numbers = #tpu.dot_dimension_numbers<[1], [0], [0], [1], [0, 0, 1, 1], [], []>} : vector<24x24xbf16>, vector<24x8xbf16>, vector<24x8xf32> -> vector<24x8xf32>
    %36 = arith.addf %30, %35 : vector<24x8xf32>
    %c0_21 = arith.constant 0 : index
    %c0_22 = arith.constant 0 : index
    %37 = vector.load %arg9[%c0_21, %c0_22] : memref<24x8xf32, #tpu.memory_space<vmem>>, vector<24x8xf32>
    tpu.vector_store %arg9[%c0_21, %c0_22], %36 {strides = array<i32>} : memref<24x8xf32, #tpu.memory_space<vmem>>, vector<24x8xf32>,
    %c0_23 = arith.constant 0 : index
    %c0_24 = arith.constant 0 : index
    %38 = vector.load %arg7[%c0_23, %c0_24] : memref<24x1xf32, #tpu.memory_space<vmem>>, vector<24x1xf32>
    tpu.vector_store %arg7[%c0_23, %c0_24], %16 {strides = array<i32>} : memref<24x1xf32, #tpu.memory_space<vmem>>, vector<24x1xf32>,
    %c0_i32_25 = arith.constant 0 : i32
    %39 = arith.cmpi eq, %arg2, %c0_i32_25 : i32
    %40 = arith.extui %39 : i1 to i32
    %c0_i32_26 = arith.constant 0 : i32
    %41 = arith.cmpi ne, %40, %c0_i32_26 : i32
    scf.if %41 {
      %c0_27 = arith.constant 0 : index
      %c0_28 = arith.constant 0 : index
      %42 = vector.load %arg9[%c0_27, %c0_28] : memref<24x8xf32, #tpu.memory_space<vmem>>, vector<24x8xf32>
      %c0_29 = arith.constant 0 : index
      %c0_30 = arith.constant 0 : index
      %43 = vector.load %arg8[%c0_29, %c0_30] : memref<24x1xf32, #tpu.memory_space<vmem>>, vector<24x1xf32>
      %44 = tpu.reciprocal %43 {approx = true} : vector<24x1xf32> -> vector<24x1xf32>
      %45 = vector.broadcast %44 : vector<24x1xf32> to vector<24x8xf32>
      %46 = arith.mulf %42, %45 : vector<24x8xf32>
      %c0_31 = arith.constant 0 : index
      %c0_32 = arith.constant 0 : index
      %c0_33 = arith.constant 0 : index
      %47 = vector.load %arg6[%c0_31, %c0_32, %c0_33] : memref<1x24x8xf32, #tpu.memory_space<vmem>>, vector<1x24x8xf32>
      %48 = vector.shape_cast %47 : vector<1x24x8xf32> to vector<24x8xf32>
      %49 = vector.shape_cast %46 : vector<24x8xf32> to vector<1x24x8xf32>
      tpu.vector_store %arg6[%c0_31, %c0_32, %c0_33], %49 {strides = array<i32>} : memref<1x24x8xf32, #tpu.memory_space<vmem>>, vector<1x24x8xf32>,
    } else {
    }
    return
  }
  func.func @transform_0(%arg0: i32, %arg1: i32, %arg2: i32) -> (i32, i32, i32) {
    %c0_i32 = arith.constant 0 : i32
    %c0_i32_0 = arith.constant 0 : i32
    return %arg0, %arg1, %c0_i32 : i32, i32, i32
  }
  func.func @transform_1(%arg0: i32, %arg1: i32, %arg2: i32) -> (i32, i32, i32) {
    %c0_i32 = arith.constant 0 : i32
    %c0_i32_0 = arith.constant 0 : i32
    return %arg0, %arg2, %c0_i32 : i32, i32, i32
  }
  func.func @transform_2(%arg0: i32, %arg1: i32, %arg2: i32) -> (i32, i32, i32) {
    %c0_i32 = arith.constant 0 : i32
    %c0_i32_0 = arith.constant 0 : i32
    return %arg0, %arg2, %c0_i32 : i32, i32, i32
  }
  func.func @transform_3(%arg0: i32, %arg1: i32, %arg2: i32) -> (i32, i32, i32) {
    %c0_i32 = arith.constant 0 : i32
    %c0_i32_0 = arith.constant 0 : i32
    return %arg0, %arg1, %c0_i32 : i32, i32, i32
  }
}

module attributes {stable_mosaic.version = 11 : i64} {
  func.func @_head_out_proj_kernel(%arg0: i32, %arg1: i32, %arg2: i32, %arg3: i32, %arg4: memref<1x24x8xf32, #tpu.memory_space<vmem>>, %arg5: memref<1x8x32xf32, #tpu.memory_space<vmem>>, %arg6: memref<1x32xf32, #tpu.memory_space<vmem>>, %arg7: memref<1x24x32xf32, #tpu.memory_space<vmem>>, %arg8: memref<24x32xf32, #tpu.memory_space<vmem>>) attributes {dimension_semantics = [#tpu.dimension_semantics<parallel>, #tpu.dimension_semantics<parallel>, #tpu.dimension_semantics<parallel>, #tpu.dimension_semantics<arbitrary>], iteration_bounds = array<i64: 2, 1, 1, 4>, scalar_prefetch = 0 : i64, scratch_operands = 1 : i64, tpu.core_type = #tpu.core_type<tc>, window_params = [{transform_indices = @transform_0, window_bounds = array<i64: 1, 24, 8>}, {transform_indices = @transform_1, window_bounds = array<i64: 1, 8, 32>}, {transform_indices = @transform_2, window_bounds = array<i64: 1, 32>}, {transform_indices = @transform_3, window_bounds = array<i64: 1, 24, 32>}]} {
    %c0_i32 = arith.constant 0 : i32
    %0 = arith.cmpi eq, %arg3, %c0_i32 : i32
    %1 = arith.extui %0 : i1 to i32
    %c0_i32_0 = arith.constant 0 : i32
    %2 = arith.cmpi ne, %1, %c0_i32_0 : i32
    scf.if %2 {
      %cst_11 = arith.constant 0.000000e+00 : f32
      %16 = vector.broadcast %cst_11 : f32 to vector<24x32xf32>
      %c0_12 = arith.constant 0 : index
      %c0_13 = arith.constant 0 : index
      %17 = vector.load %arg8[%c0_12, %c0_13] : memref<24x32xf32, #tpu.memory_space<vmem>>, vector<24x32xf32>
      tpu.vector_store %arg8[%c0_12, %c0_13], %16 {strides = array<i32>} : memref<24x32xf32, #tpu.memory_space<vmem>>, vector<24x32xf32>,
    } else {
    }
    %c0 = arith.constant 0 : index
    %c0_1 = arith.constant 0 : index
    %3 = vector.load %arg8[%c0, %c0_1] : memref<24x32xf32, #tpu.memory_space<vmem>>, vector<24x32xf32>
    %c0_2 = arith.constant 0 : index
    %c0_3 = arith.constant 0 : index
    %c0_4 = arith.constant 0 : index
    %4 = vector.load %arg4[%c0_2, %c0_3, %c0_4] : memref<1x24x8xf32, #tpu.memory_space<vmem>>, vector<1x24x8xf32>
    %5 = vector.shape_cast %4 : vector<1x24x8xf32> to vector<24x8xf32>
    %6 = arith.truncf %5 : vector<24x8xf32> to vector<24x8xbf16>
    %c0_5 = arith.constant 0 : index
    %c0_6 = arith.constant 0 : index
    %c0_7 = arith.constant 0 : index
    %7 = vector.load %arg5[%c0_5, %c0_6, %c0_7] : memref<1x8x32xf32, #tpu.memory_space<vmem>>, vector<1x8x32xf32>
    %8 = vector.shape_cast %7 : vector<1x8x32xf32> to vector<8x32xf32>
    %9 = arith.truncf %8 : vector<8x32xf32> to vector<8x32xbf16>
    %cst = arith.constant dense<0.000000e+00> : vector<24x32xf32>
    %10 = tpu.matmul %6, %9, %cst {dimension_numbers = #tpu.dot_dimension_numbers<[1], [0], [0], [1], [0, 0, 1, 1], [], []>} : vector<24x8xbf16>, vector<8x32xbf16>, vector<24x32xf32> -> vector<24x32xf32>
    %11 = arith.addf %3, %10 : vector<24x32xf32>
    %c0_8 = arith.constant 0 : index
    %c0_9 = arith.constant 0 : index
    %12 = vector.load %arg8[%c0_8, %c0_9] : memref<24x32xf32, #tpu.memory_space<vmem>>, vector<24x32xf32>
    tpu.vector_store %arg8[%c0_8, %c0_9], %11 {strides = array<i32>} : memref<24x32xf32, #tpu.memory_space<vmem>>, vector<24x32xf32>,
    %c3_i32 = arith.constant 3 : i32
    %13 = arith.cmpi eq, %arg3, %c3_i32 : i32
    %14 = arith.extui %13 : i1 to i32
    %c0_i32_10 = arith.constant 0 : i32
    %15 = arith.cmpi ne, %14, %c0_i32_10 : i32
    scf.if %15 {
      %c0_11 = arith.constant 0 : index
      %c0_12 = arith.constant 0 : index
      %16 = vector.load %arg8[%c0_11, %c0_12] : memref<24x32xf32, #tpu.memory_space<vmem>>, vector<24x32xf32>
      %c0_13 = arith.constant 0 : index
      %c0_14 = arith.constant 0 : index
      %17 = vector.load %arg6[%c0_13, %c0_14] : memref<1x32xf32, #tpu.memory_space<vmem>>, vector<1x32xf32>
      %18 = vector.broadcast %17 : vector<1x32xf32> to vector<24x32xf32>
      %19 = arith.addf %16, %18 : vector<24x32xf32>
      %c0_15 = arith.constant 0 : index
      %c0_16 = arith.constant 0 : index
      %c0_17 = arith.constant 0 : index
      %20 = vector.load %arg7[%c0_15, %c0_16, %c0_17] : memref<1x24x32xf32, #tpu.memory_space<vmem>>, vector<1x24x32xf32>
      %21 = vector.shape_cast %20 : vector<1x24x32xf32> to vector<24x32xf32>
      %22 = vector.shape_cast %19 : vector<24x32xf32> to vector<1x24x32xf32>
      tpu.vector_store %arg7[%c0_15, %c0_16, %c0_17], %22 {strides = array<i32>} : memref<1x24x32xf32, #tpu.memory_space<vmem>>, vector<1x24x32xf32>,
    } else {
    }
    return
  }
  func.func @transform_0(%arg0: i32, %arg1: i32, %arg2: i32, %arg3: i32) -> (i32, i32, i32) {
    %c4_i32 = arith.constant 4 : i32
    %0 = arith.muli %arg0, %c4_i32 : i32
    %1 = arith.addi %0, %arg3 : i32
    %c0_i32 = arith.constant 0 : i32
    %c0_i32_0 = arith.constant 0 : i32
    return %1, %arg1, %c0_i32 : i32, i32, i32
  }
  func.func @transform_1(%arg0: i32, %arg1: i32, %arg2: i32, %arg3: i32) -> (i32, i32, i32) {
    %c0_i32 = arith.constant 0 : i32
    %c0_i32_0 = arith.constant 0 : i32
    return %arg3, %c0_i32, %arg2 : i32, i32, i32
  }
  func.func @transform_2(%arg0: i32, %arg1: i32, %arg2: i32, %arg3: i32) -> (i32, i32) {
    %c0_i32 = arith.constant 0 : i32
    %c0_i32_0 = arith.constant 0 : i32
    return %c0_i32, %arg2 : i32, i32
  }
  func.func @transform_3(%arg0: i32, %arg1: i32, %arg2: i32, %arg3: i32) -> (i32, i32, i32) {
    %c0_i32 = arith.constant 0 : i32
    return %arg0, %arg1, %arg2 : i32, i32, i32
  }
}

module attributes {stable_mosaic.version = 11 : i64} {
  func.func @_linear_mod_add_kernel(%arg0: i32, %arg1: i32, %arg2: i32, %arg3: i32, %arg4: memref<1x16x32xf32, #tpu.memory_space<vmem>>, %arg5: memref<32x32xf32, #tpu.memory_space<vmem>>, %arg6: memref<1x32xf32, #tpu.memory_space<vmem>>, %arg7: memref<1x1x32xf32, #tpu.memory_space<vmem>>, %arg8: memref<1x1x32xf32, #tpu.memory_space<vmem>>, %arg9: memref<1x16x32xf32, #tpu.memory_space<vmem>>, %arg10: memref<1x16x32xf32, #tpu.memory_space<vmem>>, %arg11: memref<16x32xf32, #tpu.memory_space<vmem>>) attributes {dimension_semantics = [#tpu.dimension_semantics<parallel>, #tpu.dimension_semantics<parallel>, #tpu.dimension_semantics<parallel>, #tpu.dimension_semantics<arbitrary>], iteration_bounds = array<i64: 2, 1, 1, 1>, scalar_prefetch = 0 : i64, scratch_operands = 1 : i64, tpu.core_type = #tpu.core_type<tc>, window_params = [{transform_indices = @transform_0, window_bounds = array<i64: 1, 16, 32>}, {transform_indices = @transform_1, window_bounds = array<i64: 32, 32>}, {transform_indices = @transform_2, window_bounds = array<i64: 1, 32>}, {transform_indices = @transform_3, window_bounds = array<i64: 1, 1, 32>}, {transform_indices = @transform_4, window_bounds = array<i64: 1, 1, 32>}, {transform_indices = @transform_5, window_bounds = array<i64: 1, 16, 32>}, {transform_indices = @transform_6, window_bounds = array<i64: 1, 16, 32>}]} {
    %c0_i32 = arith.constant 0 : i32
    %0 = arith.cmpi eq, %arg3, %c0_i32 : i32
    %1 = arith.extui %0 : i1 to i32
    %c0_i32_0 = arith.constant 0 : i32
    %2 = arith.cmpi ne, %1, %c0_i32_0 : i32
    scf.if %2 {
      %cst_11 = arith.constant 0.000000e+00 : f32
      %15 = vector.broadcast %cst_11 : f32 to vector<16x32xf32>
      %c0_12 = arith.constant 0 : index
      %c0_13 = arith.constant 0 : index
      %16 = vector.load %arg11[%c0_12, %c0_13] : memref<16x32xf32, #tpu.memory_space<vmem>>, vector<16x32xf32>
      tpu.vector_store %arg11[%c0_12, %c0_13], %15 {strides = array<i32>} : memref<16x32xf32, #tpu.memory_space<vmem>>, vector<16x32xf32>,
    } else {
    }
    %c0 = arith.constant 0 : index
    %c0_1 = arith.constant 0 : index
    %3 = vector.load %arg11[%c0, %c0_1] : memref<16x32xf32, #tpu.memory_space<vmem>>, vector<16x32xf32>
    %c0_2 = arith.constant 0 : index
    %c0_3 = arith.constant 0 : index
    %c0_4 = arith.constant 0 : index
    %4 = vector.load %arg4[%c0_2, %c0_3, %c0_4] : memref<1x16x32xf32, #tpu.memory_space<vmem>>, vector<1x16x32xf32>
    %5 = vector.shape_cast %4 : vector<1x16x32xf32> to vector<16x32xf32>
    %6 = arith.truncf %5 : vector<16x32xf32> to vector<16x32xbf16>
    %c0_5 = arith.constant 0 : index
    %c0_6 = arith.constant 0 : index
    %7 = vector.load %arg5[%c0_5, %c0_6] : memref<32x32xf32, #tpu.memory_space<vmem>>, vector<32x32xf32>
    %8 = arith.truncf %7 : vector<32x32xf32> to vector<32x32xbf16>
    %cst = arith.constant dense<0.000000e+00> : vector<16x32xf32>
    %9 = tpu.matmul %6, %8, %cst {dimension_numbers = #tpu.dot_dimension_numbers<[1], [0], [0], [1], [0, 0, 1, 1], [], []>} : vector<16x32xbf16>, vector<32x32xbf16>, vector<16x32xf32> -> vector<16x32xf32>
    %10 = arith.addf %3, %9 : vector<16x32xf32>
    %c0_7 = arith.constant 0 : index
    %c0_8 = arith.constant 0 : index
    %11 = vector.load %arg11[%c0_7, %c0_8] : memref<16x32xf32, #tpu.memory_space<vmem>>, vector<16x32xf32>
    tpu.vector_store %arg11[%c0_7, %c0_8], %10 {strides = array<i32>} : memref<16x32xf32, #tpu.memory_space<vmem>>, vector<16x32xf32>,
    %c0_i32_9 = arith.constant 0 : i32
    %12 = arith.cmpi eq, %arg3, %c0_i32_9 : i32
    %13 = arith.extui %12 : i1 to i32
    %c0_i32_10 = arith.constant 0 : i32
    %14 = arith.cmpi ne, %13, %c0_i32_10 : i32
    scf.if %14 {
      %c0_11 = arith.constant 0 : index
      %c0_12 = arith.constant 0 : index
      %15 = vector.load %arg11[%c0_11, %c0_12] : memref<16x32xf32, #tpu.memory_space<vmem>>, vector<16x32xf32>
      %c0_13 = arith.constant 0 : index
      %c0_14 = arith.constant 0 : index
      %16 = vector.load %arg6[%c0_13, %c0_14] : memref<1x32xf32, #tpu.memory_space<vmem>>, vector<1x32xf32>
      %17 = vector.broadcast %16 : vector<1x32xf32> to vector<16x32xf32>
      %18 = arith.addf %15, %17 : vector<16x32xf32>
      %c0_15 = arith.constant 0 : index
      %c0_16 = arith.constant 0 : index
      %c0_17 = arith.constant 0 : index
      %19 = vector.load %arg7[%c0_15, %c0_16, %c0_17] : memref<1x1x32xf32, #tpu.memory_space<vmem>>, vector<1x1x32xf32>
      %20 = vector.shape_cast %19 : vector<1x1x32xf32> to vector<1x32xf32>
      %cst_18 = arith.constant 1.000000e+00 : f32
      %21 = vector.broadcast %cst_18 : f32 to vector<1x32xf32>
      %22 = arith.addf %21, %20 : vector<1x32xf32>
      %23 = vector.broadcast %22 : vector<1x32xf32> to vector<16x32xf32>
      %24 = arith.mulf %18, %23 : vector<16x32xf32>
      %c0_19 = arith.constant 0 : index
      %c0_20 = arith.constant 0 : index
      %c0_21 = arith.constant 0 : index
      %25 = vector.load %arg8[%c0_19, %c0_20, %c0_21] : memref<1x1x32xf32, #tpu.memory_space<vmem>>, vector<1x1x32xf32>
      %26 = vector.shape_cast %25 : vector<1x1x32xf32> to vector<1x32xf32>
      %27 = vector.broadcast %26 : vector<1x32xf32> to vector<16x32xf32>
      %28 = arith.addf %24, %27 : vector<16x32xf32>
      %c0_22 = arith.constant 0 : index
      %c0_23 = arith.constant 0 : index
      %c0_24 = arith.constant 0 : index
      %29 = vector.load %arg9[%c0_22, %c0_23, %c0_24] : memref<1x16x32xf32, #tpu.memory_space<vmem>>, vector<1x16x32xf32>
      %30 = vector.shape_cast %29 : vector<1x16x32xf32> to vector<16x32xf32>
      %31 = arith.addf %28, %30 : vector<16x32xf32>
      %c0_25 = arith.constant 0 : index
      %c0_26 = arith.constant 0 : index
      %c0_27 = arith.constant 0 : index
      %32 = vector.load %arg10[%c0_25, %c0_26, %c0_27] : memref<1x16x32xf32, #tpu.memory_space<vmem>>, vector<1x16x32xf32>
      %33 = vector.shape_cast %32 : vector<1x16x32xf32> to vector<16x32xf32>
      %34 = vector.shape_cast %31 : vector<16x32xf32> to vector<1x16x32xf32>
      tpu.vector_store %arg10[%c0_25, %c0_26, %c0_27], %34 {strides = array<i32>} : memref<1x16x32xf32, #tpu.memory_space<vmem>>, vector<1x16x32xf32>,
    } else {
    }
    return
  }
  func.func @transform_0(%arg0: i32, %arg1: i32, %arg2: i32, %arg3: i32) -> (i32, i32, i32) {
    %c0_i32 = arith.constant 0 : i32
    return %arg0, %arg1, %arg3 : i32, i32, i32
  }
  func.func @transform_1(%arg0: i32, %arg1: i32, %arg2: i32, %arg3: i32) -> (i32, i32) {
    %c0_i32 = arith.constant 0 : i32
    return %arg3, %arg2 : i32, i32
  }
  func.func @transform_2(%arg0: i32, %arg1: i32, %arg2: i32, %arg3: i32) -> (i32, i32) {
    %c0_i32 = arith.constant 0 : i32
    %c0_i32_0 = arith.constant 0 : i32
    return %c0_i32, %arg2 : i32, i32
  }
  func.func @transform_3(%arg0: i32, %arg1: i32, %arg2: i32, %arg3: i32) -> (i32, i32, i32) {
    %c0_i32 = arith.constant 0 : i32
    %c0_i32_0 = arith.constant 0 : i32
    return %arg0, %c0_i32, %arg2 : i32, i32, i32
  }
  func.func @transform_4(%arg0: i32, %arg1: i32, %arg2: i32, %arg3: i32) -> (i32, i32, i32) {
    %c0_i32 = arith.constant 0 : i32
    %c0_i32_0 = arith.constant 0 : i32
    return %arg0, %c0_i32, %arg2 : i32, i32, i32
  }
  func.func @transform_5(%arg0: i32, %arg1: i32, %arg2: i32, %arg3: i32) -> (i32, i32, i32) {
    %c0_i32 = arith.constant 0 : i32
    return %arg0, %arg1, %arg2 : i32, i32, i32
  }
  func.func @transform_6(%arg0: i32, %arg1: i32, %arg2: i32, %arg3: i32) -> (i32, i32, i32) {
    %c0_i32 = arith.constant 0 : i32
    return %arg0, %arg1, %arg2 : i32, i32, i32
  }
}

module attributes {stable_mosaic.version = 11 : i64} {
  func.func @_ln_mod_linear_kernel(%arg0: i32, %arg1: i32, %arg2: i32, %arg3: memref<1x16x32xf32, #tpu.memory_space<vmem>>, %arg4: memref<1x1x32xf32, #tpu.memory_space<vmem>>, %arg5: memref<1x1x32xf32, #tpu.memory_space<vmem>>, %arg6: memref<32x128xf32, #tpu.memory_space<vmem>>, %arg7: memref<1x128xf32, #tpu.memory_space<vmem>>, %arg8: memref<1x16x128xf32, #tpu.memory_space<vmem>>) attributes {dimension_semantics = [#tpu.dimension_semantics<parallel>, #tpu.dimension_semantics<parallel>, #tpu.dimension_semantics<parallel>], iteration_bounds = array<i64: 2, 1, 1>, scalar_prefetch = 0 : i64, scratch_operands = 0 : i64, tpu.core_type = #tpu.core_type<tc>, window_params = [{transform_indices = @transform_0, window_bounds = array<i64: 1, 16, 32>}, {transform_indices = @transform_1, window_bounds = array<i64: 1, 1, 32>}, {transform_indices = @transform_2, window_bounds = array<i64: 1, 1, 32>}, {transform_indices = @transform_3, window_bounds = array<i64: 32, 128>}, {transform_indices = @transform_4, window_bounds = array<i64: 1, 128>}, {transform_indices = @transform_5, window_bounds = array<i64: 1, 16, 128>}]} {
    %c0 = arith.constant 0 : index
    %c0_0 = arith.constant 0 : index
    %c0_1 = arith.constant 0 : index
    %0 = vector.load %arg3[%c0, %c0_0, %c0_1] : memref<1x16x32xf32, #tpu.memory_space<vmem>>, vector<1x16x32xf32>
    %1 = vector.shape_cast %0 : vector<1x16x32xf32> to vector<16x32xf32>
    %cst = arith.constant dense<0.000000e+00> : vector<16xf32>
    %2 = vector.multi_reduction <add>, %1, %cst [1] : vector<16x32xf32> to vector<16xf32>
    %3 = vector.shape_cast %2 : vector<16xf32> to vector<16x1xf32>
    %cst_2 = arith.constant 3.200000e+01 : f32
    %4 = vector.broadcast %cst_2 : f32 to vector<16x1xf32>
    %5 = arith.divf %3, %4 : vector<16x1xf32>
    %6 = vector.broadcast %5 : vector<16x1xf32> to vector<16x32xf32>
    %7 = arith.subf %1, %6 : vector<16x32xf32>
    %8 = arith.mulf %7, %7 : vector<16x32xf32>
    %cst_3 = arith.constant dense<0.000000e+00> : vector<16xf32>
    %9 = vector.multi_reduction <add>, %8, %cst_3 [1] : vector<16x32xf32> to vector<16xf32>
    %10 = vector.shape_cast %9 : vector<16xf32> to vector<16x1xf32>
    %cst_4 = arith.constant 3.200000e+01 : f32
    %11 = vector.broadcast %cst_4 : f32 to vector<16x1xf32>
    %12 = arith.divf %10, %11 : vector<16x1xf32>
    %cst_5 = arith.constant 9.99999974E-6 : f32
    %13 = vector.broadcast %cst_5 : f32 to vector<16x1xf32>
    %14 = arith.addf %12, %13 : vector<16x1xf32>
    %15 = math.rsqrt %14 : vector<16x1xf32>
    %16 = vector.broadcast %15 : vector<16x1xf32> to vector<16x32xf32>
    %17 = arith.mulf %7, %16 : vector<16x32xf32>
    %c0_6 = arith.constant 0 : index
    %c0_7 = arith.constant 0 : index
    %c0_8 = arith.constant 0 : index
    %18 = vector.load %arg4[%c0_6, %c0_7, %c0_8] : memref<1x1x32xf32, #tpu.memory_space<vmem>>, vector<1x1x32xf32>
    %19 = vector.shape_cast %18 : vector<1x1x32xf32> to vector<1x32xf32>
    %cst_9 = arith.constant 1.000000e+00 : f32
    %20 = vector.broadcast %cst_9 : f32 to vector<1x32xf32>
    %21 = arith.addf %20, %19 : vector<1x32xf32>
    %22 = vector.broadcast %21 : vector<1x32xf32> to vector<16x32xf32>
    %23 = arith.mulf %17, %22 : vector<16x32xf32>
    %c0_10 = arith.constant 0 : index
    %c0_11 = arith.constant 0 : index
    %c0_12 = arith.constant 0 : index
    %24 = vector.load %arg5[%c0_10, %c0_11, %c0_12] : memref<1x1x32xf32, #tpu.memory_space<vmem>>, vector<1x1x32xf32>
    %25 = vector.shape_cast %24 : vector<1x1x32xf32> to vector<1x32xf32>
    %26 = vector.broadcast %25 : vector<1x32xf32> to vector<16x32xf32>
    %27 = arith.addf %23, %26 : vector<16x32xf32>
    %28 = arith.truncf %27 : vector<16x32xf32> to vector<16x32xbf16>
    %c0_13 = arith.constant 0 : index
    %c0_14 = arith.constant 0 : index
    %29 = vector.load %arg6[%c0_13, %c0_14] : memref<32x128xf32, #tpu.memory_space<vmem>>, vector<32x128xf32>
    %30 = arith.truncf %29 : vector<32x128xf32> to vector<32x128xbf16>
    %cst_15 = arith.constant dense<0.000000e+00> : vector<16x128xf32>
    %31 = tpu.matmul %28, %30, %cst_15 {dimension_numbers = #tpu.dot_dimension_numbers<[1], [0], [0], [1], [0, 0, 1, 1], [], []>} : vector<16x32xbf16>, vector<32x128xbf16>, vector<16x128xf32> -> vector<16x128xf32>
    %c0_16 = arith.constant 0 : index
    %c0_17 = arith.constant 0 : index
    %32 = vector.load %arg7[%c0_16, %c0_17] : memref<1x128xf32, #tpu.memory_space<vmem>>, vector<1x128xf32>
    %33 = vector.broadcast %32 : vector<1x128xf32> to vector<16x128xf32>
    %34 = arith.addf %31, %33 : vector<16x128xf32>
    %35 = arith.mulf %34, %34 : vector<16x128xf32>
    %36 = arith.mulf %34, %35 : vector<16x128xf32>
    %cst_18 = arith.constant 4.471500e-02 : f32
    %37 = vector.broadcast %cst_18 : f32 to vector<16x128xf32>
    %38 = arith.mulf %37, %36 : vector<16x128xf32>
    %39 = arith.addf %34, %38 : vector<16x128xf32>
    %cst_19 = arith.constant 0.797884583 : f32
    %40 = vector.broadcast %cst_19 : f32 to vector<16x128xf32>
    %41 = arith.mulf %40, %39 : vector<16x128xf32>
    %42 = math.tanh %41 : vector<16x128xf32>
    %cst_20 = arith.constant 1.000000e+00 : f32
    %43 = vector.broadcast %cst_20 : f32 to vector<16x128xf32>
    %44 = arith.addf %43, %42 : vector<16x128xf32>
    %cst_21 = arith.constant 5.000000e-01 : f32
    %45 = vector.broadcast %cst_21 : f32 to vector<16x128xf32>
    %46 = arith.mulf %45, %44 : vector<16x128xf32>
    %47 = arith.mulf %34, %46 : vector<16x128xf32>
    %c0_22 = arith.constant 0 : index
    %c0_23 = arith.constant 0 : index
    %c0_24 = arith.constant 0 : index
    %48 = vector.load %arg8[%c0_22, %c0_23, %c0_24] : memref<1x16x128xf32, #tpu.memory_space<vmem>>, vector<1x16x128xf32>
    %49 = vector.shape_cast %48 : vector<1x16x128xf32> to vector<16x128xf32>
    %50 = vector.shape_cast %47 : vector<16x128xf32> to vector<1x16x128xf32>
    tpu.vector_store %arg8[%c0_22, %c0_23, %c0_24], %50 {strides = array<i32>} : memref<1x16x128xf32, #tpu.memory_space<vmem>>, vector<1x16x128xf32>,
    return
  }
  func.func @transform_0(%arg0: i32, %arg1: i32, %arg2: i32) -> (i32, i32, i32) {
    %c0_i32 = arith.constant 0 : i32
    %c0_i32_0 = arith.constant 0 : i32
    return %arg0, %arg1, %c0_i32 : i32, i32, i32
  }
  func.func @transform_1(%arg0: i32, %arg1: i32, %arg2: i32) -> (i32, i32, i32) {
    %c0_i32 = arith.constant 0 : i32
    %c0_i32_0 = arith.constant 0 : i32
    %c0_i32_1 = arith.constant 0 : i32
    return %arg0, %c0_i32, %c0_i32_0 : i32, i32, i32
  }
  func.func @transform_2(%arg0: i32, %arg1: i32, %arg2: i32) -> (i32, i32, i32) {
    %c0_i32 = arith.constant 0 : i32
    %c0_i32_0 = arith.constant 0 : i32
    %c0_i32_1 = arith.constant 0 : i32
    return %arg0, %c0_i32, %c0_i32_0 : i32, i32, i32
  }
  func.func @transform_3(%arg0: i32, %arg1: i32, %arg2: i32) -> (i32, i32) {
    %c0_i32 = arith.constant 0 : i32
    %c0_i32_0 = arith.constant 0 : i32
    return %c0_i32, %arg2 : i32, i32
  }
  func.func @transform_4(%arg0: i32, %arg1: i32, %arg2: i32) -> (i32, i32) {
    %c0_i32 = arith.constant 0 : i32
    %c0_i32_0 = arith.constant 0 : i32
    return %c0_i32, %arg2 : i32, i32
  }
  func.func @transform_5(%arg0: i32, %arg1: i32, %arg2: i32) -> (i32, i32, i32) {
    %c0_i32 = arith.constant 0 : i32
    return %arg0, %arg1, %arg2 : i32, i32, i32
  }
}

module attributes {stable_mosaic.version = 11 : i64} {
  func.func @_linear_mod_add_kernel(%arg0: i32, %arg1: i32, %arg2: i32, %arg3: i32, %arg4: memref<1x16x128xf32, #tpu.memory_space<vmem>>, %arg5: memref<128x32xf32, #tpu.memory_space<vmem>>, %arg6: memref<1x32xf32, #tpu.memory_space<vmem>>, %arg7: memref<1x1x32xf32, #tpu.memory_space<vmem>>, %arg8: memref<1x1x32xf32, #tpu.memory_space<vmem>>, %arg9: memref<1x16x32xf32, #tpu.memory_space<vmem>>, %arg10: memref<1x16x32xf32, #tpu.memory_space<vmem>>, %arg11: memref<16x32xf32, #tpu.memory_space<vmem>>) attributes {dimension_semantics = [#tpu.dimension_semantics<parallel>, #tpu.dimension_semantics<parallel>, #tpu.dimension_semantics<parallel>, #tpu.dimension_semantics<arbitrary>], iteration_bounds = array<i64: 2, 1, 1, 1>, scalar_prefetch = 0 : i64, scratch_operands = 1 : i64, tpu.core_type = #tpu.core_type<tc>, window_params = [{transform_indices = @transform_0, window_bounds = array<i64: 1, 16, 128>}, {transform_indices = @transform_1, window_bounds = array<i64: 128, 32>}, {transform_indices = @transform_2, window_bounds = array<i64: 1, 32>}, {transform_indices = @transform_3, window_bounds = array<i64: 1, 1, 32>}, {transform_indices = @transform_4, window_bounds = array<i64: 1, 1, 32>}, {transform_indices = @transform_5, window_bounds = array<i64: 1, 16, 32>}, {transform_indices = @transform_6, window_bounds = array<i64: 1, 16, 32>}]} {
    %c0_i32 = arith.constant 0 : i32
    %0 = arith.cmpi eq, %arg3, %c0_i32 : i32
    %1 = arith.extui %0 : i1 to i32
    %c0_i32_0 = arith.constant 0 : i32
    %2 = arith.cmpi ne, %1, %c0_i32_0 : i32
    scf.if %2 {
      %cst_11 = arith.constant 0.000000e+00 : f32
      %15 = vector.broadcast %cst_11 : f32 to vector<16x32xf32>
      %c0_12 = arith.constant 0 : index
      %c0_13 = arith.constant 0 : index
      %16 = vector.load %arg11[%c0_12, %c0_13] : memref<16x32xf32, #tpu.memory_space<vmem>>, vector<16x32xf32>
      tpu.vector_store %arg11[%c0_12, %c0_13], %15 {strides = array<i32>} : memref<16x32xf32, #tpu.memory_space<vmem>>, vector<16x32xf32>,
    } else {
    }
    %c0 = arith.constant 0 : index
    %c0_1 = arith.constant 0 : index
    %3 = vector.load %arg11[%c0, %c0_1] : memref<16x32xf32, #tpu.memory_space<vmem>>, vector<16x32xf32>
    %c0_2 = arith.constant 0 : index
    %c0_3 = arith.constant 0 : index
    %c0_4 = arith.constant 0 : index
    %4 = vector.load %arg4[%c0_2, %c0_3, %c0_4] : memref<1x16x128xf32, #tpu.memory_space<vmem>>, vector<1x16x128xf32>
    %5 = vector.shape_cast %4 : vector<1x16x128xf32> to vector<16x128xf32>
    %6 = arith.truncf %5 : vector<16x128xf32> to vector<16x128xbf16>
    %c0_5 = arith.constant 0 : index
    %c0_6 = arith.constant 0 : index
    %7 = vector.load %arg5[%c0_5, %c0_6] : memref<128x32xf32, #tpu.memory_space<vmem>>, vector<128x32xf32>
    %8 = arith.truncf %7 : vector<128x32xf32> to vector<128x32xbf16>
    %cst = arith.constant dense<0.000000e+00> : vector<16x32xf32>
    %9 = tpu.matmul %6, %8, %cst {dimension_numbers = #tpu.dot_dimension_numbers<[1], [0], [0], [1], [0, 0, 1, 1], [], []>} : vector<16x128xbf16>, vector<128x32xbf16>, vector<16x32xf32> -> vector<16x32xf32>
    %10 = arith.addf %3, %9 : vector<16x32xf32>
    %c0_7 = arith.constant 0 : index
    %c0_8 = arith.constant 0 : index
    %11 = vector.load %arg11[%c0_7, %c0_8] : memref<16x32xf32, #tpu.memory_space<vmem>>, vector<16x32xf32>
    tpu.vector_store %arg11[%c0_7, %c0_8], %10 {strides = array<i32>} : memref<16x32xf32, #tpu.memory_space<vmem>>, vector<16x32xf32>,
    %c0_i32_9 = arith.constant 0 : i32
    %12 = arith.cmpi eq, %arg3, %c0_i32_9 : i32
    %13 = arith.extui %12 : i1 to i32
    %c0_i32_10 = arith.constant 0 : i32
    %14 = arith.cmpi ne, %13, %c0_i32_10 : i32
    scf.if %14 {
      %c0_11 = arith.constant 0 : index
      %c0_12 = arith.constant 0 : index
      %15 = vector.load %arg11[%c0_11, %c0_12] : memref<16x32xf32, #tpu.memory_space<vmem>>, vector<16x32xf32>
      %c0_13 = arith.constant 0 : index
      %c0_14 = arith.constant 0 : index
      %16 = vector.load %arg6[%c0_13, %c0_14] : memref<1x32xf32, #tpu.memory_space<vmem>>, vector<1x32xf32>
      %17 = vector.broadcast %16 : vector<1x32xf32> to vector<16x32xf32>
      %18 = arith.addf %15, %17 : vector<16x32xf32>
      %c0_15 = arith.constant 0 : index
      %c0_16 = arith.constant 0 : index
      %c0_17 = arith.constant 0 : index
      %19 = vector.load %arg7[%c0_15, %c0_16, %c0_17] : memref<1x1x32xf32, #tpu.memory_space<vmem>>, vector<1x1x32xf32>
      %20 = vector.shape_cast %19 : vector<1x1x32xf32> to vector<1x32xf32>
      %cst_18 = arith.constant 1.000000e+00 : f32
      %21 = vector.broadcast %cst_18 : f32 to vector<1x32xf32>
      %22 = arith.addf %21, %20 : vector<1x32xf32>
      %23 = vector.broadcast %22 : vector<1x32xf32> to vector<16x32xf32>
      %24 = arith.mulf %18, %23 : vector<16x32xf32>
      %c0_19 = arith.constant 0 : index
      %c0_20 = arith.constant 0 : index
      %c0_21 = arith.constant 0 : index
      %25 = vector.load %arg8[%c0_19, %c0_20, %c0_21] : memref<1x1x32xf32, #tpu.memory_space<vmem>>, vector<1x1x32xf32>
      %26 = vector.shape_cast %25 : vector<1x1x32xf32> to vector<1x32xf32>
      %27 = vector.broadcast %26 : vector<1x32xf32> to vector<16x32xf32>
      %28 = arith.addf %24, %27 : vector<16x32xf32>
      %c0_22 = arith.constant 0 : index
      %c0_23 = arith.constant 0 : index
      %c0_24 = arith.constant 0 : index
      %29 = vector.load %arg9[%c0_22, %c0_23, %c0_24] : memref<1x16x32xf32, #tpu.memory_space<vmem>>, vector<1x16x32xf32>
      %30 = vector.shape_cast %29 : vector<1x16x32xf32> to vector<16x32xf32>
      %31 = arith.addf %28, %30 : vector<16x32xf32>
      %c0_25 = arith.constant 0 : index
      %c0_26 = arith.constant 0 : index
      %c0_27 = arith.constant 0 : index
      %32 = vector.load %arg10[%c0_25, %c0_26, %c0_27] : memref<1x16x32xf32, #tpu.memory_space<vmem>>, vector<1x16x32xf32>
      %33 = vector.shape_cast %32 : vector<1x16x32xf32> to vector<16x32xf32>
      %34 = vector.shape_cast %31 : vector<16x32xf32> to vector<1x16x32xf32>
      tpu.vector_store %arg10[%c0_25, %c0_26, %c0_27], %34 {strides = array<i32>} : memref<1x16x32xf32, #tpu.memory_space<vmem>>, vector<1x16x32xf32>,
    } else {
    }
    return
  }
  func.func @transform_0(%arg0: i32, %arg1: i32, %arg2: i32, %arg3: i32) -> (i32, i32, i32) {
    %c0_i32 = arith.constant 0 : i32
    return %arg0, %arg1, %arg3 : i32, i32, i32
  }
  func.func @transform_1(%arg0: i32, %arg1: i32, %arg2: i32, %arg3: i32) -> (i32, i32) {
    %c0_i32 = arith.constant 0 : i32
    return %arg3, %arg2 : i32, i32
  }
  func.func @transform_2(%arg0: i32, %arg1: i32, %arg2: i32, %arg3: i32) -> (i32, i32) {
    %c0_i32 = arith.constant 0 : i32
    %c0_i32_0 = arith.constant 0 : i32
    return %c0_i32, %arg2 : i32, i32
  }
  func.func @transform_3(%arg0: i32, %arg1: i32, %arg2: i32, %arg3: i32) -> (i32, i32, i32) {
    %c0_i32 = arith.constant 0 : i32
    %c0_i32_0 = arith.constant 0 : i32
    return %arg0, %c0_i32, %arg2 : i32, i32, i32
  }
  func.func @transform_4(%arg0: i32, %arg1: i32, %arg2: i32, %arg3: i32) -> (i32, i32, i32) {
    %c0_i32 = arith.constant 0 : i32
    %c0_i32_0 = arith.constant 0 : i32
    return %arg0, %c0_i32, %arg2 : i32, i32, i32
  }
  func.func @transform_5(%arg0: i32, %arg1: i32, %arg2: i32, %arg3: i32) -> (i32, i32, i32) {
    %c0_i32 = arith.constant 0 : i32
    return %arg0, %arg1, %arg2 : i32, i32, i32
  }
  func.func @transform_6(%arg0: i32, %arg1: i32, %arg2: i32, %arg3: i32) -> (i32, i32, i32) {
    %c0_i32 = arith.constant 0 : i32
    return %arg0, %arg1, %arg2 : i32, i32, i32
  }
}

module attributes {stable_mosaic.version = 11 : i64} {
  func.func @_linear_mod_add_kernel(%arg0: i32, %arg1: i32, %arg2: i32, %arg3: i32, %arg4: memref<1x8x32xf32, #tpu.memory_space<vmem>>, %arg5: memref<32x32xf32, #tpu.memory_space<vmem>>, %arg6: memref<1x32xf32, #tpu.memory_space<vmem>>, %arg7: memref<1x1x32xf32, #tpu.memory_space<vmem>>, %arg8: memref<1x1x32xf32, #tpu.memory_space<vmem>>, %arg9: memref<1x8x32xf32, #tpu.memory_space<vmem>>, %arg10: memref<1x8x32xf32, #tpu.memory_space<vmem>>, %arg11: memref<8x32xf32, #tpu.memory_space<vmem>>) attributes {dimension_semantics = [#tpu.dimension_semantics<parallel>, #tpu.dimension_semantics<parallel>, #tpu.dimension_semantics<parallel>, #tpu.dimension_semantics<arbitrary>], iteration_bounds = array<i64: 2, 1, 1, 1>, scalar_prefetch = 0 : i64, scratch_operands = 1 : i64, tpu.core_type = #tpu.core_type<tc>, window_params = [{transform_indices = @transform_0, window_bounds = array<i64: 1, 8, 32>}, {transform_indices = @transform_1, window_bounds = array<i64: 32, 32>}, {transform_indices = @transform_2, window_bounds = array<i64: 1, 32>}, {transform_indices = @transform_3, window_bounds = array<i64: 1, 1, 32>}, {transform_indices = @transform_4, window_bounds = array<i64: 1, 1, 32>}, {transform_indices = @transform_5, window_bounds = array<i64: 1, 8, 32>}, {transform_indices = @transform_6, window_bounds = array<i64: 1, 8, 32>}]} {
    %c0_i32 = arith.constant 0 : i32
    %0 = arith.cmpi eq, %arg3, %c0_i32 : i32
    %1 = arith.extui %0 : i1 to i32
    %c0_i32_0 = arith.constant 0 : i32
    %2 = arith.cmpi ne, %1, %c0_i32_0 : i32
    scf.if %2 {
      %cst_11 = arith.constant 0.000000e+00 : f32
      %15 = vector.broadcast %cst_11 : f32 to vector<8x32xf32>
      %c0_12 = arith.constant 0 : index
      %c0_13 = arith.constant 0 : index
      %16 = vector.load %arg11[%c0_12, %c0_13] : memref<8x32xf32, #tpu.memory_space<vmem>>, vector<8x32xf32>
      tpu.vector_store %arg11[%c0_12, %c0_13], %15 {strides = array<i32>} : memref<8x32xf32, #tpu.memory_space<vmem>>, vector<8x32xf32>,
    } else {
    }
    %c0 = arith.constant 0 : index
    %c0_1 = arith.constant 0 : index
    %3 = vector.load %arg11[%c0, %c0_1] : memref<8x32xf32, #tpu.memory_space<vmem>>, vector<8x32xf32>
    %c0_2 = arith.constant 0 : index
    %c0_3 = arith.constant 0 : index
    %c0_4 = arith.constant 0 : index
    %4 = vector.load %arg4[%c0_2, %c0_3, %c0_4] : memref<1x8x32xf32, #tpu.memory_space<vmem>>, vector<1x8x32xf32>
    %5 = vector.shape_cast %4 : vector<1x8x32xf32> to vector<8x32xf32>
    %6 = arith.truncf %5 : vector<8x32xf32> to vector<8x32xbf16>
    %c0_5 = arith.constant 0 : index
    %c0_6 = arith.constant 0 : index
    %7 = vector.load %arg5[%c0_5, %c0_6] : memref<32x32xf32, #tpu.memory_space<vmem>>, vector<32x32xf32>
    %8 = arith.truncf %7 : vector<32x32xf32> to vector<32x32xbf16>
    %cst = arith.constant dense<0.000000e+00> : vector<8x32xf32>
    %9 = tpu.matmul %6, %8, %cst {dimension_numbers = #tpu.dot_dimension_numbers<[1], [0], [0], [1], [0, 0, 1, 1], [], []>} : vector<8x32xbf16>, vector<32x32xbf16>, vector<8x32xf32> -> vector<8x32xf32>
    %10 = arith.addf %3, %9 : vector<8x32xf32>
    %c0_7 = arith.constant 0 : index
    %c0_8 = arith.constant 0 : index
    %11 = vector.load %arg11[%c0_7, %c0_8] : memref<8x32xf32, #tpu.memory_space<vmem>>, vector<8x32xf32>
    tpu.vector_store %arg11[%c0_7, %c0_8], %10 {strides = array<i32>} : memref<8x32xf32, #tpu.memory_space<vmem>>, vector<8x32xf32>,
    %c0_i32_9 = arith.constant 0 : i32
    %12 = arith.cmpi eq, %arg3, %c0_i32_9 : i32
    %13 = arith.extui %12 : i1 to i32
    %c0_i32_10 = arith.constant 0 : i32
    %14 = arith.cmpi ne, %13, %c0_i32_10 : i32
    scf.if %14 {
      %c0_11 = arith.constant 0 : index
      %c0_12 = arith.constant 0 : index
      %15 = vector.load %arg11[%c0_11, %c0_12] : memref<8x32xf32, #tpu.memory_space<vmem>>, vector<8x32xf32>
      %c0_13 = arith.constant 0 : index
      %c0_14 = arith.constant 0 : index
      %16 = vector.load %arg6[%c0_13, %c0_14] : memref<1x32xf32, #tpu.memory_space<vmem>>, vector<1x32xf32>
      %17 = vector.broadcast %16 : vector<1x32xf32> to vector<8x32xf32>
      %18 = arith.addf %15, %17 : vector<8x32xf32>
      %c0_15 = arith.constant 0 : index
      %c0_16 = arith.constant 0 : index
      %c0_17 = arith.constant 0 : index
      %19 = vector.load %arg7[%c0_15, %c0_16, %c0_17] : memref<1x1x32xf32, #tpu.memory_space<vmem>>, vector<1x1x32xf32>
      %20 = vector.shape_cast %19 : vector<1x1x32xf32> to vector<1x32xf32>
      %cst_18 = arith.constant 1.000000e+00 : f32
      %21 = vector.broadcast %cst_18 : f32 to vector<1x32xf32>
      %22 = arith.addf %21, %20 : vector<1x32xf32>
      %23 = vector.broadcast %22 : vector<1x32xf32> to vector<8x32xf32>
      %24 = arith.mulf %18, %23 : vector<8x32xf32>
      %c0_19 = arith.constant 0 : index
      %c0_20 = arith.constant 0 : index
      %c0_21 = arith.constant 0 : index
      %25 = vector.load %arg8[%c0_19, %c0_20, %c0_21] : memref<1x1x32xf32, #tpu.memory_space<vmem>>, vector<1x1x32xf32>
      %26 = vector.shape_cast %25 : vector<1x1x32xf32> to vector<1x32xf32>
      %27 = vector.broadcast %26 : vector<1x32xf32> to vector<8x32xf32>
      %28 = arith.addf %24, %27 : vector<8x32xf32>
      %c0_22 = arith.constant 0 : index
      %c0_23 = arith.constant 0 : index
      %c0_24 = arith.constant 0 : index
      %29 = vector.load %arg9[%c0_22, %c0_23, %c0_24] : memref<1x8x32xf32, #tpu.memory_space<vmem>>, vector<1x8x32xf32>
      %30 = vector.shape_cast %29 : vector<1x8x32xf32> to vector<8x32xf32>
      %31 = arith.addf %28, %30 : vector<8x32xf32>
      %c0_25 = arith.constant 0 : index
      %c0_26 = arith.constant 0 : index
      %c0_27 = arith.constant 0 : index
      %32 = vector.load %arg10[%c0_25, %c0_26, %c0_27] : memref<1x8x32xf32, #tpu.memory_space<vmem>>, vector<1x8x32xf32>
      %33 = vector.shape_cast %32 : vector<1x8x32xf32> to vector<8x32xf32>
      %34 = vector.shape_cast %31 : vector<8x32xf32> to vector<1x8x32xf32>
      tpu.vector_store %arg10[%c0_25, %c0_26, %c0_27], %34 {strides = array<i32>} : memref<1x8x32xf32, #tpu.memory_space<vmem>>, vector<1x8x32xf32>,
    } else {
    }
    return
  }
  func.func @transform_0(%arg0: i32, %arg1: i32, %arg2: i32, %arg3: i32) -> (i32, i32, i32) {
    %c0_i32 = arith.constant 0 : i32
    return %arg0, %arg1, %arg3 : i32, i32, i32
  }
  func.func @transform_1(%arg0: i32, %arg1: i32, %arg2: i32, %arg3: i32) -> (i32, i32) {
    %c0_i32 = arith.constant 0 : i32
    return %arg3, %arg2 : i32, i32
  }
  func.func @transform_2(%arg0: i32, %arg1: i32, %arg2: i32, %arg3: i32) -> (i32, i32) {
    %c0_i32 = arith.constant 0 : i32
    %c0_i32_0 = arith.constant 0 : i32
    return %c0_i32, %arg2 : i32, i32
  }
  func.func @transform_3(%arg0: i32, %arg1: i32, %arg2: i32, %arg3: i32) -> (i32, i32, i32) {
    %c0_i32 = arith.constant 0 : i32
    %c0_i32_0 = arith.constant 0 : i32
    return %arg0, %c0_i32, %arg2 : i32, i32, i32
  }
  func.func @transform_4(%arg0: i32, %arg1: i32, %arg2: i32, %arg3: i32) -> (i32, i32, i32) {
    %c0_i32 = arith.constant 0 : i32
    %c0_i32_0 = arith.constant 0 : i32
    return %arg0, %c0_i32, %arg2 : i32, i32, i32
  }
  func.func @transform_5(%arg0: i32, %arg1: i32, %arg2: i32, %arg3: i32) -> (i32, i32, i32) {
    %c0_i32 = arith.constant 0 : i32
    return %arg0, %arg1, %arg2 : i32, i32, i32
  }
  func.func @transform_6(%arg0: i32, %arg1: i32, %arg2: i32, %arg3: i32) -> (i32, i32, i32) {
    %c0_i32 = arith.constant 0 : i32
    return %arg0, %arg1, %arg2 : i32, i32, i32
  }
}

module attributes {stable_mosaic.version = 11 : i64} {
  func.func @_ln_mod_linear_kernel(%arg0: i32, %arg1: i32, %arg2: i32, %arg3: memref<1x8x32xf32, #tpu.memory_space<vmem>>, %arg4: memref<1x1x32xf32, #tpu.memory_space<vmem>>, %arg5: memref<1x1x32xf32, #tpu.memory_space<vmem>>, %arg6: memref<32x128xf32, #tpu.memory_space<vmem>>, %arg7: memref<1x128xf32, #tpu.memory_space<vmem>>, %arg8: memref<1x8x128xf32, #tpu.memory_space<vmem>>) attributes {dimension_semantics = [#tpu.dimension_semantics<parallel>, #tpu.dimension_semantics<parallel>, #tpu.dimension_semantics<parallel>], iteration_bounds = array<i64: 2, 1, 1>, scalar_prefetch = 0 : i64, scratch_operands = 0 : i64, tpu.core_type = #tpu.core_type<tc>, window_params = [{transform_indices = @transform_0, window_bounds = array<i64: 1, 8, 32>}, {transform_indices = @transform_1, window_bounds = array<i64: 1, 1, 32>}, {transform_indices = @transform_2, window_bounds = array<i64: 1, 1, 32>}, {transform_indices = @transform_3, window_bounds = array<i64: 32, 128>}, {transform_indices = @transform_4, window_bounds = array<i64: 1, 128>}, {transform_indices = @transform_5, window_bounds = array<i64: 1, 8, 128>}]} {
    %c0 = arith.constant 0 : index
    %c0_0 = arith.constant 0 : index
    %c0_1 = arith.constant 0 : index
    %0 = vector.load %arg3[%c0, %c0_0, %c0_1] : memref<1x8x32xf32, #tpu.memory_space<vmem>>, vector<1x8x32xf32>
    %1 = vector.shape_cast %0 : vector<1x8x32xf32> to vector<8x32xf32>
    %cst = arith.constant dense<0.000000e+00> : vector<8xf32>
    %2 = vector.multi_reduction <add>, %1, %cst [1] : vector<8x32xf32> to vector<8xf32>
    %3 = vector.shape_cast %2 : vector<8xf32> to vector<8x1xf32>
    %cst_2 = arith.constant 3.200000e+01 : f32
    %4 = vector.broadcast %cst_2 : f32 to vector<8x1xf32>
    %5 = arith.divf %3, %4 : vector<8x1xf32>
    %6 = vector.broadcast %5 : vector<8x1xf32> to vector<8x32xf32>
    %7 = arith.subf %1, %6 : vector<8x32xf32>
    %8 = arith.mulf %7, %7 : vector<8x32xf32>
    %cst_3 = arith.constant dense<0.000000e+00> : vector<8xf32>
    %9 = vector.multi_reduction <add>, %8, %cst_3 [1] : vector<8x32xf32> to vector<8xf32>
    %10 = vector.shape_cast %9 : vector<8xf32> to vector<8x1xf32>
    %cst_4 = arith.constant 3.200000e+01 : f32
    %11 = vector.broadcast %cst_4 : f32 to vector<8x1xf32>
    %12 = arith.divf %10, %11 : vector<8x1xf32>
    %cst_5 = arith.constant 9.99999974E-6 : f32
    %13 = vector.broadcast %cst_5 : f32 to vector<8x1xf32>
    %14 = arith.addf %12, %13 : vector<8x1xf32>
    %15 = math.rsqrt %14 : vector<8x1xf32>
    %16 = vector.broadcast %15 : vector<8x1xf32> to vector<8x32xf32>
    %17 = arith.mulf %7, %16 : vector<8x32xf32>
    %c0_6 = arith.constant 0 : index
    %c0_7 = arith.constant 0 : index
    %c0_8 = arith.constant 0 : index
    %18 = vector.load %arg4[%c0_6, %c0_7, %c0_8] : memref<1x1x32xf32, #tpu.memory_space<vmem>>, vector<1x1x32xf32>
    %19 = vector.shape_cast %18 : vector<1x1x32xf32> to vector<1x32xf32>
    %cst_9 = arith.constant 1.000000e+00 : f32
    %20 = vector.broadcast %cst_9 : f32 to vector<1x32xf32>
    %21 = arith.addf %20, %19 : vector<1x32xf32>
    %22 = vector.broadcast %21 : vector<1x32xf32> to vector<8x32xf32>
    %23 = arith.mulf %17, %22 : vector<8x32xf32>
    %c0_10 = arith.constant 0 : index
    %c0_11 = arith.constant 0 : index
    %c0_12 = arith.constant 0 : index
    %24 = vector.load %arg5[%c0_10, %c0_11, %c0_12] : memref<1x1x32xf32, #tpu.memory_space<vmem>>, vector<1x1x32xf32>
    %25 = vector.shape_cast %24 : vector<1x1x32xf32> to vector<1x32xf32>
    %26 = vector.broadcast %25 : vector<1x32xf32> to vector<8x32xf32>
    %27 = arith.addf %23, %26 : vector<8x32xf32>
    %28 = arith.truncf %27 : vector<8x32xf32> to vector<8x32xbf16>
    %c0_13 = arith.constant 0 : index
    %c0_14 = arith.constant 0 : index
    %29 = vector.load %arg6[%c0_13, %c0_14] : memref<32x128xf32, #tpu.memory_space<vmem>>, vector<32x128xf32>
    %30 = arith.truncf %29 : vector<32x128xf32> to vector<32x128xbf16>
    %cst_15 = arith.constant dense<0.000000e+00> : vector<8x128xf32>
    %31 = tpu.matmul %28, %30, %cst_15 {dimension_numbers = #tpu.dot_dimension_numbers<[1], [0], [0], [1], [0, 0, 1, 1], [], []>} : vector<8x32xbf16>, vector<32x128xbf16>, vector<8x128xf32> -> vector<8x128xf32>
    %c0_16 = arith.constant 0 : index
    %c0_17 = arith.constant 0 : index
    %32 = vector.load %arg7[%c0_16, %c0_17] : memref<1x128xf32, #tpu.memory_space<vmem>>, vector<1x128xf32>
    %33 = vector.broadcast %32 : vector<1x128xf32> to vector<8x128xf32>
    %34 = arith.addf %31, %33 : vector<8x128xf32>
    %35 = arith.mulf %34, %34 : vector<8x128xf32>
    %36 = arith.mulf %34, %35 : vector<8x128xf32>
    %cst_18 = arith.constant 4.471500e-02 : f32
    %37 = vector.broadcast %cst_18 : f32 to vector<8x128xf32>
    %38 = arith.mulf %37, %36 : vector<8x128xf32>
    %39 = arith.addf %34, %38 : vector<8x128xf32>
    %cst_19 = arith.constant 0.797884583 : f32
    %40 = vector.broadcast %cst_19 : f32 to vector<8x128xf32>
    %41 = arith.mulf %40, %39 : vector<8x128xf32>
    %42 = math.tanh %41 : vector<8x128xf32>
    %cst_20 = arith.constant 1.000000e+00 : f32
    %43 = vector.broadcast %cst_20 : f32 to vector<8x128xf32>
    %44 = arith.addf %43, %42 : vector<8x128xf32>
    %cst_21 = arith.constant 5.000000e-01 : f32
    %45 = vector.broadcast %cst_21 : f32 to vector<8x128xf32>
    %46 = arith.mulf %45, %44 : vector<8x128xf32>
    %47 = arith.mulf %34, %46 : vector<8x128xf32>
    %c0_22 = arith.constant 0 : index
    %c0_23 = arith.constant 0 : index
    %c0_24 = arith.constant 0 : index
    %48 = vector.load %arg8[%c0_22, %c0_23, %c0_24] : memref<1x8x128xf32, #tpu.memory_space<vmem>>, vector<1x8x128xf32>
    %49 = vector.shape_cast %48 : vector<1x8x128xf32> to vector<8x128xf32>
    %50 = vector.shape_cast %47 : vector<8x128xf32> to vector<1x8x128xf32>
    tpu.vector_store %arg8[%c0_22, %c0_23, %c0_24], %50 {strides = array<i32>} : memref<1x8x128xf32, #tpu.memory_space<vmem>>, vector<1x8x128xf32>,
    return
  }
  func.func @transform_0(%arg0: i32, %arg1: i32, %arg2: i32) -> (i32, i32, i32) {
    %c0_i32 = arith.constant 0 : i32
    %c0_i32_0 = arith.constant 0 : i32
    return %arg0, %arg1, %c0_i32 : i32, i32, i32
  }
  func.func @transform_1(%arg0: i32, %arg1: i32, %arg2: i32) -> (i32, i32, i32) {
    %c0_i32 = arith.constant 0 : i32
    %c0_i32_0 = arith.constant 0 : i32
    %c0_i32_1 = arith.constant 0 : i32
    return %arg0, %c0_i32, %c0_i32_0 : i32, i32, i32
  }
  func.func @transform_2(%arg0: i32, %arg1: i32, %arg2: i32) -> (i32, i32, i32) {
    %c0_i32 = arith.constant 0 : i32
    %c0_i32_0 = arith.constant 0 : i32
    %c0_i32_1 = arith.constant 0 : i32
    return %arg0, %c0_i32, %c0_i32_0 : i32, i32, i32
  }
  func.func @transform_3(%arg0: i32, %arg1: i32, %arg2: i32) -> (i32, i32) {
    %c0_i32 = arith.constant 0 : i32
    %c0_i32_0 = arith.constant 0 : i32
    return %c0_i32, %arg2 : i32, i32
  }
  func.func @transform_4(%arg0: i32, %arg1: i32, %arg2: i32) -> (i32, i32) {
    %c0_i32 = arith.constant 0 : i32
    %c0_i32_0 = arith.constant 0 : i32
    return %c0_i32, %arg2 : i32, i32
  }
  func.func @transform_5(%arg0: i32, %arg1: i32, %arg2: i32) -> (i32, i32, i32) {
    %c0_i32 = arith.constant 0 : i32
    return %arg0, %arg1, %arg2 : i32, i32, i32
  }
}

module attributes {stable_mosaic.version = 11 : i64} {
  func.func @_linear_mod_add_kernel(%arg0: i32, %arg1: i32, %arg2: i32, %arg3: i32, %arg4: memref<1x8x128xf32, #tpu.memory_space<vmem>>, %arg5: memref<128x32xf32, #tpu.memory_space<vmem>>, %arg6: memref<1x32xf32, #tpu.memory_space<vmem>>, %arg7: memref<1x1x32xf32, #tpu.memory_space<vmem>>, %arg8: memref<1x1x32xf32, #tpu.memory_space<vmem>>, %arg9: memref<1x8x32xf32, #tpu.memory_space<vmem>>, %arg10: memref<1x8x32xf32, #tpu.memory_space<vmem>>, %arg11: memref<8x32xf32, #tpu.memory_space<vmem>>) attributes {dimension_semantics = [#tpu.dimension_semantics<parallel>, #tpu.dimension_semantics<parallel>, #tpu.dimension_semantics<parallel>, #tpu.dimension_semantics<arbitrary>], iteration_bounds = array<i64: 2, 1, 1, 1>, scalar_prefetch = 0 : i64, scratch_operands = 1 : i64, tpu.core_type = #tpu.core_type<tc>, window_params = [{transform_indices = @transform_0, window_bounds = array<i64: 1, 8, 128>}, {transform_indices = @transform_1, window_bounds = array<i64: 128, 32>}, {transform_indices = @transform_2, window_bounds = array<i64: 1, 32>}, {transform_indices = @transform_3, window_bounds = array<i64: 1, 1, 32>}, {transform_indices = @transform_4, window_bounds = array<i64: 1, 1, 32>}, {transform_indices = @transform_5, window_bounds = array<i64: 1, 8, 32>}, {transform_indices = @transform_6, window_bounds = array<i64: 1, 8, 32>}]} {
    %c0_i32 = arith.constant 0 : i32
    %0 = arith.cmpi eq, %arg3, %c0_i32 : i32
    %1 = arith.extui %0 : i1 to i32
    %c0_i32_0 = arith.constant 0 : i32
    %2 = arith.cmpi ne, %1, %c0_i32_0 : i32
    scf.if %2 {
      %cst_11 = arith.constant 0.000000e+00 : f32
      %15 = vector.broadcast %cst_11 : f32 to vector<8x32xf32>
      %c0_12 = arith.constant 0 : index
      %c0_13 = arith.constant 0 : index
      %16 = vector.load %arg11[%c0_12, %c0_13] : memref<8x32xf32, #tpu.memory_space<vmem>>, vector<8x32xf32>
      tpu.vector_store %arg11[%c0_12, %c0_13], %15 {strides = array<i32>} : memref<8x32xf32, #tpu.memory_space<vmem>>, vector<8x32xf32>,
    } else {
    }
    %c0 = arith.constant 0 : index
    %c0_1 = arith.constant 0 : index
    %3 = vector.load %arg11[%c0, %c0_1] : memref<8x32xf32, #tpu.memory_space<vmem>>, vector<8x32xf32>
    %c0_2 = arith.constant 0 : index
    %c0_3 = arith.constant 0 : index
    %c0_4 = arith.constant 0 : index
    %4 = vector.load %arg4[%c0_2, %c0_3, %c0_4] : memref<1x8x128xf32, #tpu.memory_space<vmem>>, vector<1x8x128xf32>
    %5 = vector.shape_cast %4 : vector<1x8x128xf32> to vector<8x128xf32>
    %6 = arith.truncf %5 : vector<8x128xf32> to vector<8x128xbf16>
    %c0_5 = arith.constant 0 : index
    %c0_6 = arith.constant 0 : index
    %7 = vector.load %arg5[%c0_5, %c0_6] : memref<128x32xf32, #tpu.memory_space<vmem>>, vector<128x32xf32>
    %8 = arith.truncf %7 : vector<128x32xf32> to vector<128x32xbf16>
    %cst = arith.constant dense<0.000000e+00> : vector<8x32xf32>
    %9 = tpu.matmul %6, %8, %cst {dimension_numbers = #tpu.dot_dimension_numbers<[1], [0], [0], [1], [0, 0, 1, 1], [], []>} : vector<8x128xbf16>, vector<128x32xbf16>, vector<8x32xf32> -> vector<8x32xf32>
    %10 = arith.addf %3, %9 : vector<8x32xf32>
    %c0_7 = arith.constant 0 : index
    %c0_8 = arith.constant 0 : index
    %11 = vector.load %arg11[%c0_7, %c0_8] : memref<8x32xf32, #tpu.memory_space<vmem>>, vector<8x32xf32>
    tpu.vector_store %arg11[%c0_7, %c0_8], %10 {strides = array<i32>} : memref<8x32xf32, #tpu.memory_space<vmem>>, vector<8x32xf32>,
    %c0_i32_9 = arith.constant 0 : i32
    %12 = arith.cmpi eq, %arg3, %c0_i32_9 : i32
    %13 = arith.extui %12 : i1 to i32
    %c0_i32_10 = arith.constant 0 : i32
    %14 = arith.cmpi ne, %13, %c0_i32_10 : i32
    scf.if %14 {
      %c0_11 = arith.constant 0 : index
      %c0_12 = arith.constant 0 : index
      %15 = vector.load %arg11[%c0_11, %c0_12] : memref<8x32xf32, #tpu.memory_space<vmem>>, vector<8x32xf32>
      %c0_13 = arith.constant 0 : index
      %c0_14 = arith.constant 0 : index
      %16 = vector.load %arg6[%c0_13, %c0_14] : memref<1x32xf32, #tpu.memory_space<vmem>>, vector<1x32xf32>
      %17 = vector.broadcast %16 : vector<1x32xf32> to vector<8x32xf32>
      %18 = arith.addf %15, %17 : vector<8x32xf32>
      %c0_15 = arith.constant 0 : index
      %c0_16 = arith.constant 0 : index
      %c0_17 = arith.constant 0 : index
      %19 = vector.load %arg7[%c0_15, %c0_16, %c0_17] : memref<1x1x32xf32, #tpu.memory_space<vmem>>, vector<1x1x32xf32>
      %20 = vector.shape_cast %19 : vector<1x1x32xf32> to vector<1x32xf32>
      %cst_18 = arith.constant 1.000000e+00 : f32
      %21 = vector.broadcast %cst_18 : f32 to vector<1x32xf32>
      %22 = arith.addf %21, %20 : vector<1x32xf32>
      %23 = vector.broadcast %22 : vector<1x32xf32> to vector<8x32xf32>
      %24 = arith.mulf %18, %23 : vector<8x32xf32>
      %c0_19 = arith.constant 0 : index
      %c0_20 = arith.constant 0 : index
      %c0_21 = arith.constant 0 : index
      %25 = vector.load %arg8[%c0_19, %c0_20, %c0_21] : memref<1x1x32xf32, #tpu.memory_space<vmem>>, vector<1x1x32xf32>
      %26 = vector.shape_cast %25 : vector<1x1x32xf32> to vector<1x32xf32>
      %27 = vector.broadcast %26 : vector<1x32xf32> to vector<8x32xf32>
      %28 = arith.addf %24, %27 : vector<8x32xf32>
      %c0_22 = arith.constant 0 : index
      %c0_23 = arith.constant 0 : index
      %c0_24 = arith.constant 0 : index
      %29 = vector.load %arg9[%c0_22, %c0_23, %c0_24] : memref<1x8x32xf32, #tpu.memory_space<vmem>>, vector<1x8x32xf32>
      %30 = vector.shape_cast %29 : vector<1x8x32xf32> to vector<8x32xf32>
      %31 = arith.addf %28, %30 : vector<8x32xf32>
      %c0_25 = arith.constant 0 : index
      %c0_26 = arith.constant 0 : index
      %c0_27 = arith.constant 0 : index
      %32 = vector.load %arg10[%c0_25, %c0_26, %c0_27] : memref<1x8x32xf32, #tpu.memory_space<vmem>>, vector<1x8x32xf32>
      %33 = vector.shape_cast %32 : vector<1x8x32xf32> to vector<8x32xf32>
      %34 = vector.shape_cast %31 : vector<8x32xf32> to vector<1x8x32xf32>
      tpu.vector_store %arg10[%c0_25, %c0_26, %c0_27], %34 {strides = array<i32>} : memref<1x8x32xf32, #tpu.memory_space<vmem>>, vector<1x8x32xf32>,
    } else {
    }
    return
  }
  func.func @transform_0(%arg0: i32, %arg1: i32, %arg2: i32, %arg3: i32) -> (i32, i32, i32) {
    %c0_i32 = arith.constant 0 : i32
    return %arg0, %arg1, %arg3 : i32, i32, i32
  }
  func.func @transform_1(%arg0: i32, %arg1: i32, %arg2: i32, %arg3: i32) -> (i32, i32) {
    %c0_i32 = arith.constant 0 : i32
    return %arg3, %arg2 : i32, i32
  }
  func.func @transform_2(%arg0: i32, %arg1: i32, %arg2: i32, %arg3: i32) -> (i32, i32) {
    %c0_i32 = arith.constant 0 : i32
    %c0_i32_0 = arith.constant 0 : i32
    return %c0_i32, %arg2 : i32, i32
  }
  func.func @transform_3(%arg0: i32, %arg1: i32, %arg2: i32, %arg3: i32) -> (i32, i32, i32) {
    %c0_i32 = arith.constant 0 : i32
    %c0_i32_0 = arith.constant 0 : i32
    return %arg0, %c0_i32, %arg2 : i32, i32, i32
  }
  func.func @transform_4(%arg0: i32, %arg1: i32, %arg2: i32, %arg3: i32) -> (i32, i32, i32) {
    %c0_i32 = arith.constant 0 : i32
    %c0_i32_0 = arith.constant 0 : i32
    return %arg0, %c0_i32, %arg2 : i32, i32, i32
  }
  func.func @transform_5(%arg0: i32, %arg1: i32, %arg2: i32, %arg3: i32) -> (i32, i32, i32) {
    %c0_i32 = arith.constant 0 : i32
    return %arg0, %arg1, %arg2 : i32, i32, i32
  }
  func.func @transform_6(%arg0: i32, %arg1: i32, %arg2: i32, %arg3: i32) -> (i32, i32, i32) {
    %c0_i32 = arith.constant 0 : i32
    return %arg0, %arg1, %arg2 : i32, i32, i32
  }
}

module attributes {stable_mosaic.version = 11 : i64} {
  func.func @_ln_mod_kernel(%arg0: i32, %arg1: i32, %arg2: memref<1x16x32xf32, #tpu.memory_space<vmem>>, %arg3: memref<1x1x32xf32, #tpu.memory_space<vmem>>, %arg4: memref<1x1x32xf32, #tpu.memory_space<vmem>>, %arg5: memref<1x16x32xf32, #tpu.memory_space<vmem>>) attributes {dimension_semantics = [#tpu.dimension_semantics<parallel>, #tpu.dimension_semantics<parallel>], iteration_bounds = array<i64: 2, 1>, scalar_prefetch = 0 : i64, scratch_operands = 0 : i64, tpu.core_type = #tpu.core_type<tc>, window_params = [{transform_indices = @transform_0, window_bounds = array<i64: 1, 16, 32>}, {transform_indices = @transform_1, window_bounds = array<i64: 1, 1, 32>}, {transform_indices = @transform_2, window_bounds = array<i64: 1, 1, 32>}, {transform_indices = @transform_3, window_bounds = array<i64: 1, 16, 32>}]} {
    %c0 = arith.constant 0 : index
    %c0_0 = arith.constant 0 : index
    %c0_1 = arith.constant 0 : index
    %0 = vector.load %arg2[%c0, %c0_0, %c0_1] : memref<1x16x32xf32, #tpu.memory_space<vmem>>, vector<1x16x32xf32>
    %1 = vector.shape_cast %0 : vector<1x16x32xf32> to vector<16x32xf32>
    %cst = arith.constant dense<0.000000e+00> : vector<16xf32>
    %2 = vector.multi_reduction <add>, %1, %cst [1] : vector<16x32xf32> to vector<16xf32>
    %3 = vector.shape_cast %2 : vector<16xf32> to vector<16x1xf32>
    %cst_2 = arith.constant 3.200000e+01 : f32
    %4 = vector.broadcast %cst_2 : f32 to vector<16x1xf32>
    %5 = arith.divf %3, %4 : vector<16x1xf32>
    %6 = vector.broadcast %5 : vector<16x1xf32> to vector<16x32xf32>
    %7 = arith.subf %1, %6 : vector<16x32xf32>
    %8 = arith.mulf %7, %7 : vector<16x32xf32>
    %cst_3 = arith.constant dense<0.000000e+00> : vector<16xf32>
    %9 = vector.multi_reduction <add>, %8, %cst_3 [1] : vector<16x32xf32> to vector<16xf32>
    %10 = vector.shape_cast %9 : vector<16xf32> to vector<16x1xf32>
    %cst_4 = arith.constant 3.200000e+01 : f32
    %11 = vector.broadcast %cst_4 : f32 to vector<16x1xf32>
    %12 = arith.divf %10, %11 : vector<16x1xf32>
    %cst_5 = arith.constant 9.99999974E-6 : f32
    %13 = vector.broadcast %cst_5 : f32 to vector<16x1xf32>
    %14 = arith.addf %12, %13 : vector<16x1xf32>
    %15 = math.rsqrt %14 : vector<16x1xf32>
    %16 = vector.broadcast %15 : vector<16x1xf32> to vector<16x32xf32>
    %17 = arith.mulf %7, %16 : vector<16x32xf32>
    %c0_6 = arith.constant 0 : index
    %c0_7 = arith.constant 0 : index
    %c0_8 = arith.constant 0 : index
    %18 = vector.load %arg3[%c0_6, %c0_7, %c0_8] : memref<1x1x32xf32, #tpu.memory_space<vmem>>, vector<1x1x32xf32>
    %19 = vector.shape_cast %18 : vector<1x1x32xf32> to vector<1x32xf32>
    %cst_9 = arith.constant 1.000000e+00 : f32
    %20 = vector.broadcast %cst_9 : f32 to vector<1x32xf32>
    %21 = arith.addf %20, %19 : vector<1x32xf32>
    %22 = vector.broadcast %21 : vector<1x32xf32> to vector<16x32xf32>
    %23 = arith.mulf %17, %22 : vector<16x32xf32>
    %c0_10 = arith.constant 0 : index
    %c0_11 = arith.constant 0 : index
    %c0_12 = arith.constant 0 : index
    %24 = vector.load %arg4[%c0_10, %c0_11, %c0_12] : memref<1x1x32xf32, #tpu.memory_space<vmem>>, vector<1x1x32xf32>
    %25 = vector.shape_cast %24 : vector<1x1x32xf32> to vector<1x32xf32>
    %26 = vector.broadcast %25 : vector<1x32xf32> to vector<16x32xf32>
    %27 = arith.addf %23, %26 : vector<16x32xf32>
    %c0_13 = arith.constant 0 : index
    %c0_14 = arith.constant 0 : index
    %c0_15 = arith.constant 0 : index
    %28 = vector.load %arg5[%c0_13, %c0_14, %c0_15] : memref<1x16x32xf32, #tpu.memory_space<vmem>>, vector<1x16x32xf32>
    %29 = vector.shape_cast %28 : vector<1x16x32xf32> to vector<16x32xf32>
    %30 = vector.shape_cast %27 : vector<16x32xf32> to vector<1x16x32xf32>
    tpu.vector_store %arg5[%c0_13, %c0_14, %c0_15], %30 {strides = array<i32>} : memref<1x16x32xf32, #tpu.memory_space<vmem>>, vector<1x16x32xf32>,
    return
  }
  func.func @transform_0(%arg0: i32, %arg1: i32) -> (i32, i32, i32) {
    %c0_i32 = arith.constant 0 : i32
    %c0_i32_0 = arith.constant 0 : i32
    return %arg0, %arg1, %c0_i32 : i32, i32, i32
  }
  func.func @transform_1(%arg0: i32, %arg1: i32) -> (i32, i32, i32) {
    %c0_i32 = arith.constant 0 : i32
    %c0_i32_0 = arith.constant 0 : i32
    %c0_i32_1 = arith.constant 0 : i32
    return %arg0, %c0_i32, %c0_i32_0 : i32, i32, i32
  }
  func.func @transform_2(%arg0: i32, %arg1: i32) -> (i32, i32, i32) {
    %c0_i32 = arith.constant 0 : i32
    %c0_i32_0 = arith.constant 0 : i32
    %c0_i32_1 = arith.constant 0 : i32
    return %arg0, %c0_i32, %c0_i32_0 : i32, i32, i32
  }
  func.func @transform_3(%arg0: i32, %arg1: i32) -> (i32, i32, i32) {
    %c0_i32 = arith.constant 0 : i32
    %c0_i32_0 = arith.constant 0 : i32
    return %arg0, %arg1, %c0_i32 : i32, i32, i32
  }
}

</mosaic_0001>

<llo_original>
// kernel: dit_model.28
$region0: #{dit_model.28}
  #allocation0 [shape = 'u32[]', space=smem, size = 0x4, offset = 0x4, fixed_abs, tag = 'smem constant byte address 0x4 - core index']
  #allocation1 [shape = 'u32[144,128]{1,0:T(1,128)}', space=vmem, size = 0x12000, scoped, tag = 'internal scratch']
  #allocation2 [shape = 'f32[24,8]{1,0:T(8,128)}', space=vmem, size = 0x3000, scoped, tag = 'scratch operand']
  %s0 = inlined_call_operand.vmem [shape: f32[2,24,32], index: 0, kind: input, shape index: {}]
  %s1 = inlined_call_operand.vmem [shape: f32[4,32,8], index: 1, kind: input, shape index: {}]
  %s2 = inlined_call_operand.vmem [shape: f32[4,1,8], index: 2, kind: input, shape index: {}]
  %s3 = inlined_call_operand.vmem [shape: f32[8,24,8], index: 3, kind: output, shape index: {}]
  %s4 = sld [smem:[#allocation0]]
  $region53: #{dit_model.28} parent=0
    _
  %s6 = ssub.s32 1, %s4
  %s7 = scalar_select 0, %s6, %s4
  loop: start=0, step=1, limit=10
  $region2: #{dit_model.28} parent=0 // loop_pre_header
    _
  $region3: #{dit_model.28} parent=0 // loop_header
    %s9 = sphi 0, %s13
    %p10 = scmp.ge.s32.totalorder %s9, 10
    %s16 = sphi 0, %s42
    %s17 = sphi 0, %s38
    %s18 = sphi 0, %s34
    %s19 = sphi 0, %s30
    %s20 = sphi 0, %s16
    %s21 = sphi 0, %s17
    %s22 = sphi 0, %s18
    %s23 = sphi 0, %s19
    %s24 = sphi 0, %s20
    %s25 = sphi 0, %s21
    %s26 = sphi 0, %s22
    %s27 = sphi 0, %s23
    %s49 = sphi 0, %s51
    %s52 = sphi 0, %s49
    %s53 = sphi 0, %s52
    %s69 = sphi 0, %s53
    %s77 = sphi 0, %s79
    %s80 = sphi 0, %s77
    %s81 = sphi 0, %s80
    %s97 = sphi 0, %s81
    %s103 = sphi 0, %s105
    %s106 = sphi 0, %s103
    %s107 = sphi 0, %s106
    %s123 = sphi 0, %s107
    %s135 = sphi 0, %s137
    %s138 = sphi 0, %s135
    %s139 = sphi 0, %s138
    %s155 = sphi 0, %s139
  $region4: #{dit_model.28} parent=0 // loop_header_branch
    %12 = sbr.rel (%p10) target = $region8
  $region5: #{dit_model.28} parent=0 // loop_body
    %s14 = ssub.s32 %s9, 1
    %s15 = ssub.s32 %s9, 2
    %s28 = sadd.s32 1, %s19
    %p29 = scmp.ge.s32.totalorder %s28, 1
    %s30 = scalar_select %p29, 0, %s28
    %s31 = sadd.s32 1, %s18
    %s32 = scalar_select %p29, %s31, %s18
    %p33 = scmp.ge.s32.totalorder %s32, 1
    %s34 = scalar_select %p33, 0, %s32
    %s35 = sadd.s32 1, %s17
    %s36 = scalar_select %p33, %s35, %s17
    %p37 = scmp.ge.s32.totalorder %s36, 4
    %s38 = scalar_select %p37, 0, %s36
    %s39 = sadd.s32 1, %s16
    %s40 = scalar_select %p37, %s39, %s16
    %p41 = scmp.ge.s32.totalorder %s40, 2
    %s42 = scalar_select %p41, 0, %s40
    %s43 = ssub.s32 %s16, %s42
    %s44 = ssub.s32 %s18, %s34
    %s45 = sor.u32 %s43, %s44
    %s46 = ssub.s32 %s19, %s30
    %s47 = sor.u32 %s45, %s46
    %p48 = scmp.eq.s32.totalorder %s47, 0
    %s50 = sadd.s32 %s49, 1
    %s51 = scalar_select %p48, %s49, %s50
    %p54 = pneg %p48
    %p55 = scmp.eq.s32.totalorder %s9, 7
    %p56 = por %p54, %p55
    %p57 = scmp.ne.s32.totalorder %s49, %s52
    %p58 = scmp.eq.s32.totalorder %s9, 0
    %p59 = por %p57, %p58
    %p60 = scmp.ne.s32.totalorder %s49, %s52
    %p61 = scmp.eq.s32.totalorder %s14, 7
    %p62 = por %p60, %p61
    %p63 = scmp.ne.s32.totalorder %s52, %s53
    %p64 = scmp.eq.s32.totalorder %s14, 0
    %p65 = por %p63, %p64
    %p66 = scmp.ne.s32.totalorder %s52, %s53
    %p67 = scmp.eq.s32.totalorder %s15, 7
    %p68 = por %p66, %p67
    %p70 = scmp.ne.s32.totalorder %s53, %s69
    %p71 = scmp.eq.s32.totalorder %s15, 0
    %p72 = por %p70, %p71
    %s73 = ssub.s32 %s17, %s38
    %s74 = ssub.s32 %s19, %s30
    %s75 = sor.u32 %s73, %s74
    %p76 = scmp.eq.s32.totalorder %s75, 0
    %s78 = sadd.s32 %s77, 1
    %s79 = scalar_select %p76, %s77, %s78
    %p82 = pneg %p76
    %p83 = scmp.eq.s32.totalorder %s9, 7
    %p84 = por %p82, %p83
    %p85 = scmp.ne.s32.totalorder %s77, %s80
    %p86 = scmp.eq.s32.totalorder %s9, 0
    %p87 = por %p85, %p86
    %p88 = scmp.ne.s32.totalorder %s77, %s80
    %p89 = scmp.eq.s32.totalorder %s14, 7
    %p90 = por %p88, %p89
    %p91 = scmp.ne.s32.totalorder %s80, %s81
    %p92 = scmp.eq.s32.totalorder %s14, 0
    %p93 = por %p91, %p92
    %p94 = scmp.ne.s32.totalorder %s80, %s81
    %p95 = scmp.eq.s32.totalorder %s15, 7
    %p96 = por %p94, %p95
    %p98 = scmp.ne.s32.totalorder %s81, %s97
    %p99 = scmp.eq.s32.totalorder %s15, 0
    %p100 = por %p98, %p99
    %s101 = ssub.s32 %s17, %s38
    %p102 = scmp.eq.s32.totalorder %s101, 0
    %s104 = sadd.s32 %s103, 1
    %s105 = scalar_select %p102, %s103, %s104
    %p108 = pneg %p102
    %p109 = scmp.eq.s32.totalorder %s9, 7
    %p110 = por %p108, %p109
    %p111 = scmp.ne.s32.totalorder %s103, %s106
    %p112 = scmp.eq.s32.totalorder %s9, 0
    %p113 = por %p111, %p112
    %p114 = scmp.ne.s32.totalorder %s103, %s106
    %p115 = scmp.eq.s32.totalorder %s14, 7
    %p116 = por %p114, %p115
    %p117 = scmp.ne.s32.totalorder %s106, %s107
    %p118 = scmp.eq.s32.totalorder %s14, 0
    %p119 = por %p117, %p118
    %p120 = scmp.ne.s32.totalorder %s106, %s107
    %p121 = scmp.eq.s32.totalorder %s15, 7
    %p122 = por %p120, %p121
    %p124 = scmp.ne.s32.totalorder %s107, %s123
    %p125 = scmp.eq.s32.totalorder %s15, 0
    %p126 = por %p124, %p125
    %s127 = smul.u32 %s16, 4
    %s128 = sadd.s32 %s127, %s17
    %s129 = smul.u32 %s42, 4
    %s130 = sadd.s32 %s129, %s38
    %s131 = ssub.s32 %s128, %s130
    %s132 = ssub.s32 %s18, %s34
    %s133 = sor.u32 %s131, %s132
    %p134 = scmp.eq.s32.totalorder %s133, 0
    %s136 = sadd.s32 %s135, 1
    %s137 = scalar_select %p134, %s135, %s136
    %p140 = pneg %p134
    %p141 = scmp.eq.s32.totalorder %s9, 7
    %p142 = por %p140, %p141
    %p143 = scmp.ne.s32.totalorder %s135, %s138
    %p144 = scmp.eq.s32.totalorder %s9, 0
    %p145 = por %p143, %p144
    %p146 = scmp.ne.s32.totalorder %s135, %s138
    %p147 = scmp.eq.s32.totalorder %s14, 7
    %p148 = por %p146, %p147
    %p149 = scmp.ne.s32.totalorder %s138, %s139
    %p150 = scmp.eq.s32.totalorder %s14, 0
    %p151 = por %p149, %p150
    %p152 = scmp.ne.s32.totalorder %s138, %s139
    %p153 = scmp.eq.s32.totalorder %s15, 7
    %p154 = por %p152, %p153
    %p156 = scmp.ne.s32.totalorder %s139, %s155
    %p157 = scmp.eq.s32.totalorder %s15, 0
    %p158 = por %p156, %p157
    %p159 = scmp.le.s32.totalorder 1, %s9
    %p160 = scmp.lt.s32.totalorder %s9, 9
    %p161 = pnand %p159, %p160
    %p162 = pneg %p161
    // Predicated region
    $region9: #{dit_model.28} parent=5 // pred_check
      _
    $region10: #{dit_model.28} parent=5 // pred_check_branch
      %164 = sbr.rel (%p161) target = $region12
    $region11: #{dit_model.28} parent=5 // pred_region
      %s165 = ssub.s32 %s9, 1
    $region12: #{dit_model.28} parent=5 // pred_fallthru
      _
    %p166 = scmp.lt.s32.totalorder %s9, 8
    // Predicated region
    $region13: #{dit_model.28} parent=5 // pred_check
      %p167 = pneg %p166
    $region14: #{dit_model.28} parent=5 // pred_check_branch
      %169 = sbr.rel (%p167) target = $region16
    $region15: #{dit_model.28} parent=5 // pred_region
      // Predicated region
      $region17: #{dit_model.28} parent=15 // pred_check
        %p170 = pneg %p59
      $region18: #{dit_model.28} parent=15 // pred_check_branch
        %172 = sbr.rel (%p170) target = $region20
      $region19: #{dit_model.28} parent=15 // pred_region
        %s173 = smul.u32 3, %s18
        %p174 = scmp.lt.s32.totalorder %s16, 1
        %s175 = scalar_select %p174, %s16, 1
        %p176 = scmp.lt.s32.totalorder %s173, 2
        %s177 = scalar_select %p176, %s173, 2
        %p178 = scmp.lt.s32.totalorder %s19, 0
        %s179 = scalar_select %p178, %s19, 0
        %s180 = sadd.s32 %s179, %s177
        %s181 = smul.addr %s175, 3
        %s182 = sadd.s32 %s180, %s181
        %s183 = smul.addr %s182, 8
        %s184 = scalar_lea.vmem %s0, %s183
        %s185 = smul.u32 3, %s18
      $region20: #{dit_model.28} parent=15 // pred_fallthru
        _
      // Predicated region
      $region21: #{dit_model.28} parent=15 // pred_check
        %p186 = pneg %p87
      $region22: #{dit_model.28} parent=15 // pred_check_branch
        %188 = sbr.rel (%p186) target = $region24
      $region23: #{dit_model.28} parent=15 // pred_region
        %s189 = smul.u32 4, %s19
        %p190 = scmp.lt.s32.totalorder %s17, 3
        %s191 = scalar_select %p190, %s17, 3
        %p192 = scmp.lt.s32.totalorder %s189, 3
        %s193 = scalar_select %p192, %s189, 3
        %s194 = smul.addr %s191, 4
        %s195 = sadd.s32 %s193, %s194
        %s196 = smul.addr %s195, 8
        %s197 = scalar_lea.vmem %s1, %s196
        %s198 = smul.u32 4, %s19
      $region24: #{dit_model.28} parent=15 // pred_fallthru
        _
      // Predicated region
      $region25: #{dit_model.28} parent=15 // pred_check
        %p199 = pneg %p113
      $region26: #{dit_model.28} parent=15 // pred_check_branch
        %201 = sbr.rel (%p199) target = $region28
      $region27: #{dit_model.28} parent=15 // pred_region
        %p202 = scmp.lt.s32.totalorder %s17, 3
        %s203 = scalar_select %p202, %s17, 3
        %s204 = scalar_lea.vmem %s2, %s203
      $region28: #{dit_model.28} parent=15 // pred_fallthru
        _
    $region16: #{dit_model.28} parent=5 // pred_fallthru
      _
    %p205 = scmp.le.s32.totalorder 1, %s9
    %p206 = scmp.lt.s32.totalorder %s9, 9
    %p207 = pnand %p205, %p206
    %p208 = pneg %p207
    // Predicated region
    $region29: #{dit_model.28} parent=5 // pred_check
      _
    $region30: #{dit_model.28} parent=5 // pred_check_branch
      %210 = sbr.rel (%p207) target = $region32
    $region31: #{dit_model.28} parent=5 // pred_region
      %s211 = ssub.s32 %s9, 1
      %s212 = smul.u32 3, %s22
      %p213 = scmp.lt.s32.totalorder %s20, 1
      %s214 = scalar_select %p213, %s20, 1
      %p215 = scmp.lt.s32.totalorder %s212, 2
      %s216 = scalar_select %p215, %s212, 2
      %p217 = scmp.lt.s32.totalorder %s23, 0
      %s218 = scalar_select %p217, %s23, 0
      %s219 = sadd.s32 %s218, %s216
      %s220 = smul.addr %s214, 3
      %s221 = sadd.s32 %s219, %s220
      %s222 = smul.addr %s221, 8
      %s223 = scalar_lea.vmem %s0, %s222
      %p224 = pneg %p65
      %p225 = pneg %p62
      %s226 = smul.u32 4, %s23
      %p227 = scmp.lt.s32.totalorder %s21, 3
      %s228 = scalar_select %p227, %s21, 3
      %p229 = scmp.lt.s32.totalorder %s226, 3
      %s230 = scalar_select %p229, %s226, 3
      %s231 = smul.addr %s228, 4
      %s232 = sadd.s32 %s230, %s231
      %s233 = smul.addr %s232, 8
      %s234 = scalar_lea.vmem %s1, %s233
      %p235 = pneg %p93
      %p236 = pneg %p90
      %p237 = scmp.lt.s32.totalorder %s21, 3
      %s238 = scalar_select %p237, %s21, 3
      %s239 = scalar_lea.vmem %s2, %s238
      %p240 = pneg %p119
      %p241 = pneg %p116
      %p242 = pneg %p151
      %p243 = pneg %p148
      %s244 = smul.u32 %s20, 4
      %s245 = sadd.s32 %s244, %s21
      %s246 = smul.u32 3, %s22
      %p247 = scmp.lt.s32.totalorder %s245, 7
      %s248 = scalar_select %p247, %s245, 7
      %p249 = scmp.lt.s32.totalorder %s246, 2
      %s250 = scalar_select %p249, %s246, 2
      %s251 = smul.addr %s248, 3
      %s252 = sadd.s32 %s250, %s251
      %s253 = smul.addr %s252, 8
      %s254 = scalar_lea.vmem %s3, %s253
      %s255 = smul.u32 3, %s22
      %p256 = scmp.lt.s32.totalorder %s20, 1
      %s257 = scalar_select %p256, %s20, 1
      %p258 = scmp.lt.s32.totalorder %s255, 2
      %s259 = scalar_select %p258, %s255, 2
      %p260 = scmp.lt.s32.totalorder %s23, 0
      %s261 = scalar_select %p260, %s23, 0
      %s262 = sadd.s32 %s261, %s259
      %s263 = smul.addr %s257, 3
      %s264 = sadd.s32 %s262, %s263
      %s265 = smul.addr %s264, 8
      %s266 = scalar_lea.vmem %s0, %s265
      %s267 = smul.u32 3, %s22
      %s268 = smul.u32 4, %s23
      %p269 = scmp.lt.s32.totalorder %s21, 3
      %s270 = scalar_select %p269, %s21, 3
      %p271 = scmp.lt.s32.totalorder %s268, 3
      %s272 = scalar_select %p271, %s268, 3
      %s273 = smul.addr %s270, 4
      %s274 = sadd.s32 %s272, %s273
      %s275 = smul.addr %s274, 8
      %s276 = scalar_lea.vmem %s1, %s275
      %s277 = smul.u32 4, %s23
      %p278 = scmp.lt.s32.totalorder %s21, 3
      %s279 = scalar_select %p278, %s21, 3
      %s280 = scalar_lea.vmem %s2, %s279
      %s281 = smul.u32 %s20, 4
      %s282 = sadd.s32 %s281, %s21
      %s283 = smul.u32 3, %s22
      %p284 = scmp.lt.s32.totalorder %s282, 7
      %s285 = scalar_select %p284, %s282, 7
      %p286 = scmp.lt.s32.totalorder %s283, 2
      %s287 = scalar_select %p286, %s283, 2
      %s288 = smul.addr %s285, 3
      %s289 = sadd.s32 %s287, %s288
      %s290 = smul.addr %s289, 8
      %s291 = scalar_lea.vmem %s3, %s290
      %s292 = smul.u32 %s20, 4
      %s293 = sadd.s32 %s292, %s21
      %s294 = smul.u32 3, %s22
      %p296 = scmp.eq.s32.totalorder %s23, 0
      // Predicated region
      $region33: #{dit_model.28} parent=31 // pred_check
        %p297 = pneg %p296
      $region34: #{dit_model.28} parent=31 // pred_check_branch
        %299 = sbr.rel (%p297) target = $region36
      $region35: #{dit_model.28} parent=31 // pred_region
        %vm300 = vcmask 64512
        %301 = vst.msk [vmem:[#allocation2] sm:$0xff] %vm300, 0.0
        %302 = vst.msk [vmem:[#allocation2 + $0x8] sm:$0xff] %vm300, 0.0
        %303 = vst.msk [vmem:[#allocation2 + $0x10] sm:$0xff] %vm300, 0.0
      $region36: #{dit_model.28} parent=31 // pred_fallthru
        _
      %v304 = vld [vmem:[#allocation2] sm:$0xff]
      %v305 = vld [vmem:[#allocation2 + $0x8] sm:$0xff]
      %v306 = vld [vmem:[#allocation2 + $0x10] sm:$0xff]
      %v307 = vld [vmem:[%s266] sm:$0xff]
      %v308 = vld [vmem:[%s266 + $0x8] sm:$0xff]
      %v309 = vld [vmem:[%s266 + $0x10] sm:$0xff]
      %v310 = vpack.c.bf16 %v308, %v307
      %v311 = vpack.c.bf16 %v309, %v309
      %v312 = vld [vmem:[%s276] sm:$0xff]
      %v313 = vld [vmem:[%s276 + $0x8] sm:$0xff]
      %v314 = vld [vmem:[%s276 + $0x10] sm:$0xff]
      %v315 = vld [vmem:[%s276 + $0x18] sm:$0xff]
      %v316 = vpack.c.bf16 %v313, %v312
      %v317 = vpack.c.bf16 %v315, %v314
      %vm318 = vcmask 261120
      %v320 = vsel %vm318, %v310, 0
      %v323 = vsel %vm318, %v311, 0
      %325 = vmatprep.subr.bf16.mxu0 0
      %326 = vmatpush1.bf16.msra.mxu0 %v316
      %327 = vmatprep.subr.bf16.mxu0 0
      %328 = vmatpush1.bf16.msra.mxu0 %v317
      %329 = vmatprep.subr.bf16.mxu0 0
      %330 = vmatpush1.bf16.msra.mxu0 0
      %331 = vmatprep.subr.bf16.mxu0 0
      %332 = vmatpush1.bf16.msra.mxu0 0
      %333 = vmatprep.subr.bf16.mxu0 0
      %334 = vmatpush1.bf16.msra.mxu0 0
      %335 = vmatprep.subr.bf16.mxu0 0
      %336 = vmatpush1.bf16.msra.mxu0 0
      %337 = vmatprep.subr.bf16.mxu0 0
      %338 = vmatpush1.bf16.msra.mxu0 0
      %339 = vmatprep.subr.bf16.mxu0 0
      %340 = vmatpush1.bf16.msra.mxu0 0
      %341 = vmatprep.subr.bf16.mxu0 0
      %342 = vmatpush1.bf16.msra.mxu0 0
      %343 = vmatprep.subr.bf16.mxu0 0
      %344 = vmatpush1.bf16.msra.mxu0 0
      %345 = vmatprep.subr.bf16.mxu0 0
      %346 = vmatpush1.bf16.msra.mxu0 0
      %347 = vmatprep.subr.bf16.mxu0 0
      %348 = vmatpush1.bf16.msra.mxu0 0
      %349 = vmatprep.subr.bf16.mxu0 0
      %350 = vmatpush1.bf16.msra.mxu0 0
      %351 = vmatprep.subr.bf16.mxu0 0
      %352 = vmatpush1.bf16.msra.mxu0 0
      %353 = vmatprep.subr.bf16.mxu0 0
      %354 = vmatpush1.bf16.msra.mxu0 0
      %355 = vmatprep.subr.bf16.mxu0 0
      %356 = vmatpush1.bf16.msra.mxu0 0
      %357 = vmatprep.mubr.bf16.mxu0 0
      %358 = vmatmul.mubr.bf16.gmra.mrb[0].mxu0 %v320
      %v359 = vpop.f32.mrb[0].mxu0
      %v360 = vadd.f32 0.0, %v359
      %v361 = vpop.f32.mrb[0].mxu0
      %v362 = vpop.f32.mrb[0].mxu0
      %v363 = vadd.f32 0.0, %v362
      %v364 = vpop.f32.mrb[0].mxu0
      %365 = vmatprep.mubr.bf16.mxu0 0
      %366 = vmatmul.mubr.bf16.gmra.mrb[0].mxu0 %v323
      %v367 = vpop.f32.mrb[0].mxu0
      %v368 = vadd.f32 0.0, %v367
      %v369 = vpop.f32.mrb[0].mxu0
      %v370 = vpop.f32.mrb[0].mxu0
      %v371 = vpop.f32.mrb[0].mxu0
      %372 = vdwg.mxu0
      %v373 = vadd.f32 %v304, %v360
      %v374 = vadd.f32 %v305, %v363
      %v375 = vadd.f32 %v306, %v368
      %vm376 = vcmask 64512
      %377 = vst.msk [vmem:[#allocation2] sm:$0xff] %vm376, %v373
      %378 = vst.msk [vmem:[#allocation2 + $0x8] sm:$0xff] %vm376, %v374
      %379 = vst.msk [vmem:[#allocation2 + $0x10] sm:$0xff] %vm376, %v375
      // Predicated region
      $region37: #{dit_model.28} parent=31 // pred_check
        %p380 = pneg %p296
      $region38: #{dit_model.28} parent=31 // pred_check_branch
        %382 = sbr.rel (%p380) target = $region40
      $region39: #{dit_model.28} parent=31 // pred_region
        %v383 = vld [vmem:[#allocation2] sm:$0xff]
        %v384 = vld [vmem:[#allocation2 + $0x8] sm:$0xff]
        %v385 = vld [vmem:[#allocation2 + $0x10] sm:$0xff]
        %v386 = vld [vmem:[%s280] sm:$0x1]
        %v388 = vlaneseq
        %v389 = vshrl.u32 %v388, 7
        %v390 = vsub.s32 0, %v389
        %v391 = vrot.slane %v386, %v390
        %v393 = vadd.f32 %v383, %v391
        %v394 = vadd.f32 %v384, %v391
        %v395 = vadd.f32 %v385, %v391
        %396 = vst.msk [vmem:[%s291] sm:$0xff] %vm376, %v393
        %397 = vst.msk [vmem:[%s291 + $0x8] sm:$0xff] %vm376, %v394
        %398 = vst.msk [vmem:[%s291 + $0x10] sm:$0xff] %vm376, %v395
      $region40: #{dit_model.28} parent=31 // pred_fallthru
        _
      %s399 = smul.u32 %s20, 4
      %s400 = sadd.s32 %s399, %s21
      %s401 = smul.u32 3, %s22
      %p402 = scmp.lt.s32.totalorder %s400, 7
      %s403 = scalar_select %p402, %s400, 7
      %p404 = scmp.lt.s32.totalorder %s401, 2
      %s405 = scalar_select %p404, %s401, 2
      %s406 = smul.addr %s403, 3
      %s407 = sadd.s32 %s405, %s406
      %s408 = smul.addr %s407, 8
      %s409 = scalar_lea.vmem %s3, %s408
      // Predicated region
      $region41: #{dit_model.28} parent=31 // pred_check
        %p410 = pneg %p148
      $region42: #{dit_model.28} parent=31 // pred_check_branch
        %412 = sbr.rel (%p410) target = $region44
      $region43: #{dit_model.28} parent=31 // pred_region
        %s413 = smul.u32 %s20, 4
        %s414 = sadd.s32 %s413, %s21
        %s415 = smul.u32 3, %s22
      $region44: #{dit_model.28} parent=31 // pred_fallthru
        _
    $region32: #{dit_model.28} parent=5 // pred_fallthru
      _
    %p416 = scmp.le.s32.totalorder 2, %s9
    // Predicated region
    $region45: #{dit_model.28} parent=5 // pred_check
      %p417 = pneg %p416
    $region46: #{dit_model.28} parent=5 // pred_check_branch
      %419 = sbr.rel (%p417) target = $region48
    $region47: #{dit_model.28} parent=5 // pred_region
      %s420 = ssub.s32 %s9, 2
      // Predicated region
      $region49: #{dit_model.28} parent=47 // pred_check
        %p421 = pneg %p154
      $region50: #{dit_model.28} parent=47 // pred_check_branch
        %423 = sbr.rel (%p421) target = $region52
      $region51: #{dit_model.28} parent=47 // pred_region
        %s424 = smul.u32 %s24, 4
        %s425 = sadd.s32 %s424, %s25
        %s426 = smul.u32 3, %s26
        %p427 = scmp.lt.s32.totalorder %s425, 7
        %s428 = scalar_select %p427, %s425, 7
        %p429 = scmp.lt.s32.totalorder %s426, 2
        %s430 = scalar_select %p429, %s426, 2
        %s431 = smul.addr %s428, 3
        %s432 = sadd.s32 %s430, %s431
        %s433 = smul.addr %s432, 8
        %s434 = scalar_lea.vmem %s3, %s433
      $region52: #{dit_model.28} parent=47 // pred_fallthru
        _
    $region48: #{dit_model.28} parent=5 // pred_fallthru
      _
  $region6: #{dit_model.28} parent=0 // loop_footer
    %s13 = sadd.s32 1, %s9
  $region7: #{dit_model.28} parent=0 // loop_footer_branch
    %8 = sbr.rel target = $region3
  $region8: #{dit_model.28} parent=0 // loop_exit
    _

// kernel: dit_model.25
$region0: #{dit_model.25}
  #allocation0 [shape = 'u32[]', space=smem, size = 0x4, offset = 0x4, fixed_abs, tag = 'smem constant byte address 0x4 - core index']
  #allocation1 [shape = 'u32[144,128]{1,0:T(1,128)}', space=vmem, size = 0x12000, scoped, tag = 'internal scratch']
  #allocation2 [shape = 'f32[8,32]{1,0:T(8,128)}', space=vmem, size = 0x1000, scoped, tag = 'scratch operand']
  %s0 = inlined_call_operand.vmem [shape: f32[2,8,24], index: 0, kind: input, shape index: {}]
  %s1 = inlined_call_operand.vmem [shape: f32[24,32], index: 1, kind: input, shape index: {}]
  %s2 = inlined_call_operand.vmem [shape: f32[1,32], index: 2, kind: input, shape index: {}]
  %s3 = inlined_call_operand.vmem [shape: f32[2,8,32], index: 3, kind: output, shape index: {}]
  %s4 = sld [smem:[#allocation0]]
  $region53: #{dit_model.25} parent=0
    _
  %s6 = ssub.s32 1, %s4
  %s7 = scalar_select 0, %s6, %s4
  loop: start=0, step=1, limit=4
  $region2: #{dit_model.25} parent=0 // loop_pre_header
    _
  $region3: #{dit_model.25} parent=0 // loop_header
    %s9 = sphi 0, %s13
    %p10 = scmp.ge.s32.totalorder %s9, 4
    %s16 = sphi 0, %s42
    %s17 = sphi 0, %s38
    %s18 = sphi 0, %s34
    %s19 = sphi 0, %s30
    %s20 = sphi 0, %s16
    %s21 = sphi 0, %s17
    %s22 = sphi 0, %s18
    %s23 = sphi 0, %s19
    %s24 = sphi 0, %s20
    %s25 = sphi 0, %s21
    %s26 = sphi 0, %s22
    %s27 = sphi 0, %s23
    %s49 = sphi 0, %s51
    %s52 = sphi 0, %s49
    %s53 = sphi 0, %s52
    %s69 = sphi 0, %s53
    %s77 = sphi 0, %s79
    %s80 = sphi 0, %s77
    %s81 = sphi 0, %s80
    %s97 = sphi 0, %s81
    %s103 = sphi 0, %s105
    %s106 = sphi 0, %s103
    %s107 = sphi 0, %s106
    %s123 = sphi 0, %s107
    %s133 = sphi 0, %s135
    %s136 = sphi 0, %s133
    %s137 = sphi 0, %s136
    %s153 = sphi 0, %s137
  $region4: #{dit_model.25} parent=0 // loop_header_branch
    %12 = sbr.rel (%p10) target = $region8
  $region5: #{dit_model.25} parent=0 // loop_body
    %s14 = ssub.s32 %s9, 1
    %s15 = ssub.s32 %s9, 2
    %s28 = sadd.s32 1, %s19
    %p29 = scmp.ge.s32.totalorder %s28, 1
    %s30 = scalar_select %p29, 0, %s28
    %s31 = sadd.s32 1, %s18
    %s32 = scalar_select %p29, %s31, %s18
    %p33 = scmp.ge.s32.totalorder %s32, 1
    %s34 = scalar_select %p33, 0, %s32
    %s35 = sadd.s32 1, %s17
    %s36 = scalar_select %p33, %s35, %s17
    %p37 = scmp.ge.s32.totalorder %s36, 1
    %s38 = scalar_select %p37, 0, %s36
    %s39 = sadd.s32 1, %s16
    %s40 = scalar_select %p37, %s39, %s16
    %p41 = scmp.ge.s32.totalorder %s40, 2
    %s42 = scalar_select %p41, 0, %s40
    %s43 = ssub.s32 %s16, %s42
    %s44 = ssub.s32 %s17, %s38
    %s45 = sor.u32 %s43, %s44
    %s46 = ssub.s32 %s19, %s30
    %s47 = sor.u32 %s45, %s46
    %p48 = scmp.eq.s32.totalorder %s47, 0
    %s50 = sadd.s32 %s49, 1
    %s51 = scalar_select %p48, %s49, %s50
    %p54 = pneg %p48
    %p55 = scmp.eq.s32.totalorder %s9, 1
    %p56 = por %p54, %p55
    %p57 = scmp.ne.s32.totalorder %s49, %s52
    %p58 = scmp.eq.s32.totalorder %s9, 0
    %p59 = por %p57, %p58
    %p60 = scmp.ne.s32.totalorder %s49, %s52
    %p61 = scmp.eq.s32.totalorder %s14, 1
    %p62 = por %p60, %p61
    %p63 = scmp.ne.s32.totalorder %s52, %s53
    %p64 = scmp.eq.s32.totalorder %s14, 0
    %p65 = por %p63, %p64
    %p66 = scmp.ne.s32.totalorder %s52, %s53
    %p67 = scmp.eq.s32.totalorder %s15, 1
    %p68 = por %p66, %p67
    %p70 = scmp.ne.s32.totalorder %s53, %s69
    %p71 = scmp.eq.s32.totalorder %s15, 0
    %p72 = por %p70, %p71
    %s73 = ssub.s32 %s19, %s30
    %s74 = ssub.s32 %s18, %s34
    %s75 = sor.u32 %s73, %s74
    %p76 = scmp.eq.s32.totalorder %s75, 0
    %s78 = sadd.s32 %s77, 1
    %s79 = scalar_select %p76, %s77, %s78
    %p82 = pneg %p76
    %p83 = scmp.eq.s32.totalorder %s9, 1
    %p84 = por %p82, %p83
    %p85 = scmp.ne.s32.totalorder %s77, %s80
    %p86 = scmp.eq.s32.totalorder %s9, 0
    %p87 = por %p85, %p86
    %p88 = scmp.ne.s32.totalorder %s77, %s80
    %p89 = scmp.eq.s32.totalorder %s14, 1
    %p90 = por %p88, %p89
    %p91 = scmp.ne.s32.totalorder %s80, %s81
    %p92 = scmp.eq.s32.totalorder %s14, 0
    %p93 = por %p91, %p92
    %p94 = scmp.ne.s32.totalorder %s80, %s81
    %p95 = scmp.eq.s32.totalorder %s15, 1
    %p96 = por %p94, %p95
    %p98 = scmp.ne.s32.totalorder %s81, %s97
    %p99 = scmp.eq.s32.totalorder %s15, 0
    %p100 = por %p98, %p99
    %s101 = ssub.s32 %s18, %s34
    %p102 = scmp.eq.s32.totalorder %s101, 0
    %s104 = sadd.s32 %s103, 1
    %s105 = scalar_select %p102, %s103, %s104
    %p108 = pneg %p102
    %p109 = scmp.eq.s32.totalorder %s9, 1
    %p110 = por %p108, %p109
    %p111 = scmp.ne.s32.totalorder %s103, %s106
    %p112 = scmp.eq.s32.totalorder %s9, 0
    %p113 = por %p111, %p112
    %p114 = scmp.ne.s32.totalorder %s103, %s106
    %p115 = scmp.eq.s32.totalorder %s14, 1
    %p116 = por %p114, %p115
    %p117 = scmp.ne.s32.totalorder %s106, %s107
    %p118 = scmp.eq.s32.totalorder %s14, 0
    %p119 = por %p117, %p118
    %p120 = scmp.ne.s32.totalorder %s106, %s107
    %p121 = scmp.eq.s32.totalorder %s15, 1
    %p122 = por %p120, %p121
    %p124 = scmp.ne.s32.totalorder %s107, %s123
    %p125 = scmp.eq.s32.totalorder %s15, 0
    %p126 = por %p124, %p125
    %s127 = ssub.s32 %s16, %s42
    %s128 = ssub.s32 %s17, %s38
    %s129 = sor.u32 %s127, %s128
    %s130 = ssub.s32 %s18, %s34
    %s131 = sor.u32 %s129, %s130
    %p132 = scmp.eq.s32.totalorder %s131, 0
    %s134 = sadd.s32 %s133, 1
    %s135 = scalar_select %p132, %s133, %s134
    %p138 = pneg %p132
    %p139 = scmp.eq.s32.totalorder %s9, 1
    %p140 = por %p138, %p139
    %p141 = scmp.ne.s32.totalorder %s133, %s136
    %p142 = scmp.eq.s32.totalorder %s9, 0
    %p143 = por %p141, %p142
    %p144 = scmp.ne.s32.totalorder %s133, %s136
    %p145 = scmp.eq.s32.totalorder %s14, 1
    %p146 = por %p144, %p145
    %p147 = scmp.ne.s32.totalorder %s136, %s137
    %p148 = scmp.eq.s32.totalorder %s14, 0
    %p149 = por %p147, %p148
    %p150 = scmp.ne.s32.totalorder %s136, %s137
    %p151 = scmp.eq.s32.totalorder %s15, 1
    %p152 = por %p150, %p151
    %p154 = scmp.ne.s32.totalorder %s137, %s153
    %p155 = scmp.eq.s32.totalorder %s15, 0
    %p156 = por %p154, %p155
    %p157 = scmp.le.s32.totalorder 1, %s9
    %p158 = scmp.lt.s32.totalorder %s9, 3
    %p159 = pnand %p157, %p158
    %p160 = pneg %p159
    // Predicated region
    $region9: #{dit_model.25} parent=5 // pred_check
      _
    $region10: #{dit_model.25} parent=5 // pred_check_branch
      %162 = sbr.rel (%p159) target = $region12
    $region11: #{dit_model.25} parent=5 // pred_region
      %s163 = ssub.s32 %s9, 1
      // Predicated region
      $region13: #{dit_model.25} parent=11 // pred_check
        %p164 = pneg %p93
      $region14: #{dit_model.25} parent=11 // pred_check_branch
        %166 = sbr.rel (%p164) target = $region16
      $region15: #{dit_model.25} parent=11 // pred_region
        %s167 = smul.u32 3, %s23
        %p168 = scmp.lt.s32.totalorder %s167, 2
        %s169 = scalar_select %p168, %s167, 2
        %p170 = scmp.lt.s32.totalorder %s22, 0
        %s171 = scalar_select %p170, %s22, 0
        %s172 = sadd.s32 %s171, %s169
        %s173 = smul.addr %s172, 8
        %s174 = scalar_lea.vmem %s1, %s173
        %s175 = smul.u32 3, %s23
      $region16: #{dit_model.25} parent=11 // pred_fallthru
        _
      // Predicated region
      $region17: #{dit_model.25} parent=11 // pred_check
        %p176 = pneg %p119
      $region18: #{dit_model.25} parent=11 // pred_check_branch
        %178 = sbr.rel (%p176) target = $region20
      $region19: #{dit_model.25} parent=11 // pred_region
        %p179 = scmp.lt.s32.totalorder %s22, 0
        %s180 = scalar_select %p179, %s22, 0
        %s181 = scalar_lea.vmem %s2, %s180
      $region20: #{dit_model.25} parent=11 // pred_fallthru
        _
    $region12: #{dit_model.25} parent=5 // pred_fallthru
      _
    %p182 = scmp.lt.s32.totalorder %s9, 2
    // Predicated region
    $region21: #{dit_model.25} parent=5 // pred_check
      %p183 = pneg %p182
    $region22: #{dit_model.25} parent=5 // pred_check_branch
      %185 = sbr.rel (%p183) target = $region24
    $region23: #{dit_model.25} parent=5 // pred_region
      // Predicated region
      $region25: #{dit_model.25} parent=23 // pred_check
        %p186 = pneg %p59
      $region26: #{dit_model.25} parent=23 // pred_check_branch
        %188 = sbr.rel (%p186) target = $region28
      $region27: #{dit_model.25} parent=23 // pred_region
        %p189 = scmp.lt.s32.totalorder %s16, 1
        %s190 = scalar_select %p189, %s16, 1
        %p191 = scmp.lt.s32.totalorder %s17, 0
        %s192 = scalar_select %p191, %s17, 0
        %p193 = scmp.lt.s32.totalorder %s19, 0
        %s194 = scalar_select %p193, %s19, 0
        %s195 = sadd.s32 %s194, %s192
        %s196 = sadd.s32 %s195, %s190
        %s197 = smul.addr %s196, 8
        %s198 = scalar_lea.vmem %s0, %s197
      $region28: #{dit_model.25} parent=23 // pred_fallthru
        _
    $region24: #{dit_model.25} parent=5 // pred_fallthru
      _
    %p199 = scmp.le.s32.totalorder 1, %s9
    %p200 = scmp.lt.s32.totalorder %s9, 3
    %p201 = pnand %p199, %p200
    %p202 = pneg %p201
    // Predicated region
    $region29: #{dit_model.25} parent=5 // pred_check
      _
    $region30: #{dit_model.25} parent=5 // pred_check_branch
      %204 = sbr.rel (%p201) target = $region32
    $region31: #{dit_model.25} parent=5 // pred_region
      %s205 = ssub.s32 %s9, 1
      %p206 = scmp.lt.s32.totalorder %s20, 1
      %s207 = scalar_select %p206, %s20, 1
      %p208 = scmp.lt.s32.totalorder %s21, 0
      %s209 = scalar_select %p208, %s21, 0
      %p210 = scmp.lt.s32.totalorder %s23, 0
      %s211 = scalar_select %p210, %s23, 0
      %s212 = sadd.s32 %s211, %s209
      %s213 = sadd.s32 %s212, %s207
      %s214 = smul.addr %s213, 8
      %s215 = scalar_lea.vmem %s0, %s214
      %p216 = pneg %p65
      %p217 = pneg %p62
      %s218 = smul.u32 3, %s23
      %p219 = scmp.lt.s32.totalorder %s218, 2
      %s220 = scalar_select %p219, %s218, 2
      %p221 = scmp.lt.s32.totalorder %s22, 0
      %s222 = scalar_select %p221, %s22, 0
      %s223 = sadd.s32 %s222, %s220
      %s224 = smul.addr %s223, 8
      %s225 = scalar_lea.vmem %s1, %s224
      %p226 = pneg %p93
      %p227 = pneg %p90
      %p228 = scmp.lt.s32.totalorder %s22, 0
      %s229 = scalar_select %p228, %s22, 0
      %s230 = scalar_lea.vmem %s2, %s229
      %p231 = pneg %p119
      %p232 = pneg %p116
      %p233 = pneg %p149
      %p234 = pneg %p146
      %p235 = scmp.lt.s32.totalorder %s20, 1
      %s236 = scalar_select %p235, %s20, 1
      %p237 = scmp.lt.s32.totalorder %s21, 0
      %s238 = scalar_select %p237, %s21, 0
      %p239 = scmp.lt.s32.totalorder %s22, 0
      %s240 = scalar_select %p239, %s22, 0
      %s241 = sadd.s32 %s240, %s238
      %s242 = sadd.s32 %s241, %s236
      %s243 = smul.addr %s242, 8
      %s244 = scalar_lea.vmem %s3, %s243
      %p245 = scmp.lt.s32.totalorder %s20, 1
      %s246 = scalar_select %p245, %s20, 1
      %p247 = scmp.lt.s32.totalorder %s21, 0
      %s248 = scalar_select %p247, %s21, 0
      %p249 = scmp.lt.s32.totalorder %s23, 0
      %s250 = scalar_select %p249, %s23, 0
      %s251 = sadd.s32 %s250, %s248
      %s252 = sadd.s32 %s251, %s246
      %s253 = smul.addr %s252, 8
      %s254 = scalar_lea.vmem %s0, %s253
      %s255 = smul.u32 3, %s23
      %p256 = scmp.lt.s32.totalorder %s255, 2
      %s257 = scalar_select %p256, %s255, 2
      %p258 = scmp.lt.s32.totalorder %s22, 0
      %s259 = scalar_select %p258, %s22, 0
      %s260 = sadd.s32 %s259, %s257
      %s261 = smul.addr %s260, 8
      %s262 = scalar_lea.vmem %s1, %s261
      %s263 = smul.u32 3, %s23
      %p264 = scmp.lt.s32.totalorder %s22, 0
      %s265 = scalar_select %p264, %s22, 0
      %s266 = scalar_lea.vmem %s2, %s265
      %p267 = scmp.lt.s32.totalorder %s20, 1
      %s268 = scalar_select %p267, %s20, 1
      %p269 = scmp.lt.s32.totalorder %s21, 0
      %s270 = scalar_select %p269, %s21, 0
      %p271 = scmp.lt.s32.totalorder %s22, 0
      %s272 = scalar_select %p271, %s22, 0
      %s273 = sadd.s32 %s272, %s270
      %s274 = sadd.s32 %s273, %s268
      %s275 = smul.addr %s274, 8
      %s276 = scalar_lea.vmem %s3, %s275
      %p278 = scmp.eq.s32.totalorder %s23, 0
      // Predicated region
      $region33: #{dit_model.25} parent=31 // pred_check
        %p279 = pneg %p278
      $region34: #{dit_model.25} parent=31 // pred_check_branch
        %281 = sbr.rel (%p279) target = $region36
      $region35: #{dit_model.25} parent=31 // pred_region
        %vm282 = vcmask 261120
        %283 = vst.msk [vmem:[#allocation2] sm:$0xff] %vm282, 0.0
      $region36: #{dit_model.25} parent=31 // pred_fallthru
        _
      %v284 = vld [vmem:[#allocation2] sm:$0xff]
      %v285 = vld [vmem:[%s254] sm:$0xff]
      %v286 = vpack.c.bf16 %v285, %v285
      %v287 = vld [vmem:[%s262] sm:$0xff]
      %v288 = vld [vmem:[%s262 + $0x8] sm:$0xff]
      %v289 = vld [vmem:[%s262 + $0x10] sm:$0xff]
      %v290 = vpack.c.bf16 %v288, %v287
      %v291 = vpack.c.bf16 %v289, %v289
      %vm292 = vcmask 195584
      %v294 = vsel %vm292, %v286, 0
      %vm296 = vcmask 1043456
      %v298 = vsel %vm296, %v291, 0
      %300 = vmatprep.subr.bf16.mxu0 0
      %301 = vmatpush1.bf16.msra.mxu0 %v290
      %302 = vmatprep.subr.bf16.mxu0 0
      %303 = vmatpush1.bf16.msra.mxu0 %v298
      %304 = vmatprep.subr.bf16.mxu0 0
      %305 = vmatpush1.bf16.msra.mxu0 0
      %306 = vmatprep.subr.bf16.mxu0 0
      %307 = vmatpush1.bf16.msra.mxu0 0
      %308 = vmatprep.subr.bf16.mxu0 0
      %309 = vmatpush1.bf16.msra.mxu0 0
      %310 = vmatprep.subr.bf16.mxu0 0
      %311 = vmatpush1.bf16.msra.mxu0 0
      %312 = vmatprep.subr.bf16.mxu0 0
      %313 = vmatpush1.bf16.msra.mxu0 0
      %314 = vmatprep.subr.bf16.mxu0 0
      %315 = vmatpush1.bf16.msra.mxu0 0
      %316 = vmatprep.subr.bf16.mxu0 0
      %317 = vmatpush1.bf16.msra.mxu0 0
      %318 = vmatprep.subr.bf16.mxu0 0
      %319 = vmatpush1.bf16.msra.mxu0 0
      %320 = vmatprep.subr.bf16.mxu0 0
      %321 = vmatpush1.bf16.msra.mxu0 0
      %322 = vmatprep.subr.bf16.mxu0 0
      %323 = vmatpush1.bf16.msra.mxu0 0
      %324 = vmatprep.subr.bf16.mxu0 0
      %325 = vmatpush1.bf16.msra.mxu0 0
      %326 = vmatprep.subr.bf16.mxu0 0
      %327 = vmatpush1.bf16.msra.mxu0 0
      %328 = vmatprep.subr.bf16.mxu0 0
      %329 = vmatpush1.bf16.msra.mxu0 0
      %330 = vmatprep.subr.bf16.mxu0 0
      %331 = vmatpush1.bf16.msra.mxu0 0
      %332 = vmatprep.mubr.bf16.mxu0 0
      %333 = vmatmul.mubr.bf16.gmra.mrb[0].mxu0 %v294
      %v334 = vpop.f32.mrb[0].mxu0
      %v335 = vadd.f32 0.0, %v334
      %v336 = vpop.f32.mrb[0].mxu0
      %v337 = vpop.f32.mrb[0].mxu0
      %v338 = vpop.f32.mrb[0].mxu0
      %339 = vdwg.mxu0
      %v340 = vadd.f32 %v284, %v335
      %vm341 = vcmask 261120
      %342 = vst.msk [vmem:[#allocation2] sm:$0xff] %vm341, %v340
      // Predicated region
      $region37: #{dit_model.25} parent=31 // pred_check
        %p343 = pneg %p278
      $region38: #{dit_model.25} parent=31 // pred_check_branch
        %345 = sbr.rel (%p343) target = $region40
      $region39: #{dit_model.25} parent=31 // pred_region
        %v346 = vld [vmem:[#allocation2] sm:$0xff]
        %v347 = vld [vmem:[%s266] sm:$0x1]
        %v349 = vlaneseq
        %v350 = vshrl.u32 %v349, 7
        %v351 = vsub.s32 0, %v350
        %v352 = vrot.slane %v347, %v351
        %v354 = vadd.f32 %v346, %v352
        %355 = vst.msk [vmem:[%s276] sm:$0xff] %vm341, %v354
      $region40: #{dit_model.25} parent=31 // pred_fallthru
        _
      %p356 = scmp.lt.s32.totalorder %s20, 1
      %s357 = scalar_select %p356, %s20, 1
      %p358 = scmp.lt.s32.totalorder %s21, 0
      %s359 = scalar_select %p358, %s21, 0
      %p360 = scmp.lt.s32.totalorder %s22, 0
      %s361 = scalar_select %p360, %s22, 0
      %s362 = sadd.s32 %s361, %s359
      %s363 = sadd.s32 %s362, %s357
      %s364 = smul.addr %s363, 8
      %s365 = scalar_lea.vmem %s3, %s364
      // Predicated region
      $region41: #{dit_model.25} parent=31 // pred_check
        %p366 = pneg %p146
      $region42: #{dit_model.25} parent=31 // pred_check_branch
        %368 = sbr.rel (%p366) target = $region44
      $region43: #{dit_model.25} parent=31 // pred_region
        _
      $region44: #{dit_model.25} parent=31 // pred_fallthru
        _
    $region32: #{dit_model.25} parent=5 // pred_fallthru
      _
    %p369 = scmp.le.s32.totalorder 2, %s9
    // Predicated region
    $region45: #{dit_model.25} parent=5 // pred_check
      %p370 = pneg %p369
    $region46: #{dit_model.25} parent=5 // pred_check_branch
      %372 = sbr.rel (%p370) target = $region48
    $region47: #{dit_model.25} parent=5 // pred_region
      %s373 = ssub.s32 %s9, 2
      // Predicated region
      $region49: #{dit_model.25} parent=47 // pred_check
        %p374 = pneg %p152
      $region50: #{dit_model.25} parent=47 // pred_check_branch
        %376 = sbr.rel (%p374) target = $region52
      $region51: #{dit_model.25} parent=47 // pred_region
        %p377 = scmp.lt.s32.totalorder %s24, 1
        %s378 = scalar_select %p377, %s24, 1
        %p379 = scmp.lt.s32.totalorder %s25, 0
        %s380 = scalar_select %p379, %s25, 0
        %p381 = scmp.lt.s32.totalorder %s26, 0
        %s382 = scalar_select %p381, %s26, 0
        %s383 = sadd.s32 %s382, %s380
        %s384 = sadd.s32 %s383, %s378
        %s385 = smul.addr %s384, 8
        %s386 = scalar_lea.vmem %s3, %s385
      $region52: #{dit_model.25} parent=47 // pred_fallthru
        _
    $region48: #{dit_model.25} parent=5 // pred_fallthru
      _
  $region6: #{dit_model.25} parent=0 // loop_footer
    %s13 = sadd.s32 1, %s9
  $region7: #{dit_model.25} parent=0 // loop_footer_branch
    %8 = sbr.rel target = $region3
  $region8: #{dit_model.25} parent=0 // loop_exit
    _

// kernel: dit_model.27
$region0: #{dit_model.27}
  #allocation0 [shape = 'u32[]', space=smem, size = 0x4, offset = 0x4, fixed_abs, tag = 'smem constant byte address 0x4 - core index']
  #allocation1 [shape = 'u32[144,128]{1,0:T(1,128)}', space=vmem, size = 0x12000, scoped, tag = 'internal scratch']
  %s0 = inlined_call_operand.vmem [shape: f32[2,8,32], index: 0, kind: input, shape index: {}]
  %s1 = inlined_call_operand.vmem [shape: f32[2,1,32], index: 1, kind: input, shape index: {}]
  %s2 = inlined_call_operand.vmem [shape: f32[2,1,32], index: 2, kind: input, shape index: {}]
  %s3 = inlined_call_operand.vmem [shape: f32[32,96], index: 3, kind: input, shape index: {}]
  %s4 = inlined_call_operand.vmem [shape: f32[1,96], index: 4, kind: input, shape index: {}]
  %s5 = inlined_call_operand.vmem [shape: f32[2,8,96], index: 5, kind: output, shape index: {}]
  %s6 = sld [smem:[#allocation0]]
  $region53: #{dit_model.27} parent=0
    _
  %s8 = ssub.s32 1, %s6
  %s9 = scalar_select 0, %s8, %s6
  loop: start=0, step=1, limit=4
  $region2: #{dit_model.27} parent=0 // loop_pre_header
    _
  $region3: #{dit_model.27} parent=0 // loop_header
    %s11 = sphi 0, %s15
    %p12 = scmp.ge.s32.totalorder %s11, 4
    %s18 = sphi 0, %s37
    %s19 = sphi 0, %s33
    %s20 = sphi 0, %s29
    %s21 = sphi 0, %s18
    %s22 = sphi 0, %s19
    %s23 = sphi 0, %s20
    %s24 = sphi 0, %s21
    %s25 = sphi 0, %s22
    %s26 = sphi 0, %s23
    %s42 = sphi 0, %s44
    %s45 = sphi 0, %s42
    %s46 = sphi 0, %s45
    %s62 = sphi 0, %s46
    %s68 = sphi 0, %s70
    %s71 = sphi 0, %s68
    %s72 = sphi 0, %s71
    %s88 = sphi 0, %s72
    %s94 = sphi 0, %s96
    %s97 = sphi 0, %s94
    %s98 = sphi 0, %s97
    %s114 = sphi 0, %s98
    %s120 = sphi 0, %s122
    %s123 = sphi 0, %s120
    %s124 = sphi 0, %s123
    %s140 = sphi 0, %s124
    %s146 = sphi 0, %s148
    %s149 = sphi 0, %s146
    %s150 = sphi 0, %s149
    %s166 = sphi 0, %s150
    %s176 = sphi 0, %s178
    %s179 = sphi 0, %s176
    %s180 = sphi 0, %s179
    %s196 = sphi 0, %s180
  $region4: #{dit_model.27} parent=0 // loop_header_branch
    %14 = sbr.rel (%p12) target = $region8
  $region5: #{dit_model.27} parent=0 // loop_body
    %s16 = ssub.s32 %s11, 1
    %s17 = ssub.s32 %s11, 2
    %s27 = sadd.s32 1, %s20
    %p28 = scmp.ge.s32.totalorder %s27, 1
    %s29 = scalar_select %p28, 0, %s27
    %s30 = sadd.s32 1, %s19
    %s31 = scalar_select %p28, %s30, %s19
    %p32 = scmp.ge.s32.totalorder %s31, 1
    %s33 = scalar_select %p32, 0, %s31
    %s34 = sadd.s32 1, %s18
    %s35 = scalar_select %p32, %s34, %s18
    %p36 = scmp.ge.s32.totalorder %s35, 2
    %s37 = scalar_select %p36, 0, %s35
    %s38 = ssub.s32 %s18, %s37
    %s39 = ssub.s32 %s19, %s33
    %s40 = sor.u32 %s38, %s39
    %p41 = scmp.eq.s32.totalorder %s40, 0
    %s43 = sadd.s32 %s42, 1
    %s44 = scalar_select %p41, %s42, %s43
    %p47 = pneg %p41
    %p48 = scmp.eq.s32.totalorder %s11, 1
    %p49 = por %p47, %p48
    %p50 = scmp.ne.s32.totalorder %s42, %s45
    %p51 = scmp.eq.s32.totalorder %s11, 0
    %p52 = por %p50, %p51
    %p53 = scmp.ne.s32.totalorder %s42, %s45
    %p54 = scmp.eq.s32.totalorder %s16, 1
    %p55 = por %p53, %p54
    %p56 = scmp.ne.s32.totalorder %s45, %s46
    %p57 = scmp.eq.s32.totalorder %s16, 0
    %p58 = por %p56, %p57
    %p59 = scmp.ne.s32.totalorder %s45, %s46
    %p60 = scmp.eq.s32.totalorder %s17, 1
    %p61 = por %p59, %p60
    %p63 = scmp.ne.s32.totalorder %s46, %s62
    %p64 = scmp.eq.s32.totalorder %s17, 0
    %p65 = por %p63, %p64
    %s66 = ssub.s32 %s18, %s37
    %p67 = scmp.eq.s32.totalorder %s66, 0
    %s69 = sadd.s32 %s68, 1
    %s70 = scalar_select %p67, %s68, %s69
    %p73 = pneg %p67
    %p74 = scmp.eq.s32.totalorder %s11, 1
    %p75 = por %p73, %p74
    %p76 = scmp.ne.s32.totalorder %s68, %s71
    %p77 = scmp.eq.s32.totalorder %s11, 0
    %p78 = por %p76, %p77
    %p79 = scmp.ne.s32.totalorder %s68, %s71
    %p80 = scmp.eq.s32.totalorder %s16, 1
    %p81 = por %p79, %p80
    %p82 = scmp.ne.s32.totalorder %s71, %s72
    %p83 = scmp.eq.s32.totalorder %s16, 0
    %p84 = por %p82, %p83
    %p85 = scmp.ne.s32.totalorder %s71, %s72
    %p86 = scmp.eq.s32.totalorder %s17, 1
    %p87 = por %p85, %p86
    %p89 = scmp.ne.s32.totalorder %s72, %s88
    %p90 = scmp.eq.s32.totalorder %s17, 0
    %p91 = por %p89, %p90
    %s92 = ssub.s32 %s18, %s37
    %p93 = scmp.eq.s32.totalorder %s92, 0
    %s95 = sadd.s32 %s94, 1
    %s96 = scalar_select %p93, %s94, %s95
    %p99 = pneg %p93
    %p100 = scmp.eq.s32.totalorder %s11, 1
    %p101 = por %p99, %p100
    %p102 = scmp.ne.s32.totalorder %s94, %s97
    %p103 = scmp.eq.s32.totalorder %s11, 0
    %p104 = por %p102, %p103
    %p105 = scmp.ne.s32.totalorder %s94, %s97
    %p106 = scmp.eq.s32.totalorder %s16, 1
    %p107 = por %p105, %p106
    %p108 = scmp.ne.s32.totalorder %s97, %s98
    %p109 = scmp.eq.s32.totalorder %s16, 0
    %p110 = por %p108, %p109
    %p111 = scmp.ne.s32.totalorder %s97, %s98
    %p112 = scmp.eq.s32.totalorder %s17, 1
    %p113 = por %p111, %p112
    %p115 = scmp.ne.s32.totalorder %s98, %s114
    %p116 = scmp.eq.s32.totalorder %s17, 0
    %p117 = por %p115, %p116
    %s118 = ssub.s32 %s20, %s29
    %p119 = scmp.eq.s32.totalorder %s118, 0
    %s121 = sadd.s32 %s120, 1
    %s122 = scalar_select %p119, %s120, %s121
    %p125 = pneg %p119
    %p126 = scmp.eq.s32.totalorder %s11, 1
    %p127 = por %p125, %p126
    %p128 = scmp.ne.s32.totalorder %s120, %s123
    %p129 = scmp.eq.s32.totalorder %s11, 0
    %p130 = por %p128, %p129
    %p131 = scmp.ne.s32.totalorder %s120, %s123
    %p132 = scmp.eq.s32.totalorder %s16, 1
    %p133 = por %p131, %p132
    %p134 = scmp.ne.s32.totalorder %s123, %s124
    %p135 = scmp.eq.s32.totalorder %s16, 0
    %p136 = por %p134, %p135
    %p137 = scmp.ne.s32.totalorder %s123, %s124
    %p138 = scmp.eq.s32.totalorder %s17, 1
    %p139 = por %p137, %p138
    %p141 = scmp.ne.s32.totalorder %s124, %s140
    %p142 = scmp.eq.s32.totalorder %s17, 0
    %p143 = por %p141, %p142
    %s144 = ssub.s32 %s20, %s29
    %p145 = scmp.eq.s32.totalorder %s144, 0
    %s147 = sadd.s32 %s146, 1
    %s148 = scalar_select %p145, %s146, %s147
    %p151 = pneg %p145
    %p152 = scmp.eq.s32.totalorder %s11, 1
    %p153 = por %p151, %p152
    %p154 = scmp.ne.s32.totalorder %s146, %s149
    %p155 = scmp.eq.s32.totalorder %s11, 0
    %p156 = por %p154, %p155
    %p157 = scmp.ne.s32.totalorder %s146, %s149
    %p158 = scmp.eq.s32.totalorder %s16, 1
    %p159 = por %p157, %p158
    %p160 = scmp.ne.s32.totalorder %s149, %s150
    %p161 = scmp.eq.s32.totalorder %s16, 0
    %p162 = por %p160, %p161
    %p163 = scmp.ne.s32.totalorder %s149, %s150
    %p164 = scmp.eq.s32.totalorder %s17, 1
    %p165 = por %p163, %p164
    %p167 = scmp.ne.s32.totalorder %s150, %s166
    %p168 = scmp.eq.s32.totalorder %s17, 0
    %p169 = por %p167, %p168
    %s170 = ssub.s32 %s18, %s37
    %s171 = ssub.s32 %s19, %s33
    %s172 = sor.u32 %s170, %s171
    %s173 = ssub.s32 %s20, %s29
    %s174 = sor.u32 %s172, %s173
    %p175 = scmp.eq.s32.totalorder %s174, 0
    %s177 = sadd.s32 %s176, 1
    %s178 = scalar_select %p175, %s176, %s177
    %p181 = pneg %p175
    %p182 = scmp.eq.s32.totalorder %s11, 1
    %p183 = por %p181, %p182
    %p184 = scmp.ne.s32.totalorder %s176, %s179
    %p185 = scmp.eq.s32.totalorder %s11, 0
    %p186 = por %p184, %p185
    %p187 = scmp.ne.s32.totalorder %s176, %s179
    %p188 = scmp.eq.s32.totalorder %s16, 1
    %p189 = por %p187, %p188
    %p190 = scmp.ne.s32.totalorder %s179, %s180
    %p191 = scmp.eq.s32.totalorder %s16, 0
    %p192 = por %p190, %p191
    %p193 = scmp.ne.s32.totalorder %s179, %s180
    %p194 = scmp.eq.s32.totalorder %s17, 1
    %p195 = por %p193, %p194
    %p197 = scmp.ne.s32.totalorder %s180, %s196
    %p198 = scmp.eq.s32.totalorder %s17, 0
    %p199 = por %p197, %p198
    %p200 = scmp.le.s32.totalorder 1, %s11
    %p201 = scmp.lt.s32.totalorder %s11, 3
    %p202 = pnand %p200, %p201
    %p203 = pneg %p202
    // Predicated region
    $region9: #{dit_model.27} parent=5 // pred_check
      _
    $region10: #{dit_model.27} parent=5 // pred_check_branch
      %205 = sbr.rel (%p202) target = $region12
    $region11: #{dit_model.27} parent=5 // pred_region
      %s206 = ssub.s32 %s11, 1
      // Predicated region
      $region13: #{dit_model.27} parent=11 // pred_check
        %p207 = pneg %p136
      $region14: #{dit_model.27} parent=11 // pred_check_branch
        %209 = sbr.rel (%p207) target = $region16
      $region15: #{dit_model.27} parent=11 // pred_region
        %p210 = scmp.lt.s32.totalorder %s23, 0
        %s211 = scalar_select %p210, %s23, 0
        %s212 = smul.addr %s211, 8
        %s213 = scalar_lea.vmem %s3, %s212
      $region16: #{dit_model.27} parent=11 // pred_fallthru
        _
      // Predicated region
      $region17: #{dit_model.27} parent=11 // pred_check
        %p214 = pneg %p162
      $region18: #{dit_model.27} parent=11 // pred_check_branch
        %216 = sbr.rel (%p214) target = $region20
      $region19: #{dit_model.27} parent=11 // pred_region
        %p217 = scmp.lt.s32.totalorder %s23, 0
        %s218 = scalar_select %p217, %s23, 0
        %s219 = scalar_lea.vmem %s4, %s218
      $region20: #{dit_model.27} parent=11 // pred_fallthru
        _
    $region12: #{dit_model.27} parent=5 // pred_fallthru
      _
    %p220 = scmp.lt.s32.totalorder %s11, 2
    // Predicated region
    $region21: #{dit_model.27} parent=5 // pred_check
      %p221 = pneg %p220
    $region22: #{dit_model.27} parent=5 // pred_check_branch
      %223 = sbr.rel (%p221) target = $region24
    $region23: #{dit_model.27} parent=5 // pred_region
      // Predicated region
      $region25: #{dit_model.27} parent=23 // pred_check
        %p224 = pneg %p52
      $region26: #{dit_model.27} parent=23 // pred_check_branch
        %226 = sbr.rel (%p224) target = $region28
      $region27: #{dit_model.27} parent=23 // pred_region
        %p227 = scmp.lt.s32.totalorder %s18, 1
        %s228 = scalar_select %p227, %s18, 1
        %p229 = scmp.lt.s32.totalorder %s19, 0
        %s230 = scalar_select %p229, %s19, 0
        %s231 = sadd.s32 %s230, %s228
        %s232 = smul.addr %s231, 8
        %s233 = scalar_lea.vmem %s0, %s232
      $region28: #{dit_model.27} parent=23 // pred_fallthru
        _
      // Predicated region
      $region29: #{dit_model.27} parent=23 // pred_check
        %p234 = pneg %p78
      $region30: #{dit_model.27} parent=23 // pred_check_branch
        %236 = sbr.rel (%p234) target = $region32
      $region31: #{dit_model.27} parent=23 // pred_region
        %p237 = scmp.lt.s32.totalorder %s18, 1
        %s238 = scalar_select %p237, %s18, 1
        %s239 = scalar_lea.vmem %s1, %s238
      $region32: #{dit_model.27} parent=23 // pred_fallthru
        _
      // Predicated region
      $region33: #{dit_model.27} parent=23 // pred_check
        %p240 = pneg %p104
      $region34: #{dit_model.27} parent=23 // pred_check_branch
        %242 = sbr.rel (%p240) target = $region36
      $region35: #{dit_model.27} parent=23 // pred_region
        %p243 = scmp.lt.s32.totalorder %s18, 1
        %s244 = scalar_select %p243, %s18, 1
        %s245 = scalar_lea.vmem %s2, %s244
      $region36: #{dit_model.27} parent=23 // pred_fallthru
        _
    $region24: #{dit_model.27} parent=5 // pred_fallthru
      _
    %p246 = scmp.le.s32.totalorder 1, %s11
    %p247 = scmp.lt.s32.totalorder %s11, 3
    %p248 = pnand %p246, %p247
    %p249 = pneg %p248
    // Predicated region
    $region37: #{dit_model.27} parent=5 // pred_check
      _
    $region38: #{dit_model.27} parent=5 // pred_check_branch
      %251 = sbr.rel (%p248) target = $region40
    $region39: #{dit_model.27} parent=5 // pred_region
      %s252 = ssub.s32 %s11, 1
      %p253 = scmp.lt.s32.totalorder %s21, 1
      %s254 = scalar_select %p253, %s21, 1
      %p255 = scmp.lt.s32.totalorder %s22, 0
      %s256 = scalar_select %p255, %s22, 0
      %s257 = sadd.s32 %s256, %s254
      %s258 = smul.addr %s257, 8
      %s259 = scalar_lea.vmem %s0, %s258
      %p260 = pneg %p58
      %p261 = pneg %p55
      %p262 = scmp.lt.s32.totalorder %s21, 1
      %s263 = scalar_select %p262, %s21, 1
      %s264 = scalar_lea.vmem %s1, %s263
      %p265 = pneg %p84
      %p266 = pneg %p81
      %p267 = scmp.lt.s32.totalorder %s21, 1
      %s268 = scalar_select %p267, %s21, 1
      %s269 = scalar_lea.vmem %s2, %s268
      %p270 = pneg %p110
      %p271 = pneg %p107
      %p272 = scmp.lt.s32.totalorder %s23, 0
      %s273 = scalar_select %p272, %s23, 0
      %s274 = smul.addr %s273, 8
      %s275 = scalar_lea.vmem %s3, %s274
      %p276 = pneg %p136
      %p277 = pneg %p133
      %p278 = scmp.lt.s32.totalorder %s23, 0
      %s279 = scalar_select %p278, %s23, 0
      %s280 = scalar_lea.vmem %s4, %s279
      %p281 = pneg %p162
      %p282 = pneg %p159
      %p283 = pneg %p192
      %p284 = pneg %p189
      %p285 = scmp.lt.s32.totalorder %s21, 1
      %s286 = scalar_select %p285, %s21, 1
      %p287 = scmp.lt.s32.totalorder %s22, 0
      %s288 = scalar_select %p287, %s22, 0
      %p289 = scmp.lt.s32.totalorder %s23, 0
      %s290 = scalar_select %p289, %s23, 0
      %s291 = sadd.s32 %s290, %s288
      %s292 = sadd.s32 %s291, %s286
      %s293 = smul.addr %s292, 8
      %s294 = scalar_lea.vmem %s5, %s293
      %p295 = scmp.lt.s32.totalorder %s21, 1
      %s296 = scalar_select %p295, %s21, 1
      %p297 = scmp.lt.s32.totalorder %s22, 0
      %s298 = scalar_select %p297, %s22, 0
      %s299 = sadd.s32 %s298, %s296
      %s300 = smul.addr %s299, 8
      %s301 = scalar_lea.vmem %s0, %s300
      %p302 = scmp.lt.s32.totalorder %s21, 1
      %s303 = scalar_select %p302, %s21, 1
      %s304 = scalar_lea.vmem %s1, %s303
      %p305 = scmp.lt.s32.totalorder %s21, 1
      %s306 = scalar_select %p305, %s21, 1
      %s307 = scalar_lea.vmem %s2, %s306
      %p308 = scmp.lt.s32.totalorder %s23, 0
      %s309 = scalar_select %p308, %s23, 0
      %s310 = smul.addr %s309, 8
      %s311 = scalar_lea.vmem %s3, %s310
      %p312 = scmp.lt.s32.totalorder %s23, 0
      %s313 = scalar_select %p312, %s23, 0
      %s314 = scalar_lea.vmem %s4, %s313
      %p315 = scmp.lt.s32.totalorder %s21, 1
      %s316 = scalar_select %p315, %s21, 1
      %p317 = scmp.lt.s32.totalorder %s22, 0
      %s318 = scalar_select %p317, %s22, 0
      %p319 = scmp.lt.s32.totalorder %s23, 0
      %s320 = scalar_select %p319, %s23, 0
      %s321 = sadd.s32 %s320, %s318
      %s322 = sadd.s32 %s321, %s316
      %s323 = smul.addr %s322, 8
      %s324 = scalar_lea.vmem %s5, %s323
      %v326 = vld [vmem:[%s301] sm:$0xff]
      %vm327 = vcmask 261120
      %v328 = vsel %vm327, %v326, 0.0
      %329 = vadd.xlane.f32.xlu0 %v328
      %v330 = vpop.xlane.xlu0 %329
      %v331 = vrcp.pop 32.0
      %v332 = vmul.f32 %v330, %v331
      %v333 = vsub.f32 %v326, %v332
      %v334 = vmul.f32 %v333, %v333
      %v335 = vsel %vm327, %v334, 0.0
      %336 = vadd.xlane.f32.xlu0 %v335
      %v337 = vpop.xlane.xlu0 %336
      %v338 = vmul.f32 %v337, %v331
      %v339 = vadd.f32 %v338, 1e-05
      %v340 = vrsqrt.pop %v339
      %v341 = vmul.f32 %v333, %v340
      %v342 = vld [vmem:[%s304] sm:$0x1]
      %v343 = vadd.f32 %v342, 1.0
      %v345 = vlaneseq
      %v346 = vshrl.u32 %v345, 7
      %v347 = vsub.s32 0, %v346
      %v348 = vrot.slane %v343, %v347
      %v350 = vmul.f32 %v341, %v348
      %v351 = vld [vmem:[%s307] sm:$0x1]
      %v353 = vlaneseq
      %v354 = vshrl.u32 %v353, 7
      %v355 = vsub.s32 0, %v354
      %v356 = vrot.slane %v351, %v355
      %v358 = vadd.f32 %v350, %v356
      %v359 = vpack.c.bf16 %v358, %v358
      %v360 = vld [vmem:[%s311] sm:$0xff]
      %v361 = vld [vmem:[%s311 + $0x8] sm:$0xff]
      %v362 = vld [vmem:[%s311 + $0x10] sm:$0xff]
      %v363 = vld [vmem:[%s311 + $0x18] sm:$0xff]
      %v364 = vpack.c.bf16 %v361, %v360
      %v365 = vpack.c.bf16 %v363, %v362
      %v366 = vld [vmem:[%s314] sm:$0x1]
      %v368 = vlaneseq
      %v369 = vshrl.u32 %v368, 7
      %v370 = vsub.s32 0, %v369
      %v371 = vrot.slane %v366, %v370
      %v374 = vsel %vm327, %v359, 0
      %376 = vmatprep.subr.bf16.mxu0 0
      %377 = vmatpush1.bf16.msra.mxu0 %v364
      %378 = vmatprep.subr.bf16.mxu0 0
      %379 = vmatpush1.bf16.msra.mxu0 %v365
      %380 = vmatprep.subr.bf16.mxu0 0
      %381 = vmatpush1.bf16.msra.mxu0 0
      %382 = vmatprep.subr.bf16.mxu0 0
      %383 = vmatpush1.bf16.msra.mxu0 0
      %384 = vmatprep.subr.bf16.mxu0 0
      %385 = vmatpush1.bf16.msra.mxu0 0
      %386 = vmatprep.subr.bf16.mxu0 0
      %387 = vmatpush1.bf16.msra.mxu0 0
      %388 = vmatprep.subr.bf16.mxu0 0
      %389 = vmatpush1.bf16.msra.mxu0 0
      %390 = vmatprep.subr.bf16.mxu0 0
      %391 = vmatpush1.bf16.msra.mxu0 0
      %392 = vmatprep.subr.bf16.mxu0 0
      %393 = vmatpush1.bf16.msra.mxu0 0
      %394 = vmatprep.subr.bf16.mxu0 0
      %395 = vmatpush1.bf16.msra.mxu0 0
      %396 = vmatprep.subr.bf16.mxu0 0
      %397 = vmatpush1.bf16.msra.mxu0 0
      %398 = vmatprep.subr.bf16.mxu0 0
      %399 = vmatpush1.bf16.msra.mxu0 0
      %400 = vmatprep.subr.bf16.mxu0 0
      %401 = vmatpush1.bf16.msra.mxu0 0
      %402 = vmatprep.subr.bf16.mxu0 0
      %403 = vmatpush1.bf16.msra.mxu0 0
      %404 = vmatprep.subr.bf16.mxu0 0
      %405 = vmatpush1.bf16.msra.mxu0 0
      %406 = vmatprep.subr.bf16.mxu0 0
      %407 = vmatpush1.bf16.msra.mxu0 0
      %408 = vmatprep.mubr.bf16.mxu0 0
      %409 = vmatmul.mubr.bf16.gmra.mrb[0].mxu0 %v374
      %v410 = vpop.f32.mrb[0].mxu0
      %v411 = vadd.f32 %v371, %v410
      %v412 = vpop.f32.mrb[0].mxu0
      %v413 = vpop.f32.mrb[0].mxu0
      %v414 = vpop.f32.mrb[0].mxu0
      %415 = vdwg.mxu0
      %vm416 = vcmask 785408
      %417 = vst.msk [vmem:[%s324] sm:$0xff] %vm416, %v411
      %p418 = scmp.lt.s32.totalorder %s21, 1
      %s419 = scalar_select %p418, %s21, 1
      %p420 = scmp.lt.s32.totalorder %s22, 0
      %s421 = scalar_select %p420, %s22, 0
      %p422 = scmp.lt.s32.totalorder %s23, 0
      %s423 = scalar_select %p422, %s23, 0
      %s424 = sadd.s32 %s423, %s421
      %s425 = sadd.s32 %s424, %s419
      %s426 = smul.addr %s425, 8
      %s427 = scalar_lea.vmem %s5, %s426
      // Predicated region
      $region41: #{dit_model.27} parent=39 // pred_check
        %p428 = pneg %p189
      $region42: #{dit_model.27} parent=39 // pred_check_branch
        %430 = sbr.rel (%p428) target = $region44
      $region43: #{dit_model.27} parent=39 // pred_region
        _
      $region44: #{dit_model.27} parent=39 // pred_fallthru
        _
    $region40: #{dit_model.27} parent=5 // pred_fallthru
      _
    %p431 = scmp.le.s32.totalorder 2, %s11
    // Predicated region
    $region45: #{dit_model.27} parent=5 // pred_check
      %p432 = pneg %p431
    $region46: #{dit_model.27} parent=5 // pred_check_branch
      %434 = sbr.rel (%p432) target = $region48
    $region47: #{dit_model.27} parent=5 // pred_region
      %s435 = ssub.s32 %s11, 2
      // Predicated region
      $region49: #{dit_model.27} parent=47 // pred_check
        %p436 = pneg %p195
      $region50: #{dit_model.27} parent=47 // pred_check_branch
        %438 = sbr.rel (%p436) target = $region52
      $region51: #{dit_model.27} parent=47 // pred_region
        %p439 = scmp.lt.s32.totalorder %s24, 1
        %s440 = scalar_select %p439, %s24, 1
        %p441 = scmp.lt.s32.totalorder %s25, 0
        %s442 = scalar_select %p441, %s25, 0
        %p443 = scmp.lt.s32.totalorder %s26, 0
        %s444 = scalar_select %p443, %s26, 0
        %s445 = sadd.s32 %s444, %s442
        %s446 = sadd.s32 %s445, %s440
        %s447 = smul.addr %s446, 8
        %s448 = scalar_lea.vmem %s5, %s447
      $region52: #{dit_model.27} parent=47 // pred_fallthru
        _
    $region48: #{dit_model.27} parent=5 // pred_fallthru
      _
  $region6: #{dit_model.27} parent=0 // loop_footer
    %s15 = sadd.s32 1, %s11
  $region7: #{dit_model.27} parent=0 // loop_footer_branch
    %10 = sbr.rel target = $region3
  $region8: #{dit_model.27} parent=0 // loop_exit
    _

// kernel: dit_model.26
$region0: #{dit_model.26}
  #allocation0 [shape = 'u32[]', space=smem, size = 0x4, offset = 0x4, fixed_abs, tag = 'smem constant byte address 0x4 - core index']
  #allocation1 [shape = 'u32[144,128]{1,0:T(1,128)}', space=vmem, size = 0x12000, scoped, tag = 'internal scratch']
  %s0 = inlined_call_operand.vmem [shape: f32[2,16,32], index: 0, kind: input, shape index: {}]
  %s1 = inlined_call_operand.vmem [shape: f32[2,1,32], index: 1, kind: input, shape index: {}]
  %s2 = inlined_call_operand.vmem [shape: f32[2,1,32], index: 2, kind: input, shape index: {}]
  %s3 = inlined_call_operand.vmem [shape: f32[32,96], index: 3, kind: input, shape index: {}]
  %s4 = inlined_call_operand.vmem [shape: f32[1,96], index: 4, kind: input, shape index: {}]
  %s5 = inlined_call_operand.vmem [shape: f32[2,16,96], index: 5, kind: output, shape index: {}]
  %s6 = sld [smem:[#allocation0]]
  $region53: #{dit_model.26} parent=0
    _
  %s8 = ssub.s32 1, %s6
  %s9 = scalar_select 0, %s8, %s6
  loop: start=0, step=1, limit=4
  $region2: #{dit_model.26} parent=0 // loop_pre_header
    _
  $region3: #{dit_model.26} parent=0 // loop_header
    %s11 = sphi 0, %s15
    %p12 = scmp.ge.s32.totalorder %s11, 4
    %s18 = sphi 0, %s37
    %s19 = sphi 0, %s33
    %s20 = sphi 0, %s29
    %s21 = sphi 0, %s18
    %s22 = sphi 0, %s19
    %s23 = sphi 0, %s20
    %s24 = sphi 0, %s21
    %s25 = sphi 0, %s22
    %s26 = sphi 0, %s23
    %s42 = sphi 0, %s44
    %s45 = sphi 0, %s42
    %s46 = sphi 0, %s45
    %s62 = sphi 0, %s46
    %s68 = sphi 0, %s70
    %s71 = sphi 0, %s68
    %s72 = sphi 0, %s71
    %s88 = sphi 0, %s72
    %s94 = sphi 0, %s96
    %s97 = sphi 0, %s94
    %s98 = sphi 0, %s97
    %s114 = sphi 0, %s98
    %s120 = sphi 0, %s122
    %s123 = sphi 0, %s120
    %s124 = sphi 0, %s123
    %s140 = sphi 0, %s124
    %s146 = sphi 0, %s148
    %s149 = sphi 0, %s146
    %s150 = sphi 0, %s149
    %s166 = sphi 0, %s150
    %s176 = sphi 0, %s178
    %s179 = sphi 0, %s176
    %s180 = sphi 0, %s179
    %s196 = sphi 0, %s180
  $region4: #{dit_model.26} parent=0 // loop_header_branch
    %14 = sbr.rel (%p12) target = $region8
  $region5: #{dit_model.26} parent=0 // loop_body
    %s16 = ssub.s32 %s11, 1
    %s17 = ssub.s32 %s11, 2
    %s27 = sadd.s32 1, %s20
    %p28 = scmp.ge.s32.totalorder %s27, 1
    %s29 = scalar_select %p28, 0, %s27
    %s30 = sadd.s32 1, %s19
    %s31 = scalar_select %p28, %s30, %s19
    %p32 = scmp.ge.s32.totalorder %s31, 1
    %s33 = scalar_select %p32, 0, %s31
    %s34 = sadd.s32 1, %s18
    %s35 = scalar_select %p32, %s34, %s18
    %p36 = scmp.ge.s32.totalorder %s35, 2
    %s37 = scalar_select %p36, 0, %s35
    %s38 = ssub.s32 %s18, %s37
    %s39 = ssub.s32 %s19, %s33
    %s40 = sor.u32 %s38, %s39
    %p41 = scmp.eq.s32.totalorder %s40, 0
    %s43 = sadd.s32 %s42, 1
    %s44 = scalar_select %p41, %s42, %s43
    %p47 = pneg %p41
    %p48 = scmp.eq.s32.totalorder %s11, 1
    %p49 = por %p47, %p48
    %p50 = scmp.ne.s32.totalorder %s42, %s45
    %p51 = scmp.eq.s32.totalorder %s11, 0
    %p52 = por %p50, %p51
    %p53 = scmp.ne.s32.totalorder %s42, %s45
    %p54 = scmp.eq.s32.totalorder %s16, 1
    %p55 = por %p53, %p54
    %p56 = scmp.ne.s32.totalorder %s45, %s46
    %p57 = scmp.eq.s32.totalorder %s16, 0
    %p58 = por %p56, %p57
    %p59 = scmp.ne.s32.totalorder %s45, %s46
    %p60 = scmp.eq.s32.totalorder %s17, 1
    %p61 = por %p59, %p60
    %p63 = scmp.ne.s32.totalorder %s46, %s62
    %p64 = scmp.eq.s32.totalorder %s17, 0
    %p65 = por %p63, %p64
    %s66 = ssub.s32 %s18, %s37
    %p67 = scmp.eq.s32.totalorder %s66, 0
    %s69 = sadd.s32 %s68, 1
    %s70 = scalar_select %p67, %s68, %s69
    %p73 = pneg %p67
    %p74 = scmp.eq.s32.totalorder %s11, 1
    %p75 = por %p73, %p74
    %p76 = scmp.ne.s32.totalorder %s68, %s71
    %p77 = scmp.eq.s32.totalorder %s11, 0
    %p78 = por %p76, %p77
    %p79 = scmp.ne.s32.totalorder %s68, %s71
    %p80 = scmp.eq.s32.totalorder %s16, 1
    %p81 = por %p79, %p80
    %p82 = scmp.ne.s32.totalorder %s71, %s72
    %p83 = scmp.eq.s32.totalorder %s16, 0
    %p84 = por %p82, %p83
    %p85 = scmp.ne.s32.totalorder %s71, %s72
    %p86 = scmp.eq.s32.totalorder %s17, 1
    %p87 = por %p85, %p86
    %p89 = scmp.ne.s32.totalorder %s72, %s88
    %p90 = scmp.eq.s32.totalorder %s17, 0
    %p91 = por %p89, %p90
    %s92 = ssub.s32 %s18, %s37
    %p93 = scmp.eq.s32.totalorder %s92, 0
    %s95 = sadd.s32 %s94, 1
    %s96 = scalar_select %p93, %s94, %s95
    %p99 = pneg %p93
    %p100 = scmp.eq.s32.totalorder %s11, 1
    %p101 = por %p99, %p100
    %p102 = scmp.ne.s32.totalorder %s94, %s97
    %p103 = scmp.eq.s32.totalorder %s11, 0
    %p104 = por %p102, %p103
    %p105 = scmp.ne.s32.totalorder %s94, %s97
    %p106 = scmp.eq.s32.totalorder %s16, 1
    %p107 = por %p105, %p106
    %p108 = scmp.ne.s32.totalorder %s97, %s98
    %p109 = scmp.eq.s32.totalorder %s16, 0
    %p110 = por %p108, %p109
    %p111 = scmp.ne.s32.totalorder %s97, %s98
    %p112 = scmp.eq.s32.totalorder %s17, 1
    %p113 = por %p111, %p112
    %p115 = scmp.ne.s32.totalorder %s98, %s114
    %p116 = scmp.eq.s32.totalorder %s17, 0
    %p117 = por %p115, %p116
    %s118 = ssub.s32 %s20, %s29
    %p119 = scmp.eq.s32.totalorder %s118, 0
    %s121 = sadd.s32 %s120, 1
    %s122 = scalar_select %p119, %s120, %s121
    %p125 = pneg %p119
    %p126 = scmp.eq.s32.totalorder %s11, 1
    %p127 = por %p125, %p126
    %p128 = scmp.ne.s32.totalorder %s120, %s123
    %p129 = scmp.eq.s32.totalorder %s11, 0
    %p130 = por %p128, %p129
    %p131 = scmp.ne.s32.totalorder %s120, %s123
    %p132 = scmp.eq.s32.totalorder %s16, 1
    %p133 = por %p131, %p132
    %p134 = scmp.ne.s32.totalorder %s123, %s124
    %p135 = scmp.eq.s32.totalorder %s16, 0
    %p136 = por %p134, %p135
    %p137 = scmp.ne.s32.totalorder %s123, %s124
    %p138 = scmp.eq.s32.totalorder %s17, 1
    %p139 = por %p137, %p138
    %p141 = scmp.ne.s32.totalorder %s124, %s140
    %p142 = scmp.eq.s32.totalorder %s17, 0
    %p143 = por %p141, %p142
    %s144 = ssub.s32 %s20, %s29
    %p145 = scmp.eq.s32.totalorder %s144, 0
    %s147 = sadd.s32 %s146, 1
    %s148 = scalar_select %p145, %s146, %s147
    %p151 = pneg %p145
    %p152 = scmp.eq.s32.totalorder %s11, 1
    %p153 = por %p151, %p152
    %p154 = scmp.ne.s32.totalorder %s146, %s149
    %p155 = scmp.eq.s32.totalorder %s11, 0
    %p156 = por %p154, %p155
    %p157 = scmp.ne.s32.totalorder %s146, %s149
    %p158 = scmp.eq.s32.totalorder %s16, 1
    %p159 = por %p157, %p158
    %p160 = scmp.ne.s32.totalorder %s149, %s150
    %p161 = scmp.eq.s32.totalorder %s16, 0
    %p162 = por %p160, %p161
    %p163 = scmp.ne.s32.totalorder %s149, %s150
    %p164 = scmp.eq.s32.totalorder %s17, 1
    %p165 = por %p163, %p164
    %p167 = scmp.ne.s32.totalorder %s150, %s166
    %p168 = scmp.eq.s32.totalorder %s17, 0
    %p169 = por %p167, %p168
    %s170 = ssub.s32 %s18, %s37
    %s171 = ssub.s32 %s19, %s33
    %s172 = sor.u32 %s170, %s171
    %s173 = ssub.s32 %s20, %s29
    %s174 = sor.u32 %s172, %s173
    %p175 = scmp.eq.s32.totalorder %s174, 0
    %s177 = sadd.s32 %s176, 1
    %s178 = scalar_select %p175, %s176, %s177
    %p181 = pneg %p175
    %p182 = scmp.eq.s32.totalorder %s11, 1
    %p183 = por %p181, %p182
    %p184 = scmp.ne.s32.totalorder %s176, %s179
    %p185 = scmp.eq.s32.totalorder %s11, 0
    %p186 = por %p184, %p185
    %p187 = scmp.ne.s32.totalorder %s176, %s179
    %p188 = scmp.eq.s32.totalorder %s16, 1
    %p189 = por %p187, %p188
    %p190 = scmp.ne.s32.totalorder %s179, %s180
    %p191 = scmp.eq.s32.totalorder %s16, 0
    %p192 = por %p190, %p191
    %p193 = scmp.ne.s32.totalorder %s179, %s180
    %p194 = scmp.eq.s32.totalorder %s17, 1
    %p195 = por %p193, %p194
    %p197 = scmp.ne.s32.totalorder %s180, %s196
    %p198 = scmp.eq.s32.totalorder %s17, 0
    %p199 = por %p197, %p198
    %p200 = scmp.le.s32.totalorder 1, %s11
    %p201 = scmp.lt.s32.totalorder %s11, 3
    %p202 = pnand %p200, %p201
    %p203 = pneg %p202
    // Predicated region
    $region9: #{dit_model.26} parent=5 // pred_check
      _
    $region10: #{dit_model.26} parent=5 // pred_check_branch
      %205 = sbr.rel (%p202) target = $region12
    $region11: #{dit_model.26} parent=5 // pred_region
      %s206 = ssub.s32 %s11, 1
      // Predicated region
      $region13: #{dit_model.26} parent=11 // pred_check
        %p207 = pneg %p136
      $region14: #{dit_model.26} parent=11 // pred_check_branch
        %209 = sbr.rel (%p207) target = $region16
      $region15: #{dit_model.26} parent=11 // pred_region
        %p210 = scmp.lt.s32.totalorder %s23, 0
        %s211 = scalar_select %p210, %s23, 0
        %s212 = smul.addr %s211, 8
        %s213 = scalar_lea.vmem %s3, %s212
      $region16: #{dit_model.26} parent=11 // pred_fallthru
        _
      // Predicated region
      $region17: #{dit_model.26} parent=11 // pred_check
        %p214 = pneg %p162
      $region18: #{dit_model.26} parent=11 // pred_check_branch
        %216 = sbr.rel (%p214) target = $region20
      $region19: #{dit_model.26} parent=11 // pred_region
        %p217 = scmp.lt.s32.totalorder %s23, 0
        %s218 = scalar_select %p217, %s23, 0
        %s219 = scalar_lea.vmem %s4, %s218
      $region20: #{dit_model.26} parent=11 // pred_fallthru
        _
    $region12: #{dit_model.26} parent=5 // pred_fallthru
      _
    %p220 = scmp.lt.s32.totalorder %s11, 2
    // Predicated region
    $region21: #{dit_model.26} parent=5 // pred_check
      %p221 = pneg %p220
    $region22: #{dit_model.26} parent=5 // pred_check_branch
      %223 = sbr.rel (%p221) target = $region24
    $region23: #{dit_model.26} parent=5 // pred_region
      // Predicated region
      $region25: #{dit_model.26} parent=23 // pred_check
        %p224 = pneg %p52
      $region26: #{dit_model.26} parent=23 // pred_check_branch
        %226 = sbr.rel (%p224) target = $region28
      $region27: #{dit_model.26} parent=23 // pred_region
        %s227 = smul.u32 2, %s19
        %p228 = scmp.lt.s32.totalorder %s18, 1
        %s229 = scalar_select %p228, %s18, 1
        %p230 = scmp.lt.s32.totalorder %s227, 1
        %s231 = scalar_select %p230, %s227, 1
        %s232 = smul.addr %s229, 2
        %s233 = sadd.s32 %s231, %s232
        %s234 = smul.addr %s233, 8
        %s235 = scalar_lea.vmem %s0, %s234
        %s236 = smul.u32 2, %s19
      $region28: #{dit_model.26} parent=23 // pred_fallthru
        _
      // Predicated region
      $region29: #{dit_model.26} parent=23 // pred_check
        %p237 = pneg %p78
      $region30: #{dit_model.26} parent=23 // pred_check_branch
        %239 = sbr.rel (%p237) target = $region32
      $region31: #{dit_model.26} parent=23 // pred_region
        %p240 = scmp.lt.s32.totalorder %s18, 1
        %s241 = scalar_select %p240, %s18, 1
        %s242 = scalar_lea.vmem %s1, %s241
      $region32: #{dit_model.26} parent=23 // pred_fallthru
        _
      // Predicated region
      $region33: #{dit_model.26} parent=23 // pred_check
        %p243 = pneg %p104
      $region34: #{dit_model.26} parent=23 // pred_check_branch
        %245 = sbr.rel (%p243) target = $region36
      $region35: #{dit_model.26} parent=23 // pred_region
        %p246 = scmp.lt.s32.totalorder %s18, 1
        %s247 = scalar_select %p246, %s18, 1
        %s248 = scalar_lea.vmem %s2, %s247
      $region36: #{dit_model.26} parent=23 // pred_fallthru
        _
    $region24: #{dit_model.26} parent=5 // pred_fallthru
      _
    %p249 = scmp.le.s32.totalorder 1, %s11
    %p250 = scmp.lt.s32.totalorder %s11, 3
    %p251 = pnand %p249, %p250
    %p252 = pneg %p251
    // Predicated region
    $region37: #{dit_model.26} parent=5 // pred_check
      _
    $region38: #{dit_model.26} parent=5 // pred_check_branch
      %254 = sbr.rel (%p251) target = $region40
    $region39: #{dit_model.26} parent=5 // pred_region
      %s255 = ssub.s32 %s11, 1
      %s256 = smul.u32 2, %s22
      %p257 = scmp.lt.s32.totalorder %s21, 1
      %s258 = scalar_select %p257, %s21, 1
      %p259 = scmp.lt.s32.totalorder %s256, 1
      %s260 = scalar_select %p259, %s256, 1
      %s261 = smul.addr %s258, 2
      %s262 = sadd.s32 %s260, %s261
      %s263 = smul.addr %s262, 8
      %s264 = scalar_lea.vmem %s0, %s263
      %p265 = pneg %p58
      %p266 = pneg %p55
      %p267 = scmp.lt.s32.totalorder %s21, 1
      %s268 = scalar_select %p267, %s21, 1
      %s269 = scalar_lea.vmem %s1, %s268
      %p270 = pneg %p84
      %p271 = pneg %p81
      %p272 = scmp.lt.s32.totalorder %s21, 1
      %s273 = scalar_select %p272, %s21, 1
      %s274 = scalar_lea.vmem %s2, %s273
      %p275 = pneg %p110
      %p276 = pneg %p107
      %p277 = scmp.lt.s32.totalorder %s23, 0
      %s278 = scalar_select %p277, %s23, 0
      %s279 = smul.addr %s278, 8
      %s280 = scalar_lea.vmem %s3, %s279
      %p281 = pneg %p136
      %p282 = pneg %p133
      %p283 = scmp.lt.s32.totalorder %s23, 0
      %s284 = scalar_select %p283, %s23, 0
      %s285 = scalar_lea.vmem %s4, %s284
      %p286 = pneg %p162
      %p287 = pneg %p159
      %p288 = pneg %p192
      %p289 = pneg %p189
      %s290 = smul.u32 2, %s22
      %p291 = scmp.lt.s32.totalorder %s21, 1
      %s292 = scalar_select %p291, %s21, 1
      %p293 = scmp.lt.s32.totalorder %s290, 1
      %s294 = scalar_select %p293, %s290, 1
      %p295 = scmp.lt.s32.totalorder %s23, 0
      %s296 = scalar_select %p295, %s23, 0
      %s297 = sadd.s32 %s296, %s294
      %s298 = smul.addr %s292, 2
      %s299 = sadd.s32 %s297, %s298
      %s300 = smul.addr %s299, 8
      %s301 = scalar_lea.vmem %s5, %s300
      %s302 = smul.u32 2, %s22
      %p303 = scmp.lt.s32.totalorder %s21, 1
      %s304 = scalar_select %p303, %s21, 1
      %p305 = scmp.lt.s32.totalorder %s302, 1
      %s306 = scalar_select %p305, %s302, 1
      %s307 = smul.addr %s304, 2
      %s308 = sadd.s32 %s306, %s307
      %s309 = smul.addr %s308, 8
      %s310 = scalar_lea.vmem %s0, %s309
      %s311 = smul.u32 2, %s22
      %p312 = scmp.lt.s32.totalorder %s21, 1
      %s313 = scalar_select %p312, %s21, 1
      %s314 = scalar_lea.vmem %s1, %s313
      %p315 = scmp.lt.s32.totalorder %s21, 1
      %s316 = scalar_select %p315, %s21, 1
      %s317 = scalar_lea.vmem %s2, %s316
      %p318 = scmp.lt.s32.totalorder %s23, 0
      %s319 = scalar_select %p318, %s23, 0
      %s320 = smul.addr %s319, 8
      %s321 = scalar_lea.vmem %s3, %s320
      %p322 = scmp.lt.s32.totalorder %s23, 0
      %s323 = scalar_select %p322, %s23, 0
      %s324 = scalar_lea.vmem %s4, %s323
      %s325 = smul.u32 2, %s22
      %p326 = scmp.lt.s32.totalorder %s21, 1
      %s327 = scalar_select %p326, %s21, 1
      %p328 = scmp.lt.s32.totalorder %s325, 1
      %s329 = scalar_select %p328, %s325, 1
      %p330 = scmp.lt.s32.totalorder %s23, 0
      %s331 = scalar_select %p330, %s23, 0
      %s332 = sadd.s32 %s331, %s329
      %s333 = smul.addr %s327, 2
      %s334 = sadd.s32 %s332, %s333
      %s335 = smul.addr %s334, 8
      %s336 = scalar_lea.vmem %s5, %s335
      %s337 = smul.u32 2, %s22
      %v339 = vld [vmem:[%s310] sm:$0xff]
      %v340 = vld [vmem:[%s310 + $0x8] sm:$0xff]
      %vm341 = vcmask 261120
      %v342 = vsel %vm341, %v339, 0.0
      %343 = vadd.xlane.f32.xlu0 %v342
      %v344 = vpop.xlane.xlu0 %343
      %v345 = vsel %vm341, %v340, 0.0
      %346 = vadd.xlane.f32.xlu0 %v345
      %v347 = vpop.xlane.xlu0 %346
      %v348 = vrcp.pop 32.0
      %v349 = vmul.f32 %v344, %v348
      %v350 = vmul.f32 %v347, %v348
      %v351 = vsub.f32 %v339, %v349
      %v352 = vsub.f32 %v340, %v350
      %v353 = vmul.f32 %v351, %v351
      %v354 = vmul.f32 %v352, %v352
      %v355 = vsel %vm341, %v353, 0.0
      %356 = vadd.xlane.f32.xlu0 %v355
      %v357 = vpop.xlane.xlu0 %356
      %v358 = vsel %vm341, %v354, 0.0
      %359 = vadd.xlane.f32.xlu0 %v358
      %v360 = vpop.xlane.xlu0 %359
      %v361 = vmul.f32 %v357, %v348
      %v362 = vmul.f32 %v360, %v348
      %v363 = vadd.f32 %v361, 1e-05
      %v364 = vadd.f32 %v362, 1e-05
      %v365 = vrsqrt.pop %v363
      %v366 = vrsqrt.pop %v364
      %v367 = vmul.f32 %v351, %v365
      %v368 = vmul.f32 %v352, %v366
      %v369 = vld [vmem:[%s314] sm:$0x1]
      %v370 = vadd.f32 %v369, 1.0
      %v372 = vlaneseq
      %v373 = vshrl.u32 %v372, 7
      %v374 = vsub.s32 0, %v373
      %v375 = vrot.slane %v370, %v374
      %v377 = vmul.f32 %v367, %v375
      %v378 = vmul.f32 %v368, %v375
      %v379 = vld [vmem:[%s317] sm:$0x1]
      %v381 = vlaneseq
      %v382 = vshrl.u32 %v381, 7
      %v383 = vsub.s32 0, %v382
      %v384 = vrot.slane %v379, %v383
      %v386 = vadd.f32 %v377, %v384
      %v387 = vadd.f32 %v378, %v384
      %v388 = vpack.c.bf16 %v387, %v386
      %v389 = vld [vmem:[%s321] sm:$0xff]
      %v390 = vld [vmem:[%s321 + $0x8] sm:$0xff]
      %v391 = vld [vmem:[%s321 + $0x10] sm:$0xff]
      %v392 = vld [vmem:[%s321 + $0x18] sm:$0xff]
      %v393 = vpack.c.bf16 %v390, %v389
      %v394 = vpack.c.bf16 %v392, %v391
      %v395 = vld [vmem:[%s324] sm:$0x1]
      %v397 = vlaneseq
      %v398 = vshrl.u32 %v397, 7
      %v399 = vsub.s32 0, %v398
      %v400 = vrot.slane %v395, %v399
      %v403 = vsel %vm341, %v388, 0
      %405 = vmatprep.subr.bf16.mxu0 0
      %406 = vmatpush1.bf16.msra.mxu0 %v393
      %407 = vmatprep.subr.bf16.mxu0 0
      %408 = vmatpush1.bf16.msra.mxu0 %v394
      %409 = vmatprep.subr.bf16.mxu0 0
      %410 = vmatpush1.bf16.msra.mxu0 0
      %411 = vmatprep.subr.bf16.mxu0 0
      %412 = vmatpush1.bf16.msra.mxu0 0
      %413 = vmatprep.subr.bf16.mxu0 0
      %414 = vmatpush1.bf16.msra.mxu0 0
      %415 = vmatprep.subr.bf16.mxu0 0
      %416 = vmatpush1.bf16.msra.mxu0 0
      %417 = vmatprep.subr.bf16.mxu0 0
      %418 = vmatpush1.bf16.msra.mxu0 0
      %419 = vmatprep.subr.bf16.mxu0 0
      %420 = vmatpush1.bf16.msra.mxu0 0
      %421 = vmatprep.subr.bf16.mxu0 0
      %422 = vmatpush1.bf16.msra.mxu0 0
      %423 = vmatprep.subr.bf16.mxu0 0
      %424 = vmatpush1.bf16.msra.mxu0 0
      %425 = vmatprep.subr.bf16.mxu0 0
      %426 = vmatpush1.bf16.msra.mxu0 0
      %427 = vmatprep.subr.bf16.mxu0 0
      %428 = vmatpush1.bf16.msra.mxu0 0
      %429 = vmatprep.subr.bf16.mxu0 0
      %430 = vmatpush1.bf16.msra.mxu0 0
      %431 = vmatprep.subr.bf16.mxu0 0
      %432 = vmatpush1.bf16.msra.mxu0 0
      %433 = vmatprep.subr.bf16.mxu0 0
      %434 = vmatpush1.bf16.msra.mxu0 0
      %435 = vmatprep.subr.bf16.mxu0 0
      %436 = vmatpush1.bf16.msra.mxu0 0
      %437 = vmatprep.mubr.bf16.mxu0 0
      %438 = vmatmul.mubr.bf16.gmra.mrb[0].mxu0 %v403
      %v439 = vpop.f32.mrb[0].mxu0
      %v440 = vadd.f32 %v400, %v439
      %v441 = vpop.f32.mrb[0].mxu0
      %v442 = vpop.f32.mrb[0].mxu0
      %v443 = vadd.f32 %v400, %v442
      %v444 = vpop.f32.mrb[0].mxu0
      %445 = vdwg.mxu0
      %vm446 = vcmask 785408
      %447 = vst.msk [vmem:[%s336] sm:$0xff] %vm446, %v440
      %448 = vst.msk [vmem:[%s336 + $0x8] sm:$0xff] %vm446, %v443
      %s449 = smul.u32 2, %s22
      %p450 = scmp.lt.s32.totalorder %s21, 1
      %s451 = scalar_select %p450, %s21, 1
      %p452 = scmp.lt.s32.totalorder %s449, 1
      %s453 = scalar_select %p452, %s449, 1
      %p454 = scmp.lt.s32.totalorder %s23, 0
      %s455 = scalar_select %p454, %s23, 0
      %s456 = sadd.s32 %s455, %s453
      %s457 = smul.addr %s451, 2
      %s458 = sadd.s32 %s456, %s457
      %s459 = smul.addr %s458, 8
      %s460 = scalar_lea.vmem %s5, %s459
      // Predicated region
      $region41: #{dit_model.26} parent=39 // pred_check
        %p461 = pneg %p189
      $region42: #{dit_model.26} parent=39 // pred_check_branch
        %463 = sbr.rel (%p461) target = $region44
      $region43: #{dit_model.26} parent=39 // pred_region
        %s464 = smul.u32 2, %s22
      $region44: #{dit_model.26} parent=39 // pred_fallthru
        _
    $region40: #{dit_model.26} parent=5 // pred_fallthru
      _
    %p465 = scmp.le.s32.totalorder 2, %s11
    // Predicated region
    $region45: #{dit_model.26} parent=5 // pred_check
      %p466 = pneg %p465
    $region46: #{dit_model.26} parent=5 // pred_check_branch
      %468 = sbr.rel (%p466) target = $region48
    $region47: #{dit_model.26} parent=5 // pred_region
      %s469 = ssub.s32 %s11, 2
      // Predicated region
      $region49: #{dit_model.26} parent=47 // pred_check
        %p470 = pneg %p195
      $region50: #{dit_model.26} parent=47 // pred_check_branch
        %472 = sbr.rel (%p470) target = $region52
      $region51: #{dit_model.26} parent=47 // pred_region
        %s473 = smul.u32 2, %s25
        %p474 = scmp.lt.s32.totalorder %s24, 1
        %s475 = scalar_select %p474, %s24, 1
        %p476 = scmp.lt.s32.totalorder %s473, 1
        %s477 = scalar_select %p476, %s473, 1
        %p478 = scmp.lt.s32.totalorder %s26, 0
        %s479 = scalar_select %p478, %s26, 0
        %s480 = sadd.s32 %s479, %s477
        %s481 = smul.addr %s475, 2
        %s482 = sadd.s32 %s480, %s481
        %s483 = smul.addr %s482, 8
        %s484 = scalar_lea.vmem %s5, %s483
      $region52: #{dit_model.26} parent=47 // pred_fallthru
        _
    $region48: #{dit_model.26} parent=5 // pred_fallthru
      _
  $region6: #{dit_model.26} parent=0 // loop_footer
    %s15 = sadd.s32 1, %s11
  $region7: #{dit_model.26} parent=0 // loop_footer_branch
    %10 = sbr.rel target = $region3
  $region8: #{dit_model.26} parent=0 // loop_exit
    _

// kernel: dit_model.31
$region0: #{dit_model.31}
  #allocation0 [shape = 'u32[]', space=smem, size = 0x4, offset = 0x4, fixed_abs, tag = 'smem constant byte address 0x4 - core index']
  #allocation1 [shape = 'u32[144,128]{1,0:T(1,128)}', space=vmem, size = 0x12000, scoped, tag = 'internal scratch']
  #allocation2 [shape = 'f32[24,1]{1,0:T(8,128)}', space=vmem, size = 0x3000, scoped, tag = 'scratch operand']
  #allocation3 [shape = 'f32[24,1]{1,0:T(8,128)}', space=vmem, size = 0x3000, scoped, tag = 'scratch operand']
  #allocation4 [shape = 'f32[24,8]{1,0:T(8,128)}', space=vmem, size = 0x3000, scoped, tag = 'scratch operand']
  %s0 = inlined_call_operand.vmem [shape: f32[8,24,8], index: 0, kind: input, shape index: {}]
  %s1 = inlined_call_operand.vmem [shape: f32[8,24,8], index: 1, kind: input, shape index: {}]
  %s2 = inlined_call_operand.vmem [shape: f32[8,24,8], index: 2, kind: input, shape index: {}]
  %s3 = inlined_call_operand.vmem [shape: f32[8,24,8], index: 3, kind: output, shape index: {}]
  %s4 = sld [smem:[#allocation0]]
  $region53: #{dit_model.31} parent=0
    _
  %s6 = ssub.s32 1, %s4
  %s7 = scalar_select 0, %s6, %s4
  loop: start=0, step=1, limit=10
  $region2: #{dit_model.31} parent=0 // loop_pre_header
    _
  $region3: #{dit_model.31} parent=0 // loop_header
    %s9 = sphi 0, %s13
    %p10 = scmp.ge.s32.totalorder %s9, 10
    %s16 = sphi 0, %s35
    %s17 = sphi 0, %s31
    %s18 = sphi 0, %s27
    %s19 = sphi 0, %s16
    %s20 = sphi 0, %s17
    %s21 = sphi 0, %s18
    %s22 = sphi 0, %s19
    %s23 = sphi 0, %s20
    %s24 = sphi 0, %s21
    %s40 = sphi 0, %s42
    %s43 = sphi 0, %s40
    %s44 = sphi 0, %s43
    %s60 = sphi 0, %s44
    %s68 = sphi 0, %s70
    %s71 = sphi 0, %s68
    %s72 = sphi 0, %s71
    %s88 = sphi 0, %s72
    %s96 = sphi 0, %s98
    %s99 = sphi 0, %s96
    %s100 = sphi 0, %s99
    %s116 = sphi 0, %s100
    %s124 = sphi 0, %s126
    %s127 = sphi 0, %s124
    %s128 = sphi 0, %s127
    %s144 = sphi 0, %s128
  $region4: #{dit_model.31} parent=0 // loop_header_branch
    %12 = sbr.rel (%p10) target = $region8
  $region5: #{dit_model.31} parent=0 // loop_body
    %s14 = ssub.s32 %s9, 1
    %s15 = ssub.s32 %s9, 2
    %s25 = sadd.s32 1, %s18
    %p26 = scmp.ge.s32.totalorder %s25, 1
    %s27 = scalar_select %p26, 0, %s25
    %s28 = sadd.s32 1, %s17
    %s29 = scalar_select %p26, %s28, %s17
    %p30 = scmp.ge.s32.totalorder %s29, 1
    %s31 = scalar_select %p30, 0, %s29
    %s32 = sadd.s32 1, %s16
    %s33 = scalar_select %p30, %s32, %s16
    %p34 = scmp.ge.s32.totalorder %s33, 8
    %s35 = scalar_select %p34, 0, %s33
    %s36 = ssub.s32 %s16, %s35
    %s37 = ssub.s32 %s17, %s31
    %s38 = sor.u32 %s36, %s37
    %p39 = scmp.eq.s32.totalorder %s38, 0
    %s41 = sadd.s32 %s40, 1
    %s42 = scalar_select %p39, %s40, %s41
    %p45 = pneg %p39
    %p46 = scmp.eq.s32.totalorder %s9, 7
    %p47 = por %p45, %p46
    %p48 = scmp.ne.s32.totalorder %s40, %s43
    %p49 = scmp.eq.s32.totalorder %s9, 0
    %p50 = por %p48, %p49
    %p51 = scmp.ne.s32.totalorder %s40, %s43
    %p52 = scmp.eq.s32.totalorder %s14, 7
    %p53 = por %p51, %p52
    %p54 = scmp.ne.s32.totalorder %s43, %s44
    %p55 = scmp.eq.s32.totalorder %s14, 0
    %p56 = por %p54, %p55
    %p57 = scmp.ne.s32.totalorder %s43, %s44
    %p58 = scmp.eq.s32.totalorder %s15, 7
    %p59 = por %p57, %p58
    %p61 = scmp.ne.s32.totalorder %s44, %s60
    %p62 = scmp.eq.s32.totalorder %s15, 0
    %p63 = por %p61, %p62
    %s64 = ssub.s32 %s16, %s35
    %s65 = ssub.s32 %s18, %s27
    %s66 = sor.u32 %s64, %s65
    %p67 = scmp.eq.s32.totalorder %s66, 0
    %s69 = sadd.s32 %s68, 1
    %s70 = scalar_select %p67, %s68, %s69
    %p73 = pneg %p67
    %p74 = scmp.eq.s32.totalorder %s9, 7
    %p75 = por %p73, %p74
    %p76 = scmp.ne.s32.totalorder %s68, %s71
    %p77 = scmp.eq.s32.totalorder %s9, 0
    %p78 = por %p76, %p77
    %p79 = scmp.ne.s32.totalorder %s68, %s71
    %p80 = scmp.eq.s32.totalorder %s14, 7
    %p81 = por %p79, %p80
    %p82 = scmp.ne.s32.totalorder %s71, %s72
    %p83 = scmp.eq.s32.totalorder %s14, 0
    %p84 = por %p82, %p83
    %p85 = scmp.ne.s32.totalorder %s71, %s72
    %p86 = scmp.eq.s32.totalorder %s15, 7
    %p87 = por %p85, %p86
    %p89 = scmp.ne.s32.totalorder %s72, %s88
    %p90 = scmp.eq.s32.totalorder %s15, 0
    %p91 = por %p89, %p90
    %s92 = ssub.s32 %s16, %s35
    %s93 = ssub.s32 %s18, %s27
    %s94 = sor.u32 %s92, %s93
    %p95 = scmp.eq.s32.totalorder %s94, 0
    %s97 = sadd.s32 %s96, 1
    %s98 = scalar_select %p95, %s96, %s97
    %p101 = pneg %p95
    %p102 = scmp.eq.s32.totalorder %s9, 7
    %p103 = por %p101, %p102
    %p104 = scmp.ne.s32.totalorder %s96, %s99
    %p105 = scmp.eq.s32.totalorder %s9, 0
    %p106 = por %p104, %p105
    %p107 = scmp.ne.s32.totalorder %s96, %s99
    %p108 = scmp.eq.s32.totalorder %s14, 7
    %p109 = por %p107, %p108
    %p110 = scmp.ne.s32.totalorder %s99, %s100
    %p111 = scmp.eq.s32.totalorder %s14, 0
    %p112 = por %p110, %p111
    %p113 = scmp.ne.s32.totalorder %s99, %s100
    %p114 = scmp.eq.s32.totalorder %s15, 7
    %p115 = por %p113, %p114
    %p117 = scmp.ne.s32.totalorder %s100, %s116
    %p118 = scmp.eq.s32.totalorder %s15, 0
    %p119 = por %p117, %p118
    %s120 = ssub.s32 %s16, %s35
    %s121 = ssub.s32 %s17, %s31
    %s122 = sor.u32 %s120, %s121
    %p123 = scmp.eq.s32.totalorder %s122, 0
    %s125 = sadd.s32 %s124, 1
    %s126 = scalar_select %p123, %s124, %s125
    %p129 = pneg %p123
    %p130 = scmp.eq.s32.totalorder %s9, 7
    %p131 = por %p129, %p130
    %p132 = scmp.ne.s32.totalorder %s124, %s127
    %p133 = scmp.eq.s32.totalorder %s9, 0
    %p134 = por %p132, %p133
    %p135 = scmp.ne.s32.totalorder %s124, %s127
    %p136 = scmp.eq.s32.totalorder %s14, 7
    %p137 = por %p135, %p136
    %p138 = scmp.ne.s32.totalorder %s127, %s128
    %p139 = scmp.eq.s32.totalorder %s14, 0
    %p140 = por %p138, %p139
    %p141 = scmp.ne.s32.totalorder %s127, %s128
    %p142 = scmp.eq.s32.totalorder %s15, 7
    %p143 = por %p141, %p142
    %p145 = scmp.ne.s32.totalorder %s128, %s144
    %p146 = scmp.eq.s32.totalorder %s15, 0
    %p147 = por %p145, %p146
    %p148 = scmp.le.s32.totalorder 1, %s9
    %p149 = scmp.lt.s32.totalorder %s9, 9
    %p150 = pnand %p148, %p149
    %p151 = pneg %p150
    // Predicated region
    $region9: #{dit_model.31} parent=5 // pred_check
      _
    $region10: #{dit_model.31} parent=5 // pred_check_branch
      %153 = sbr.rel (%p150) target = $region12
    $region11: #{dit_model.31} parent=5 // pred_region
      %s154 = ssub.s32 %s9, 1
    $region12: #{dit_model.31} parent=5 // pred_fallthru
      _
    %p155 = scmp.lt.s32.totalorder %s9, 8
    // Predicated region
    $region13: #{dit_model.31} parent=5 // pred_check
      %p156 = pneg %p155
    $region14: #{dit_model.31} parent=5 // pred_check_branch
      %158 = sbr.rel (%p156) target = $region16
    $region15: #{dit_model.31} parent=5 // pred_region
      // Predicated region
      $region17: #{dit_model.31} parent=15 // pred_check
        %p159 = pneg %p50
      $region18: #{dit_model.31} parent=15 // pred_check_branch
        %161 = sbr.rel (%p159) target = $region20
      $region19: #{dit_model.31} parent=15 // pred_region
        %s162 = smul.u32 3, %s17
        %p163 = scmp.lt.s32.totalorder %s16, 7
        %s164 = scalar_select %p163, %s16, 7
        %p165 = scmp.lt.s32.totalorder %s162, 2
        %s166 = scalar_select %p165, %s162, 2
        %s167 = smul.addr %s164, 3
        %s168 = sadd.s32 %s166, %s167
        %s169 = smul.addr %s168, 8
        %s170 = scalar_lea.vmem %s0, %s169
        %s171 = smul.u32 3, %s17
      $region20: #{dit_model.31} parent=15 // pred_fallthru
        _
      // Predicated region
      $region21: #{dit_model.31} parent=15 // pred_check
        %p172 = pneg %p78
      $region22: #{dit_model.31} parent=15 // pred_check_branch
        %174 = sbr.rel (%p172) target = $region24
      $region23: #{dit_model.31} parent=15 // pred_region
        %s175 = smul.u32 3, %s18
        %p176 = scmp.lt.s32.totalorder %s16, 7
        %s177 = scalar_select %p176, %s16, 7
        %p178 = scmp.lt.s32.totalorder %s175, 2
        %s179 = scalar_select %p178, %s175, 2
        %s180 = smul.addr %s177, 3
        %s181 = sadd.s32 %s179, %s180
        %s182 = smul.addr %s181, 8
        %s183 = scalar_lea.vmem %s1, %s182
        %s184 = smul.u32 3, %s18
      $region24: #{dit_model.31} parent=15 // pred_fallthru
        _
      // Predicated region
      $region25: #{dit_model.31} parent=15 // pred_check
        %p185 = pneg %p106
      $region26: #{dit_model.31} parent=15 // pred_check_branch
        %187 = sbr.rel (%p185) target = $region28
      $region27: #{dit_model.31} parent=15 // pred_region
        %s188 = smul.u32 3, %s18
        %p189 = scmp.lt.s32.totalorder %s16, 7
        %s190 = scalar_select %p189, %s16, 7
        %p191 = scmp.lt.s32.totalorder %s188, 2
        %s192 = scalar_select %p191, %s188, 2
        %s193 = smul.addr %s190, 3
        %s194 = sadd.s32 %s192, %s193
        %s195 = smul.addr %s194, 8
        %s196 = scalar_lea.vmem %s2, %s195
        %s197 = smul.u32 3, %s18
      $region28: #{dit_model.31} parent=15 // pred_fallthru
        _
    $region16: #{dit_model.31} parent=5 // pred_fallthru
      _
    %p198 = scmp.le.s32.totalorder 1, %s9
    %p199 = scmp.lt.s32.totalorder %s9, 9
    %p200 = pnand %p198, %p199
    %p201 = pneg %p200
    // Predicated region
    $region29: #{dit_model.31} parent=5 // pred_check
      _
    $region30: #{dit_model.31} parent=5 // pred_check_branch
      %203 = sbr.rel (%p200) target = $region32
    $region31: #{dit_model.31} parent=5 // pred_region
      %s204 = ssub.s32 %s9, 1
      %s205 = smul.u32 3, %s20
      %p206 = scmp.lt.s32.totalorder %s19, 7
      %s207 = scalar_select %p206, %s19, 7
      %p208 = scmp.lt.s32.totalorder %s205, 2
      %s209 = scalar_select %p208, %s205, 2
      %s210 = smul.addr %s207, 3
      %s211 = sadd.s32 %s209, %s210
      %s212 = smul.addr %s211, 8
      %s213 = scalar_lea.vmem %s0, %s212
      %p214 = pneg %p56
      %p215 = pneg %p53
      %s216 = smul.u32 3, %s21
      %p217 = scmp.lt.s32.totalorder %s19, 7
      %s218 = scalar_select %p217, %s19, 7
      %p219 = scmp.lt.s32.totalorder %s216, 2
      %s220 = scalar_select %p219, %s216, 2
      %s221 = smul.addr %s218, 3
      %s222 = sadd.s32 %s220, %s221
      %s223 = smul.addr %s222, 8
      %s224 = scalar_lea.vmem %s1, %s223
      %p225 = pneg %p84
      %p226 = pneg %p81
      %s227 = smul.u32 3, %s21
      %p228 = scmp.lt.s32.totalorder %s19, 7
      %s229 = scalar_select %p228, %s19, 7
      %p230 = scmp.lt.s32.totalorder %s227, 2
      %s231 = scalar_select %p230, %s227, 2
      %s232 = smul.addr %s229, 3
      %s233 = sadd.s32 %s231, %s232
      %s234 = smul.addr %s233, 8
      %s235 = scalar_lea.vmem %s2, %s234
      %p236 = pneg %p112
      %p237 = pneg %p109
      %p238 = pneg %p140
      %p239 = pneg %p137
      %s240 = smul.u32 3, %s20
      %p241 = scmp.lt.s32.totalorder %s19, 7
      %s242 = scalar_select %p241, %s19, 7
      %p243 = scmp.lt.s32.totalorder %s240, 2
      %s244 = scalar_select %p243, %s240, 2
      %s245 = smul.addr %s242, 3
      %s246 = sadd.s32 %s244, %s245
      %s247 = smul.addr %s246, 8
      %s248 = scalar_lea.vmem %s3, %s247
      %s249 = smul.u32 3, %s20
      %p250 = scmp.lt.s32.totalorder %s19, 7
      %s251 = scalar_select %p250, %s19, 7
      %p252 = scmp.lt.s32.totalorder %s249, 2
      %s253 = scalar_select %p252, %s249, 2
      %s254 = smul.addr %s251, 3
      %s255 = sadd.s32 %s253, %s254
      %s256 = smul.addr %s255, 8
      %s257 = scalar_lea.vmem %s0, %s256
      %s258 = smul.u32 3, %s20
      %s259 = smul.u32 3, %s21
      %p260 = scmp.lt.s32.totalorder %s19, 7
      %s261 = scalar_select %p260, %s19, 7
      %p262 = scmp.lt.s32.totalorder %s259, 2
      %s263 = scalar_select %p262, %s259, 2
      %s264 = smul.addr %s261, 3
      %s265 = sadd.s32 %s263, %s264
      %s266 = smul.addr %s265, 8
      %s267 = scalar_lea.vmem %s1, %s266
      %s268 = smul.u32 3, %s21
      %s269 = smul.u32 3, %s21
      %p270 = scmp.lt.s32.totalorder %s19, 7
      %s271 = scalar_select %p270, %s19, 7
      %p272 = scmp.lt.s32.totalorder %s269, 2
      %s273 = scalar_select %p272, %s269, 2
      %s274 = smul.addr %s271, 3
      %s275 = sadd.s32 %s273, %s274
      %s276 = smul.addr %s275, 8
      %s277 = scalar_lea.vmem %s2, %s276
      %s278 = smul.u32 3, %s21
      %s279 = smul.u32 3, %s20
      %p280 = scmp.lt.s32.totalorder %s19, 7
      %s281 = scalar_select %p280, %s19, 7
      %p282 = scmp.lt.s32.totalorder %s279, 2
      %s283 = scalar_select %p282, %s279, 2
      %s284 = smul.addr %s281, 3
      %s285 = sadd.s32 %s283, %s284
      %s286 = smul.addr %s285, 8
      %s287 = scalar_lea.vmem %s3, %s286
      %s288 = smul.u32 3, %s20
      %p290 = scmp.eq.s32.totalorder %s21, 0
      // Predicated region
      $region33: #{dit_model.31} parent=31 // pred_check
        %p291 = pneg %p290
      $region34: #{dit_model.31} parent=31 // pred_check_branch
        %293 = sbr.rel (%p291) target = $region36
      $region35: #{dit_model.31} parent=31 // pred_region
        %vm294 = vcmask 7168
        %295 = vst.msk [vmem:[#allocation2] sm:$0xff] %vm294, -inf
        %296 = vst.msk [vmem:[#allocation2 + $0x8] sm:$0xff] %vm294, -inf
        %297 = vst.msk [vmem:[#allocation2 + $0x10] sm:$0xff] %vm294, -inf
        %298 = vst.msk [vmem:[#allocation3] sm:$0xff] %vm294, 0.0
        %299 = vst.msk [vmem:[#allocation3 + $0x8] sm:$0xff] %vm294, 0.0
        %300 = vst.msk [vmem:[#allocation3 + $0x10] sm:$0xff] %vm294, 0.0
        %vm301 = vcmask 64512
        %302 = vst.msk [vmem:[#allocation4] sm:$0xff] %vm301, 0.0
        %303 = vst.msk [vmem:[#allocation4 + $0x8] sm:$0xff] %vm301, 0.0
        %304 = vst.msk [vmem:[#allocation4 + $0x10] sm:$0xff] %vm301, 0.0
      $region36: #{dit_model.31} parent=31 // pred_fallthru
        _
      %v305 = vld [vmem:[%s257] sm:$0xff]
      %v306 = vld [vmem:[%s257 + $0x8] sm:$0xff]
      %v307 = vld [vmem:[%s257 + $0x10] sm:$0xff]
      %v308 = vmul.f32 %v305, 0.35355338
      %v309 = vmul.f32 %v306, 0.35355338
      %v310 = vmul.f32 %v307, 0.35355338
      %v311 = vpack.c.bf16 %v309, %v308
      %v312 = vpack.c.bf16 %v310, %v310
      %v313 = vld [vmem:[%s267] sm:$0xff]
      %v314 = vld [vmem:[%s267 + $0x8] sm:$0xff]
      %v315 = vld [vmem:[%s267 + $0x10] sm:$0xff]
      %v316 = vpack.c.bf16 %v314, %v313
      %v317 = vpack.c.bf16 %v315, %v315
      %vm318 = vcmask 64512
      %v320 = vsel %vm318, %v311, 0
      %v323 = vsel %vm318, %v312, 0
      %v326 = vsel %vm318, %v316, 0
      %v329 = vsel %vm318, %v317, 0
      %331 = vmatprep.subr.bf16.mxu0 0
      %332 = vmatpush1.bf16.xpose.msra.mxu0 %v326
      %333 = vmatprep.subr.bf16.mxu0 0
      %334 = vmatpush1.bf16.xpose.msra.mxu0 %v329
      %335 = vmatprep.subr.bf16.mxu0 0
      %336 = vmatpush1.bf16.xpose.msra.mxu0 0
      %337 = vmatprep.subr.bf16.mxu0 0
      %338 = vmatpush1.bf16.xpose.msra.mxu0 0
      %339 = vmatprep.subr.bf16.mxu0 0
      %340 = vmatpush1.bf16.xpose.msra.mxu0 0
      %341 = vmatprep.subr.bf16.mxu0 0
      %342 = vmatpush1.bf16.xpose.msra.mxu0 0
      %343 = vmatprep.subr.bf16.mxu0 0
      %344 = vmatpush1.bf16.xpose.msra.mxu0 0
      %345 = vmatprep.subr.bf16.mxu0 0
      %346 = vmatpush1.bf16.xpose.msra.mxu0 0
      %347 = vmatprep.subr.bf16.mxu0 0
      %348 = vmatpush1.bf16.xpose.msra.mxu0 0
      %349 = vmatprep.subr.bf16.mxu0 0
      %350 = vmatpush1.bf16.xpose.msra.mxu0 0
      %351 = vmatprep.subr.bf16.mxu0 0
      %352 = vmatpush1.bf16.xpose.msra.mxu0 0
      %353 = vmatprep.subr.bf16.mxu0 0
      %354 = vmatpush1.bf16.xpose.msra.mxu0 0
      %355 = vmatprep.subr.bf16.mxu0 0
      %356 = vmatpush1.bf16.xpose.msra.mxu0 0
      %357 = vmatprep.subr.bf16.mxu0 0
      %358 = vmatpush1.bf16.xpose.msra.mxu0 0
      %359 = vmatprep.subr.bf16.mxu0 0
      %360 = vmatpush1.bf16.xpose.msra.mxu0 0
      %361 = vmatprep.subr.bf16.mxu0 0
      %362 = vmatpush1.bf16.xpose.msra.mxu0 0
      %363 = vmatprep.mubr.bf16.mxu0 0
      %364 = vmatmul.mubr.bf16.gmra.mrb[0].mxu0 %v320
      %v365 = vpop.f32.mrb[0].mxu0
      %v366 = vadd.f32 0.0, %v365
      %v367 = vpop.f32.mrb[0].mxu0
      %v368 = vpop.f32.mrb[0].mxu0
      %v369 = vadd.f32 0.0, %v368
      %v370 = vpop.f32.mrb[0].mxu0
      %371 = vmatprep.mubr.bf16.mxu0 0
      %372 = vmatmul.mubr.bf16.gmra.mrb[0].mxu0 %v323
      %v373 = vpop.f32.mrb[0].mxu0
      %v374 = vadd.f32 0.0, %v373
      %v375 = vpop.f32.mrb[0].mxu0
      %v376 = vpop.f32.mrb[0].mxu0
      %v377 = vpop.f32.mrb[0].mxu0
      %378 = vdwg.mxu0
      %v379 = vld [vmem:[#allocation2] sm:$0xff]
      %v380 = vld [vmem:[#allocation2 + $0x8] sm:$0xff]
      %v381 = vld [vmem:[#allocation2 + $0x10] sm:$0xff]
      %vm382 = vcmask 195584
      %v383 = vsel %vm382, %v366, -inf
      %384 = vmax.xlane.f32.xlu0 %v383
      %v385 = vpop.xlane.xlu0 %384
      %v386 = vsel %vm382, %v369, -inf
      %387 = vmax.xlane.f32.xlu0 %v386
      %v388 = vpop.xlane.xlu0 %387
      %v389 = vsel %vm382, %v374, -inf
      %390 = vmax.xlane.f32.xlu0 %v389
      %v391 = vpop.xlane.xlu0 %390
      %v392 = vmax.f32 %v379, %v385
      %v393 = vmax.f32 %v380, %v388
      %v394 = vmax.f32 %v381, %v391
      %v395 = vsub.f32 %v379, %v392
      %v396 = vsub.f32 %v380, %v393
      %v397 = vsub.f32 %v381, %v394
      %v398 = vmul.f32 %v395, 1.442695
      %v399 = vpow.pop %v398
      %v400 = vmul.f32 %v396, 1.442695
      %v401 = vpow.pop %v400
      %v402 = vmul.f32 %v397, 1.442695
      %v403 = vpow.pop %v402
      %405 = vset.pattern.permute.xlu0 0
      %406 = vperm.xlu0 %405, %v392
      %v407 = vpop.permute.xlu0 %406
      %410 = vset.pattern.permute.xlu0 0
      %411 = vperm.xlu0 %410, %v393
      %v412 = vpop.permute.xlu0 %411
      %415 = vset.pattern.permute.xlu0 0
      %416 = vperm.xlu0 %415, %v394
      %v417 = vpop.permute.xlu0 %416
      %v419 = vsub.f32 %v366, %v407
      %v420 = vsub.f32 %v369, %v412
      %v421 = vsub.f32 %v374, %v417
      %v422 = vmul.f32 %v419, 1.442695
      %v423 = vpow.pop %v422
      %v424 = vmul.f32 %v420, 1.442695
      %v425 = vpow.pop %v424
      %v426 = vmul.f32 %v421, 1.442695
      %v427 = vpow.pop %v426
      %v428 = vld [vmem:[#allocation3] sm:$0xff]
      %v429 = vld [vmem:[#allocation3 + $0x8] sm:$0xff]
      %v430 = vld [vmem:[#allocation3 + $0x10] sm:$0xff]
      %v431 = vmul.f32 %v399, %v428
      %v432 = vmul.f32 %v401, %v429
      %v433 = vmul.f32 %v403, %v430
      %v434 = vsel %vm382, %v423, 0.0
      %435 = vadd.xlane.f32.xlu0 %v434
      %v436 = vpop.xlane.xlu0 %435
      %v437 = vsel %vm382, %v425, 0.0
      %438 = vadd.xlane.f32.xlu0 %v437
      %v439 = vpop.xlane.xlu0 %438
      %v440 = vsel %vm382, %v427, 0.0
      %441 = vadd.xlane.f32.xlu0 %v440
      %v442 = vpop.xlane.xlu0 %441
      %v443 = vadd.f32 %v431, %v436
      %v444 = vadd.f32 %v432, %v439
      %v445 = vadd.f32 %v433, %v442
      %vm446 = vcmask 7168
      %447 = vst.msk [vmem:[#allocation3] sm:$0xff] %vm446, %v443
      %448 = vst.msk [vmem:[#allocation3 + $0x8] sm:$0xff] %vm446, %v444
      %449 = vst.msk [vmem:[#allocation3 + $0x10] sm:$0xff] %vm446, %v445
      %v450 = vld [vmem:[#allocation4] sm:$0xff]
      %v451 = vld [vmem:[#allocation4 + $0x8] sm:$0xff]
      %v452 = vld [vmem:[#allocation4 + $0x10] sm:$0xff]
      %454 = vset.pattern.permute.xlu0 0
      %455 = vperm.xlu0 %454, %v399
      %v456 = vpop.permute.xlu0 %455
      %459 = vset.pattern.permute.xlu0 0
      %460 = vperm.xlu0 %459, %v401
      %v461 = vpop.permute.xlu0 %460
      %464 = vset.pattern.permute.xlu0 0
      %465 = vperm.xlu0 %464, %v403
      %v466 = vpop.permute.xlu0 %465
      %v468 = vmul.f32 %v456, %v450
      %v469 = vmul.f32 %v461, %v451
      %v470 = vmul.f32 %v466, %v452
      %v471 = vpack.c.bf16 %v425, %v423
      %v472 = vpack.c.bf16 %v427, %v427
      %v473 = vld [vmem:[%s277] sm:$0xff]
      %v474 = vld [vmem:[%s277 + $0x8] sm:$0xff]
      %v475 = vld [vmem:[%s277 + $0x10] sm:$0xff]
      %v476 = vpack.c.bf16 %v474, %v473
      %v477 = vpack.c.bf16 %v475, %v475
      %v479 = vsel %vm382, %v471, 0
      %v482 = vsel %vm382, %v472, 0
      %vm484 = vcmask 1043456
      %v486 = vsel %vm484, %v477, 0
      %488 = vmatprep.subr.bf16.mxu0 0
      %489 = vmatpush1.bf16.msra.mxu0 %v476
      %490 = vmatprep.subr.bf16.mxu0 0
      %491 = vmatpush1.bf16.msra.mxu0 %v486
      %492 = vmatprep.subr.bf16.mxu0 0
      %493 = vmatpush1.bf16.msra.mxu0 0
      %494 = vmatprep.subr.bf16.mxu0 0
      %495 = vmatpush1.bf16.msra.mxu0 0
      %496 = vmatprep.subr.bf16.mxu0 0
      %497 = vmatpush1.bf16.msra.mxu0 0
      %498 = vmatprep.subr.bf16.mxu0 0
      %499 = vmatpush1.bf16.msra.mxu0 0
      %500 = vmatprep.subr.bf16.mxu0 0
      %501 = vmatpush1.bf16.msra.mxu0 0
      %502 = vmatprep.subr.bf16.mxu0 0
      %503 = vmatpush1.bf16.msra.mxu0 0
      %504 = vmatprep.subr.bf16.mxu0 0
      %505 = vmatpush1.bf16.msra.mxu0 0
      %506 = vmatprep.subr.bf16.mxu0 0
      %507 = vmatpush1.bf16.msra.mxu0 0
      %508 = vmatprep.subr.bf16.mxu0 0
      %509 = vmatpush1.bf16.msra.mxu0 0
      %510 = vmatprep.subr.bf16.mxu0 0
      %511 = vmatpush1.bf16.msra.mxu0 0
      %512 = vmatprep.subr.bf16.mxu0 0
      %513 = vmatpush1.bf16.msra.mxu0 0
      %514 = vmatprep.subr.bf16.mxu0 0
      %515 = vmatpush1.bf16.msra.mxu0 0
      %516 = vmatprep.subr.bf16.mxu0 0
      %517 = vmatpush1.bf16.msra.mxu0 0
      %518 = vmatprep.subr.bf16.mxu0 0
      %519 = vmatpush1.bf16.msra.mxu0 0
      %520 = vmatprep.mubr.bf16.mxu0 0
      %521 = vmatmul.mubr.bf16.gmra.mrb[0].mxu0 %v479
      %v522 = vpop.f32.mrb[0].mxu0
      %v523 = vadd.f32 0.0, %v522
      %v524 = vpop.f32.mrb[0].mxu0
      %v525 = vpop.f32.mrb[0].mxu0
      %v526 = vadd.f32 0.0, %v525
      %v527 = vpop.f32.mrb[0].mxu0
      %528 = vmatprep.mubr.bf16.mxu0 0
      %529 = vmatmul.mubr.bf16.gmra.mrb[0].mxu0 %v482
      %v530 = vpop.f32.mrb[0].mxu0
      %v531 = vadd.f32 0.0, %v530
      %v532 = vpop.f32.mrb[0].mxu0
      %v533 = vpop.f32.mrb[0].mxu0
      %v534 = vpop.f32.mrb[0].mxu0
      %535 = vdwg.mxu0
      %v536 = vadd.f32 %v468, %v523
      %v537 = vadd.f32 %v469, %v526
      %v538 = vadd.f32 %v470, %v531
      %539 = vst.msk [vmem:[#allocation4] sm:$0xff] %vm318, %v536
      %540 = vst.msk [vmem:[#allocation4 + $0x8] sm:$0xff] %vm318, %v537
      %541 = vst.msk [vmem:[#allocation4 + $0x10] sm:$0xff] %vm318, %v538
      %542 = vst.msk [vmem:[#allocation2] sm:$0xff] %vm446, %v392
      %543 = vst.msk [vmem:[#allocation2 + $0x8] sm:$0xff] %vm446, %v393
      %544 = vst.msk [vmem:[#allocation2 + $0x10] sm:$0xff] %vm446, %v394
      // Predicated region
      $region37: #{dit_model.31} parent=31 // pred_check
        %p545 = pneg %p290
      $region38: #{dit_model.31} parent=31 // pred_check_branch
        %547 = sbr.rel (%p545) target = $region40
      $region39: #{dit_model.31} parent=31 // pred_region
        %v548 = vld [vmem:[#allocation4] sm:$0xff]
        %v549 = vld [vmem:[#allocation4 + $0x8] sm:$0xff]
        %v550 = vld [vmem:[#allocation4 + $0x10] sm:$0xff]
        %v551 = vld [vmem:[#allocation3] sm:$0xff]
        %v552 = vld [vmem:[#allocation3 + $0x8] sm:$0xff]
        %v553 = vld [vmem:[#allocation3 + $0x10] sm:$0xff]
        %v554 = vrcp.pop %v551
        %v555 = vrcp.pop %v552
        %v556 = vrcp.pop %v553
        %558 = vset.pattern.permute.xlu0 0
        %559 = vperm.xlu0 %558, %v554
        %v560 = vpop.permute.xlu0 %559
        %563 = vset.pattern.permute.xlu0 0
        %564 = vperm.xlu0 %563, %v555
        %v565 = vpop.permute.xlu0 %564
        %568 = vset.pattern.permute.xlu0 0
        %569 = vperm.xlu0 %568, %v556
        %v570 = vpop.permute.xlu0 %569
        %v572 = vmul.f32 %v548, %v560
        %v573 = vmul.f32 %v549, %v565
        %v574 = vmul.f32 %v550, %v570
        %575 = vst.msk [vmem:[%s287] sm:$0xff] %vm318, %v572
        %576 = vst.msk [vmem:[%s287 + $0x8] sm:$0xff] %vm318, %v573
        %577 = vst.msk [vmem:[%s287 + $0x10] sm:$0xff] %vm318, %v574
      $region40: #{dit_model.31} parent=31 // pred_fallthru
        _
      %s578 = smul.u32 3, %s20
      %p579 = scmp.lt.s32.totalorder %s19, 7
      %s580 = scalar_select %p579, %s19, 7
      %p581 = scmp.lt.s32.totalorder %s578, 2
      %s582 = scalar_select %p581, %s578, 2
      %s583 = smul.addr %s580, 3
      %s584 = sadd.s32 %s582, %s583
      %s585 = smul.addr %s584, 8
      %s586 = scalar_lea.vmem %s3, %s585
      // Predicated region
      $region41: #{dit_model.31} parent=31 // pred_check
        %p587 = pneg %p137
      $region42: #{dit_model.31} parent=31 // pred_check_branch
        %589 = sbr.rel (%p587) target = $region44
      $region43: #{dit_model.31} parent=31 // pred_region
        %s590 = smul.u32 3, %s20
      $region44: #{dit_model.31} parent=31 // pred_fallthru
        _
    $region32: #{dit_model.31} parent=5 // pred_fallthru
      _
    %p591 = scmp.le.s32.totalorder 2, %s9
    // Predicated region
    $region45: #{dit_model.31} parent=5 // pred_check
      %p592 = pneg %p591
    $region46: #{dit_model.31} parent=5 // pred_check_branch
      %594 = sbr.rel (%p592) target = $region48
    $region47: #{dit_model.31} parent=5 // pred_region
      %s595 = ssub.s32 %s9, 2
      // Predicated region
      $region49: #{dit_model.31} parent=47 // pred_check
        %p596 = pneg %p143
      $region50: #{dit_model.31} parent=47 // pred_check_branch
        %598 = sbr.rel (%p596) target = $region52
      $region51: #{dit_model.31} parent=47 // pred_region
        %s599 = smul.u32 3, %s23
        %p600 = scmp.lt.s32.totalorder %s22, 7
        %s601 = scalar_select %p600, %s22, 7
        %p602 = scmp.lt.s32.totalorder %s599, 2
        %s603 = scalar_select %p602, %s599, 2
        %s604 = smul.addr %s601, 3
        %s605 = sadd.s32 %s603, %s604
        %s606 = smul.addr %s605, 8
        %s607 = scalar_lea.vmem %s3, %s606
      $region52: #{dit_model.31} parent=47 // pred_fallthru
        _
    $region48: #{dit_model.31} parent=5 // pred_fallthru
      _
  $region6: #{dit_model.31} parent=0 // loop_footer
    %s13 = sadd.s32 1, %s9
  $region7: #{dit_model.31} parent=0 // loop_footer_branch
    %8 = sbr.rel target = $region3
  $region8: #{dit_model.31} parent=0 // loop_exit
    _

// kernel: dit_model.32
$region0: #{dit_model.32}
  #allocation0 [shape = 'u32[]', space=smem, size = 0x4, offset = 0x4, fixed_abs, tag = 'smem constant byte address 0x4 - core index']
  #allocation1 [shape = 'u32[144,128]{1,0:T(1,128)}', space=vmem, size = 0x12000, scoped, tag = 'internal scratch']
  #allocation2 [shape = 'f32[24,32]{1,0:T(8,128)}', space=vmem, size = 0x3000, scoped, tag = 'scratch operand']
  %s0 = inlined_call_operand.vmem [shape: f32[8,24,8], index: 0, kind: input, shape index: {}]
  %s1 = inlined_call_operand.vmem [shape: f32[4,8,32], index: 1, kind: input, shape index: {}]
  %s2 = inlined_call_operand.vmem [shape: f32[1,32], index: 2, kind: input, shape index: {}]
  %s3 = inlined_call_operand.vmem [shape: f32[2,24,32], index: 3, kind: output, shape index: {}]
  %s4 = sld [smem:[#allocation0]]
  $region53: #{dit_model.32} parent=0
    _
  %s6 = ssub.s32 1, %s4
  %s7 = scalar_select 0, %s6, %s4
  loop: start=0, step=1, limit=10
  $region2: #{dit_model.32} parent=0 // loop_pre_header
    _
  $region3: #{dit_model.32} parent=0 // loop_header
    %s9 = sphi 0, %s13
    %p10 = scmp.ge.s32.totalorder %s9, 10
    %s16 = sphi 0, %s42
    %s17 = sphi 0, %s38
    %s18 = sphi 0, %s34
    %s19 = sphi 0, %s30
    %s20 = sphi 0, %s16
    %s21 = sphi 0, %s17
    %s22 = sphi 0, %s18
    %s23 = sphi 0, %s19
    %s24 = sphi 0, %s20
    %s25 = sphi 0, %s21
    %s26 = sphi 0, %s22
    %s27 = sphi 0, %s23
    %s51 = sphi 0, %s53
    %s54 = sphi 0, %s51
    %s55 = sphi 0, %s54
    %s71 = sphi 0, %s55
    %s79 = sphi 0, %s81
    %s82 = sphi 0, %s79
    %s83 = sphi 0, %s82
    %s99 = sphi 0, %s83
    %s105 = sphi 0, %s107
    %s108 = sphi 0, %s105
    %s109 = sphi 0, %s108
    %s125 = sphi 0, %s109
    %s135 = sphi 0, %s137
    %s138 = sphi 0, %s135
    %s139 = sphi 0, %s138
    %s155 = sphi 0, %s139
  $region4: #{dit_model.32} parent=0 // loop_header_branch
    %12 = sbr.rel (%p10) target = $region8
  $region5: #{dit_model.32} parent=0 // loop_body
    %s14 = ssub.s32 %s9, 1
    %s15 = ssub.s32 %s9, 2
    %s28 = sadd.s32 1, %s19
    %p29 = scmp.ge.s32.totalorder %s28, 4
    %s30 = scalar_select %p29, 0, %s28
    %s31 = sadd.s32 1, %s18
    %s32 = scalar_select %p29, %s31, %s18
    %p33 = scmp.ge.s32.totalorder %s32, 1
    %s34 = scalar_select %p33, 0, %s32
    %s35 = sadd.s32 1, %s17
    %s36 = scalar_select %p33, %s35, %s17
    %p37 = scmp.ge.s32.totalorder %s36, 1
    %s38 = scalar_select %p37, 0, %s36
    %s39 = sadd.s32 1, %s16
    %s40 = scalar_select %p37, %s39, %s16
    %p41 = scmp.ge.s32.totalorder %s40, 2
    %s42 = scalar_select %p41, 0, %s40
    %s43 = smul.u32 %s16, 4
    %s44 = sadd.s32 %s43, %s19
    %s45 = smul.u32 %s42, 4
    %s46 = sadd.s32 %s45, %s30
    %s47 = ssub.s32 %s44, %s46
    %s48 = ssub.s32 %s17, %s38
    %s49 = sor.u32 %s47, %s48
    %p50 = scmp.eq.s32.totalorder %s49, 0
    %s52 = sadd.s32 %s51, 1
    %s53 = scalar_select %p50, %s51, %s52
    %p56 = pneg %p50
    %p57 = scmp.eq.s32.totalorder %s9, 7
    %p58 = por %p56, %p57
    %p59 = scmp.ne.s32.totalorder %s51, %s54
    %p60 = scmp.eq.s32.totalorder %s9, 0
    %p61 = por %p59, %p60
    %p62 = scmp.ne.s32.totalorder %s51, %s54
    %p63 = scmp.eq.s32.totalorder %s14, 7
    %p64 = por %p62, %p63
    %p65 = scmp.ne.s32.totalorder %s54, %s55
    %p66 = scmp.eq.s32.totalorder %s14, 0
    %p67 = por %p65, %p66
    %p68 = scmp.ne.s32.totalorder %s54, %s55
    %p69 = scmp.eq.s32.totalorder %s15, 7
    %p70 = por %p68, %p69
    %p72 = scmp.ne.s32.totalorder %s55, %s71
    %p73 = scmp.eq.s32.totalorder %s15, 0
    %p74 = por %p72, %p73
    %s75 = ssub.s32 %s19, %s30
    %s76 = ssub.s32 %s18, %s34
    %s77 = sor.u32 %s75, %s76
    %p78 = scmp.eq.s32.totalorder %s77, 0
    %s80 = sadd.s32 %s79, 1
    %s81 = scalar_select %p78, %s79, %s80
    %p84 = pneg %p78
    %p85 = scmp.eq.s32.totalorder %s9, 7
    %p86 = por %p84, %p85
    %p87 = scmp.ne.s32.totalorder %s79, %s82
    %p88 = scmp.eq.s32.totalorder %s9, 0
    %p89 = por %p87, %p88
    %p90 = scmp.ne.s32.totalorder %s79, %s82
    %p91 = scmp.eq.s32.totalorder %s14, 7
    %p92 = por %p90, %p91
    %p93 = scmp.ne.s32.totalorder %s82, %s83
    %p94 = scmp.eq.s32.totalorder %s14, 0
    %p95 = por %p93, %p94
    %p96 = scmp.ne.s32.totalorder %s82, %s83
    %p97 = scmp.eq.s32.totalorder %s15, 7
    %p98 = por %p96, %p97
    %p100 = scmp.ne.s32.totalorder %s83, %s99
    %p101 = scmp.eq.s32.totalorder %s15, 0
    %p102 = por %p100, %p101
    %s103 = ssub.s32 %s18, %s34
    %p104 = scmp.eq.s32.totalorder %s103, 0
    %s106 = sadd.s32 %s105, 1
    %s107 = scalar_select %p104, %s105, %s106
    %p110 = pneg %p104
    %p111 = scmp.eq.s32.totalorder %s9, 7
    %p112 = por %p110, %p111
    %p113 = scmp.ne.s32.totalorder %s105, %s108
    %p114 = scmp.eq.s32.totalorder %s9, 0
    %p115 = por %p113, %p114
    %p116 = scmp.ne.s32.totalorder %s105, %s108
    %p117 = scmp.eq.s32.totalorder %s14, 7
    %p118 = por %p116, %p117
    %p119 = scmp.ne.s32.totalorder %s108, %s109
    %p120 = scmp.eq.s32.totalorder %s14, 0
    %p121 = por %p119, %p120
    %p122 = scmp.ne.s32.totalorder %s108, %s109
    %p123 = scmp.eq.s32.totalorder %s15, 7
    %p124 = por %p122, %p123
    %p126 = scmp.ne.s32.totalorder %s109, %s125
    %p127 = scmp.eq.s32.totalorder %s15, 0
    %p128 = por %p126, %p127
    %s129 = ssub.s32 %s16, %s42
    %s130 = ssub.s32 %s17, %s38
    %s131 = sor.u32 %s129, %s130
    %s132 = ssub.s32 %s18, %s34
    %s133 = sor.u32 %s131, %s132
    %p134 = scmp.eq.s32.totalorder %s133, 0
    %s136 = sadd.s32 %s135, 1
    %s137 = scalar_select %p134, %s135, %s136
    %p140 = pneg %p134
    %p141 = scmp.eq.s32.totalorder %s9, 7
    %p142 = por %p140, %p141
    %p143 = scmp.ne.s32.totalorder %s135, %s138
    %p144 = scmp.eq.s32.totalorder %s9, 0
    %p145 = por %p143, %p144
    %p146 = scmp.ne.s32.totalorder %s135, %s138
    %p147 = scmp.eq.s32.totalorder %s14, 7
    %p148 = por %p146, %p147
    %p149 = scmp.ne.s32.totalorder %s138, %s139
    %p150 = scmp.eq.s32.totalorder %s14, 0
    %p151 = por %p149, %p150
    %p152 = scmp.ne.s32.totalorder %s138, %s139
    %p153 = scmp.eq.s32.totalorder %s15, 7
    %p154 = por %p152, %p153
    %p156 = scmp.ne.s32.totalorder %s139, %s155
    %p157 = scmp.eq.s32.totalorder %s15, 0
    %p158 = por %p156, %p157
    %p159 = scmp.le.s32.totalorder 1, %s9
    %p160 = scmp.lt.s32.totalorder %s9, 9
    %p161 = pnand %p159, %p160
    %p162 = pneg %p161
    // Predicated region
    $region9: #{dit_model.32} parent=5 // pred_check
      _
    $region10: #{dit_model.32} parent=5 // pred_check_branch
      %164 = sbr.rel (%p161) target = $region12
    $region11: #{dit_model.32} parent=5 // pred_region
      %s165 = ssub.s32 %s9, 1
      // Predicated region
      $region13: #{dit_model.32} parent=11 // pred_check
        %p166 = pneg %p121
      $region14: #{dit_model.32} parent=11 // pred_check_branch
        %168 = sbr.rel (%p166) target = $region16
      $region15: #{dit_model.32} parent=11 // pred_region
        %p169 = scmp.lt.s32.totalorder %s22, 0
        %s170 = scalar_select %p169, %s22, 0
        %s171 = scalar_lea.vmem %s2, %s170
      $region16: #{dit_model.32} parent=11 // pred_fallthru
        _
    $region12: #{dit_model.32} parent=5 // pred_fallthru
      _
    %p172 = scmp.lt.s32.totalorder %s9, 8
    // Predicated region
    $region17: #{dit_model.32} parent=5 // pred_check
      %p173 = pneg %p172
    $region18: #{dit_model.32} parent=5 // pred_check_branch
      %175 = sbr.rel (%p173) target = $region20
    $region19: #{dit_model.32} parent=5 // pred_region
      // Predicated region
      $region21: #{dit_model.32} parent=19 // pred_check
        %p176 = pneg %p61
      $region22: #{dit_model.32} parent=19 // pred_check_branch
        %178 = sbr.rel (%p176) target = $region24
      $region23: #{dit_model.32} parent=19 // pred_region
        %s179 = smul.u32 %s16, 4
        %s180 = sadd.s32 %s179, %s19
        %s181 = smul.u32 3, %s17
        %p182 = scmp.lt.s32.totalorder %s180, 7
        %s183 = scalar_select %p182, %s180, 7
        %p184 = scmp.lt.s32.totalorder %s181, 2
        %s185 = scalar_select %p184, %s181, 2
        %s186 = smul.addr %s183, 3
        %s187 = sadd.s32 %s185, %s186
        %s188 = smul.addr %s187, 8
        %s189 = scalar_lea.vmem %s0, %s188
        %s190 = smul.u32 %s16, 4
        %s191 = sadd.s32 %s190, %s19
        %s192 = smul.u32 3, %s17
      $region24: #{dit_model.32} parent=19 // pred_fallthru
        _
      // Predicated region
      $region25: #{dit_model.32} parent=19 // pred_check
        %p193 = pneg %p89
      $region26: #{dit_model.32} parent=19 // pred_check_branch
        %195 = sbr.rel (%p193) target = $region28
      $region27: #{dit_model.32} parent=19 // pred_region
        %p196 = scmp.lt.s32.totalorder %s19, 3
        %s197 = scalar_select %p196, %s19, 3
        %p198 = scmp.lt.s32.totalorder %s18, 0
        %s199 = scalar_select %p198, %s18, 0
        %s200 = sadd.s32 %s199, %s197
        %s201 = smul.addr %s200, 8
        %s202 = scalar_lea.vmem %s1, %s201
      $region28: #{dit_model.32} parent=19 // pred_fallthru
        _
    $region20: #{dit_model.32} parent=5 // pred_fallthru
      _
    %p203 = scmp.le.s32.totalorder 1, %s9
    %p204 = scmp.lt.s32.totalorder %s9, 9
    %p205 = pnand %p203, %p204
    %p206 = pneg %p205
    // Predicated region
    $region29: #{dit_model.32} parent=5 // pred_check
      _
    $region30: #{dit_model.32} parent=5 // pred_check_branch
      %208 = sbr.rel (%p205) target = $region32
    $region31: #{dit_model.32} parent=5 // pred_region
      %s209 = ssub.s32 %s9, 1
      %s210 = smul.u32 %s20, 4
      %s211 = sadd.s32 %s210, %s23
      %s212 = smul.u32 3, %s21
      %p213 = scmp.lt.s32.totalorder %s211, 7
      %s214 = scalar_select %p213, %s211, 7
      %p215 = scmp.lt.s32.totalorder %s212, 2
      %s216 = scalar_select %p215, %s212, 2
      %s217 = smul.addr %s214, 3
      %s218 = sadd.s32 %s216, %s217
      %s219 = smul.addr %s218, 8
      %s220 = scalar_lea.vmem %s0, %s219
      %p221 = pneg %p67
      %p222 = pneg %p64
      %p223 = scmp.lt.s32.totalorder %s23, 3
      %s224 = scalar_select %p223, %s23, 3
      %p225 = scmp.lt.s32.totalorder %s22, 0
      %s226 = scalar_select %p225, %s22, 0
      %s227 = sadd.s32 %s226, %s224
      %s228 = smul.addr %s227, 8
      %s229 = scalar_lea.vmem %s1, %s228
      %p230 = pneg %p95
      %p231 = pneg %p92
      %p232 = scmp.lt.s32.totalorder %s22, 0
      %s233 = scalar_select %p232, %s22, 0
      %s234 = scalar_lea.vmem %s2, %s233
      %p235 = pneg %p121
      %p236 = pneg %p118
      %p237 = pneg %p151
      %p238 = pneg %p148
      %s239 = smul.u32 3, %s21
      %p240 = scmp.lt.s32.totalorder %s20, 1
      %s241 = scalar_select %p240, %s20, 1
      %p242 = scmp.lt.s32.totalorder %s239, 2
      %s243 = scalar_select %p242, %s239, 2
      %p244 = scmp.lt.s32.totalorder %s22, 0
      %s245 = scalar_select %p244, %s22, 0
      %s246 = sadd.s32 %s245, %s243
      %s247 = smul.addr %s241, 3
      %s248 = sadd.s32 %s246, %s247
      %s249 = smul.addr %s248, 8
      %s250 = scalar_lea.vmem %s3, %s249
      %s251 = smul.u32 %s20, 4
      %s252 = sadd.s32 %s251, %s23
      %s253 = smul.u32 3, %s21
      %p254 = scmp.lt.s32.totalorder %s252, 7
      %s255 = scalar_select %p254, %s252, 7
      %p256 = scmp.lt.s32.totalorder %s253, 2
      %s257 = scalar_select %p256, %s253, 2
      %s258 = smul.addr %s255, 3
      %s259 = sadd.s32 %s257, %s258
      %s260 = smul.addr %s259, 8
      %s261 = scalar_lea.vmem %s0, %s260
      %s262 = smul.u32 %s20, 4
      %s263 = sadd.s32 %s262, %s23
      %s264 = smul.u32 3, %s21
      %p265 = scmp.lt.s32.totalorder %s23, 3
      %s266 = scalar_select %p265, %s23, 3
      %p267 = scmp.lt.s32.totalorder %s22, 0
      %s268 = scalar_select %p267, %s22, 0
      %s269 = sadd.s32 %s268, %s266
      %s270 = smul.addr %s269, 8
      %s271 = scalar_lea.vmem %s1, %s270
      %p272 = scmp.lt.s32.totalorder %s22, 0
      %s273 = scalar_select %p272, %s22, 0
      %s274 = scalar_lea.vmem %s2, %s273
      %s275 = smul.u32 3, %s21
      %p276 = scmp.lt.s32.totalorder %s20, 1
      %s277 = scalar_select %p276, %s20, 1
      %p278 = scmp.lt.s32.totalorder %s275, 2
      %s279 = scalar_select %p278, %s275, 2
      %p280 = scmp.lt.s32.totalorder %s22, 0
      %s281 = scalar_select %p280, %s22, 0
      %s282 = sadd.s32 %s281, %s279
      %s283 = smul.addr %s277, 3
      %s284 = sadd.s32 %s282, %s283
      %s285 = smul.addr %s284, 8
      %s286 = scalar_lea.vmem %s3, %s285
      %s287 = smul.u32 3, %s21
      %p289 = scmp.eq.s32.totalorder %s23, 0
      // Predicated region
      $region33: #{dit_model.32} parent=31 // pred_check
        %p290 = pneg %p289
      $region34: #{dit_model.32} parent=31 // pred_check_branch
        %292 = sbr.rel (%p290) target = $region36
      $region35: #{dit_model.32} parent=31 // pred_region
        %vm293 = vcmask 261120
        %294 = vst.msk [vmem:[#allocation2] sm:$0xff] %vm293, 0.0
        %295 = vst.msk [vmem:[#allocation2 + $0x8] sm:$0xff] %vm293, 0.0
        %296 = vst.msk [vmem:[#allocation2 + $0x10] sm:$0xff] %vm293, 0.0
      $region36: #{dit_model.32} parent=31 // pred_fallthru
        _
      %v297 = vld [vmem:[#allocation2] sm:$0xff]
      %v298 = vld [vmem:[#allocation2 + $0x8] sm:$0xff]
      %v299 = vld [vmem:[#allocation2 + $0x10] sm:$0xff]
      %v300 = vld [vmem:[%s261] sm:$0xff]
      %v301 = vld [vmem:[%s261 + $0x8] sm:$0xff]
      %v302 = vld [vmem:[%s261 + $0x10] sm:$0xff]
      %v303 = vpack.c.bf16 %v301, %v300
      %v304 = vpack.c.bf16 %v302, %v302
      %v305 = vld [vmem:[%s271] sm:$0xff]
      %v306 = vpack.c.bf16 %v305, %v305
      %vm307 = vcmask 64512
      %v309 = vsel %vm307, %v303, 0
      %v312 = vsel %vm307, %v304, 0
      %vm314 = vcmask 1043456
      %v316 = vsel %vm314, %v306, 0
      %318 = vmatprep.subr.bf16.mxu0 0
      %319 = vmatpush1.bf16.msra.mxu0 %v316
      %320 = vmatprep.subr.bf16.mxu0 0
      %321 = vmatpush1.bf16.msra.mxu0 0
      %322 = vmatprep.subr.bf16.mxu0 0
      %323 = vmatpush1.bf16.msra.mxu0 0
      %324 = vmatprep.subr.bf16.mxu0 0
      %325 = vmatpush1.bf16.msra.mxu0 0
      %326 = vmatprep.subr.bf16.mxu0 0
      %327 = vmatpush1.bf16.msra.mxu0 0
      %328 = vmatprep.subr.bf16.mxu0 0
      %329 = vmatpush1.bf16.msra.mxu0 0
      %330 = vmatprep.subr.bf16.mxu0 0
      %331 = vmatpush1.bf16.msra.mxu0 0
      %332 = vmatprep.subr.bf16.mxu0 0
      %333 = vmatpush1.bf16.msra.mxu0 0
      %334 = vmatprep.subr.bf16.mxu0 0
      %335 = vmatpush1.bf16.msra.mxu0 0
      %336 = vmatprep.subr.bf16.mxu0 0
      %337 = vmatpush1.bf16.msra.mxu0 0
      %338 = vmatprep.subr.bf16.mxu0 0
      %339 = vmatpush1.bf16.msra.mxu0 0
      %340 = vmatprep.subr.bf16.mxu0 0
      %341 = vmatpush1.bf16.msra.mxu0 0
      %342 = vmatprep.subr.bf16.mxu0 0
      %343 = vmatpush1.bf16.msra.mxu0 0
      %344 = vmatprep.subr.bf16.mxu0 0
      %345 = vmatpush1.bf16.msra.mxu0 0
      %346 = vmatprep.subr.bf16.mxu0 0
      %347 = vmatpush1.bf16.msra.mxu0 0
      %348 = vmatprep.subr.bf16.mxu0 0
      %349 = vmatpush1.bf16.msra.mxu0 0
      %350 = vmatprep.mubr.bf16.mxu0 0
      %351 = vmatmul.mubr.bf16.gmra.mrb[0].mxu0 %v309
      %v352 = vpop.f32.mrb[0].mxu0
      %v353 = vadd.f32 0.0, %v352
      %v354 = vpop.f32.mrb[0].mxu0
      %v355 = vpop.f32.mrb[0].mxu0
      %v356 = vadd.f32 0.0, %v355
      %v357 = vpop.f32.mrb[0].mxu0
      %358 = vmatprep.mubr.bf16.mxu0 0
      %359 = vmatmul.mubr.bf16.gmra.mrb[0].mxu0 %v312
      %v360 = vpop.f32.mrb[0].mxu0
      %v361 = vadd.f32 0.0, %v360
      %v362 = vpop.f32.mrb[0].mxu0
      %v363 = vpop.f32.mrb[0].mxu0
      %v364 = vpop.f32.mrb[0].mxu0
      %365 = vdwg.mxu0
      %v366 = vadd.f32 %v297, %v353
      %v367 = vadd.f32 %v298, %v356
      %v368 = vadd.f32 %v299, %v361
      %vm369 = vcmask 261120
      %370 = vst.msk [vmem:[#allocation2] sm:$0xff] %vm369, %v366
      %371 = vst.msk [vmem:[#allocation2 + $0x8] sm:$0xff] %vm369, %v367
      %372 = vst.msk [vmem:[#allocation2 + $0x10] sm:$0xff] %vm369, %v368
      %p373 = scmp.eq.s32.totalorder %s23, 3
      // Predicated region
      $region37: #{dit_model.32} parent=31 // pred_check
        %p374 = pneg %p373
      $region38: #{dit_model.32} parent=31 // pred_check_branch
        %376 = sbr.rel (%p374) target = $region40
      $region39: #{dit_model.32} parent=31 // pred_region
        %v377 = vld [vmem:[#allocation2] sm:$0xff]
        %v378 = vld [vmem:[#allocation2 + $0x8] sm:$0xff]
        %v379 = vld [vmem:[#allocation2 + $0x10] sm:$0xff]
        %v380 = vld [vmem:[%s274] sm:$0x1]
        %v382 = vlaneseq
        %v383 = vshrl.u32 %v382, 7
        %v384 = vsub.s32 0, %v383
        %v385 = vrot.slane %v380, %v384
        %v387 = vadd.f32 %v377, %v385
        %v388 = vadd.f32 %v378, %v385
        %v389 = vadd.f32 %v379, %v385
        %390 = vst.msk [vmem:[%s286] sm:$0xff] %vm369, %v387
        %391 = vst.msk [vmem:[%s286 + $0x8] sm:$0xff] %vm369, %v388
        %392 = vst.msk [vmem:[%s286 + $0x10] sm:$0xff] %vm369, %v389
      $region40: #{dit_model.32} parent=31 // pred_fallthru
        _
      %s393 = smul.u32 3, %s21
      %p394 = scmp.lt.s32.totalorder %s20, 1
      %s395 = scalar_select %p394, %s20, 1
      %p396 = scmp.lt.s32.totalorder %s393, 2
      %s397 = scalar_select %p396, %s393, 2
      %p398 = scmp.lt.s32.totalorder %s22, 0
      %s399 = scalar_select %p398, %s22, 0
      %s400 = sadd.s32 %s399, %s397
      %s401 = smul.addr %s395, 3
      %s402 = sadd.s32 %s400, %s401
      %s403 = smul.addr %s402, 8
      %s404 = scalar_lea.vmem %s3, %s403
      // Predicated region
      $region41: #{dit_model.32} parent=31 // pred_check
        %p405 = pneg %p148
      $region42: #{dit_model.32} parent=31 // pred_check_branch
        %407 = sbr.rel (%p405) target = $region44
      $region43: #{dit_model.32} parent=31 // pred_region
        %s408 = smul.u32 3, %s21
      $region44: #{dit_model.32} parent=31 // pred_fallthru
        _
    $region32: #{dit_model.32} parent=5 // pred_fallthru
      _
    %p409 = scmp.le.s32.totalorder 2, %s9
    // Predicated region
    $region45: #{dit_model.32} parent=5 // pred_check
      %p410 = pneg %p409
    $region46: #{dit_model.32} parent=5 // pred_check_branch
      %412 = sbr.rel (%p410) target = $region48
    $region47: #{dit_model.32} parent=5 // pred_region
      %s413 = ssub.s32 %s9, 2
      // Predicated region
      $region49: #{dit_model.32} parent=47 // pred_check
        %p414 = pneg %p154
      $region50: #{dit_model.32} parent=47 // pred_check_branch
        %416 = sbr.rel (%p414) target = $region52
      $region51: #{dit_model.32} parent=47 // pred_region
        %s417 = smul.u32 3, %s25
        %p418 = scmp.lt.s32.totalorder %s24, 1
        %s419 = scalar_select %p418, %s24, 1
        %p420 = scmp.lt.s32.totalorder %s417, 2
        %s421 = scalar_select %p420, %s417, 2
        %p422 = scmp.lt.s32.totalorder %s26, 0
        %s423 = scalar_select %p422, %s26, 0
        %s424 = sadd.s32 %s423, %s421
        %s425 = smul.addr %s419, 3
        %s426 = sadd.s32 %s424, %s425
        %s427 = smul.addr %s426, 8
        %s428 = scalar_lea.vmem %s3, %s427
      $region52: #{dit_model.32} parent=47 // pred_fallthru
        _
    $region48: #{dit_model.32} parent=5 // pred_fallthru
      _
  $region6: #{dit_model.32} parent=0 // loop_footer
    %s13 = sadd.s32 1, %s9
  $region7: #{dit_model.32} parent=0 // loop_footer_branch
    %8 = sbr.rel target = $region3
  $region8: #{dit_model.32} parent=0 // loop_exit
    _

// kernel: dit_model.33
$region0: #{dit_model.33}
  #allocation0 [shape = 'u32[]', space=smem, size = 0x4, offset = 0x4, fixed_abs, tag = 'smem constant byte address 0x4 - core index']
  #allocation1 [shape = 'u32[144,128]{1,0:T(1,128)}', space=vmem, size = 0x12000, scoped, tag = 'internal scratch']
  #allocation2 [shape = 'f32[16,32]{1,0:T(8,128)}', space=vmem, size = 0x2000, scoped, tag = 'scratch operand']
  %s0 = inlined_call_operand.vmem [shape: f32[2,16,32], index: 0, kind: input, shape index: {}]
  %s1 = inlined_call_operand.vmem [shape: f32[32,32], index: 1, kind: input, shape index: {}]
  %s2 = inlined_call_operand.vmem [shape: f32[1,32], index: 2, kind: input, shape index: {}]
  %s3 = inlined_call_operand.vmem [shape: f32[2,1,32], index: 3, kind: input, shape index: {}]
  %s4 = inlined_call_operand.vmem [shape: f32[2,1,32], index: 4, kind: input, shape index: {}]
  %s5 = inlined_call_operand.vmem [shape: f32[2,16,32], index: 5, kind: input, shape index: {}]
  %s6 = inlined_call_operand.vmem [shape: f32[2,16,32], index: 6, kind: output, shape index: {}]
  %s7 = sld [smem:[#allocation0]]
  $region65: #{dit_model.33} parent=0
    _
  %s9 = ssub.s32 1, %s7
  %s10 = scalar_select 0, %s9, %s7
  loop: start=0, step=1, limit=4
  $region2: #{dit_model.33} parent=0 // loop_pre_header
    _
  $region3: #{dit_model.33} parent=0 // loop_header
    %s12 = sphi 0, %s16
    %p13 = scmp.ge.s32.totalorder %s12, 4
    %s19 = sphi 0, %s45
    %s20 = sphi 0, %s41
    %s21 = sphi 0, %s37
    %s22 = sphi 0, %s33
    %s23 = sphi 0, %s19
    %s24 = sphi 0, %s20
    %s25 = sphi 0, %s21
    %s26 = sphi 0, %s22
    %s27 = sphi 0, %s23
    %s28 = sphi 0, %s24
    %s29 = sphi 0, %s25
    %s30 = sphi 0, %s26
    %s52 = sphi 0, %s54
    %s55 = sphi 0, %s52
    %s56 = sphi 0, %s55
    %s72 = sphi 0, %s56
    %s80 = sphi 0, %s82
    %s83 = sphi 0, %s80
    %s84 = sphi 0, %s83
    %s100 = sphi 0, %s84
    %s106 = sphi 0, %s108
    %s109 = sphi 0, %s106
    %s110 = sphi 0, %s109
    %s126 = sphi 0, %s110
    %s134 = sphi 0, %s136
    %s137 = sphi 0, %s134
    %s138 = sphi 0, %s137
    %s154 = sphi 0, %s138
    %s162 = sphi 0, %s164
    %s165 = sphi 0, %s162
    %s166 = sphi 0, %s165
    %s182 = sphi 0, %s166
    %s192 = sphi 0, %s194
    %s195 = sphi 0, %s192
    %s196 = sphi 0, %s195
    %s212 = sphi 0, %s196
    %s222 = sphi 0, %s224
    %s225 = sphi 0, %s222
    %s226 = sphi 0, %s225
    %s242 = sphi 0, %s226
  $region4: #{dit_model.33} parent=0 // loop_header_branch
    %15 = sbr.rel (%p13) target = $region8
  $region5: #{dit_model.33} parent=0 // loop_body
    %s17 = ssub.s32 %s12, 1
    %s18 = ssub.s32 %s12, 2
    %s31 = sadd.s32 1, %s22
    %p32 = scmp.ge.s32.totalorder %s31, 1
    %s33 = scalar_select %p32, 0, %s31
    %s34 = sadd.s32 1, %s21
    %s35 = scalar_select %p32, %s34, %s21
    %p36 = scmp.ge.s32.totalorder %s35, 1
    %s37 = scalar_select %p36, 0, %s35
    %s38 = sadd.s32 1, %s20
    %s39 = scalar_select %p36, %s38, %s20
    %p40 = scmp.ge.s32.totalorder %s39, 1
    %s41 = scalar_select %p40, 0, %s39
    %s42 = sadd.s32 1, %s19
    %s43 = scalar_select %p40, %s42, %s19
    %p44 = scmp.ge.s32.totalorder %s43, 2
    %s45 = scalar_select %p44, 0, %s43
    %s46 = ssub.s32 %s19, %s45
    %s47 = ssub.s32 %s20, %s41
    %s48 = sor.u32 %s46, %s47
    %s49 = ssub.s32 %s22, %s33
    %s50 = sor.u32 %s48, %s49
    %p51 = scmp.eq.s32.totalorder %s50, 0
    %s53 = sadd.s32 %s52, 1
    %s54 = scalar_select %p51, %s52, %s53
    %p57 = pneg %p51
    %p58 = scmp.eq.s32.totalorder %s12, 1
    %p59 = por %p57, %p58
    %p60 = scmp.ne.s32.totalorder %s52, %s55
    %p61 = scmp.eq.s32.totalorder %s12, 0
    %p62 = por %p60, %p61
    %p63 = scmp.ne.s32.totalorder %s52, %s55
    %p64 = scmp.eq.s32.totalorder %s17, 1
    %p65 = por %p63, %p64
    %p66 = scmp.ne.s32.totalorder %s55, %s56
    %p67 = scmp.eq.s32.totalorder %s17, 0
    %p68 = por %p66, %p67
    %p69 = scmp.ne.s32.totalorder %s55, %s56
    %p70 = scmp.eq.s32.totalorder %s18, 1
    %p71 = por %p69, %p70
    %p73 = scmp.ne.s32.totalorder %s56, %s72
    %p74 = scmp.eq.s32.totalorder %s18, 0
    %p75 = por %p73, %p74
    %s76 = ssub.s32 %s22, %s33
    %s77 = ssub.s32 %s21, %s37
    %s78 = sor.u32 %s76, %s77
    %p79 = scmp.eq.s32.totalorder %s78, 0
    %s81 = sadd.s32 %s80, 1
    %s82 = scalar_select %p79, %s80, %s81
    %p85 = pneg %p79
    %p86 = scmp.eq.s32.totalorder %s12, 1
    %p87 = por %p85, %p86
    %p88 = scmp.ne.s32.totalorder %s80, %s83
    %p89 = scmp.eq.s32.totalorder %s12, 0
    %p90 = por %p88, %p89
    %p91 = scmp.ne.s32.totalorder %s80, %s83
    %p92 = scmp.eq.s32.totalorder %s17, 1
    %p93 = por %p91, %p92
    %p94 = scmp.ne.s32.totalorder %s83, %s84
    %p95 = scmp.eq.s32.totalorder %s17, 0
    %p96 = por %p94, %p95
    %p97 = scmp.ne.s32.totalorder %s83, %s84
    %p98 = scmp.eq.s32.totalorder %s18, 1
    %p99 = por %p97, %p98
    %p101 = scmp.ne.s32.totalorder %s84, %s100
    %p102 = scmp.eq.s32.totalorder %s18, 0
    %p103 = por %p101, %p102
    %s104 = ssub.s32 %s21, %s37
    %p105 = scmp.eq.s32.totalorder %s104, 0
    %s107 = sadd.s32 %s106, 1
    %s108 = scalar_select %p105, %s106, %s107
    %p111 = pneg %p105
    %p112 = scmp.eq.s32.totalorder %s12, 1
    %p113 = por %p111, %p112
    %p114 = scmp.ne.s32.totalorder %s106, %s109
    %p115 = scmp.eq.s32.totalorder %s12, 0
    %p116 = por %p114, %p115
    %p117 = scmp.ne.s32.totalorder %s106, %s109
    %p118 = scmp.eq.s32.totalorder %s17, 1
    %p119 = por %p117, %p118
    %p120 = scmp.ne.s32.totalorder %s109, %s110
    %p121 = scmp.eq.s32.totalorder %s17, 0
    %p122 = por %p120, %p121
    %p123 = scmp.ne.s32.totalorder %s109, %s110
    %p124 = scmp.eq.s32.totalorder %s18, 1
    %p125 = por %p123, %p124
    %p127 = scmp.ne.s32.totalorder %s110, %s126
    %p128 = scmp.eq.s32.totalorder %s18, 0
    %p129 = por %p127, %p128
    %s130 = ssub.s32 %s19, %s45
    %s131 = ssub.s32 %s21, %s37
    %s132 = sor.u32 %s130, %s131
    %p133 = scmp.eq.s32.totalorder %s132, 0
    %s135 = sadd.s32 %s134, 1
    %s136 = scalar_select %p133, %s134, %s135
    %p139 = pneg %p133
    %p140 = scmp.eq.s32.totalorder %s12, 1
    %p141 = por %p139, %p140
    %p142 = scmp.ne.s32.totalorder %s134, %s137
    %p143 = scmp.eq.s32.totalorder %s12, 0
    %p144 = por %p142, %p143
    %p145 = scmp.ne.s32.totalorder %s134, %s137
    %p146 = scmp.eq.s32.totalorder %s17, 1
    %p147 = por %p145, %p146
    %p148 = scmp.ne.s32.totalorder %s137, %s138
    %p149 = scmp.eq.s32.totalorder %s17, 0
    %p150 = por %p148, %p149
    %p151 = scmp.ne.s32.totalorder %s137, %s138
    %p152 = scmp.eq.s32.totalorder %s18, 1
    %p153 = por %p151, %p152
    %p155 = scmp.ne.s32.totalorder %s138, %s154
    %p156 = scmp.eq.s32.totalorder %s18, 0
    %p157 = por %p155, %p156
    %s158 = ssub.s32 %s19, %s45
    %s159 = ssub.s32 %s21, %s37
    %s160 = sor.u32 %s158, %s159
    %p161 = scmp.eq.s32.totalorder %s160, 0
    %s163 = sadd.s32 %s162, 1
    %s164 = scalar_select %p161, %s162, %s163
    %p167 = pneg %p161
    %p168 = scmp.eq.s32.totalorder %s12, 1
    %p169 = por %p167, %p168
    %p170 = scmp.ne.s32.totalorder %s162, %s165
    %p171 = scmp.eq.s32.totalorder %s12, 0
    %p172 = por %p170, %p171
    %p173 = scmp.ne.s32.totalorder %s162, %s165
    %p174 = scmp.eq.s32.totalorder %s17, 1
    %p175 = por %p173, %p174
    %p176 = scmp.ne.s32.totalorder %s165, %s166
    %p177 = scmp.eq.s32.totalorder %s17, 0
    %p178 = por %p176, %p177
    %p179 = scmp.ne.s32.totalorder %s165, %s166
    %p180 = scmp.eq.s32.totalorder %s18, 1
    %p181 = por %p179, %p180
    %p183 = scmp.ne.s32.totalorder %s166, %s182
    %p184 = scmp.eq.s32.totalorder %s18, 0
    %p185 = por %p183, %p184
    %s186 = ssub.s32 %s19, %s45
    %s187 = ssub.s32 %s20, %s41
    %s188 = sor.u32 %s186, %s187
    %s189 = ssub.s32 %s21, %s37
    %s190 = sor.u32 %s188, %s189
    %p191 = scmp.eq.s32.totalorder %s190, 0
    %s193 = sadd.s32 %s192, 1
    %s194 = scalar_select %p191, %s192, %s193
    %p197 = pneg %p191
    %p198 = scmp.eq.s32.totalorder %s12, 1
    %p199 = por %p197, %p198
    %p200 = scmp.ne.s32.totalorder %s192, %s195
    %p201 = scmp.eq.s32.totalorder %s12, 0
    %p202 = por %p200, %p201
    %p203 = scmp.ne.s32.totalorder %s192, %s195
    %p204 = scmp.eq.s32.totalorder %s17, 1
    %p205 = por %p203, %p204
    %p206 = scmp.ne.s32.totalorder %s195, %s196
    %p207 = scmp.eq.s32.totalorder %s17, 0
    %p208 = por %p206, %p207
    %p209 = scmp.ne.s32.totalorder %s195, %s196
    %p210 = scmp.eq.s32.totalorder %s18, 1
    %p211 = por %p209, %p210
    %p213 = scmp.ne.s32.totalorder %s196, %s212
    %p214 = scmp.eq.s32.totalorder %s18, 0
    %p215 = por %p213, %p214
    %s216 = ssub.s32 %s19, %s45
    %s217 = ssub.s32 %s20, %s41
    %s218 = sor.u32 %s216, %s217
    %s219 = ssub.s32 %s21, %s37
    %s220 = sor.u32 %s218, %s219
    %p221 = scmp.eq.s32.totalorder %s220, 0
    %s223 = sadd.s32 %s222, 1
    %s224 = scalar_select %p221, %s222, %s223
    %p227 = pneg %p221
    %p228 = scmp.eq.s32.totalorder %s12, 1
    %p229 = por %p227, %p228
    %p230 = scmp.ne.s32.totalorder %s222, %s225
    %p231 = scmp.eq.s32.totalorder %s12, 0
    %p232 = por %p230, %p231
    %p233 = scmp.ne.s32.totalorder %s222, %s225
    %p234 = scmp.eq.s32.totalorder %s17, 1
    %p235 = por %p233, %p234
    %p236 = scmp.ne.s32.totalorder %s225, %s226
    %p237 = scmp.eq.s32.totalorder %s17, 0
    %p238 = por %p236, %p237
    %p239 = scmp.ne.s32.totalorder %s225, %s226
    %p240 = scmp.eq.s32.totalorder %s18, 1
    %p241 = por %p239, %p240
    %p243 = scmp.ne.s32.totalorder %s226, %s242
    %p244 = scmp.eq.s32.totalorder %s18, 0
    %p245 = por %p243, %p244
    %p246 = scmp.le.s32.totalorder 1, %s12
    %p247 = scmp.lt.s32.totalorder %s12, 3
    %p248 = pnand %p246, %p247
    %p249 = pneg %p248
    // Predicated region
    $region9: #{dit_model.33} parent=5 // pred_check
      _
    $region10: #{dit_model.33} parent=5 // pred_check_branch
      %251 = sbr.rel (%p248) target = $region12
    $region11: #{dit_model.33} parent=5 // pred_region
      %s252 = ssub.s32 %s12, 1
      // Predicated region
      $region13: #{dit_model.33} parent=11 // pred_check
        %p253 = pneg %p96
      $region14: #{dit_model.33} parent=11 // pred_check_branch
        %255 = sbr.rel (%p253) target = $region16
      $region15: #{dit_model.33} parent=11 // pred_region
        %s256 = smul.u32 4, %s26
        %p257 = scmp.lt.s32.totalorder %s256, 3
        %s258 = scalar_select %p257, %s256, 3
        %p259 = scmp.lt.s32.totalorder %s25, 0
        %s260 = scalar_select %p259, %s25, 0
        %s261 = sadd.s32 %s260, %s258
        %s262 = smul.addr %s261, 8
        %s263 = scalar_lea.vmem %s1, %s262
        %s264 = smul.u32 4, %s26
      $region16: #{dit_model.33} parent=11 // pred_fallthru
        _
      // Predicated region
      $region17: #{dit_model.33} parent=11 // pred_check
        %p265 = pneg %p122
      $region18: #{dit_model.33} parent=11 // pred_check_branch
        %267 = sbr.rel (%p265) target = $region20
      $region19: #{dit_model.33} parent=11 // pred_region
        %p268 = scmp.lt.s32.totalorder %s25, 0
        %s269 = scalar_select %p268, %s25, 0
        %s270 = scalar_lea.vmem %s2, %s269
      $region20: #{dit_model.33} parent=11 // pred_fallthru
        _
    $region12: #{dit_model.33} parent=5 // pred_fallthru
      _
    %p271 = scmp.lt.s32.totalorder %s12, 2
    // Predicated region
    $region21: #{dit_model.33} parent=5 // pred_check
      %p272 = pneg %p271
    $region22: #{dit_model.33} parent=5 // pred_check_branch
      %274 = sbr.rel (%p272) target = $region24
    $region23: #{dit_model.33} parent=5 // pred_region
      // Predicated region
      $region25: #{dit_model.33} parent=23 // pred_check
        %p275 = pneg %p62
      $region26: #{dit_model.33} parent=23 // pred_check_branch
        %277 = sbr.rel (%p275) target = $region28
      $region27: #{dit_model.33} parent=23 // pred_region
        %s278 = smul.u32 2, %s20
        %p279 = scmp.lt.s32.totalorder %s19, 1
        %s280 = scalar_select %p279, %s19, 1
        %p281 = scmp.lt.s32.totalorder %s278, 1
        %s282 = scalar_select %p281, %s278, 1
        %p283 = scmp.lt.s32.totalorder %s22, 0
        %s284 = scalar_select %p283, %s22, 0
        %s285 = sadd.s32 %s284, %s282
        %s286 = smul.addr %s280, 2
        %s287 = sadd.s32 %s285, %s286
        %s288 = smul.addr %s287, 8
        %s289 = scalar_lea.vmem %s0, %s288
        %s290 = smul.u32 2, %s20
      $region28: #{dit_model.33} parent=23 // pred_fallthru
        _
      // Predicated region
      $region29: #{dit_model.33} parent=23 // pred_check
        %p291 = pneg %p144
      $region30: #{dit_model.33} parent=23 // pred_check_branch
        %293 = sbr.rel (%p291) target = $region32
      $region31: #{dit_model.33} parent=23 // pred_region
        %p294 = scmp.lt.s32.totalorder %s19, 1
        %s295 = scalar_select %p294, %s19, 1
        %p296 = scmp.lt.s32.totalorder %s21, 0
        %s297 = scalar_select %p296, %s21, 0
        %s298 = sadd.s32 %s297, %s295
        %s299 = scalar_lea.vmem %s3, %s298
      $region32: #{dit_model.33} parent=23 // pred_fallthru
        _
      // Predicated region
      $region33: #{dit_model.33} parent=23 // pred_check
        %p300 = pneg %p172
      $region34: #{dit_model.33} parent=23 // pred_check_branch
        %302 = sbr.rel (%p300) target = $region36
      $region35: #{dit_model.33} parent=23 // pred_region
        %p303 = scmp.lt.s32.totalorder %s19, 1
        %s304 = scalar_select %p303, %s19, 1
        %p305 = scmp.lt.s32.totalorder %s21, 0
        %s306 = scalar_select %p305, %s21, 0
        %s307 = sadd.s32 %s306, %s304
        %s308 = scalar_lea.vmem %s4, %s307
      $region36: #{dit_model.33} parent=23 // pred_fallthru
        _
      // Predicated region
      $region37: #{dit_model.33} parent=23 // pred_check
        %p309 = pneg %p202
      $region38: #{dit_model.33} parent=23 // pred_check_branch
        %311 = sbr.rel (%p309) target = $region40
      $region39: #{dit_model.33} parent=23 // pred_region
        %s312 = smul.u32 2, %s20
        %p313 = scmp.lt.s32.totalorder %s19, 1
        %s314 = scalar_select %p313, %s19, 1
        %p315 = scmp.lt.s32.totalorder %s312, 1
        %s316 = scalar_select %p315, %s312, 1
        %p317 = scmp.lt.s32.totalorder %s21, 0
        %s318 = scalar_select %p317, %s21, 0
        %s319 = sadd.s32 %s318, %s316
        %s320 = smul.addr %s314, 2
        %s321 = sadd.s32 %s319, %s320
        %s322 = smul.addr %s321, 8
        %s323 = scalar_lea.vmem %s5, %s322
        %s324 = smul.u32 2, %s20
      $region40: #{dit_model.33} parent=23 // pred_fallthru
        _
    $region24: #{dit_model.33} parent=5 // pred_fallthru
      _
    %p325 = scmp.le.s32.totalorder 1, %s12
    %p326 = scmp.lt.s32.totalorder %s12, 3
    %p327 = pnand %p325, %p326
    %p328 = pneg %p327
    // Predicated region
    $region41: #{dit_model.33} parent=5 // pred_check
      _
    $region42: #{dit_model.33} parent=5 // pred_check_branch
      %330 = sbr.rel (%p327) target = $region44
    $region43: #{dit_model.33} parent=5 // pred_region
      %s331 = ssub.s32 %s12, 1
      %s332 = smul.u32 2, %s24
      %p333 = scmp.lt.s32.totalorder %s23, 1
      %s334 = scalar_select %p333, %s23, 1
      %p335 = scmp.lt.s32.totalorder %s332, 1
      %s336 = scalar_select %p335, %s332, 1
      %p337 = scmp.lt.s32.totalorder %s26, 0
      %s338 = scalar_select %p337, %s26, 0
      %s339 = sadd.s32 %s338, %s336
      %s340 = smul.addr %s334, 2
      %s341 = sadd.s32 %s339, %s340
      %s342 = smul.addr %s341, 8
      %s343 = scalar_lea.vmem %s0, %s342
      %p344 = pneg %p68
      %p345 = pneg %p65
      %s346 = smul.u32 4, %s26
      %p347 = scmp.lt.s32.totalorder %s346, 3
      %s348 = scalar_select %p347, %s346, 3
      %p349 = scmp.lt.s32.totalorder %s25, 0
      %s350 = scalar_select %p349, %s25, 0
      %s351 = sadd.s32 %s350, %s348
      %s352 = smul.addr %s351, 8
      %s353 = scalar_lea.vmem %s1, %s352
      %p354 = pneg %p96
      %p355 = pneg %p93
      %p356 = scmp.lt.s32.totalorder %s25, 0
      %s357 = scalar_select %p356, %s25, 0
      %s358 = scalar_lea.vmem %s2, %s357
      %p359 = pneg %p122
      %p360 = pneg %p119
      %p361 = scmp.lt.s32.totalorder %s23, 1
      %s362 = scalar_select %p361, %s23, 1
      %p363 = scmp.lt.s32.totalorder %s25, 0
      %s364 = scalar_select %p363, %s25, 0
      %s365 = sadd.s32 %s364, %s362
      %s366 = scalar_lea.vmem %s3, %s365
      %p367 = pneg %p150
      %p368 = pneg %p147
      %p369 = scmp.lt.s32.totalorder %s23, 1
      %s370 = scalar_select %p369, %s23, 1
      %p371 = scmp.lt.s32.totalorder %s25, 0
      %s372 = scalar_select %p371, %s25, 0
      %s373 = sadd.s32 %s372, %s370
      %s374 = scalar_lea.vmem %s4, %s373
      %p375 = pneg %p178
      %p376 = pneg %p175
      %s377 = smul.u32 2, %s24
      %p378 = scmp.lt.s32.totalorder %s23, 1
      %s379 = scalar_select %p378, %s23, 1
      %p380 = scmp.lt.s32.totalorder %s377, 1
      %s381 = scalar_select %p380, %s377, 1
      %p382 = scmp.lt.s32.totalorder %s25, 0
      %s383 = scalar_select %p382, %s25, 0
      %s384 = sadd.s32 %s383, %s381
      %s385 = smul.addr %s379, 2
      %s386 = sadd.s32 %s384, %s385
      %s387 = smul.addr %s386, 8
      %s388 = scalar_lea.vmem %s5, %s387
      %p389 = pneg %p208
      %p390 = pneg %p205
      %p391 = pneg %p238
      %p392 = pneg %p235
      %s393 = smul.u32 2, %s24
      %p394 = scmp.lt.s32.totalorder %s23, 1
      %s395 = scalar_select %p394, %s23, 1
      %p396 = scmp.lt.s32.totalorder %s393, 1
      %s397 = scalar_select %p396, %s393, 1
      %p398 = scmp.lt.s32.totalorder %s25, 0
      %s399 = scalar_select %p398, %s25, 0
      %s400 = sadd.s32 %s399, %s397
      %s401 = smul.addr %s395, 2
      %s402 = sadd.s32 %s400, %s401
      %s403 = smul.addr %s402, 8
      %s404 = scalar_lea.vmem %s6, %s403
      %s405 = smul.u32 2, %s24
      %p406 = scmp.lt.s32.totalorder %s23, 1
      %s407 = scalar_select %p406, %s23, 1
      %p408 = scmp.lt.s32.totalorder %s405, 1
      %s409 = scalar_select %p408, %s405, 1
      %p410 = scmp.lt.s32.totalorder %s26, 0
      %s411 = scalar_select %p410, %s26, 0
      %s412 = sadd.s32 %s411, %s409
      %s413 = smul.addr %s407, 2
      %s414 = sadd.s32 %s412, %s413
      %s415 = smul.addr %s414, 8
      %s416 = scalar_lea.vmem %s0, %s415
      %s417 = smul.u32 2, %s24
      %s418 = smul.u32 4, %s26
      %p419 = scmp.lt.s32.totalorder %s418, 3
      %s420 = scalar_select %p419, %s418, 3
      %p421 = scmp.lt.s32.totalorder %s25, 0
      %s422 = scalar_select %p421, %s25, 0
      %s423 = sadd.s32 %s422, %s420
      %s424 = smul.addr %s423, 8
      %s425 = scalar_lea.vmem %s1, %s424
      %s426 = smul.u32 4, %s26
      %p427 = scmp.lt.s32.totalorder %s25, 0
      %s428 = scalar_select %p427, %s25, 0
      %s429 = scalar_lea.vmem %s2, %s428
      %p430 = scmp.lt.s32.totalorder %s23, 1
      %s431 = scalar_select %p430, %s23, 1
      %p432 = scmp.lt.s32.totalorder %s25, 0
      %s433 = scalar_select %p432, %s25, 0
      %s434 = sadd.s32 %s433, %s431
      %s435 = scalar_lea.vmem %s3, %s434
      %p436 = scmp.lt.s32.totalorder %s23, 1
      %s437 = scalar_select %p436, %s23, 1
      %p438 = scmp.lt.s32.totalorder %s25, 0
      %s439 = scalar_select %p438, %s25, 0
      %s440 = sadd.s32 %s439, %s437
      %s441 = scalar_lea.vmem %s4, %s440
      %s442 = smul.u32 2, %s24
      %p443 = scmp.lt.s32.totalorder %s23, 1
      %s444 = scalar_select %p443, %s23, 1
      %p445 = scmp.lt.s32.totalorder %s442, 1
      %s446 = scalar_select %p445, %s442, 1
      %p447 = scmp.lt.s32.totalorder %s25, 0
      %s448 = scalar_select %p447, %s25, 0
      %s449 = sadd.s32 %s448, %s446
      %s450 = smul.addr %s444, 2
      %s451 = sadd.s32 %s449, %s450
      %s452 = smul.addr %s451, 8
      %s453 = scalar_lea.vmem %s5, %s452
      %s454 = smul.u32 2, %s24
      %s455 = smul.u32 2, %s24
      %p456 = scmp.lt.s32.totalorder %s23, 1
      %s457 = scalar_select %p456, %s23, 1
      %p458 = scmp.lt.s32.totalorder %s455, 1
      %s459 = scalar_select %p458, %s455, 1
      %p460 = scmp.lt.s32.totalorder %s25, 0
      %s461 = scalar_select %p460, %s25, 0
      %s462 = sadd.s32 %s461, %s459
      %s463 = smul.addr %s457, 2
      %s464 = sadd.s32 %s462, %s463
      %s465 = smul.addr %s464, 8
      %s466 = scalar_lea.vmem %s6, %s465
      %s467 = smul.u32 2, %s24
      %p469 = scmp.eq.s32.totalorder %s26, 0
      // Predicated region
      $region45: #{dit_model.33} parent=43 // pred_check
        %p470 = pneg %p469
      $region46: #{dit_model.33} parent=43 // pred_check_branch
        %472 = sbr.rel (%p470) target = $region48
      $region47: #{dit_model.33} parent=43 // pred_region
        %vm473 = vcmask 261120
        %474 = vst.msk [vmem:[#allocation2] sm:$0xff] %vm473, 0.0
        %475 = vst.msk [vmem:[#allocation2 + $0x8] sm:$0xff] %vm473, 0.0
      $region48: #{dit_model.33} parent=43 // pred_fallthru
        _
      %v476 = vld [vmem:[#allocation2] sm:$0xff]
      %v477 = vld [vmem:[#allocation2 + $0x8] sm:$0xff]
      %v478 = vld [vmem:[%s416] sm:$0xff]
      %v479 = vld [vmem:[%s416 + $0x8] sm:$0xff]
      %v480 = vpack.c.bf16 %v479, %v478
      %v481 = vld [vmem:[%s425] sm:$0xff]
      %v482 = vld [vmem:[%s425 + $0x8] sm:$0xff]
      %v483 = vld [vmem:[%s425 + $0x10] sm:$0xff]
      %v484 = vld [vmem:[%s425 + $0x18] sm:$0xff]
      %v485 = vpack.c.bf16 %v482, %v481
      %v486 = vpack.c.bf16 %v484, %v483
      %vm487 = vcmask 261120
      %v489 = vsel %vm487, %v480, 0
      %491 = vmatprep.subr.bf16.mxu0 0
      %492 = vmatpush1.bf16.msra.mxu0 %v485
      %493 = vmatprep.subr.bf16.mxu0 0
      %494 = vmatpush1.bf16.msra.mxu0 %v486
      %495 = vmatprep.subr.bf16.mxu0 0
      %496 = vmatpush1.bf16.msra.mxu0 0
      %497 = vmatprep.subr.bf16.mxu0 0
      %498 = vmatpush1.bf16.msra.mxu0 0
      %499 = vmatprep.subr.bf16.mxu0 0
      %500 = vmatpush1.bf16.msra.mxu0 0
      %501 = vmatprep.subr.bf16.mxu0 0
      %502 = vmatpush1.bf16.msra.mxu0 0
      %503 = vmatprep.subr.bf16.mxu0 0
      %504 = vmatpush1.bf16.msra.mxu0 0
      %505 = vmatprep.subr.bf16.mxu0 0
      %506 = vmatpush1.bf16.msra.mxu0 0
      %507 = vmatprep.subr.bf16.mxu0 0
      %508 = vmatpush1.bf16.msra.mxu0 0
      %509 = vmatprep.subr.bf16.mxu0 0
      %510 = vmatpush1.bf16.msra.mxu0 0
      %511 = vmatprep.subr.bf16.mxu0 0
      %512 = vmatpush1.bf16.msra.mxu0 0
      %513 = vmatprep.subr.bf16.mxu0 0
      %514 = vmatpush1.bf16.msra.mxu0 0
      %515 = vmatprep.subr.bf16.mxu0 0
      %516 = vmatpush1.bf16.msra.mxu0 0
      %517 = vmatprep.subr.bf16.mxu0 0
      %518 = vmatpush1.bf16.msra.mxu0 0
      %519 = vmatprep.subr.bf16.mxu0 0
      %520 = vmatpush1.bf16.msra.mxu0 0
      %521 = vmatprep.subr.bf16.mxu0 0
      %522 = vmatpush1.bf16.msra.mxu0 0
      %523 = vmatprep.mubr.bf16.mxu0 0
      %524 = vmatmul.mubr.bf16.gmra.mrb[0].mxu0 %v489
      %v525 = vpop.f32.mrb[0].mxu0
      %v526 = vadd.f32 0.0, %v525
      %v527 = vpop.f32.mrb[0].mxu0
      %v528 = vpop.f32.mrb[0].mxu0
      %v529 = vadd.f32 0.0, %v528
      %v530 = vpop.f32.mrb[0].mxu0
      %531 = vdwg.mxu0
      %v532 = vadd.f32 %v476, %v526
      %v533 = vadd.f32 %v477, %v529
      %534 = vst.msk [vmem:[#allocation2] sm:$0xff] %vm487, %v532
      %535 = vst.msk [vmem:[#allocation2 + $0x8] sm:$0xff] %vm487, %v533
      // Predicated region
      $region49: #{dit_model.33} parent=43 // pred_check
        %p536 = pneg %p469
      $region50: #{dit_model.33} parent=43 // pred_check_branch
        %538 = sbr.rel (%p536) target = $region52
      $region51: #{dit_model.33} parent=43 // pred_region
        %v539 = vld [vmem:[#allocation2] sm:$0xff]
        %v540 = vld [vmem:[#allocation2 + $0x8] sm:$0xff]
        %v541 = vld [vmem:[%s429] sm:$0x1]
        %v543 = vlaneseq
        %v544 = vshrl.u32 %v543, 7
        %v545 = vsub.s32 0, %v544
        %v546 = vrot.slane %v541, %v545
        %v548 = vadd.f32 %v539, %v546
        %v549 = vadd.f32 %v540, %v546
        %v550 = vld [vmem:[%s435] sm:$0x1]
        %v551 = vadd.f32 %v550, 1.0
        %v553 = vlaneseq
        %v554 = vshrl.u32 %v553, 7
        %v555 = vsub.s32 0, %v554
        %v556 = vrot.slane %v551, %v555
        %v558 = vmul.f32 %v548, %v556
        %v559 = vmul.f32 %v549, %v556
        %v560 = vld [vmem:[%s441] sm:$0x1]
        %v562 = vlaneseq
        %v563 = vshrl.u32 %v562, 7
        %v564 = vsub.s32 0, %v563
        %v565 = vrot.slane %v560, %v564
        %v567 = vadd.f32 %v558, %v565
        %v568 = vadd.f32 %v559, %v565
        %v569 = vld [vmem:[%s453] sm:$0xff]
        %v570 = vld [vmem:[%s453 + $0x8] sm:$0xff]
        %v571 = vadd.f32 %v567, %v569
        %v572 = vadd.f32 %v568, %v570
        %573 = vst.msk [vmem:[%s466] sm:$0xff] %vm487, %v571
        %574 = vst.msk [vmem:[%s466 + $0x8] sm:$0xff] %vm487, %v572
      $region52: #{dit_model.33} parent=43 // pred_fallthru
        _
      %s575 = smul.u32 2, %s24
      %p576 = scmp.lt.s32.totalorder %s23, 1
      %s577 = scalar_select %p576, %s23, 1
      %p578 = scmp.lt.s32.totalorder %s575, 1
      %s579 = scalar_select %p578, %s575, 1
      %p580 = scmp.lt.s32.totalorder %s25, 0
      %s581 = scalar_select %p580, %s25, 0
      %s582 = sadd.s32 %s581, %s579
      %s583 = smul.addr %s577, 2
      %s584 = sadd.s32 %s582, %s583
      %s585 = smul.addr %s584, 8
      %s586 = scalar_lea.vmem %s6, %s585
      // Predicated region
      $region53: #{dit_model.33} parent=43 // pred_check
        %p587 = pneg %p235
      $region54: #{dit_model.33} parent=43 // pred_check_branch
        %589 = sbr.rel (%p587) target = $region56
      $region55: #{dit_model.33} parent=43 // pred_region
        %s590 = smul.u32 2, %s24
      $region56: #{dit_model.33} parent=43 // pred_fallthru
        _
    $region44: #{dit_model.33} parent=5 // pred_fallthru
      _
    %p591 = scmp.le.s32.totalorder 2, %s12
    // Predicated region
    $region57: #{dit_model.33} parent=5 // pred_check
      %p592 = pneg %p591
    $region58: #{dit_model.33} parent=5 // pred_check_branch
      %594 = sbr.rel (%p592) target = $region60
    $region59: #{dit_model.33} parent=5 // pred_region
      %s595 = ssub.s32 %s12, 2
      // Predicated region
      $region61: #{dit_model.33} parent=59 // pred_check
        %p596 = pneg %p241
      $region62: #{dit_model.33} parent=59 // pred_check_branch
        %598 = sbr.rel (%p596) target = $region64
      $region63: #{dit_model.33} parent=59 // pred_region
        %s599 = smul.u32 2, %s28
        %p600 = scmp.lt.s32.totalorder %s27, 1
        %s601 = scalar_select %p600, %s27, 1
        %p602 = scmp.lt.s32.totalorder %s599, 1
        %s603 = scalar_select %p602, %s599, 1
        %p604 = scmp.lt.s32.totalorder %s29, 0
        %s605 = scalar_select %p604, %s29, 0
        %s606 = sadd.s32 %s605, %s603
        %s607 = smul.addr %s601, 2
        %s608 = sadd.s32 %s606, %s607
        %s609 = smul.addr %s608, 8
        %s610 = scalar_lea.vmem %s6, %s609
      $region64: #{dit_model.33} parent=59 // pred_fallthru
        _
    $region60: #{dit_model.33} parent=5 // pred_fallthru
      _
  $region6: #{dit_model.33} parent=0 // loop_footer
    %s16 = sadd.s32 1, %s12
  $region7: #{dit_model.33} parent=0 // loop_footer_branch
    %11 = sbr.rel target = $region3
  $region8: #{dit_model.33} parent=0 // loop_exit
    _

// kernel: dit_model.35
$region0: #{dit_model.35}
  #allocation0 [shape = 'u32[]', space=smem, size = 0x4, offset = 0x4, fixed_abs, tag = 'smem constant byte address 0x4 - core index']
  #allocation1 [shape = 'u32[144,128]{1,0:T(1,128)}', space=vmem, size = 0x12000, scoped, tag = 'internal scratch']
  %s0 = inlined_call_operand.vmem [shape: f32[2,16,32], index: 0, kind: input, shape index: {}]
  %s1 = inlined_call_operand.vmem [shape: f32[2,1,32], index: 1, kind: input, shape index: {}]
  %s2 = inlined_call_operand.vmem [shape: f32[2,1,32], index: 2, kind: input, shape index: {}]
  %s3 = inlined_call_operand.vmem [shape: f32[32,128], index: 3, kind: input, shape index: {}]
  %s4 = inlined_call_operand.vmem [shape: f32[1,128], index: 4, kind: input, shape index: {}]
  %s5 = inlined_call_operand.vmem [shape: f32[2,16,128], index: 5, kind: output, shape index: {}]
  %s6 = sld [smem:[#allocation0]]
  $region53: #{dit_model.35} parent=0
    _
  %s8 = ssub.s32 1, %s6
  %s9 = scalar_select 0, %s8, %s6
  loop: start=0, step=1, limit=4
  $region2: #{dit_model.35} parent=0 // loop_pre_header
    _
  $region3: #{dit_model.35} parent=0 // loop_header
    %s11 = sphi 0, %s15
    %p12 = scmp.ge.s32.totalorder %s11, 4
    %s18 = sphi 0, %s37
    %s19 = sphi 0, %s33
    %s20 = sphi 0, %s29
    %s21 = sphi 0, %s18
    %s22 = sphi 0, %s19
    %s23 = sphi 0, %s20
    %s24 = sphi 0, %s21
    %s25 = sphi 0, %s22
    %s26 = sphi 0, %s23
    %s42 = sphi 0, %s44
    %s45 = sphi 0, %s42
    %s46 = sphi 0, %s45
    %s62 = sphi 0, %s46
    %s68 = sphi 0, %s70
    %s71 = sphi 0, %s68
    %s72 = sphi 0, %s71
    %s88 = sphi 0, %s72
    %s94 = sphi 0, %s96
    %s97 = sphi 0, %s94
    %s98 = sphi 0, %s97
    %s114 = sphi 0, %s98
    %s120 = sphi 0, %s122
    %s123 = sphi 0, %s120
    %s124 = sphi 0, %s123
    %s140 = sphi 0, %s124
    %s146 = sphi 0, %s148
    %s149 = sphi 0, %s146
    %s150 = sphi 0, %s149
    %s166 = sphi 0, %s150
    %s176 = sphi 0, %s178
    %s179 = sphi 0, %s176
    %s180 = sphi 0, %s179
    %s196 = sphi 0, %s180
  $region4: #{dit_model.35} parent=0 // loop_header_branch
    %14 = sbr.rel (%p12) target = $region8
  $region5: #{dit_model.35} parent=0 // loop_body
    %s16 = ssub.s32 %s11, 1
    %s17 = ssub.s32 %s11, 2
    %s27 = sadd.s32 1, %s20
    %p28 = scmp.ge.s32.totalorder %s27, 1
    %s29 = scalar_select %p28, 0, %s27
    %s30 = sadd.s32 1, %s19
    %s31 = scalar_select %p28, %s30, %s19
    %p32 = scmp.ge.s32.totalorder %s31, 1
    %s33 = scalar_select %p32, 0, %s31
    %s34 = sadd.s32 1, %s18
    %s35 = scalar_select %p32, %s34, %s18
    %p36 = scmp.ge.s32.totalorder %s35, 2
    %s37 = scalar_select %p36, 0, %s35
    %s38 = ssub.s32 %s18, %s37
    %s39 = ssub.s32 %s19, %s33
    %s40 = sor.u32 %s38, %s39
    %p41 = scmp.eq.s32.totalorder %s40, 0
    %s43 = sadd.s32 %s42, 1
    %s44 = scalar_select %p41, %s42, %s43
    %p47 = pneg %p41
    %p48 = scmp.eq.s32.totalorder %s11, 1
    %p49 = por %p47, %p48
    %p50 = scmp.ne.s32.totalorder %s42, %s45
    %p51 = scmp.eq.s32.totalorder %s11, 0
    %p52 = por %p50, %p51
    %p53 = scmp.ne.s32.totalorder %s42, %s45
    %p54 = scmp.eq.s32.totalorder %s16, 1
    %p55 = por %p53, %p54
    %p56 = scmp.ne.s32.totalorder %s45, %s46
    %p57 = scmp.eq.s32.totalorder %s16, 0
    %p58 = por %p56, %p57
    %p59 = scmp.ne.s32.totalorder %s45, %s46
    %p60 = scmp.eq.s32.totalorder %s17, 1
    %p61 = por %p59, %p60
    %p63 = scmp.ne.s32.totalorder %s46, %s62
    %p64 = scmp.eq.s32.totalorder %s17, 0
    %p65 = por %p63, %p64
    %s66 = ssub.s32 %s18, %s37
    %p67 = scmp.eq.s32.totalorder %s66, 0
    %s69 = sadd.s32 %s68, 1
    %s70 = scalar_select %p67, %s68, %s69
    %p73 = pneg %p67
    %p74 = scmp.eq.s32.totalorder %s11, 1
    %p75 = por %p73, %p74
    %p76 = scmp.ne.s32.totalorder %s68, %s71
    %p77 = scmp.eq.s32.totalorder %s11, 0
    %p78 = por %p76, %p77
    %p79 = scmp.ne.s32.totalorder %s68, %s71
    %p80 = scmp.eq.s32.totalorder %s16, 1
    %p81 = por %p79, %p80
    %p82 = scmp.ne.s32.totalorder %s71, %s72
    %p83 = scmp.eq.s32.totalorder %s16, 0
    %p84 = por %p82, %p83
    %p85 = scmp.ne.s32.totalorder %s71, %s72
    %p86 = scmp.eq.s32.totalorder %s17, 1
    %p87 = por %p85, %p86
    %p89 = scmp.ne.s32.totalorder %s72, %s88
    %p90 = scmp.eq.s32.totalorder %s17, 0
    %p91 = por %p89, %p90
    %s92 = ssub.s32 %s18, %s37
    %p93 = scmp.eq.s32.totalorder %s92, 0
    %s95 = sadd.s32 %s94, 1
    %s96 = scalar_select %p93, %s94, %s95
    %p99 = pneg %p93
    %p100 = scmp.eq.s32.totalorder %s11, 1
    %p101 = por %p99, %p100
    %p102 = scmp.ne.s32.totalorder %s94, %s97
    %p103 = scmp.eq.s32.totalorder %s11, 0
    %p104 = por %p102, %p103
    %p105 = scmp.ne.s32.totalorder %s94, %s97
    %p106 = scmp.eq.s32.totalorder %s16, 1
    %p107 = por %p105, %p106
    %p108 = scmp.ne.s32.totalorder %s97, %s98
    %p109 = scmp.eq.s32.totalorder %s16, 0
    %p110 = por %p108, %p109
    %p111 = scmp.ne.s32.totalorder %s97, %s98
    %p112 = scmp.eq.s32.totalorder %s17, 1
    %p113 = por %p111, %p112
    %p115 = scmp.ne.s32.totalorder %s98, %s114
    %p116 = scmp.eq.s32.totalorder %s17, 0
    %p117 = por %p115, %p116
    %s118 = ssub.s32 %s20, %s29
    %p119 = scmp.eq.s32.totalorder %s118, 0
    %s121 = sadd.s32 %s120, 1
    %s122 = scalar_select %p119, %s120, %s121
    %p125 = pneg %p119
    %p126 = scmp.eq.s32.totalorder %s11, 1
    %p127 = por %p125, %p126
    %p128 = scmp.ne.s32.totalorder %s120, %s123
    %p129 = scmp.eq.s32.totalorder %s11, 0
    %p130 = por %p128, %p129
    %p131 = scmp.ne.s32.totalorder %s120, %s123
    %p132 = scmp.eq.s32.totalorder %s16, 1
    %p133 = por %p131, %p132
    %p134 = scmp.ne.s32.totalorder %s123, %s124
    %p135 = scmp.eq.s32.totalorder %s16, 0
    %p136 = por %p134, %p135
    %p137 = scmp.ne.s32.totalorder %s123, %s124
    %p138 = scmp.eq.s32.totalorder %s17, 1
    %p139 = por %p137, %p138
    %p141 = scmp.ne.s32.totalorder %s124, %s140
    %p142 = scmp.eq.s32.totalorder %s17, 0
    %p143 = por %p141, %p142
    %s144 = ssub.s32 %s20, %s29
    %p145 = scmp.eq.s32.totalorder %s144, 0
    %s147 = sadd.s32 %s146, 1
    %s148 = scalar_select %p145, %s146, %s147
    %p151 = pneg %p145
    %p152 = scmp.eq.s32.totalorder %s11, 1
    %p153 = por %p151, %p152
    %p154 = scmp.ne.s32.totalorder %s146, %s149
    %p155 = scmp.eq.s32.totalorder %s11, 0
    %p156 = por %p154, %p155
    %p157 = scmp.ne.s32.totalorder %s146, %s149
    %p158 = scmp.eq.s32.totalorder %s16, 1
    %p159 = por %p157, %p158
    %p160 = scmp.ne.s32.totalorder %s149, %s150
    %p161 = scmp.eq.s32.totalorder %s16, 0
    %p162 = por %p160, %p161
    %p163 = scmp.ne.s32.totalorder %s149, %s150
    %p164 = scmp.eq.s32.totalorder %s17, 1
    %p165 = por %p163, %p164
    %p167 = scmp.ne.s32.totalorder %s150, %s166
    %p168 = scmp.eq.s32.totalorder %s17, 0
    %p169 = por %p167, %p168
    %s170 = ssub.s32 %s18, %s37
    %s171 = ssub.s32 %s19, %s33
    %s172 = sor.u32 %s170, %s171
    %s173 = ssub.s32 %s20, %s29
    %s174 = sor.u32 %s172, %s173
    %p175 = scmp.eq.s32.totalorder %s174, 0
    %s177 = sadd.s32 %s176, 1
    %s178 = scalar_select %p175, %s176, %s177
    %p181 = pneg %p175
    %p182 = scmp.eq.s32.totalorder %s11, 1
    %p183 = por %p181, %p182
    %p184 = scmp.ne.s32.totalorder %s176, %s179
    %p185 = scmp.eq.s32.totalorder %s11, 0
    %p186 = por %p184, %p185
    %p187 = scmp.ne.s32.totalorder %s176, %s179
    %p188 = scmp.eq.s32.totalorder %s16, 1
    %p189 = por %p187, %p188
    %p190 = scmp.ne.s32.totalorder %s179, %s180
    %p191 = scmp.eq.s32.totalorder %s16, 0
    %p192 = por %p190, %p191
    %p193 = scmp.ne.s32.totalorder %s179, %s180
    %p194 = scmp.eq.s32.totalorder %s17, 1
    %p195 = por %p193, %p194
    %p197 = scmp.ne.s32.totalorder %s180, %s196
    %p198 = scmp.eq.s32.totalorder %s17, 0
    %p199 = por %p197, %p198
    %p200 = scmp.le.s32.totalorder 1, %s11
    %p201 = scmp.lt.s32.totalorder %s11, 3
    %p202 = pnand %p200, %p201
    %p203 = pneg %p202
    // Predicated region
    $region9: #{dit_model.35} parent=5 // pred_check
      _
    $region10: #{dit_model.35} parent=5 // pred_check_branch
      %205 = sbr.rel (%p202) target = $region12
    $region11: #{dit_model.35} parent=5 // pred_region
      %s206 = ssub.s32 %s11, 1
      // Predicated region
      $region13: #{dit_model.35} parent=11 // pred_check
        %p207 = pneg %p136
      $region14: #{dit_model.35} parent=11 // pred_check_branch
        %209 = sbr.rel (%p207) target = $region16
      $region15: #{dit_model.35} parent=11 // pred_region
        %p210 = scmp.lt.s32.totalorder %s23, 0
        %s211 = scalar_select %p210, %s23, 0
        %s212 = smul.addr %s211, 8
        %s213 = scalar_lea.vmem %s3, %s212
      $region16: #{dit_model.35} parent=11 // pred_fallthru
        _
      // Predicated region
      $region17: #{dit_model.35} parent=11 // pred_check
        %p214 = pneg %p162
      $region18: #{dit_model.35} parent=11 // pred_check_branch
        %216 = sbr.rel (%p214) target = $region20
      $region19: #{dit_model.35} parent=11 // pred_region
        %p217 = scmp.lt.s32.totalorder %s23, 0
        %s218 = scalar_select %p217, %s23, 0
        %s219 = scalar_lea.vmem %s4, %s218
      $region20: #{dit_model.35} parent=11 // pred_fallthru
        _
    $region12: #{dit_model.35} parent=5 // pred_fallthru
      _
    %p220 = scmp.lt.s32.totalorder %s11, 2
    // Predicated region
    $region21: #{dit_model.35} parent=5 // pred_check
      %p221 = pneg %p220
    $region22: #{dit_model.35} parent=5 // pred_check_branch
      %223 = sbr.rel (%p221) target = $region24
    $region23: #{dit_model.35} parent=5 // pred_region
      // Predicated region
      $region25: #{dit_model.35} parent=23 // pred_check
        %p224 = pneg %p52
      $region26: #{dit_model.35} parent=23 // pred_check_branch
        %226 = sbr.rel (%p224) target = $region28
      $region27: #{dit_model.35} parent=23 // pred_region
        %s227 = smul.u32 2, %s19
        %p228 = scmp.lt.s32.totalorder %s18, 1
        %s229 = scalar_select %p228, %s18, 1
        %p230 = scmp.lt.s32.totalorder %s227, 1
        %s231 = scalar_select %p230, %s227, 1
        %s232 = smul.addr %s229, 2
        %s233 = sadd.s32 %s231, %s232
        %s234 = smul.addr %s233, 8
        %s235 = scalar_lea.vmem %s0, %s234
        %s236 = smul.u32 2, %s19
      $region28: #{dit_model.35} parent=23 // pred_fallthru
        _
      // Predicated region
      $region29: #{dit_model.35} parent=23 // pred_check
        %p237 = pneg %p78
      $region30: #{dit_model.35} parent=23 // pred_check_branch
        %239 = sbr.rel (%p237) target = $region32
      $region31: #{dit_model.35} parent=23 // pred_region
        %p240 = scmp.lt.s32.totalorder %s18, 1
        %s241 = scalar_select %p240, %s18, 1
        %s242 = scalar_lea.vmem %s1, %s241
      $region32: #{dit_model.35} parent=23 // pred_fallthru
        _
      // Predicated region
      $region33: #{dit_model.35} parent=23 // pred_check
        %p243 = pneg %p104
      $region34: #{dit_model.35} parent=23 // pred_check_branch
        %245 = sbr.rel (%p243) target = $region36
      $region35: #{dit_model.35} parent=23 // pred_region
        %p246 = scmp.lt.s32.totalorder %s18, 1
        %s247 = scalar_select %p246, %s18, 1
        %s248 = scalar_lea.vmem %s2, %s247
      $region36: #{dit_model.35} parent=23 // pred_fallthru
        _
    $region24: #{dit_model.35} parent=5 // pred_fallthru
      _
    %p249 = scmp.le.s32.totalorder 1, %s11
    %p250 = scmp.lt.s32.totalorder %s11, 3
    %p251 = pnand %p249, %p250
    %p252 = pneg %p251
    // Predicated region
    $region37: #{dit_model.35} parent=5 // pred_check
      _
    $region38: #{dit_model.35} parent=5 // pred_check_branch
      %254 = sbr.rel (%p251) target = $region40
    $region39: #{dit_model.35} parent=5 // pred_region
      %s255 = ssub.s32 %s11, 1
      %s256 = smul.u32 2, %s22
      %p257 = scmp.lt.s32.totalorder %s21, 1
      %s258 = scalar_select %p257, %s21, 1
      %p259 = scmp.lt.s32.totalorder %s256, 1
      %s260 = scalar_select %p259, %s256, 1
      %s261 = smul.addr %s258, 2
      %s262 = sadd.s32 %s260, %s261
      %s263 = smul.addr %s262, 8
      %s264 = scalar_lea.vmem %s0, %s263
      %p265 = pneg %p58
      %p266 = pneg %p55
      %p267 = scmp.lt.s32.totalorder %s21, 1
      %s268 = scalar_select %p267, %s21, 1
      %s269 = scalar_lea.vmem %s1, %s268
      %p270 = pneg %p84
      %p271 = pneg %p81
      %p272 = scmp.lt.s32.totalorder %s21, 1
      %s273 = scalar_select %p272, %s21, 1
      %s274 = scalar_lea.vmem %s2, %s273
      %p275 = pneg %p110
      %p276 = pneg %p107
      %p277 = scmp.lt.s32.totalorder %s23, 0
      %s278 = scalar_select %p277, %s23, 0
      %s279 = smul.addr %s278, 8
      %s280 = scalar_lea.vmem %s3, %s279
      %p281 = pneg %p136
      %p282 = pneg %p133
      %p283 = scmp.lt.s32.totalorder %s23, 0
      %s284 = scalar_select %p283, %s23, 0
      %s285 = scalar_lea.vmem %s4, %s284
      %p286 = pneg %p162
      %p287 = pneg %p159
      %p288 = pneg %p192
      %p289 = pneg %p189
      %s290 = smul.u32 2, %s22
      %p291 = scmp.lt.s32.totalorder %s21, 1
      %s292 = scalar_select %p291, %s21, 1
      %p293 = scmp.lt.s32.totalorder %s290, 1
      %s294 = scalar_select %p293, %s290, 1
      %p295 = scmp.lt.s32.totalorder %s23, 0
      %s296 = scalar_select %p295, %s23, 0
      %s297 = sadd.s32 %s296, %s294
      %s298 = smul.addr %s292, 2
      %s299 = sadd.s32 %s297, %s298
      %s300 = smul.addr %s299, 8
      %s301 = scalar_lea.vmem %s5, %s300
      %s302 = smul.u32 2, %s22
      %p303 = scmp.lt.s32.totalorder %s21, 1
      %s304 = scalar_select %p303, %s21, 1
      %p305 = scmp.lt.s32.totalorder %s302, 1
      %s306 = scalar_select %p305, %s302, 1
      %s307 = smul.addr %s304, 2
      %s308 = sadd.s32 %s306, %s307
      %s309 = smul.addr %s308, 8
      %s310 = scalar_lea.vmem %s0, %s309
      %s311 = smul.u32 2, %s22
      %p312 = scmp.lt.s32.totalorder %s21, 1
      %s313 = scalar_select %p312, %s21, 1
      %s314 = scalar_lea.vmem %s1, %s313
      %p315 = scmp.lt.s32.totalorder %s21, 1
      %s316 = scalar_select %p315, %s21, 1
      %s317 = scalar_lea.vmem %s2, %s316
      %p318 = scmp.lt.s32.totalorder %s23, 0
      %s319 = scalar_select %p318, %s23, 0
      %s320 = smul.addr %s319, 8
      %s321 = scalar_lea.vmem %s3, %s320
      %p322 = scmp.lt.s32.totalorder %s23, 0
      %s323 = scalar_select %p322, %s23, 0
      %s324 = scalar_lea.vmem %s4, %s323
      %s325 = smul.u32 2, %s22
      %p326 = scmp.lt.s32.totalorder %s21, 1
      %s327 = scalar_select %p326, %s21, 1
      %p328 = scmp.lt.s32.totalorder %s325, 1
      %s329 = scalar_select %p328, %s325, 1
      %p330 = scmp.lt.s32.totalorder %s23, 0
      %s331 = scalar_select %p330, %s23, 0
      %s332 = sadd.s32 %s331, %s329
      %s333 = smul.addr %s327, 2
      %s334 = sadd.s32 %s332, %s333
      %s335 = smul.addr %s334, 8
      %s336 = scalar_lea.vmem %s5, %s335
      %s337 = smul.u32 2, %s22
      %v339 = vld [vmem:[%s310] sm:$0xff]
      %v340 = vld [vmem:[%s310 + $0x8] sm:$0xff]
      %vm341 = vcmask 261120
      %v342 = vsel %vm341, %v339, 0.0
      %343 = vadd.xlane.f32.xlu0 %v342
      %v344 = vpop.xlane.xlu0 %343
      %v345 = vsel %vm341, %v340, 0.0
      %346 = vadd.xlane.f32.xlu0 %v345
      %v347 = vpop.xlane.xlu0 %346
      %v348 = vrcp.pop 32.0
      %v349 = vmul.f32 %v344, %v348
      %v350 = vmul.f32 %v347, %v348
      %v351 = vsub.f32 %v339, %v349
      %v352 = vsub.f32 %v340, %v350
      %v353 = vmul.f32 %v351, %v351
      %v354 = vmul.f32 %v352, %v352
      %v355 = vsel %vm341, %v353, 0.0
      %356 = vadd.xlane.f32.xlu0 %v355
      %v357 = vpop.xlane.xlu0 %356
      %v358 = vsel %vm341, %v354, 0.0
      %359 = vadd.xlane.f32.xlu0 %v358
      %v360 = vpop.xlane.xlu0 %359
      %v361 = vmul.f32 %v357, %v348
      %v362 = vmul.f32 %v360, %v348
      %v363 = vadd.f32 %v361, 1e-05
      %v364 = vadd.f32 %v362, 1e-05
      %v365 = vrsqrt.pop %v363
      %v366 = vrsqrt.pop %v364
      %v367 = vmul.f32 %v351, %v365
      %v368 = vmul.f32 %v352, %v366
      %v369 = vld [vmem:[%s314] sm:$0x1]
      %v370 = vadd.f32 %v369, 1.0
      %v372 = vlaneseq
      %v373 = vshrl.u32 %v372, 7
      %v374 = vsub.s32 0, %v373
      %v375 = vrot.slane %v370, %v374
      %v377 = vmul.f32 %v367, %v375
      %v378 = vmul.f32 %v368, %v375
      %v379 = vld [vmem:[%s317] sm:$0x1]
      %v381 = vlaneseq
      %v382 = vshrl.u32 %v381, 7
      %v383 = vsub.s32 0, %v382
      %v384 = vrot.slane %v379, %v383
      %v386 = vadd.f32 %v377, %v384
      %v387 = vadd.f32 %v378, %v384
      %v388 = vpack.c.bf16 %v387, %v386
      %v389 = vld [vmem:[%s321] sm:$0xff]
      %v390 = vld [vmem:[%s321 + $0x8] sm:$0xff]
      %v391 = vld [vmem:[%s321 + $0x10] sm:$0xff]
      %v392 = vld [vmem:[%s321 + $0x18] sm:$0xff]
      %v393 = vpack.c.bf16 %v390, %v389
      %v394 = vpack.c.bf16 %v392, %v391
      %v395 = vld [vmem:[%s324] sm:$0x1]
      %v397 = vlaneseq
      %v398 = vshrl.u32 %v397, 7
      %v399 = vsub.s32 0, %v398
      %v400 = vrot.slane %v395, %v399
      %v403 = vsel %vm341, %v388, 0
      %405 = vmatprep.subr.bf16.mxu0 0
      %406 = vmatpush1.bf16.msra.mxu0 %v393
      %407 = vmatprep.subr.bf16.mxu0 0
      %408 = vmatpush1.bf16.msra.mxu0 %v394
      %409 = vmatprep.subr.bf16.mxu0 0
      %410 = vmatpush1.bf16.msra.mxu0 0
      %411 = vmatprep.subr.bf16.mxu0 0
      %412 = vmatpush1.bf16.msra.mxu0 0
      %413 = vmatprep.subr.bf16.mxu0 0
      %414 = vmatpush1.bf16.msra.mxu0 0
      %415 = vmatprep.subr.bf16.mxu0 0
      %416 = vmatpush1.bf16.msra.mxu0 0
      %417 = vmatprep.subr.bf16.mxu0 0
      %418 = vmatpush1.bf16.msra.mxu0 0
      %419 = vmatprep.subr.bf16.mxu0 0
      %420 = vmatpush1.bf16.msra.mxu0 0
      %421 = vmatprep.subr.bf16.mxu0 0
      %422 = vmatpush1.bf16.msra.mxu0 0
      %423 = vmatprep.subr.bf16.mxu0 0
      %424 = vmatpush1.bf16.msra.mxu0 0
      %425 = vmatprep.subr.bf16.mxu0 0
      %426 = vmatpush1.bf16.msra.mxu0 0
      %427 = vmatprep.subr.bf16.mxu0 0
      %428 = vmatpush1.bf16.msra.mxu0 0
      %429 = vmatprep.subr.bf16.mxu0 0
      %430 = vmatpush1.bf16.msra.mxu0 0
      %431 = vmatprep.subr.bf16.mxu0 0
      %432 = vmatpush1.bf16.msra.mxu0 0
      %433 = vmatprep.subr.bf16.mxu0 0
      %434 = vmatpush1.bf16.msra.mxu0 0
      %435 = vmatprep.subr.bf16.mxu0 0
      %436 = vmatpush1.bf16.msra.mxu0 0
      %437 = vmatprep.mubr.bf16.mxu0 0
      %438 = vmatmul.mubr.bf16.gmra.mrb[0].mxu0 %v403
      %v439 = vpop.f32.mrb[0].mxu0
      %v440 = vadd.f32 %v400, %v439
      %v441 = vpop.f32.mrb[0].mxu0
      %v442 = vpop.f32.mrb[0].mxu0
      %v443 = vadd.f32 %v400, %v442
      %v444 = vpop.f32.mrb[0].mxu0
      %445 = vdwg.mxu0
      %v446 = vmul.f32 %v440, %v440
      %v447 = vmul.f32 %v443, %v443
      %v448 = vmul.f32 %v440, %v446
      %v449 = vmul.f32 %v443, %v447
      %v450 = vmul.f32 %v448, 0.044715
      %v451 = vmul.f32 %v449, 0.044715
      %v452 = vadd.f32 %v440, %v450
      %v453 = vadd.f32 %v443, %v451
      %v454 = vmul.f32 %v452, 0.7978846
      %v455 = vmul.f32 %v453, 0.7978846
      %v456 = vtanh.pop %v454
      %v457 = vtanh.pop %v455
      %v458 = vadd.f32 %v456, 1.0
      %v459 = vadd.f32 %v457, 1.0
      %v460 = vmul.f32 %v458, 0.5
      %v461 = vmul.f32 %v459, 0.5
      %v462 = vmul.f32 %v440, %v460
      %v463 = vmul.f32 %v443, %v461
      %464 = vst [vmem:[%s336] sm:$0xff] %v462
      %465 = vst [vmem:[%s336 + $0x8] sm:$0xff] %v463
      %s466 = smul.u32 2, %s22
      %p467 = scmp.lt.s32.totalorder %s21, 1
      %s468 = scalar_select %p467, %s21, 1
      %p469 = scmp.lt.s32.totalorder %s466, 1
      %s470 = scalar_select %p469, %s466, 1
      %p471 = scmp.lt.s32.totalorder %s23, 0
      %s472 = scalar_select %p471, %s23, 0
      %s473 = sadd.s32 %s472, %s470
      %s474 = smul.addr %s468, 2
      %s475 = sadd.s32 %s473, %s474
      %s476 = smul.addr %s475, 8
      %s477 = scalar_lea.vmem %s5, %s476
      // Predicated region
      $region41: #{dit_model.35} parent=39 // pred_check
        %p478 = pneg %p189
      $region42: #{dit_model.35} parent=39 // pred_check_branch
        %480 = sbr.rel (%p478) target = $region44
      $region43: #{dit_model.35} parent=39 // pred_region
        %s481 = smul.u32 2, %s22
      $region44: #{dit_model.35} parent=39 // pred_fallthru
        _
    $region40: #{dit_model.35} parent=5 // pred_fallthru
      _
    %p482 = scmp.le.s32.totalorder 2, %s11
    // Predicated region
    $region45: #{dit_model.35} parent=5 // pred_check
      %p483 = pneg %p482
    $region46: #{dit_model.35} parent=5 // pred_check_branch
      %485 = sbr.rel (%p483) target = $region48
    $region47: #{dit_model.35} parent=5 // pred_region
      %s486 = ssub.s32 %s11, 2
      // Predicated region
      $region49: #{dit_model.35} parent=47 // pred_check
        %p487 = pneg %p195
      $region50: #{dit_model.35} parent=47 // pred_check_branch
        %489 = sbr.rel (%p487) target = $region52
      $region51: #{dit_model.35} parent=47 // pred_region
        %s490 = smul.u32 2, %s25
        %p491 = scmp.lt.s32.totalorder %s24, 1
        %s492 = scalar_select %p491, %s24, 1
        %p493 = scmp.lt.s32.totalorder %s490, 1
        %s494 = scalar_select %p493, %s490, 1
        %p495 = scmp.lt.s32.totalorder %s26, 0
        %s496 = scalar_select %p495, %s26, 0
        %s497 = sadd.s32 %s496, %s494
        %s498 = smul.addr %s492, 2
        %s499 = sadd.s32 %s497, %s498
        %s500 = smul.addr %s499, 8
        %s501 = scalar_lea.vmem %s5, %s500
      $region52: #{dit_model.35} parent=47 // pred_fallthru
        _
    $region48: #{dit_model.35} parent=5 // pred_fallthru
      _
  $region6: #{dit_model.35} parent=0 // loop_footer
    %s15 = sadd.s32 1, %s11
  $region7: #{dit_model.35} parent=0 // loop_footer_branch
    %10 = sbr.rel target = $region3
  $region8: #{dit_model.35} parent=0 // loop_exit
    _

// kernel: dit_model.37
$region0: #{dit_model.37}
  #allocation0 [shape = 'u32[]', space=smem, size = 0x4, offset = 0x4, fixed_abs, tag = 'smem constant byte address 0x4 - core index']
  #allocation1 [shape = 'u32[144,128]{1,0:T(1,128)}', space=vmem, size = 0x12000, scoped, tag = 'internal scratch']
  #allocation2 [shape = 'f32[16,32]{1,0:T(8,128)}', space=vmem, size = 0x2000, scoped, tag = 'scratch operand']
  %s0 = inlined_call_operand.vmem [shape: f32[2,16,128], index: 0, kind: input, shape index: {}]
  %s1 = inlined_call_operand.vmem [shape: f32[128,32], index: 1, kind: input, shape index: {}]
  %s2 = inlined_call_operand.vmem [shape: f32[1,32], index: 2, kind: input, shape index: {}]
  %s3 = inlined_call_operand.vmem [shape: f32[2,1,32], index: 3, kind: input, shape index: {}]
  %s4 = inlined_call_operand.vmem [shape: f32[2,1,32], index: 4, kind: input, shape index: {}]
  %s5 = inlined_call_operand.vmem [shape: f32[2,16,32], index: 5, kind: input, shape index: {}]
  %s6 = inlined_call_operand.vmem [shape: f32[2,16,32], index: 6, kind: output, shape index: {}]
  %s7 = sld [smem:[#allocation0]]
  $region65: #{dit_model.37} parent=0
    _
  %s9 = ssub.s32 1, %s7
  %s10 = scalar_select 0, %s9, %s7
  loop: start=0, step=1, limit=4
  $region2: #{dit_model.37} parent=0 // loop_pre_header
    _
  $region3: #{dit_model.37} parent=0 // loop_header
    %s12 = sphi 0, %s16
    %p13 = scmp.ge.s32.totalorder %s12, 4
    %s19 = sphi 0, %s45
    %s20 = sphi 0, %s41
    %s21 = sphi 0, %s37
    %s22 = sphi 0, %s33
    %s23 = sphi 0, %s19
    %s24 = sphi 0, %s20
    %s25 = sphi 0, %s21
    %s26 = sphi 0, %s22
    %s27 = sphi 0, %s23
    %s28 = sphi 0, %s24
    %s29 = sphi 0, %s25
    %s30 = sphi 0, %s26
    %s52 = sphi 0, %s54
    %s55 = sphi 0, %s52
    %s56 = sphi 0, %s55
    %s72 = sphi 0, %s56
    %s80 = sphi 0, %s82
    %s83 = sphi 0, %s80
    %s84 = sphi 0, %s83
    %s100 = sphi 0, %s84
    %s106 = sphi 0, %s108
    %s109 = sphi 0, %s106
    %s110 = sphi 0, %s109
    %s126 = sphi 0, %s110
    %s134 = sphi 0, %s136
    %s137 = sphi 0, %s134
    %s138 = sphi 0, %s137
    %s154 = sphi 0, %s138
    %s162 = sphi 0, %s164
    %s165 = sphi 0, %s162
    %s166 = sphi 0, %s165
    %s182 = sphi 0, %s166
    %s192 = sphi 0, %s194
    %s195 = sphi 0, %s192
    %s196 = sphi 0, %s195
    %s212 = sphi 0, %s196
    %s222 = sphi 0, %s224
    %s225 = sphi 0, %s222
    %s226 = sphi 0, %s225
    %s242 = sphi 0, %s226
  $region4: #{dit_model.37} parent=0 // loop_header_branch
    %15 = sbr.rel (%p13) target = $region8
  $region5: #{dit_model.37} parent=0 // loop_body
    %s17 = ssub.s32 %s12, 1
    %s18 = ssub.s32 %s12, 2
    %s31 = sadd.s32 1, %s22
    %p32 = scmp.ge.s32.totalorder %s31, 1
    %s33 = scalar_select %p32, 0, %s31
    %s34 = sadd.s32 1, %s21
    %s35 = scalar_select %p32, %s34, %s21
    %p36 = scmp.ge.s32.totalorder %s35, 1
    %s37 = scalar_select %p36, 0, %s35
    %s38 = sadd.s32 1, %s20
    %s39 = scalar_select %p36, %s38, %s20
    %p40 = scmp.ge.s32.totalorder %s39, 1
    %s41 = scalar_select %p40, 0, %s39
    %s42 = sadd.s32 1, %s19
    %s43 = scalar_select %p40, %s42, %s19
    %p44 = scmp.ge.s32.totalorder %s43, 2
    %s45 = scalar_select %p44, 0, %s43
    %s46 = ssub.s32 %s19, %s45
    %s47 = ssub.s32 %s20, %s41
    %s48 = sor.u32 %s46, %s47
    %s49 = ssub.s32 %s22, %s33
    %s50 = sor.u32 %s48, %s49
    %p51 = scmp.eq.s32.totalorder %s50, 0
    %s53 = sadd.s32 %s52, 1
    %s54 = scalar_select %p51, %s52, %s53
    %p57 = pneg %p51
    %p58 = scmp.eq.s32.totalorder %s12, 1
    %p59 = por %p57, %p58
    %p60 = scmp.ne.s32.totalorder %s52, %s55
    %p61 = scmp.eq.s32.totalorder %s12, 0
    %p62 = por %p60, %p61
    %p63 = scmp.ne.s32.totalorder %s52, %s55
    %p64 = scmp.eq.s32.totalorder %s17, 1
    %p65 = por %p63, %p64
    %p66 = scmp.ne.s32.totalorder %s55, %s56
    %p67 = scmp.eq.s32.totalorder %s17, 0
    %p68 = por %p66, %p67
    %p69 = scmp.ne.s32.totalorder %s55, %s56
    %p70 = scmp.eq.s32.totalorder %s18, 1
    %p71 = por %p69, %p70
    %p73 = scmp.ne.s32.totalorder %s56, %s72
    %p74 = scmp.eq.s32.totalorder %s18, 0
    %p75 = por %p73, %p74
    %s76 = ssub.s32 %s22, %s33
    %s77 = ssub.s32 %s21, %s37
    %s78 = sor.u32 %s76, %s77
    %p79 = scmp.eq.s32.totalorder %s78, 0
    %s81 = sadd.s32 %s80, 1
    %s82 = scalar_select %p79, %s80, %s81
    %p85 = pneg %p79
    %p86 = scmp.eq.s32.totalorder %s12, 1
    %p87 = por %p85, %p86
    %p88 = scmp.ne.s32.totalorder %s80, %s83
    %p89 = scmp.eq.s32.totalorder %s12, 0
    %p90 = por %p88, %p89
    %p91 = scmp.ne.s32.totalorder %s80, %s83
    %p92 = scmp.eq.s32.totalorder %s17, 1
    %p93 = por %p91, %p92
    %p94 = scmp.ne.s32.totalorder %s83, %s84
    %p95 = scmp.eq.s32.totalorder %s17, 0
    %p96 = por %p94, %p95
    %p97 = scmp.ne.s32.totalorder %s83, %s84
    %p98 = scmp.eq.s32.totalorder %s18, 1
    %p99 = por %p97, %p98
    %p101 = scmp.ne.s32.totalorder %s84, %s100
    %p102 = scmp.eq.s32.totalorder %s18, 0
    %p103 = por %p101, %p102
    %s104 = ssub.s32 %s21, %s37
    %p105 = scmp.eq.s32.totalorder %s104, 0
    %s107 = sadd.s32 %s106, 1
    %s108 = scalar_select %p105, %s106, %s107
    %p111 = pneg %p105
    %p112 = scmp.eq.s32.totalorder %s12, 1
    %p113 = por %p111, %p112
    %p114 = scmp.ne.s32.totalorder %s106, %s109
    %p115 = scmp.eq.s32.totalorder %s12, 0
    %p116 = por %p114, %p115
    %p117 = scmp.ne.s32.totalorder %s106, %s109
    %p118 = scmp.eq.s32.totalorder %s17, 1
    %p119 = por %p117, %p118
    %p120 = scmp.ne.s32.totalorder %s109, %s110
    %p121 = scmp.eq.s32.totalorder %s17, 0
    %p122 = por %p120, %p121
    %p123 = scmp.ne.s32.totalorder %s109, %s110
    %p124 = scmp.eq.s32.totalorder %s18, 1
    %p125 = por %p123, %p124
    %p127 = scmp.ne.s32.totalorder %s110, %s126
    %p128 = scmp.eq.s32.totalorder %s18, 0
    %p129 = por %p127, %p128
    %s130 = ssub.s32 %s19, %s45
    %s131 = ssub.s32 %s21, %s37
    %s132 = sor.u32 %s130, %s131
    %p133 = scmp.eq.s32.totalorder %s132, 0
    %s135 = sadd.s32 %s134, 1
    %s136 = scalar_select %p133, %s134, %s135
    %p139 = pneg %p133
    %p140 = scmp.eq.s32.totalorder %s12, 1
    %p141 = por %p139, %p140
    %p142 = scmp.ne.s32.totalorder %s134, %s137
    %p143 = scmp.eq.s32.totalorder %s12, 0
    %p144 = por %p142, %p143
    %p145 = scmp.ne.s32.totalorder %s134, %s137
    %p146 = scmp.eq.s32.totalorder %s17, 1
    %p147 = por %p145, %p146
    %p148 = scmp.ne.s32.totalorder %s137, %s138
    %p149 = scmp.eq.s32.totalorder %s17, 0
    %p150 = por %p148, %p149
    %p151 = scmp.ne.s32.totalorder %s137, %s138
    %p152 = scmp.eq.s32.totalorder %s18, 1
    %p153 = por %p151, %p152
    %p155 = scmp.ne.s32.totalorder %s138, %s154
    %p156 = scmp.eq.s32.totalorder %s18, 0
    %p157 = por %p155, %p156
    %s158 = ssub.s32 %s19, %s45
    %s159 = ssub.s32 %s21, %s37
    %s160 = sor.u32 %s158, %s159
    %p161 = scmp.eq.s32.totalorder %s160, 0
    %s163 = sadd.s32 %s162, 1
    %s164 = scalar_select %p161, %s162, %s163
    %p167 = pneg %p161
    %p168 = scmp.eq.s32.totalorder %s12, 1
    %p169 = por %p167, %p168
    %p170 = scmp.ne.s32.totalorder %s162, %s165
    %p171 = scmp.eq.s32.totalorder %s12, 0
    %p172 = por %p170, %p171
    %p173 = scmp.ne.s32.totalorder %s162, %s165
    %p174 = scmp.eq.s32.totalorder %s17, 1
    %p175 = por %p173, %p174
    %p176 = scmp.ne.s32.totalorder %s165, %s166
    %p177 = scmp.eq.s32.totalorder %s17, 0
    %p178 = por %p176, %p177
    %p179 = scmp.ne.s32.totalorder %s165, %s166
    %p180 = scmp.eq.s32.totalorder %s18, 1
    %p181 = por %p179, %p180
    %p183 = scmp.ne.s32.totalorder %s166, %s182
    %p184 = scmp.eq.s32.totalorder %s18, 0
    %p185 = por %p183, %p184
    %s186 = ssub.s32 %s19, %s45
    %s187 = ssub.s32 %s20, %s41
    %s188 = sor.u32 %s186, %s187
    %s189 = ssub.s32 %s21, %s37
    %s190 = sor.u32 %s188, %s189
    %p191 = scmp.eq.s32.totalorder %s190, 0
    %s193 = sadd.s32 %s192, 1
    %s194 = scalar_select %p191, %s192, %s193
    %p197 = pneg %p191
    %p198 = scmp.eq.s32.totalorder %s12, 1
    %p199 = por %p197, %p198
    %p200 = scmp.ne.s32.totalorder %s192, %s195
    %p201 = scmp.eq.s32.totalorder %s12, 0
    %p202 = por %p200, %p201
    %p203 = scmp.ne.s32.totalorder %s192, %s195
    %p204 = scmp.eq.s32.totalorder %s17, 1
    %p205 = por %p203, %p204
    %p206 = scmp.ne.s32.totalorder %s195, %s196
    %p207 = scmp.eq.s32.totalorder %s17, 0
    %p208 = por %p206, %p207
    %p209 = scmp.ne.s32.totalorder %s195, %s196
    %p210 = scmp.eq.s32.totalorder %s18, 1
    %p211 = por %p209, %p210
    %p213 = scmp.ne.s32.totalorder %s196, %s212
    %p214 = scmp.eq.s32.totalorder %s18, 0
    %p215 = por %p213, %p214
    %s216 = ssub.s32 %s19, %s45
    %s217 = ssub.s32 %s20, %s41
    %s218 = sor.u32 %s216, %s217
    %s219 = ssub.s32 %s21, %s37
    %s220 = sor.u32 %s218, %s219
    %p221 = scmp.eq.s32.totalorder %s220, 0
    %s223 = sadd.s32 %s222, 1
    %s224 = scalar_select %p221, %s222, %s223
    %p227 = pneg %p221
    %p228 = scmp.eq.s32.totalorder %s12, 1
    %p229 = por %p227, %p228
    %p230 = scmp.ne.s32.totalorder %s222, %s225
    %p231 = scmp.eq.s32.totalorder %s12, 0
    %p232 = por %p230, %p231
    %p233 = scmp.ne.s32.totalorder %s222, %s225
    %p234 = scmp.eq.s32.totalorder %s17, 1
    %p235 = por %p233, %p234
    %p236 = scmp.ne.s32.totalorder %s225, %s226
    %p237 = scmp.eq.s32.totalorder %s17, 0
    %p238 = por %p236, %p237
    %p239 = scmp.ne.s32.totalorder %s225, %s226
    %p240 = scmp.eq.s32.totalorder %s18, 1
    %p241 = por %p239, %p240
    %p243 = scmp.ne.s32.totalorder %s226, %s242
    %p244 = scmp.eq.s32.totalorder %s18, 0
    %p245 = por %p243, %p244
    %p246 = scmp.le.s32.totalorder 1, %s12
    %p247 = scmp.lt.s32.totalorder %s12, 3
    %p248 = pnand %p246, %p247
    %p249 = pneg %p248
    // Predicated region
    $region9: #{dit_model.37} parent=5 // pred_check
      _
    $region10: #{dit_model.37} parent=5 // pred_check_branch
      %251 = sbr.rel (%p248) target = $region12
    $region11: #{dit_model.37} parent=5 // pred_region
      %s252 = ssub.s32 %s12, 1
      // Predicated region
      $region13: #{dit_model.37} parent=11 // pred_check
        %p253 = pneg %p96
      $region14: #{dit_model.37} parent=11 // pred_check_branch
        %255 = sbr.rel (%p253) target = $region16
      $region15: #{dit_model.37} parent=11 // pred_region
        %s256 = smul.u32 16, %s26
        %p257 = scmp.lt.s32.totalorder %s256, 15
        %s258 = scalar_select %p257, %s256, 15
        %p259 = scmp.lt.s32.totalorder %s25, 0
        %s260 = scalar_select %p259, %s25, 0
        %s261 = sadd.s32 %s260, %s258
        %s262 = smul.addr %s261, 8
        %s263 = scalar_lea.vmem %s1, %s262
        %s264 = smul.u32 16, %s26
      $region16: #{dit_model.37} parent=11 // pred_fallthru
        _
      // Predicated region
      $region17: #{dit_model.37} parent=11 // pred_check
        %p265 = pneg %p122
      $region18: #{dit_model.37} parent=11 // pred_check_branch
        %267 = sbr.rel (%p265) target = $region20
      $region19: #{dit_model.37} parent=11 // pred_region
        %p268 = scmp.lt.s32.totalorder %s25, 0
        %s269 = scalar_select %p268, %s25, 0
        %s270 = scalar_lea.vmem %s2, %s269
      $region20: #{dit_model.37} parent=11 // pred_fallthru
        _
    $region12: #{dit_model.37} parent=5 // pred_fallthru
      _
    %p271 = scmp.lt.s32.totalorder %s12, 2
    // Predicated region
    $region21: #{dit_model.37} parent=5 // pred_check
      %p272 = pneg %p271
    $region22: #{dit_model.37} parent=5 // pred_check_branch
      %274 = sbr.rel (%p272) target = $region24
    $region23: #{dit_model.37} parent=5 // pred_region
      // Predicated region
      $region25: #{dit_model.37} parent=23 // pred_check
        %p275 = pneg %p62
      $region26: #{dit_model.37} parent=23 // pred_check_branch
        %277 = sbr.rel (%p275) target = $region28
      $region27: #{dit_model.37} parent=23 // pred_region
        %s278 = smul.u32 2, %s20
        %p279 = scmp.lt.s32.totalorder %s19, 1
        %s280 = scalar_select %p279, %s19, 1
        %p281 = scmp.lt.s32.totalorder %s278, 1
        %s282 = scalar_select %p281, %s278, 1
        %p283 = scmp.lt.s32.totalorder %s22, 0
        %s284 = scalar_select %p283, %s22, 0
        %s285 = sadd.s32 %s284, %s282
        %s286 = smul.addr %s280, 2
        %s287 = sadd.s32 %s285, %s286
        %s288 = smul.addr %s287, 8
        %s289 = scalar_lea.vmem %s0, %s288
        %s290 = smul.u32 2, %s20
      $region28: #{dit_model.37} parent=23 // pred_fallthru
        _
      // Predicated region
      $region29: #{dit_model.37} parent=23 // pred_check
        %p291 = pneg %p144
      $region30: #{dit_model.37} parent=23 // pred_check_branch
        %293 = sbr.rel (%p291) target = $region32
      $region31: #{dit_model.37} parent=23 // pred_region
        %p294 = scmp.lt.s32.totalorder %s19, 1
        %s295 = scalar_select %p294, %s19, 1
        %p296 = scmp.lt.s32.totalorder %s21, 0
        %s297 = scalar_select %p296, %s21, 0
        %s298 = sadd.s32 %s297, %s295
        %s299 = scalar_lea.vmem %s3, %s298
      $region32: #{dit_model.37} parent=23 // pred_fallthru
        _
      // Predicated region
      $region33: #{dit_model.37} parent=23 // pred_check
        %p300 = pneg %p172
      $region34: #{dit_model.37} parent=23 // pred_check_branch
        %302 = sbr.rel (%p300) target = $region36
      $region35: #{dit_model.37} parent=23 // pred_region
        %p303 = scmp.lt.s32.totalorder %s19, 1
        %s304 = scalar_select %p303, %s19, 1
        %p305 = scmp.lt.s32.totalorder %s21, 0
        %s306 = scalar_select %p305, %s21, 0
        %s307 = sadd.s32 %s306, %s304
        %s308 = scalar_lea.vmem %s4, %s307
      $region36: #{dit_model.37} parent=23 // pred_fallthru
        _
      // Predicated region
      $region37: #{dit_model.37} parent=23 // pred_check
        %p309 = pneg %p202
      $region38: #{dit_model.37} parent=23 // pred_check_branch
        %311 = sbr.rel (%p309) target = $region40
      $region39: #{dit_model.37} parent=23 // pred_region
        %s312 = smul.u32 2, %s20
        %p313 = scmp.lt.s32.totalorder %s19, 1
        %s314 = scalar_select %p313, %s19, 1
        %p315 = scmp.lt.s32.totalorder %s312, 1
        %s316 = scalar_select %p315, %s312, 1
        %p317 = scmp.lt.s32.totalorder %s21, 0
        %s318 = scalar_select %p317, %s21, 0
        %s319 = sadd.s32 %s318, %s316
        %s320 = smul.addr %s314, 2
        %s321 = sadd.s32 %s319, %s320
        %s322 = smul.addr %s321, 8
        %s323 = scalar_lea.vmem %s5, %s322
        %s324 = smul.u32 2, %s20
      $region40: #{dit_model.37} parent=23 // pred_fallthru
        _
    $region24: #{dit_model.37} parent=5 // pred_fallthru
      _
    %p325 = scmp.le.s32.totalorder 1, %s12
    %p326 = scmp.lt.s32.totalorder %s12, 3
    %p327 = pnand %p325, %p326
    %p328 = pneg %p327
    // Predicated region
    $region41: #{dit_model.37} parent=5 // pred_check
      _
    $region42: #{dit_model.37} parent=5 // pred_check_branch
      %330 = sbr.rel (%p327) target = $region44
    $region43: #{dit_model.37} parent=5 // pred_region
      %s331 = ssub.s32 %s12, 1
      %s332 = smul.u32 2, %s24
      %p333 = scmp.lt.s32.totalorder %s23, 1
      %s334 = scalar_select %p333, %s23, 1
      %p335 = scmp.lt.s32.totalorder %s332, 1
      %s336 = scalar_select %p335, %s332, 1
      %p337 = scmp.lt.s32.totalorder %s26, 0
      %s338 = scalar_select %p337, %s26, 0
      %s339 = sadd.s32 %s338, %s336
      %s340 = smul.addr %s334, 2
      %s341 = sadd.s32 %s339, %s340
      %s342 = smul.addr %s341, 8
      %s343 = scalar_lea.vmem %s0, %s342
      %p344 = pneg %p68
      %p345 = pneg %p65
      %s346 = smul.u32 16, %s26
      %p347 = scmp.lt.s32.totalorder %s346, 15
      %s348 = scalar_select %p347, %s346, 15
      %p349 = scmp.lt.s32.totalorder %s25, 0
      %s350 = scalar_select %p349, %s25, 0
      %s351 = sadd.s32 %s350, %s348
      %s352 = smul.addr %s351, 8
      %s353 = scalar_lea.vmem %s1, %s352
      %p354 = pneg %p96
      %p355 = pneg %p93
      %p356 = scmp.lt.s32.totalorder %s25, 0
      %s357 = scalar_select %p356, %s25, 0
      %s358 = scalar_lea.vmem %s2, %s357
      %p359 = pneg %p122
      %p360 = pneg %p119
      %p361 = scmp.lt.s32.totalorder %s23, 1
      %s362 = scalar_select %p361, %s23, 1
      %p363 = scmp.lt.s32.totalorder %s25, 0
      %s364 = scalar_select %p363, %s25, 0
      %s365 = sadd.s32 %s364, %s362
      %s366 = scalar_lea.vmem %s3, %s365
      %p367 = pneg %p150
      %p368 = pneg %p147
      %p369 = scmp.lt.s32.totalorder %s23, 1
      %s370 = scalar_select %p369, %s23, 1
      %p371 = scmp.lt.s32.totalorder %s25, 0
      %s372 = scalar_select %p371, %s25, 0
      %s373 = sadd.s32 %s372, %s370
      %s374 = scalar_lea.vmem %s4, %s373
      %p375 = pneg %p178
      %p376 = pneg %p175
      %s377 = smul.u32 2, %s24
      %p378 = scmp.lt.s32.totalorder %s23, 1
      %s379 = scalar_select %p378, %s23, 1
      %p380 = scmp.lt.s32.totalorder %s377, 1
      %s381 = scalar_select %p380, %s377, 1
      %p382 = scmp.lt.s32.totalorder %s25, 0
      %s383 = scalar_select %p382, %s25, 0
      %s384 = sadd.s32 %s383, %s381
      %s385 = smul.addr %s379, 2
      %s386 = sadd.s32 %s384, %s385
      %s387 = smul.addr %s386, 8
      %s388 = scalar_lea.vmem %s5, %s387
      %p389 = pneg %p208
      %p390 = pneg %p205
      %p391 = pneg %p238
      %p392 = pneg %p235
      %s393 = smul.u32 2, %s24
      %p394 = scmp.lt.s32.totalorder %s23, 1
      %s395 = scalar_select %p394, %s23, 1
      %p396 = scmp.lt.s32.totalorder %s393, 1
      %s397 = scalar_select %p396, %s393, 1
      %p398 = scmp.lt.s32.totalorder %s25, 0
      %s399 = scalar_select %p398, %s25, 0
      %s400 = sadd.s32 %s399, %s397
      %s401 = smul.addr %s395, 2
      %s402 = sadd.s32 %s400, %s401
      %s403 = smul.addr %s402, 8
      %s404 = scalar_lea.vmem %s6, %s403
      %s405 = smul.u32 2, %s24
      %p406 = scmp.lt.s32.totalorder %s23, 1
      %s407 = scalar_select %p406, %s23, 1
      %p408 = scmp.lt.s32.totalorder %s405, 1
      %s409 = scalar_select %p408, %s405, 1
      %p410 = scmp.lt.s32.totalorder %s26, 0
      %s411 = scalar_select %p410, %s26, 0
      %s412 = sadd.s32 %s411, %s409
      %s413 = smul.addr %s407, 2
      %s414 = sadd.s32 %s412, %s413
      %s415 = smul.addr %s414, 8
      %s416 = scalar_lea.vmem %s0, %s415
      %s417 = smul.u32 2, %s24
      %s418 = smul.u32 16, %s26
      %p419 = scmp.lt.s32.totalorder %s418, 15
      %s420 = scalar_select %p419, %s418, 15
      %p421 = scmp.lt.s32.totalorder %s25, 0
      %s422 = scalar_select %p421, %s25, 0
      %s423 = sadd.s32 %s422, %s420
      %s424 = smul.addr %s423, 8
      %s425 = scalar_lea.vmem %s1, %s424
      %s426 = smul.u32 16, %s26
      %p427 = scmp.lt.s32.totalorder %s25, 0
      %s428 = scalar_select %p427, %s25, 0
      %s429 = scalar_lea.vmem %s2, %s428
      %p430 = scmp.lt.s32.totalorder %s23, 1
      %s431 = scalar_select %p430, %s23, 1
      %p432 = scmp.lt.s32.totalorder %s25, 0
      %s433 = scalar_select %p432, %s25, 0
      %s434 = sadd.s32 %s433, %s431
      %s435 = scalar_lea.vmem %s3, %s434
      %p436 = scmp.lt.s32.totalorder %s23, 1
      %s437 = scalar_select %p436, %s23, 1
      %p438 = scmp.lt.s32.totalorder %s25, 0
      %s439 = scalar_select %p438, %s25, 0
      %s440 = sadd.s32 %s439, %s437
      %s441 = scalar_lea.vmem %s4, %s440
      %s442 = smul.u32 2, %s24
      %p443 = scmp.lt.s32.totalorder %s23, 1
      %s444 = scalar_select %p443, %s23, 1
      %p445 = scmp.lt.s32.totalorder %s442, 1
      %s446 = scalar_select %p445, %s442, 1
      %p447 = scmp.lt.s32.totalorder %s25, 0
      %s448 = scalar_select %p447, %s25, 0
      %s449 = sadd.s32 %s448, %s446
      %s450 = smul.addr %s444, 2
      %s451 = sadd.s32 %s449, %s450
      %s452 = smul.addr %s451, 8
      %s453 = scalar_lea.vmem %s5, %s452
      %s454 = smul.u32 2, %s24
      %s455 = smul.u32 2, %s24
      %p456 = scmp.lt.s32.totalorder %s23, 1
      %s457 = scalar_select %p456, %s23, 1
      %p458 = scmp.lt.s32.totalorder %s455, 1
      %s459 = scalar_select %p458, %s455, 1
      %p460 = scmp.lt.s32.totalorder %s25, 0
      %s461 = scalar_select %p460, %s25, 0
      %s462 = sadd.s32 %s461, %s459
      %s463 = smul.addr %s457, 2
      %s464 = sadd.s32 %s462, %s463
      %s465 = smul.addr %s464, 8
      %s466 = scalar_lea.vmem %s6, %s465
      %s467 = smul.u32 2, %s24
      %p469 = scmp.eq.s32.totalorder %s26, 0
      // Predicated region
      $region45: #{dit_model.37} parent=43 // pred_check
        %p470 = pneg %p469
      $region46: #{dit_model.37} parent=43 // pred_check_branch
        %472 = sbr.rel (%p470) target = $region48
      $region47: #{dit_model.37} parent=43 // pred_region
        %vm473 = vcmask 261120
        %474 = vst.msk [vmem:[#allocation2] sm:$0xff] %vm473, 0.0
        %475 = vst.msk [vmem:[#allocation2 + $0x8] sm:$0xff] %vm473, 0.0
      $region48: #{dit_model.37} parent=43 // pred_fallthru
        _
      %v476 = vld [vmem:[#allocation2] sm:$0xff]
      %v477 = vld [vmem:[#allocation2 + $0x8] sm:$0xff]
      %v478 = vld [vmem:[%s416] sm:$0xff]
      %v479 = vld [vmem:[%s416 + $0x8] sm:$0xff]
      %v480 = vpack.c.bf16 %v479, %v478
      %v481 = vld [vmem:[%s425] sm:$0xff]
      %v482 = vld [vmem:[%s425 + $0x8] sm:$0xff]
      %v483 = vld [vmem:[%s425 + $0x10] sm:$0xff]
      %v484 = vld [vmem:[%s425 + $0x18] sm:$0xff]
      %v485 = vld [vmem:[%s425 + $0x20] sm:$0xff]
      %v486 = vld [vmem:[%s425 + $0x28] sm:$0xff]
      %v487 = vld [vmem:[%s425 + $0x30] sm:$0xff]
      %v488 = vld [vmem:[%s425 + $0x38] sm:$0xff]
      %v489 = vld [vmem:[%s425 + $0x40] sm:$0xff]
      %v490 = vld [vmem:[%s425 + $0x48] sm:$0xff]
      %v491 = vld [vmem:[%s425 + $0x50] sm:$0xff]
      %v492 = vld [vmem:[%s425 + $0x58] sm:$0xff]
      %v493 = vld [vmem:[%s425 + $0x60] sm:$0xff]
      %v494 = vld [vmem:[%s425 + $0x68] sm:$0xff]
      %v495 = vld [vmem:[%s425 + $0x70] sm:$0xff]
      %v496 = vld [vmem:[%s425 + $0x78] sm:$0xff]
      %v497 = vpack.c.bf16 %v482, %v481
      %v498 = vpack.c.bf16 %v484, %v483
      %v499 = vpack.c.bf16 %v486, %v485
      %v500 = vpack.c.bf16 %v488, %v487
      %v501 = vpack.c.bf16 %v490, %v489
      %v502 = vpack.c.bf16 %v492, %v491
      %v503 = vpack.c.bf16 %v494, %v493
      %v504 = vpack.c.bf16 %v496, %v495
      %505 = vmatprep.subr.bf16.mxu0 0
      %506 = vmatpush1.bf16.msra.mxu0 %v497
      %507 = vmatprep.subr.bf16.mxu0 0
      %508 = vmatpush1.bf16.msra.mxu0 %v498
      %509 = vmatprep.subr.bf16.mxu0 0
      %510 = vmatpush1.bf16.msra.mxu0 %v499
      %511 = vmatprep.subr.bf16.mxu0 0
      %512 = vmatpush1.bf16.msra.mxu0 %v500
      %513 = vmatprep.subr.bf16.mxu0 0
      %514 = vmatpush1.bf16.msra.mxu0 %v501
      %515 = vmatprep.subr.bf16.mxu0 0
      %516 = vmatpush1.bf16.msra.mxu0 %v502
      %517 = vmatprep.subr.bf16.mxu0 0
      %518 = vmatpush1.bf16.msra.mxu0 %v503
      %519 = vmatprep.subr.bf16.mxu0 0
      %520 = vmatpush1.bf16.msra.mxu0 %v504
      %521 = vmatprep.subr.bf16.mxu0 0
      %522 = vmatpush1.bf16.msra.mxu0 0
      %523 = vmatprep.subr.bf16.mxu0 0
      %524 = vmatpush1.bf16.msra.mxu0 0
      %525 = vmatprep.subr.bf16.mxu0 0
      %526 = vmatpush1.bf16.msra.mxu0 0
      %527 = vmatprep.subr.bf16.mxu0 0
      %528 = vmatpush1.bf16.msra.mxu0 0
      %529 = vmatprep.subr.bf16.mxu0 0
      %530 = vmatpush1.bf16.msra.mxu0 0
      %531 = vmatprep.subr.bf16.mxu0 0
      %532 = vmatpush1.bf16.msra.mxu0 0
      %533 = vmatprep.subr.bf16.mxu0 0
      %534 = vmatpush1.bf16.msra.mxu0 0
      %535 = vmatprep.subr.bf16.mxu0 0
      %536 = vmatpush1.bf16.msra.mxu0 0
      %537 = vmatprep.mubr.bf16.mxu0 0
      %538 = vmatmul.mubr.bf16.gmra.mrb[0].mxu0 %v480
      %v539 = vpop.f32.mrb[0].mxu0
      %v540 = vadd.f32 0.0, %v539
      %v541 = vpop.f32.mrb[0].mxu0
      %v542 = vpop.f32.mrb[0].mxu0
      %v543 = vadd.f32 0.0, %v542
      %v544 = vpop.f32.mrb[0].mxu0
      %545 = vdwg.mxu0
      %v546 = vadd.f32 %v476, %v540
      %v547 = vadd.f32 %v477, %v543
      %vm548 = vcmask 261120
      %549 = vst.msk [vmem:[#allocation2] sm:$0xff] %vm548, %v546
      %550 = vst.msk [vmem:[#allocation2 + $0x8] sm:$0xff] %vm548, %v547
      // Predicated region
      $region49: #{dit_model.37} parent=43 // pred_check
        %p551 = pneg %p469
      $region50: #{dit_model.37} parent=43 // pred_check_branch
        %553 = sbr.rel (%p551) target = $region52
      $region51: #{dit_model.37} parent=43 // pred_region
        %v554 = vld [vmem:[#allocation2] sm:$0xff]
        %v555 = vld [vmem:[#allocation2 + $0x8] sm:$0xff]
        %v556 = vld [vmem:[%s429] sm:$0x1]
        %v558 = vlaneseq
        %v559 = vshrl.u32 %v558, 7
        %v560 = vsub.s32 0, %v559
        %v561 = vrot.slane %v556, %v560
        %v563 = vadd.f32 %v554, %v561
        %v564 = vadd.f32 %v555, %v561
        %v565 = vld [vmem:[%s435] sm:$0x1]
        %v566 = vadd.f32 %v565, 1.0
        %v568 = vlaneseq
        %v569 = vshrl.u32 %v568, 7
        %v570 = vsub.s32 0, %v569
        %v571 = vrot.slane %v566, %v570
        %v573 = vmul.f32 %v563, %v571
        %v574 = vmul.f32 %v564, %v571
        %v575 = vld [vmem:[%s441] sm:$0x1]
        %v577 = vlaneseq
        %v578 = vshrl.u32 %v577, 7
        %v579 = vsub.s32 0, %v578
        %v580 = vrot.slane %v575, %v579
        %v582 = vadd.f32 %v573, %v580
        %v583 = vadd.f32 %v574, %v580
        %v584 = vld [vmem:[%s453] sm:$0xff]
        %v585 = vld [vmem:[%s453 + $0x8] sm:$0xff]
        %v586 = vadd.f32 %v582, %v584
        %v587 = vadd.f32 %v583, %v585
        %588 = vst.msk [vmem:[%s466] sm:$0xff] %vm548, %v586
        %589 = vst.msk [vmem:[%s466 + $0x8] sm:$0xff] %vm548, %v587
      $region52: #{dit_model.37} parent=43 // pred_fallthru
        _
      %s590 = smul.u32 2, %s24
      %p591 = scmp.lt.s32.totalorder %s23, 1
      %s592 = scalar_select %p591, %s23, 1
      %p593 = scmp.lt.s32.totalorder %s590, 1
      %s594 = scalar_select %p593, %s590, 1
      %p595 = scmp.lt.s32.totalorder %s25, 0
      %s596 = scalar_select %p595, %s25, 0
      %s597 = sadd.s32 %s596, %s594
      %s598 = smul.addr %s592, 2
      %s599 = sadd.s32 %s597, %s598
      %s600 = smul.addr %s599, 8
      %s601 = scalar_lea.vmem %s6, %s600
      // Predicated region
      $region53: #{dit_model.37} parent=43 // pred_check
        %p602 = pneg %p235
      $region54: #{dit_model.37} parent=43 // pred_check_branch
        %604 = sbr.rel (%p602) target = $region56
      $region55: #{dit_model.37} parent=43 // pred_region
        %s605 = smul.u32 2, %s24
      $region56: #{dit_model.37} parent=43 // pred_fallthru
        _
    $region44: #{dit_model.37} parent=5 // pred_fallthru
      _
    %p606 = scmp.le.s32.totalorder 2, %s12
    // Predicated region
    $region57: #{dit_model.37} parent=5 // pred_check
      %p607 = pneg %p606
    $region58: #{dit_model.37} parent=5 // pred_check_branch
      %609 = sbr.rel (%p607) target = $region60
    $region59: #{dit_model.37} parent=5 // pred_region
      %s610 = ssub.s32 %s12, 2
      // Predicated region
      $region61: #{dit_model.37} parent=59 // pred_check
        %p611 = pneg %p241
      $region62: #{dit_model.37} parent=59 // pred_check_branch
        %613 = sbr.rel (%p611) target = $region64
      $region63: #{dit_model.37} parent=59 // pred_region
        %s614 = smul.u32 2, %s28
        %p615 = scmp.lt.s32.totalorder %s27, 1
        %s616 = scalar_select %p615, %s27, 1
        %p617 = scmp.lt.s32.totalorder %s614, 1
        %s618 = scalar_select %p617, %s614, 1
        %p619 = scmp.lt.s32.totalorder %s29, 0
        %s620 = scalar_select %p619, %s29, 0
        %s621 = sadd.s32 %s620, %s618
        %s622 = smul.addr %s616, 2
        %s623 = sadd.s32 %s621, %s622
        %s624 = smul.addr %s623, 8
        %s625 = scalar_lea.vmem %s6, %s624
      $region64: #{dit_model.37} parent=59 // pred_fallthru
        _
    $region60: #{dit_model.37} parent=5 // pred_fallthru
      _
  $region6: #{dit_model.37} parent=0 // loop_footer
    %s16 = sadd.s32 1, %s12
  $region7: #{dit_model.37} parent=0 // loop_footer_branch
    %11 = sbr.rel target = $region3
  $region8: #{dit_model.37} parent=0 // loop_exit
    _

// kernel: dit_model.34
$region0: #{dit_model.34}
  #allocation0 [shape = 'u32[]', space=smem, size = 0x4, offset = 0x4, fixed_abs, tag = 'smem constant byte address 0x4 - core index']
  #allocation1 [shape = 'u32[144,128]{1,0:T(1,128)}', space=vmem, size = 0x12000, scoped, tag = 'internal scratch']
  #allocation2 [shape = 'f32[8,32]{1,0:T(8,128)}', space=vmem, size = 0x1000, scoped, tag = 'scratch operand']
  %s0 = inlined_call_operand.vmem [shape: f32[2,8,32], index: 0, kind: input, shape index: {}]
  %s1 = inlined_call_operand.vmem [shape: f32[32,32], index: 1, kind: input, shape index: {}]
  %s2 = inlined_call_operand.vmem [shape: f32[1,32], index: 2, kind: input, shape index: {}]
  %s3 = inlined_call_operand.vmem [shape: f32[2,1,32], index: 3, kind: input, shape index: {}]
  %s4 = inlined_call_operand.vmem [shape: f32[2,1,32], index: 4, kind: input, shape index: {}]
  %s5 = inlined_call_operand.vmem [shape: f32[2,8,32], index: 5, kind: input, shape index: {}]
  %s6 = inlined_call_operand.vmem [shape: f32[2,8,32], index: 6, kind: output, shape index: {}]
  %s7 = sld [smem:[#allocation0]]
  $region65: #{dit_model.34} parent=0
    _
  %s9 = ssub.s32 1, %s7
  %s10 = scalar_select 0, %s9, %s7
  loop: start=0, step=1, limit=4
  $region2: #{dit_model.34} parent=0 // loop_pre_header
    _
  $region3: #{dit_model.34} parent=0 // loop_header
    %s12 = sphi 0, %s16
    %p13 = scmp.ge.s32.totalorder %s12, 4
    %s19 = sphi 0, %s45
    %s20 = sphi 0, %s41
    %s21 = sphi 0, %s37
    %s22 = sphi 0, %s33
    %s23 = sphi 0, %s19
    %s24 = sphi 0, %s20
    %s25 = sphi 0, %s21
    %s26 = sphi 0, %s22
    %s27 = sphi 0, %s23
    %s28 = sphi 0, %s24
    %s29 = sphi 0, %s25
    %s30 = sphi 0, %s26
    %s52 = sphi 0, %s54
    %s55 = sphi 0, %s52
    %s56 = sphi 0, %s55
    %s72 = sphi 0, %s56
    %s80 = sphi 0, %s82
    %s83 = sphi 0, %s80
    %s84 = sphi 0, %s83
    %s100 = sphi 0, %s84
    %s106 = sphi 0, %s108
    %s109 = sphi 0, %s106
    %s110 = sphi 0, %s109
    %s126 = sphi 0, %s110
    %s134 = sphi 0, %s136
    %s137 = sphi 0, %s134
    %s138 = sphi 0, %s137
    %s154 = sphi 0, %s138
    %s162 = sphi 0, %s164
    %s165 = sphi 0, %s162
    %s166 = sphi 0, %s165
    %s182 = sphi 0, %s166
    %s192 = sphi 0, %s194
    %s195 = sphi 0, %s192
    %s196 = sphi 0, %s195
    %s212 = sphi 0, %s196
    %s222 = sphi 0, %s224
    %s225 = sphi 0, %s222
    %s226 = sphi 0, %s225
    %s242 = sphi 0, %s226
  $region4: #{dit_model.34} parent=0 // loop_header_branch
    %15 = sbr.rel (%p13) target = $region8
  $region5: #{dit_model.34} parent=0 // loop_body
    %s17 = ssub.s32 %s12, 1
    %s18 = ssub.s32 %s12, 2
    %s31 = sadd.s32 1, %s22
    %p32 = scmp.ge.s32.totalorder %s31, 1
    %s33 = scalar_select %p32, 0, %s31
    %s34 = sadd.s32 1, %s21
    %s35 = scalar_select %p32, %s34, %s21
    %p36 = scmp.ge.s32.totalorder %s35, 1
    %s37 = scalar_select %p36, 0, %s35
    %s38 = sadd.s32 1, %s20
    %s39 = scalar_select %p36, %s38, %s20
    %p40 = scmp.ge.s32.totalorder %s39, 1
    %s41 = scalar_select %p40, 0, %s39
    %s42 = sadd.s32 1, %s19
    %s43 = scalar_select %p40, %s42, %s19
    %p44 = scmp.ge.s32.totalorder %s43, 2
    %s45 = scalar_select %p44, 0, %s43
    %s46 = ssub.s32 %s19, %s45
    %s47 = ssub.s32 %s20, %s41
    %s48 = sor.u32 %s46, %s47
    %s49 = ssub.s32 %s22, %s33
    %s50 = sor.u32 %s48, %s49
    %p51 = scmp.eq.s32.totalorder %s50, 0
    %s53 = sadd.s32 %s52, 1
    %s54 = scalar_select %p51, %s52, %s53
    %p57 = pneg %p51
    %p58 = scmp.eq.s32.totalorder %s12, 1
    %p59 = por %p57, %p58
    %p60 = scmp.ne.s32.totalorder %s52, %s55
    %p61 = scmp.eq.s32.totalorder %s12, 0
    %p62 = por %p60, %p61
    %p63 = scmp.ne.s32.totalorder %s52, %s55
    %p64 = scmp.eq.s32.totalorder %s17, 1
    %p65 = por %p63, %p64
    %p66 = scmp.ne.s32.totalorder %s55, %s56
    %p67 = scmp.eq.s32.totalorder %s17, 0
    %p68 = por %p66, %p67
    %p69 = scmp.ne.s32.totalorder %s55, %s56
    %p70 = scmp.eq.s32.totalorder %s18, 1
    %p71 = por %p69, %p70
    %p73 = scmp.ne.s32.totalorder %s56, %s72
    %p74 = scmp.eq.s32.totalorder %s18, 0
    %p75 = por %p73, %p74
    %s76 = ssub.s32 %s22, %s33
    %s77 = ssub.s32 %s21, %s37
    %s78 = sor.u32 %s76, %s77
    %p79 = scmp.eq.s32.totalorder %s78, 0
    %s81 = sadd.s32 %s80, 1
    %s82 = scalar_select %p79, %s80, %s81
    %p85 = pneg %p79
    %p86 = scmp.eq.s32.totalorder %s12, 1
    %p87 = por %p85, %p86
    %p88 = scmp.ne.s32.totalorder %s80, %s83
    %p89 = scmp.eq.s32.totalorder %s12, 0
    %p90 = por %p88, %p89
    %p91 = scmp.ne.s32.totalorder %s80, %s83
    %p92 = scmp.eq.s32.totalorder %s17, 1
    %p93 = por %p91, %p92
    %p94 = scmp.ne.s32.totalorder %s83, %s84
    %p95 = scmp.eq.s32.totalorder %s17, 0
    %p96 = por %p94, %p95
    %p97 = scmp.ne.s32.totalorder %s83, %s84
    %p98 = scmp.eq.s32.totalorder %s18, 1
    %p99 = por %p97, %p98
    %p101 = scmp.ne.s32.totalorder %s84, %s100
    %p102 = scmp.eq.s32.totalorder %s18, 0
    %p103 = por %p101, %p102
    %s104 = ssub.s32 %s21, %s37
    %p105 = scmp.eq.s32.totalorder %s104, 0
    %s107 = sadd.s32 %s106, 1
    %s108 = scalar_select %p105, %s106, %s107
    %p111 = pneg %p105
    %p112 = scmp.eq.s32.totalorder %s12, 1
    %p113 = por %p111, %p112
    %p114 = scmp.ne.s32.totalorder %s106, %s109
    %p115 = scmp.eq.s32.totalorder %s12, 0
    %p116 = por %p114, %p115
    %p117 = scmp.ne.s32.totalorder %s106, %s109
    %p118 = scmp.eq.s32.totalorder %s17, 1
    %p119 = por %p117, %p118
    %p120 = scmp.ne.s32.totalorder %s109, %s110
    %p121 = scmp.eq.s32.totalorder %s17, 0
    %p122 = por %p120, %p121
    %p123 = scmp.ne.s32.totalorder %s109, %s110
    %p124 = scmp.eq.s32.totalorder %s18, 1
    %p125 = por %p123, %p124
    %p127 = scmp.ne.s32.totalorder %s110, %s126
    %p128 = scmp.eq.s32.totalorder %s18, 0
    %p129 = por %p127, %p128
    %s130 = ssub.s32 %s19, %s45
    %s131 = ssub.s32 %s21, %s37
    %s132 = sor.u32 %s130, %s131
    %p133 = scmp.eq.s32.totalorder %s132, 0
    %s135 = sadd.s32 %s134, 1
    %s136 = scalar_select %p133, %s134, %s135
    %p139 = pneg %p133
    %p140 = scmp.eq.s32.totalorder %s12, 1
    %p141 = por %p139, %p140
    %p142 = scmp.ne.s32.totalorder %s134, %s137
    %p143 = scmp.eq.s32.totalorder %s12, 0
    %p144 = por %p142, %p143
    %p145 = scmp.ne.s32.totalorder %s134, %s137
    %p146 = scmp.eq.s32.totalorder %s17, 1
    %p147 = por %p145, %p146
    %p148 = scmp.ne.s32.totalorder %s137, %s138
    %p149 = scmp.eq.s32.totalorder %s17, 0
    %p150 = por %p148, %p149
    %p151 = scmp.ne.s32.totalorder %s137, %s138
    %p152 = scmp.eq.s32.totalorder %s18, 1
    %p153 = por %p151, %p152
    %p155 = scmp.ne.s32.totalorder %s138, %s154
    %p156 = scmp.eq.s32.totalorder %s18, 0
    %p157 = por %p155, %p156
    %s158 = ssub.s32 %s19, %s45
    %s159 = ssub.s32 %s21, %s37
    %s160 = sor.u32 %s158, %s159
    %p161 = scmp.eq.s32.totalorder %s160, 0
    %s163 = sadd.s32 %s162, 1
    %s164 = scalar_select %p161, %s162, %s163
    %p167 = pneg %p161
    %p168 = scmp.eq.s32.totalorder %s12, 1
    %p169 = por %p167, %p168
    %p170 = scmp.ne.s32.totalorder %s162, %s165
    %p171 = scmp.eq.s32.totalorder %s12, 0
    %p172 = por %p170, %p171
    %p173 = scmp.ne.s32.totalorder %s162, %s165
    %p174 = scmp.eq.s32.totalorder %s17, 1
    %p175 = por %p173, %p174
    %p176 = scmp.ne.s32.totalorder %s165, %s166
    %p177 = scmp.eq.s32.totalorder %s17, 0
    %p178 = por %p176, %p177
    %p179 = scmp.ne.s32.totalorder %s165, %s166
    %p180 = scmp.eq.s32.totalorder %s18, 1
    %p181 = por %p179, %p180
    %p183 = scmp.ne.s32.totalorder %s166, %s182
    %p184 = scmp.eq.s32.totalorder %s18, 0
    %p185 = por %p183, %p184
    %s186 = ssub.s32 %s19, %s45
    %s187 = ssub.s32 %s20, %s41
    %s188 = sor.u32 %s186, %s187
    %s189 = ssub.s32 %s21, %s37
    %s190 = sor.u32 %s188, %s189
    %p191 = scmp.eq.s32.totalorder %s190, 0
    %s193 = sadd.s32 %s192, 1
    %s194 = scalar_select %p191, %s192, %s193
    %p197 = pneg %p191
    %p198 = scmp.eq.s32.totalorder %s12, 1
    %p199 = por %p197, %p198
    %p200 = scmp.ne.s32.totalorder %s192, %s195
    %p201 = scmp.eq.s32.totalorder %s12, 0
    %p202 = por %p200, %p201
    %p203 = scmp.ne.s32.totalorder %s192, %s195
    %p204 = scmp.eq.s32.totalorder %s17, 1
    %p205 = por %p203, %p204
    %p206 = scmp.ne.s32.totalorder %s195, %s196
    %p207 = scmp.eq.s32.totalorder %s17, 0
    %p208 = por %p206, %p207
    %p209 = scmp.ne.s32.totalorder %s195, %s196
    %p210 = scmp.eq.s32.totalorder %s18, 1
    %p211 = por %p209, %p210
    %p213 = scmp.ne.s32.totalorder %s196, %s212
    %p214 = scmp.eq.s32.totalorder %s18, 0
    %p215 = por %p213, %p214
    %s216 = ssub.s32 %s19, %s45
    %s217 = ssub.s32 %s20, %s41
    %s218 = sor.u32 %s216, %s217
    %s219 = ssub.s32 %s21, %s37
    %s220 = sor.u32 %s218, %s219
    %p221 = scmp.eq.s32.totalorder %s220, 0
    %s223 = sadd.s32 %s222, 1
    %s224 = scalar_select %p221, %s222, %s223
    %p227 = pneg %p221
    %p228 = scmp.eq.s32.totalorder %s12, 1
    %p229 = por %p227, %p228
    %p230 = scmp.ne.s32.totalorder %s222, %s225
    %p231 = scmp.eq.s32.totalorder %s12, 0
    %p232 = por %p230, %p231
    %p233 = scmp.ne.s32.totalorder %s222, %s225
    %p234 = scmp.eq.s32.totalorder %s17, 1
    %p235 = por %p233, %p234
    %p236 = scmp.ne.s32.totalorder %s225, %s226
    %p237 = scmp.eq.s32.totalorder %s17, 0
    %p238 = por %p236, %p237
    %p239 = scmp.ne.s32.totalorder %s225, %s226
    %p240 = scmp.eq.s32.totalorder %s18, 1
    %p241 = por %p239, %p240
    %p243 = scmp.ne.s32.totalorder %s226, %s242
    %p244 = scmp.eq.s32.totalorder %s18, 0
    %p245 = por %p243, %p244
    %p246 = scmp.le.s32.totalorder 1, %s12
    %p247 = scmp.lt.s32.totalorder %s12, 3
    %p248 = pnand %p246, %p247
    %p249 = pneg %p248
    // Predicated region
    $region9: #{dit_model.34} parent=5 // pred_check
      _
    $region10: #{dit_model.34} parent=5 // pred_check_branch
      %251 = sbr.rel (%p248) target = $region12
    $region11: #{dit_model.34} parent=5 // pred_region
      %s252 = ssub.s32 %s12, 1
      // Predicated region
      $region13: #{dit_model.34} parent=11 // pred_check
        %p253 = pneg %p96
      $region14: #{dit_model.34} parent=11 // pred_check_branch
        %255 = sbr.rel (%p253) target = $region16
      $region15: #{dit_model.34} parent=11 // pred_region
        %s256 = smul.u32 4, %s26
        %p257 = scmp.lt.s32.totalorder %s256, 3
        %s258 = scalar_select %p257, %s256, 3
        %p259 = scmp.lt.s32.totalorder %s25, 0
        %s260 = scalar_select %p259, %s25, 0
        %s261 = sadd.s32 %s260, %s258
        %s262 = smul.addr %s261, 8
        %s263 = scalar_lea.vmem %s1, %s262
        %s264 = smul.u32 4, %s26
      $region16: #{dit_model.34} parent=11 // pred_fallthru
        _
      // Predicated region
      $region17: #{dit_model.34} parent=11 // pred_check
        %p265 = pneg %p122
      $region18: #{dit_model.34} parent=11 // pred_check_branch
        %267 = sbr.rel (%p265) target = $region20
      $region19: #{dit_model.34} parent=11 // pred_region
        %p268 = scmp.lt.s32.totalorder %s25, 0
        %s269 = scalar_select %p268, %s25, 0
        %s270 = scalar_lea.vmem %s2, %s269
      $region20: #{dit_model.34} parent=11 // pred_fallthru
        _
    $region12: #{dit_model.34} parent=5 // pred_fallthru
      _
    %p271 = scmp.lt.s32.totalorder %s12, 2
    // Predicated region
    $region21: #{dit_model.34} parent=5 // pred_check
      %p272 = pneg %p271
    $region22: #{dit_model.34} parent=5 // pred_check_branch
      %274 = sbr.rel (%p272) target = $region24
    $region23: #{dit_model.34} parent=5 // pred_region
      // Predicated region
      $region25: #{dit_model.34} parent=23 // pred_check
        %p275 = pneg %p62
      $region26: #{dit_model.34} parent=23 // pred_check_branch
        %277 = sbr.rel (%p275) target = $region28
      $region27: #{dit_model.34} parent=23 // pred_region
        %p278 = scmp.lt.s32.totalorder %s19, 1
        %s279 = scalar_select %p278, %s19, 1
        %p280 = scmp.lt.s32.totalorder %s20, 0
        %s281 = scalar_select %p280, %s20, 0
        %p282 = scmp.lt.s32.totalorder %s22, 0
        %s283 = scalar_select %p282, %s22, 0
        %s284 = sadd.s32 %s283, %s281
        %s285 = sadd.s32 %s284, %s279
        %s286 = smul.addr %s285, 8
        %s287 = scalar_lea.vmem %s0, %s286
      $region28: #{dit_model.34} parent=23 // pred_fallthru
        _
      // Predicated region
      $region29: #{dit_model.34} parent=23 // pred_check
        %p288 = pneg %p144
      $region30: #{dit_model.34} parent=23 // pred_check_branch
        %290 = sbr.rel (%p288) target = $region32
      $region31: #{dit_model.34} parent=23 // pred_region
        %p291 = scmp.lt.s32.totalorder %s19, 1
        %s292 = scalar_select %p291, %s19, 1
        %p293 = scmp.lt.s32.totalorder %s21, 0
        %s294 = scalar_select %p293, %s21, 0
        %s295 = sadd.s32 %s294, %s292
        %s296 = scalar_lea.vmem %s3, %s295
      $region32: #{dit_model.34} parent=23 // pred_fallthru
        _
      // Predicated region
      $region33: #{dit_model.34} parent=23 // pred_check
        %p297 = pneg %p172
      $region34: #{dit_model.34} parent=23 // pred_check_branch
        %299 = sbr.rel (%p297) target = $region36
      $region35: #{dit_model.34} parent=23 // pred_region
        %p300 = scmp.lt.s32.totalorder %s19, 1
        %s301 = scalar_select %p300, %s19, 1
        %p302 = scmp.lt.s32.totalorder %s21, 0
        %s303 = scalar_select %p302, %s21, 0
        %s304 = sadd.s32 %s303, %s301
        %s305 = scalar_lea.vmem %s4, %s304
      $region36: #{dit_model.34} parent=23 // pred_fallthru
        _
      // Predicated region
      $region37: #{dit_model.34} parent=23 // pred_check
        %p306 = pneg %p202
      $region38: #{dit_model.34} parent=23 // pred_check_branch
        %308 = sbr.rel (%p306) target = $region40
      $region39: #{dit_model.34} parent=23 // pred_region
        %p309 = scmp.lt.s32.totalorder %s19, 1
        %s310 = scalar_select %p309, %s19, 1
        %p311 = scmp.lt.s32.totalorder %s20, 0
        %s312 = scalar_select %p311, %s20, 0
        %p313 = scmp.lt.s32.totalorder %s21, 0
        %s314 = scalar_select %p313, %s21, 0
        %s315 = sadd.s32 %s314, %s312
        %s316 = sadd.s32 %s315, %s310
        %s317 = smul.addr %s316, 8
        %s318 = scalar_lea.vmem %s5, %s317
      $region40: #{dit_model.34} parent=23 // pred_fallthru
        _
    $region24: #{dit_model.34} parent=5 // pred_fallthru
      _
    %p319 = scmp.le.s32.totalorder 1, %s12
    %p320 = scmp.lt.s32.totalorder %s12, 3
    %p321 = pnand %p319, %p320
    %p322 = pneg %p321
    // Predicated region
    $region41: #{dit_model.34} parent=5 // pred_check
      _
    $region42: #{dit_model.34} parent=5 // pred_check_branch
      %324 = sbr.rel (%p321) target = $region44
    $region43: #{dit_model.34} parent=5 // pred_region
      %s325 = ssub.s32 %s12, 1
      %p326 = scmp.lt.s32.totalorder %s23, 1
      %s327 = scalar_select %p326, %s23, 1
      %p328 = scmp.lt.s32.totalorder %s24, 0
      %s329 = scalar_select %p328, %s24, 0
      %p330 = scmp.lt.s32.totalorder %s26, 0
      %s331 = scalar_select %p330, %s26, 0
      %s332 = sadd.s32 %s331, %s329
      %s333 = sadd.s32 %s332, %s327
      %s334 = smul.addr %s333, 8
      %s335 = scalar_lea.vmem %s0, %s334
      %p336 = pneg %p68
      %p337 = pneg %p65
      %s338 = smul.u32 4, %s26
      %p339 = scmp.lt.s32.totalorder %s338, 3
      %s340 = scalar_select %p339, %s338, 3
      %p341 = scmp.lt.s32.totalorder %s25, 0
      %s342 = scalar_select %p341, %s25, 0
      %s343 = sadd.s32 %s342, %s340
      %s344 = smul.addr %s343, 8
      %s345 = scalar_lea.vmem %s1, %s344
      %p346 = pneg %p96
      %p347 = pneg %p93
      %p348 = scmp.lt.s32.totalorder %s25, 0
      %s349 = scalar_select %p348, %s25, 0
      %s350 = scalar_lea.vmem %s2, %s349
      %p351 = pneg %p122
      %p352 = pneg %p119
      %p353 = scmp.lt.s32.totalorder %s23, 1
      %s354 = scalar_select %p353, %s23, 1
      %p355 = scmp.lt.s32.totalorder %s25, 0
      %s356 = scalar_select %p355, %s25, 0
      %s357 = sadd.s32 %s356, %s354
      %s358 = scalar_lea.vmem %s3, %s357
      %p359 = pneg %p150
      %p360 = pneg %p147
      %p361 = scmp.lt.s32.totalorder %s23, 1
      %s362 = scalar_select %p361, %s23, 1
      %p363 = scmp.lt.s32.totalorder %s25, 0
      %s364 = scalar_select %p363, %s25, 0
      %s365 = sadd.s32 %s364, %s362
      %s366 = scalar_lea.vmem %s4, %s365
      %p367 = pneg %p178
      %p368 = pneg %p175
      %p369 = scmp.lt.s32.totalorder %s23, 1
      %s370 = scalar_select %p369, %s23, 1
      %p371 = scmp.lt.s32.totalorder %s24, 0
      %s372 = scalar_select %p371, %s24, 0
      %p373 = scmp.lt.s32.totalorder %s25, 0
      %s374 = scalar_select %p373, %s25, 0
      %s375 = sadd.s32 %s374, %s372
      %s376 = sadd.s32 %s375, %s370
      %s377 = smul.addr %s376, 8
      %s378 = scalar_lea.vmem %s5, %s377
      %p379 = pneg %p208
      %p380 = pneg %p205
      %p381 = pneg %p238
      %p382 = pneg %p235
      %p383 = scmp.lt.s32.totalorder %s23, 1
      %s384 = scalar_select %p383, %s23, 1
      %p385 = scmp.lt.s32.totalorder %s24, 0
      %s386 = scalar_select %p385, %s24, 0
      %p387 = scmp.lt.s32.totalorder %s25, 0
      %s388 = scalar_select %p387, %s25, 0
      %s389 = sadd.s32 %s388, %s386
      %s390 = sadd.s32 %s389, %s384
      %s391 = smul.addr %s390, 8
      %s392 = scalar_lea.vmem %s6, %s391
      %p393 = scmp.lt.s32.totalorder %s23, 1
      %s394 = scalar_select %p393, %s23, 1
      %p395 = scmp.lt.s32.totalorder %s24, 0
      %s396 = scalar_select %p395, %s24, 0
      %p397 = scmp.lt.s32.totalorder %s26, 0
      %s398 = scalar_select %p397, %s26, 0
      %s399 = sadd.s32 %s398, %s396
      %s400 = sadd.s32 %s399, %s394
      %s401 = smul.addr %s400, 8
      %s402 = scalar_lea.vmem %s0, %s401
      %s403 = smul.u32 4, %s26
      %p404 = scmp.lt.s32.totalorder %s403, 3
      %s405 = scalar_select %p404, %s403, 3
      %p406 = scmp.lt.s32.totalorder %s25, 0
      %s407 = scalar_select %p406, %s25, 0
      %s408 = sadd.s32 %s407, %s405
      %s409 = smul.addr %s408, 8
      %s410 = scalar_lea.vmem %s1, %s409
      %s411 = smul.u32 4, %s26
      %p412 = scmp.lt.s32.totalorder %s25, 0
      %s413 = scalar_select %p412, %s25, 0
      %s414 = scalar_lea.vmem %s2, %s413
      %p415 = scmp.lt.s32.totalorder %s23, 1
      %s416 = scalar_select %p415, %s23, 1
      %p417 = scmp.lt.s32.totalorder %s25, 0
      %s418 = scalar_select %p417, %s25, 0
      %s419 = sadd.s32 %s418, %s416
      %s420 = scalar_lea.vmem %s3, %s419
      %p421 = scmp.lt.s32.totalorder %s23, 1
      %s422 = scalar_select %p421, %s23, 1
      %p423 = scmp.lt.s32.totalorder %s25, 0
      %s424 = scalar_select %p423, %s25, 0
      %s425 = sadd.s32 %s424, %s422
      %s426 = scalar_lea.vmem %s4, %s425
      %p427 = scmp.lt.s32.totalorder %s23, 1
      %s428 = scalar_select %p427, %s23, 1
      %p429 = scmp.lt.s32.totalorder %s24, 0
      %s430 = scalar_select %p429, %s24, 0
      %p431 = scmp.lt.s32.totalorder %s25, 0
      %s432 = scalar_select %p431, %s25, 0
      %s433 = sadd.s32 %s432, %s430
      %s434 = sadd.s32 %s433, %s428
      %s435 = smul.addr %s434, 8
      %s436 = scalar_lea.vmem %s5, %s435
      %p437 = scmp.lt.s32.totalorder %s23, 1
      %s438 = scalar_select %p437, %s23, 1
      %p439 = scmp.lt.s32.totalorder %s24, 0
      %s440 = scalar_select %p439, %s24, 0
      %p441 = scmp.lt.s32.totalorder %s25, 0
      %s442 = scalar_select %p441, %s25, 0
      %s443 = sadd.s32 %s442, %s440
      %s444 = sadd.s32 %s443, %s438
      %s445 = smul.addr %s444, 8
      %s446 = scalar_lea.vmem %s6, %s445
      %p448 = scmp.eq.s32.totalorder %s26, 0
      // Predicated region
      $region45: #{dit_model.34} parent=43 // pred_check
        %p449 = pneg %p448
      $region46: #{dit_model.34} parent=43 // pred_check_branch
        %451 = sbr.rel (%p449) target = $region48
      $region47: #{dit_model.34} parent=43 // pred_region
        %vm452 = vcmask 261120
        %453 = vst.msk [vmem:[#allocation2] sm:$0xff] %vm452, 0.0
      $region48: #{dit_model.34} parent=43 // pred_fallthru
        _
      %v454 = vld [vmem:[#allocation2] sm:$0xff]
      %v455 = vld [vmem:[%s402] sm:$0xff]
      %v456 = vpack.c.bf16 %v455, %v455
      %v457 = vld [vmem:[%s410] sm:$0xff]
      %v458 = vld [vmem:[%s410 + $0x8] sm:$0xff]
      %v459 = vld [vmem:[%s410 + $0x10] sm:$0xff]
      %v460 = vld [vmem:[%s410 + $0x18] sm:$0xff]
      %v461 = vpack.c.bf16 %v458, %v457
      %v462 = vpack.c.bf16 %v460, %v459
      %vm463 = vcmask 261120
      %v465 = vsel %vm463, %v456, 0
      %467 = vmatprep.subr.bf16.mxu0 0
      %468 = vmatpush1.bf16.msra.mxu0 %v461
      %469 = vmatprep.subr.bf16.mxu0 0
      %470 = vmatpush1.bf16.msra.mxu0 %v462
      %471 = vmatprep.subr.bf16.mxu0 0
      %472 = vmatpush1.bf16.msra.mxu0 0
      %473 = vmatprep.subr.bf16.mxu0 0
      %474 = vmatpush1.bf16.msra.mxu0 0
      %475 = vmatprep.subr.bf16.mxu0 0
      %476 = vmatpush1.bf16.msra.mxu0 0
      %477 = vmatprep.subr.bf16.mxu0 0
      %478 = vmatpush1.bf16.msra.mxu0 0
      %479 = vmatprep.subr.bf16.mxu0 0
      %480 = vmatpush1.bf16.msra.mxu0 0
      %481 = vmatprep.subr.bf16.mxu0 0
      %482 = vmatpush1.bf16.msra.mxu0 0
      %483 = vmatprep.subr.bf16.mxu0 0
      %484 = vmatpush1.bf16.msra.mxu0 0
      %485 = vmatprep.subr.bf16.mxu0 0
      %486 = vmatpush1.bf16.msra.mxu0 0
      %487 = vmatprep.subr.bf16.mxu0 0
      %488 = vmatpush1.bf16.msra.mxu0 0
      %489 = vmatprep.subr.bf16.mxu0 0
      %490 = vmatpush1.bf16.msra.mxu0 0
      %491 = vmatprep.subr.bf16.mxu0 0
      %492 = vmatpush1.bf16.msra.mxu0 0
      %493 = vmatprep.subr.bf16.mxu0 0
      %494 = vmatpush1.bf16.msra.mxu0 0
      %495 = vmatprep.subr.bf16.mxu0 0
      %496 = vmatpush1.bf16.msra.mxu0 0
      %497 = vmatprep.subr.bf16.mxu0 0
      %498 = vmatpush1.bf16.msra.mxu0 0
      %499 = vmatprep.mubr.bf16.mxu0 0
      %500 = vmatmul.mubr.bf16.gmra.mrb[0].mxu0 %v465
      %v501 = vpop.f32.mrb[0].mxu0
      %v502 = vadd.f32 0.0, %v501
      %v503 = vpop.f32.mrb[0].mxu0
      %v504 = vpop.f32.mrb[0].mxu0
      %v505 = vpop.f32.mrb[0].mxu0
      %506 = vdwg.mxu0
      %v507 = vadd.f32 %v454, %v502
      %508 = vst.msk [vmem:[#allocation2] sm:$0xff] %vm463, %v507
      // Predicated region
      $region49: #{dit_model.34} parent=43 // pred_check
        %p509 = pneg %p448
      $region50: #{dit_model.34} parent=43 // pred_check_branch
        %511 = sbr.rel (%p509) target = $region52
      $region51: #{dit_model.34} parent=43 // pred_region
        %v512 = vld [vmem:[#allocation2] sm:$0xff]
        %v513 = vld [vmem:[%s414] sm:$0x1]
        %v515 = vlaneseq
        %v516 = vshrl.u32 %v515, 7
        %v517 = vsub.s32 0, %v516
        %v518 = vrot.slane %v513, %v517
        %v520 = vadd.f32 %v512, %v518
        %v521 = vld [vmem:[%s420] sm:$0x1]
        %v522 = vadd.f32 %v521, 1.0
        %v524 = vlaneseq
        %v525 = vshrl.u32 %v524, 7
        %v526 = vsub.s32 0, %v525
        %v527 = vrot.slane %v522, %v526
        %v529 = vmul.f32 %v520, %v527
        %v530 = vld [vmem:[%s426] sm:$0x1]
        %v532 = vlaneseq
        %v533 = vshrl.u32 %v532, 7
        %v534 = vsub.s32 0, %v533
        %v535 = vrot.slane %v530, %v534
        %v537 = vadd.f32 %v529, %v535
        %v538 = vld [vmem:[%s436] sm:$0xff]
        %v539 = vadd.f32 %v537, %v538
        %540 = vst.msk [vmem:[%s446] sm:$0xff] %vm463, %v539
      $region52: #{dit_model.34} parent=43 // pred_fallthru
        _
      %p541 = scmp.lt.s32.totalorder %s23, 1
      %s542 = scalar_select %p541, %s23, 1
      %p543 = scmp.lt.s32.totalorder %s24, 0
      %s544 = scalar_select %p543, %s24, 0
      %p545 = scmp.lt.s32.totalorder %s25, 0
      %s546 = scalar_select %p545, %s25, 0
      %s547 = sadd.s32 %s546, %s544
      %s548 = sadd.s32 %s547, %s542
      %s549 = smul.addr %s548, 8
      %s550 = scalar_lea.vmem %s6, %s549
      // Predicated region
      $region53: #{dit_model.34} parent=43 // pred_check
        %p551 = pneg %p235
      $region54: #{dit_model.34} parent=43 // pred_check_branch
        %553 = sbr.rel (%p551) target = $region56
      $region55: #{dit_model.34} parent=43 // pred_region
        _
      $region56: #{dit_model.34} parent=43 // pred_fallthru
        _
    $region44: #{dit_model.34} parent=5 // pred_fallthru
      _
    %p554 = scmp.le.s32.totalorder 2, %s12
    // Predicated region
    $region57: #{dit_model.34} parent=5 // pred_check
      %p555 = pneg %p554
    $region58: #{dit_model.34} parent=5 // pred_check_branch
      %557 = sbr.rel (%p555) target = $region60
    $region59: #{dit_model.34} parent=5 // pred_region
      %s558 = ssub.s32 %s12, 2
      // Predicated region
      $region61: #{dit_model.34} parent=59 // pred_check
        %p559 = pneg %p241
      $region62: #{dit_model.34} parent=59 // pred_check_branch
        %561 = sbr.rel (%p559) target = $region64
      $region63: #{dit_model.34} parent=59 // pred_region
        %p562 = scmp.lt.s32.totalorder %s27, 1
        %s563 = scalar_select %p562, %s27, 1
        %p564 = scmp.lt.s32.totalorder %s28, 0
        %s565 = scalar_select %p564, %s28, 0
        %p566 = scmp.lt.s32.totalorder %s29, 0
        %s567 = scalar_select %p566, %s29, 0
        %s568 = sadd.s32 %s567, %s565
        %s569 = sadd.s32 %s568, %s563
        %s570 = smul.addr %s569, 8
        %s571 = scalar_lea.vmem %s6, %s570
      $region64: #{dit_model.34} parent=59 // pred_fallthru
        _
    $region60: #{dit_model.34} parent=5 // pred_fallthru
      _
  $region6: #{dit_model.34} parent=0 // loop_footer
    %s16 = sadd.s32 1, %s12
  $region7: #{dit_model.34} parent=0 // loop_footer_branch
    %11 = sbr.rel target = $region3
  $region8: #{dit_model.34} parent=0 // loop_exit
    _

// kernel: dit_model.36
$region0: #{dit_model.36}
  #allocation0 [shape = 'u32[]', space=smem, size = 0x4, offset = 0x4, fixed_abs, tag = 'smem constant byte address 0x4 - core index']
  #allocation1 [shape = 'u32[144,128]{1,0:T(1,128)}', space=vmem, size = 0x12000, scoped, tag = 'internal scratch']
  %s0 = inlined_call_operand.vmem [shape: f32[2,8,32], index: 0, kind: input, shape index: {}]
  %s1 = inlined_call_operand.vmem [shape: f32[2,1,32], index: 1, kind: input, shape index: {}]
  %s2 = inlined_call_operand.vmem [shape: f32[2,1,32], index: 2, kind: input, shape index: {}]
  %s3 = inlined_call_operand.vmem [shape: f32[32,128], index: 3, kind: input, shape index: {}]
  %s4 = inlined_call_operand.vmem [shape: f32[1,128], index: 4, kind: input, shape index: {}]
  %s5 = inlined_call_operand.vmem [shape: f32[2,8,128], index: 5, kind: output, shape index: {}]
  %s6 = sld [smem:[#allocation0]]
  $region53: #{dit_model.36} parent=0
    _
  %s8 = ssub.s32 1, %s6
  %s9 = scalar_select 0, %s8, %s6
  loop: start=0, step=1, limit=4
  $region2: #{dit_model.36} parent=0 // loop_pre_header
    _
  $region3: #{dit_model.36} parent=0 // loop_header
    %s11 = sphi 0, %s15
    %p12 = scmp.ge.s32.totalorder %s11, 4
    %s18 = sphi 0, %s37
    %s19 = sphi 0, %s33
    %s20 = sphi 0, %s29
    %s21 = sphi 0, %s18
    %s22 = sphi 0, %s19
    %s23 = sphi 0, %s20
    %s24 = sphi 0, %s21
    %s25 = sphi 0, %s22
    %s26 = sphi 0, %s23
    %s42 = sphi 0, %s44
    %s45 = sphi 0, %s42
    %s46 = sphi 0, %s45
    %s62 = sphi 0, %s46
    %s68 = sphi 0, %s70
    %s71 = sphi 0, %s68
    %s72 = sphi 0, %s71
    %s88 = sphi 0, %s72
    %s94 = sphi 0, %s96
    %s97 = sphi 0, %s94
    %s98 = sphi 0, %s97
    %s114 = sphi 0, %s98
    %s120 = sphi 0, %s122
    %s123 = sphi 0, %s120
    %s124 = sphi 0, %s123
    %s140 = sphi 0, %s124
    %s146 = sphi 0, %s148
    %s149 = sphi 0, %s146
    %s150 = sphi 0, %s149
    %s166 = sphi 0, %s150
    %s176 = sphi 0, %s178
    %s179 = sphi 0, %s176
    %s180 = sphi 0, %s179
    %s196 = sphi 0, %s180
  $region4: #{dit_model.36} parent=0 // loop_header_branch
    %14 = sbr.rel (%p12) target = $region8
  $region5: #{dit_model.36} parent=0 // loop_body
    %s16 = ssub.s32 %s11, 1
    %s17 = ssub.s32 %s11, 2
    %s27 = sadd.s32 1, %s20
    %p28 = scmp.ge.s32.totalorder %s27, 1
    %s29 = scalar_select %p28, 0, %s27
    %s30 = sadd.s32 1, %s19
    %s31 = scalar_select %p28, %s30, %s19
    %p32 = scmp.ge.s32.totalorder %s31, 1
    %s33 = scalar_select %p32, 0, %s31
    %s34 = sadd.s32 1, %s18
    %s35 = scalar_select %p32, %s34, %s18
    %p36 = scmp.ge.s32.totalorder %s35, 2
    %s37 = scalar_select %p36, 0, %s35
    %s38 = ssub.s32 %s18, %s37
    %s39 = ssub.s32 %s19, %s33
    %s40 = sor.u32 %s38, %s39
    %p41 = scmp.eq.s32.totalorder %s40, 0
    %s43 = sadd.s32 %s42, 1
    %s44 = scalar_select %p41, %s42, %s43
    %p47 = pneg %p41
    %p48 = scmp.eq.s32.totalorder %s11, 1
    %p49 = por %p47, %p48
    %p50 = scmp.ne.s32.totalorder %s42, %s45
    %p51 = scmp.eq.s32.totalorder %s11, 0
    %p52 = por %p50, %p51
    %p53 = scmp.ne.s32.totalorder %s42, %s45
    %p54 = scmp.eq.s32.totalorder %s16, 1
    %p55 = por %p53, %p54
    %p56 = scmp.ne.s32.totalorder %s45, %s46
    %p57 = scmp.eq.s32.totalorder %s16, 0
    %p58 = por %p56, %p57
    %p59 = scmp.ne.s32.totalorder %s45, %s46
    %p60 = scmp.eq.s32.totalorder %s17, 1
    %p61 = por %p59, %p60
    %p63 = scmp.ne.s32.totalorder %s46, %s62
    %p64 = scmp.eq.s32.totalorder %s17, 0
    %p65 = por %p63, %p64
    %s66 = ssub.s32 %s18, %s37
    %p67 = scmp.eq.s32.totalorder %s66, 0
    %s69 = sadd.s32 %s68, 1
    %s70 = scalar_select %p67, %s68, %s69
    %p73 = pneg %p67
    %p74 = scmp.eq.s32.totalorder %s11, 1
    %p75 = por %p73, %p74
    %p76 = scmp.ne.s32.totalorder %s68, %s71
    %p77 = scmp.eq.s32.totalorder %s11, 0
    %p78 = por %p76, %p77
    %p79 = scmp.ne.s32.totalorder %s68, %s71
    %p80 = scmp.eq.s32.totalorder %s16, 1
    %p81 = por %p79, %p80
    %p82 = scmp.ne.s32.totalorder %s71, %s72
    %p83 = scmp.eq.s32.totalorder %s16, 0
    %p84 = por %p82, %p83
    %p85 = scmp.ne.s32.totalorder %s71, %s72
    %p86 = scmp.eq.s32.totalorder %s17, 1
    %p87 = por %p85, %p86
    %p89 = scmp.ne.s32.totalorder %s72, %s88
    %p90 = scmp.eq.s32.totalorder %s17, 0
    %p91 = por %p89, %p90
    %s92 = ssub.s32 %s18, %s37
    %p93 = scmp.eq.s32.totalorder %s92, 0
    %s95 = sadd.s32 %s94, 1
    %s96 = scalar_select %p93, %s94, %s95
    %p99 = pneg %p93
    %p100 = scmp.eq.s32.totalorder %s11, 1
    %p101 = por %p99, %p100
    %p102 = scmp.ne.s32.totalorder %s94, %s97
    %p103 = scmp.eq.s32.totalorder %s11, 0
    %p104 = por %p102, %p103
    %p105 = scmp.ne.s32.totalorder %s94, %s97
    %p106 = scmp.eq.s32.totalorder %s16, 1
    %p107 = por %p105, %p106
    %p108 = scmp.ne.s32.totalorder %s97, %s98
    %p109 = scmp.eq.s32.totalorder %s16, 0
    %p110 = por %p108, %p109
    %p111 = scmp.ne.s32.totalorder %s97, %s98
    %p112 = scmp.eq.s32.totalorder %s17, 1
    %p113 = por %p111, %p112
    %p115 = scmp.ne.s32.totalorder %s98, %s114
    %p116 = scmp.eq.s32.totalorder %s17, 0
    %p117 = por %p115, %p116
    %s118 = ssub.s32 %s20, %s29
    %p119 = scmp.eq.s32.totalorder %s118, 0
    %s121 = sadd.s32 %s120, 1
    %s122 = scalar_select %p119, %s120, %s121
    %p125 = pneg %p119
    %p126 = scmp.eq.s32.totalorder %s11, 1
    %p127 = por %p125, %p126
    %p128 = scmp.ne.s32.totalorder %s120, %s123
    %p129 = scmp.eq.s32.totalorder %s11, 0
    %p130 = por %p128, %p129
    %p131 = scmp.ne.s32.totalorder %s120, %s123
    %p132 = scmp.eq.s32.totalorder %s16, 1
    %p133 = por %p131, %p132
    %p134 = scmp.ne.s32.totalorder %s123, %s124
    %p135 = scmp.eq.s32.totalorder %s16, 0
    %p136 = por %p134, %p135
    %p137 = scmp.ne.s32.totalorder %s123, %s124
    %p138 = scmp.eq.s32.totalorder %s17, 1
    %p139 = por %p137, %p138
    %p141 = scmp.ne.s32.totalorder %s124, %s140
    %p142 = scmp.eq.s32.totalorder %s17, 0
    %p143 = por %p141, %p142
    %s144 = ssub.s32 %s20, %s29
    %p145 = scmp.eq.s32.totalorder %s144, 0
    %s147 = sadd.s32 %s146, 1
    %s148 = scalar_select %p145, %s146, %s147
    %p151 = pneg %p145
    %p152 = scmp.eq.s32.totalorder %s11, 1
    %p153 = por %p151, %p152
    %p154 = scmp.ne.s32.totalorder %s146, %s149
    %p155 = scmp.eq.s32.totalorder %s11, 0
    %p156 = por %p154, %p155
    %p157 = scmp.ne.s32.totalorder %s146, %s149
    %p158 = scmp.eq.s32.totalorder %s16, 1
    %p159 = por %p157, %p158
    %p160 = scmp.ne.s32.totalorder %s149, %s150
    %p161 = scmp.eq.s32.totalorder %s16, 0
    %p162 = por %p160, %p161
    %p163 = scmp.ne.s32.totalorder %s149, %s150
    %p164 = scmp.eq.s32.totalorder %s17, 1
    %p165 = por %p163, %p164
    %p167 = scmp.ne.s32.totalorder %s150, %s166
    %p168 = scmp.eq.s32.totalorder %s17, 0
    %p169 = por %p167, %p168
    %s170 = ssub.s32 %s18, %s37
    %s171 = ssub.s32 %s19, %s33
    %s172 = sor.u32 %s170, %s171
    %s173 = ssub.s32 %s20, %s29
    %s174 = sor.u32 %s172, %s173
    %p175 = scmp.eq.s32.totalorder %s174, 0
    %s177 = sadd.s32 %s176, 1
    %s178 = scalar_select %p175, %s176, %s177
    %p181 = pneg %p175
    %p182 = scmp.eq.s32.totalorder %s11, 1
    %p183 = por %p181, %p182
    %p184 = scmp.ne.s32.totalorder %s176, %s179
    %p185 = scmp.eq.s32.totalorder %s11, 0
    %p186 = por %p184, %p185
    %p187 = scmp.ne.s32.totalorder %s176, %s179
    %p188 = scmp.eq.s32.totalorder %s16, 1
    %p189 = por %p187, %p188
    %p190 = scmp.ne.s32.totalorder %s179, %s180
    %p191 = scmp.eq.s32.totalorder %s16, 0
    %p192 = por %p190, %p191
    %p193 = scmp.ne.s32.totalorder %s179, %s180
    %p194 = scmp.eq.s32.totalorder %s17, 1
    %p195 = por %p193, %p194
    %p197 = scmp.ne.s32.totalorder %s180, %s196
    %p198 = scmp.eq.s32.totalorder %s17, 0
    %p199 = por %p197, %p198
    %p200 = scmp.le.s32.totalorder 1, %s11
    %p201 = scmp.lt.s32.totalorder %s11, 3
    %p202 = pnand %p200, %p201
    %p203 = pneg %p202
    // Predicated region
    $region9: #{dit_model.36} parent=5 // pred_check
      _
    $region10: #{dit_model.36} parent=5 // pred_check_branch
      %205 = sbr.rel (%p202) target = $region12
    $region11: #{dit_model.36} parent=5 // pred_region
      %s206 = ssub.s32 %s11, 1
      // Predicated region
      $region13: #{dit_model.36} parent=11 // pred_check
        %p207 = pneg %p136
      $region14: #{dit_model.36} parent=11 // pred_check_branch
        %209 = sbr.rel (%p207) target = $region16
      $region15: #{dit_model.36} parent=11 // pred_region
        %p210 = scmp.lt.s32.totalorder %s23, 0
        %s211 = scalar_select %p210, %s23, 0
        %s212 = smul.addr %s211, 8
        %s213 = scalar_lea.vmem %s3, %s212
      $region16: #{dit_model.36} parent=11 // pred_fallthru
        _
      // Predicated region
      $region17: #{dit_model.36} parent=11 // pred_check
        %p214 = pneg %p162
      $region18: #{dit_model.36} parent=11 // pred_check_branch
        %216 = sbr.rel (%p214) target = $region20
      $region19: #{dit_model.36} parent=11 // pred_region
        %p217 = scmp.lt.s32.totalorder %s23, 0
        %s218 = scalar_select %p217, %s23, 0
        %s219 = scalar_lea.vmem %s4, %s218
      $region20: #{dit_model.36} parent=11 // pred_fallthru
        _
    $region12: #{dit_model.36} parent=5 // pred_fallthru
      _
    %p220 = scmp.lt.s32.totalorder %s11, 2
    // Predicated region
    $region21: #{dit_model.36} parent=5 // pred_check
      %p221 = pneg %p220
    $region22: #{dit_model.36} parent=5 // pred_check_branch
      %223 = sbr.rel (%p221) target = $region24
    $region23: #{dit_model.36} parent=5 // pred_region
      // Predicated region
      $region25: #{dit_model.36} parent=23 // pred_check
        %p224 = pneg %p52
      $region26: #{dit_model.36} parent=23 // pred_check_branch
        %226 = sbr.rel (%p224) target = $region28
      $region27: #{dit_model.36} parent=23 // pred_region
        %p227 = scmp.lt.s32.totalorder %s18, 1
        %s228 = scalar_select %p227, %s18, 1
        %p229 = scmp.lt.s32.totalorder %s19, 0
        %s230 = scalar_select %p229, %s19, 0
        %s231 = sadd.s32 %s230, %s228
        %s232 = smul.addr %s231, 8
        %s233 = scalar_lea.vmem %s0, %s232
      $region28: #{dit_model.36} parent=23 // pred_fallthru
        _
      // Predicated region
      $region29: #{dit_model.36} parent=23 // pred_check
        %p234 = pneg %p78
      $region30: #{dit_model.36} parent=23 // pred_check_branch
        %236 = sbr.rel (%p234) target = $region32
      $region31: #{dit_model.36} parent=23 // pred_region
        %p237 = scmp.lt.s32.totalorder %s18, 1
        %s238 = scalar_select %p237, %s18, 1
        %s239 = scalar_lea.vmem %s1, %s238
      $region32: #{dit_model.36} parent=23 // pred_fallthru
        _
      // Predicated region
      $region33: #{dit_model.36} parent=23 // pred_check
        %p240 = pneg %p104
      $region34: #{dit_model.36} parent=23 // pred_check_branch
        %242 = sbr.rel (%p240) target = $region36
      $region35: #{dit_model.36} parent=23 // pred_region
        %p243 = scmp.lt.s32.totalorder %s18, 1
        %s244 = scalar_select %p243, %s18, 1
        %s245 = scalar_lea.vmem %s2, %s244
      $region36: #{dit_model.36} parent=23 // pred_fallthru
        _
    $region24: #{dit_model.36} parent=5 // pred_fallthru
      _
    %p246 = scmp.le.s32.totalorder 1, %s11
    %p247 = scmp.lt.s32.totalorder %s11, 3
    %p248 = pnand %p246, %p247
    %p249 = pneg %p248
    // Predicated region
    $region37: #{dit_model.36} parent=5 // pred_check
      _
    $region38: #{dit_model.36} parent=5 // pred_check_branch
      %251 = sbr.rel (%p248) target = $region40
    $region39: #{dit_model.36} parent=5 // pred_region
      %s252 = ssub.s32 %s11, 1
      %p253 = scmp.lt.s32.totalorder %s21, 1
      %s254 = scalar_select %p253, %s21, 1
      %p255 = scmp.lt.s32.totalorder %s22, 0
      %s256 = scalar_select %p255, %s22, 0
      %s257 = sadd.s32 %s256, %s254
      %s258 = smul.addr %s257, 8
      %s259 = scalar_lea.vmem %s0, %s258
      %p260 = pneg %p58
      %p261 = pneg %p55
      %p262 = scmp.lt.s32.totalorder %s21, 1
      %s263 = scalar_select %p262, %s21, 1
      %s264 = scalar_lea.vmem %s1, %s263
      %p265 = pneg %p84
      %p266 = pneg %p81
      %p267 = scmp.lt.s32.totalorder %s21, 1
      %s268 = scalar_select %p267, %s21, 1
      %s269 = scalar_lea.vmem %s2, %s268
      %p270 = pneg %p110
      %p271 = pneg %p107
      %p272 = scmp.lt.s32.totalorder %s23, 0
      %s273 = scalar_select %p272, %s23, 0
      %s274 = smul.addr %s273, 8
      %s275 = scalar_lea.vmem %s3, %s274
      %p276 = pneg %p136
      %p277 = pneg %p133
      %p278 = scmp.lt.s32.totalorder %s23, 0
      %s279 = scalar_select %p278, %s23, 0
      %s280 = scalar_lea.vmem %s4, %s279
      %p281 = pneg %p162
      %p282 = pneg %p159
      %p283 = pneg %p192
      %p284 = pneg %p189
      %p285 = scmp.lt.s32.totalorder %s21, 1
      %s286 = scalar_select %p285, %s21, 1
      %p287 = scmp.lt.s32.totalorder %s22, 0
      %s288 = scalar_select %p287, %s22, 0
      %p289 = scmp.lt.s32.totalorder %s23, 0
      %s290 = scalar_select %p289, %s23, 0
      %s291 = sadd.s32 %s290, %s288
      %s292 = sadd.s32 %s291, %s286
      %s293 = smul.addr %s292, 8
      %s294 = scalar_lea.vmem %s5, %s293
      %p295 = scmp.lt.s32.totalorder %s21, 1
      %s296 = scalar_select %p295, %s21, 1
      %p297 = scmp.lt.s32.totalorder %s22, 0
      %s298 = scalar_select %p297, %s22, 0
      %s299 = sadd.s32 %s298, %s296
      %s300 = smul.addr %s299, 8
      %s301 = scalar_lea.vmem %s0, %s300
      %p302 = scmp.lt.s32.totalorder %s21, 1
      %s303 = scalar_select %p302, %s21, 1
      %s304 = scalar_lea.vmem %s1, %s303
      %p305 = scmp.lt.s32.totalorder %s21, 1
      %s306 = scalar_select %p305, %s21, 1
      %s307 = scalar_lea.vmem %s2, %s306
      %p308 = scmp.lt.s32.totalorder %s23, 0
      %s309 = scalar_select %p308, %s23, 0
      %s310 = smul.addr %s309, 8
      %s311 = scalar_lea.vmem %s3, %s310
      %p312 = scmp.lt.s32.totalorder %s23, 0
      %s313 = scalar_select %p312, %s23, 0
      %s314 = scalar_lea.vmem %s4, %s313
      %p315 = scmp.lt.s32.totalorder %s21, 1
      %s316 = scalar_select %p315, %s21, 1
      %p317 = scmp.lt.s32.totalorder %s22, 0
      %s318 = scalar_select %p317, %s22, 0
      %p319 = scmp.lt.s32.totalorder %s23, 0
      %s320 = scalar_select %p319, %s23, 0
      %s321 = sadd.s32 %s320, %s318
      %s322 = sadd.s32 %s321, %s316
      %s323 = smul.addr %s322, 8
      %s324 = scalar_lea.vmem %s5, %s323
      %v326 = vld [vmem:[%s301] sm:$0xff]
      %vm327 = vcmask 261120
      %v328 = vsel %vm327, %v326, 0.0
      %329 = vadd.xlane.f32.xlu0 %v328
      %v330 = vpop.xlane.xlu0 %329
      %v331 = vrcp.pop 32.0
      %v332 = vmul.f32 %v330, %v331
      %v333 = vsub.f32 %v326, %v332
      %v334 = vmul.f32 %v333, %v333
      %v335 = vsel %vm327, %v334, 0.0
      %336 = vadd.xlane.f32.xlu0 %v335
      %v337 = vpop.xlane.xlu0 %336
      %v338 = vmul.f32 %v337, %v331
      %v339 = vadd.f32 %v338, 1e-05
      %v340 = vrsqrt.pop %v339
      %v341 = vmul.f32 %v333, %v340
      %v342 = vld [vmem:[%s304] sm:$0x1]
      %v343 = vadd.f32 %v342, 1.0
      %v345 = vlaneseq
      %v346 = vshrl.u32 %v345, 7
      %v347 = vsub.s32 0, %v346
      %v348 = vrot.slane %v343, %v347
      %v350 = vmul.f32 %v341, %v348
      %v351 = vld [vmem:[%s307] sm:$0x1]
      %v353 = vlaneseq
      %v354 = vshrl.u32 %v353, 7
      %v355 = vsub.s32 0, %v354
      %v356 = vrot.slane %v351, %v355
      %v358 = vadd.f32 %v350, %v356
      %v359 = vpack.c.bf16 %v358, %v358
      %v360 = vld [vmem:[%s311] sm:$0xff]
      %v361 = vld [vmem:[%s311 + $0x8] sm:$0xff]
      %v362 = vld [vmem:[%s311 + $0x10] sm:$0xff]
      %v363 = vld [vmem:[%s311 + $0x18] sm:$0xff]
      %v364 = vpack.c.bf16 %v361, %v360
      %v365 = vpack.c.bf16 %v363, %v362
      %v366 = vld [vmem:[%s314] sm:$0x1]
      %v368 = vlaneseq
      %v369 = vshrl.u32 %v368, 7
      %v370 = vsub.s32 0, %v369
      %v371 = vrot.slane %v366, %v370
      %v374 = vsel %vm327, %v359, 0
      %376 = vmatprep.subr.bf16.mxu0 0
      %377 = vmatpush1.bf16.msra.mxu0 %v364
      %378 = vmatprep.subr.bf16.mxu0 0
      %379 = vmatpush1.bf16.msra.mxu0 %v365
      %380 = vmatprep.subr.bf16.mxu0 0
      %381 = vmatpush1.bf16.msra.mxu0 0
      %382 = vmatprep.subr.bf16.mxu0 0
      %383 = vmatpush1.bf16.msra.mxu0 0
      %384 = vmatprep.subr.bf16.mxu0 0
      %385 = vmatpush1.bf16.msra.mxu0 0
      %386 = vmatprep.subr.bf16.mxu0 0
      %387 = vmatpush1.bf16.msra.mxu0 0
      %388 = vmatprep.subr.bf16.mxu0 0
      %389 = vmatpush1.bf16.msra.mxu0 0
      %390 = vmatprep.subr.bf16.mxu0 0
      %391 = vmatpush1.bf16.msra.mxu0 0
      %392 = vmatprep.subr.bf16.mxu0 0
      %393 = vmatpush1.bf16.msra.mxu0 0
      %394 = vmatprep.subr.bf16.mxu0 0
      %395 = vmatpush1.bf16.msra.mxu0 0
      %396 = vmatprep.subr.bf16.mxu0 0
      %397 = vmatpush1.bf16.msra.mxu0 0
      %398 = vmatprep.subr.bf16.mxu0 0
      %399 = vmatpush1.bf16.msra.mxu0 0
      %400 = vmatprep.subr.bf16.mxu0 0
      %401 = vmatpush1.bf16.msra.mxu0 0
      %402 = vmatprep.subr.bf16.mxu0 0
      %403 = vmatpush1.bf16.msra.mxu0 0
      %404 = vmatprep.subr.bf16.mxu0 0
      %405 = vmatpush1.bf16.msra.mxu0 0
      %406 = vmatprep.subr.bf16.mxu0 0
      %407 = vmatpush1.bf16.msra.mxu0 0
      %408 = vmatprep.mubr.bf16.mxu0 0
      %409 = vmatmul.mubr.bf16.gmra.mrb[0].mxu0 %v374
      %v410 = vpop.f32.mrb[0].mxu0
      %v411 = vadd.f32 %v371, %v410
      %v412 = vpop.f32.mrb[0].mxu0
      %v413 = vpop.f32.mrb[0].mxu0
      %v414 = vpop.f32.mrb[0].mxu0
      %415 = vdwg.mxu0
      %v416 = vmul.f32 %v411, %v411
      %v417 = vmul.f32 %v411, %v416
      %v418 = vmul.f32 %v417, 0.044715
      %v419 = vadd.f32 %v411, %v418
      %v420 = vmul.f32 %v419, 0.7978846
      %v421 = vtanh.pop %v420
      %v422 = vadd.f32 %v421, 1.0
      %v423 = vmul.f32 %v422, 0.5
      %v424 = vmul.f32 %v411, %v423
      %425 = vst [vmem:[%s324] sm:$0xff] %v424
      %p426 = scmp.lt.s32.totalorder %s21, 1
      %s427 = scalar_select %p426, %s21, 1
      %p428 = scmp.lt.s32.totalorder %s22, 0
      %s429 = scalar_select %p428, %s22, 0
      %p430 = scmp.lt.s32.totalorder %s23, 0
      %s431 = scalar_select %p430, %s23, 0
      %s432 = sadd.s32 %s431, %s429
      %s433 = sadd.s32 %s432, %s427
      %s434 = smul.addr %s433, 8
      %s435 = scalar_lea.vmem %s5, %s434
      // Predicated region
      $region41: #{dit_model.36} parent=39 // pred_check
        %p436 = pneg %p189
      $region42: #{dit_model.36} parent=39 // pred_check_branch
        %438 = sbr.rel (%p436) target = $region44
      $region43: #{dit_model.36} parent=39 // pred_region
        _
      $region44: #{dit_model.36} parent=39 // pred_fallthru
        _
    $region40: #{dit_model.36} parent=5 // pred_fallthru
      _
    %p439 = scmp.le.s32.totalorder 2, %s11
    // Predicated region
    $region45: #{dit_model.36} parent=5 // pred_check
      %p440 = pneg %p439
    $region46: #{dit_model.36} parent=5 // pred_check_branch
      %442 = sbr.rel (%p440) target = $region48
    $region47: #{dit_model.36} parent=5 // pred_region
      %s443 = ssub.s32 %s11, 2
      // Predicated region
      $region49: #{dit_model.36} parent=47 // pred_check
        %p444 = pneg %p195
      $region50: #{dit_model.36} parent=47 // pred_check_branch
        %446 = sbr.rel (%p444) target = $region52
      $region51: #{dit_model.36} parent=47 // pred_region
        %p447 = scmp.lt.s32.totalorder %s24, 1
        %s448 = scalar_select %p447, %s24, 1
        %p449 = scmp.lt.s32.totalorder %s25, 0
        %s450 = scalar_select %p449, %s25, 0
        %p451 = scmp.lt.s32.totalorder %s26, 0
        %s452 = scalar_select %p451, %s26, 0
        %s453 = sadd.s32 %s452, %s450
        %s454 = sadd.s32 %s453, %s448
        %s455 = smul.addr %s454, 8
        %s456 = scalar_lea.vmem %s5, %s455
      $region52: #{dit_model.36} parent=47 // pred_fallthru
        _
    $region48: #{dit_model.36} parent=5 // pred_fallthru
      _
  $region6: #{dit_model.36} parent=0 // loop_footer
    %s15 = sadd.s32 1, %s11
  $region7: #{dit_model.36} parent=0 // loop_footer_branch
    %10 = sbr.rel target = $region3
  $region8: #{dit_model.36} parent=0 // loop_exit
    _

// kernel: dit_model.38
$region0: #{dit_model.38}
  #allocation0 [shape = 'u32[]', space=smem, size = 0x4, offset = 0x4, fixed_abs, tag = 'smem constant byte address 0x4 - core index']
  #allocation1 [shape = 'u32[144,128]{1,0:T(1,128)}', space=vmem, size = 0x12000, scoped, tag = 'internal scratch']
  #allocation2 [shape = 'f32[8,32]{1,0:T(8,128)}', space=vmem, size = 0x1000, scoped, tag = 'scratch operand']
  %s0 = inlined_call_operand.vmem [shape: f32[2,8,128], index: 0, kind: input, shape index: {}]
  %s1 = inlined_call_operand.vmem [shape: f32[128,32], index: 1, kind: input, shape index: {}]
  %s2 = inlined_call_operand.vmem [shape: f32[1,32], index: 2, kind: input, shape index: {}]
  %s3 = inlined_call_operand.vmem [shape: f32[2,1,32], index: 3, kind: input, shape index: {}]
  %s4 = inlined_call_operand.vmem [shape: f32[2,1,32], index: 4, kind: input, shape index: {}]
  %s5 = inlined_call_operand.vmem [shape: f32[2,8,32], index: 5, kind: input, shape index: {}]
  %s6 = inlined_call_operand.vmem [shape: f32[2,8,32], index: 6, kind: output, shape index: {}]
  %s7 = sld [smem:[#allocation0]]
  $region65: #{dit_model.38} parent=0
    _
  %s9 = ssub.s32 1, %s7
  %s10 = scalar_select 0, %s9, %s7
  loop: start=0, step=1, limit=4
  $region2: #{dit_model.38} parent=0 // loop_pre_header
    _
  $region3: #{dit_model.38} parent=0 // loop_header
    %s12 = sphi 0, %s16
    %p13 = scmp.ge.s32.totalorder %s12, 4
    %s19 = sphi 0, %s45
    %s20 = sphi 0, %s41
    %s21 = sphi 0, %s37
    %s22 = sphi 0, %s33
    %s23 = sphi 0, %s19
    %s24 = sphi 0, %s20
    %s25 = sphi 0, %s21
    %s26 = sphi 0, %s22
    %s27 = sphi 0, %s23
    %s28 = sphi 0, %s24
    %s29 = sphi 0, %s25
    %s30 = sphi 0, %s26
    %s52 = sphi 0, %s54
    %s55 = sphi 0, %s52
    %s56 = sphi 0, %s55
    %s72 = sphi 0, %s56
    %s80 = sphi 0, %s82
    %s83 = sphi 0, %s80
    %s84 = sphi 0, %s83
    %s100 = sphi 0, %s84
    %s106 = sphi 0, %s108
    %s109 = sphi 0, %s106
    %s110 = sphi 0, %s109
    %s126 = sphi 0, %s110
    %s134 = sphi 0, %s136
    %s137 = sphi 0, %s134
    %s138 = sphi 0, %s137
    %s154 = sphi 0, %s138
    %s162 = sphi 0, %s164
    %s165 = sphi 0, %s162
    %s166 = sphi 0, %s165
    %s182 = sphi 0, %s166
    %s192 = sphi 0, %s194
    %s195 = sphi 0, %s192
    %s196 = sphi 0, %s195
    %s212 = sphi 0, %s196
    %s222 = sphi 0, %s224
    %s225 = sphi 0, %s222
    %s226 = sphi 0, %s225
    %s242 = sphi 0, %s226
  $region4: #{dit_model.38} parent=0 // loop_header_branch
    %15 = sbr.rel (%p13) target = $region8
  $region5: #{dit_model.38} parent=0 // loop_body
    %s17 = ssub.s32 %s12, 1
    %s18 = ssub.s32 %s12, 2
    %s31 = sadd.s32 1, %s22
    %p32 = scmp.ge.s32.totalorder %s31, 1
    %s33 = scalar_select %p32, 0, %s31
    %s34 = sadd.s32 1, %s21
    %s35 = scalar_select %p32, %s34, %s21
    %p36 = scmp.ge.s32.totalorder %s35, 1
    %s37 = scalar_select %p36, 0, %s35
    %s38 = sadd.s32 1, %s20
    %s39 = scalar_select %p36, %s38, %s20
    %p40 = scmp.ge.s32.totalorder %s39, 1
    %s41 = scalar_select %p40, 0, %s39
    %s42 = sadd.s32 1, %s19
    %s43 = scalar_select %p40, %s42, %s19
    %p44 = scmp.ge.s32.totalorder %s43, 2
    %s45 = scalar_select %p44, 0, %s43
    %s46 = ssub.s32 %s19, %s45
    %s47 = ssub.s32 %s20, %s41
    %s48 = sor.u32 %s46, %s47
    %s49 = ssub.s32 %s22, %s33
    %s50 = sor.u32 %s48, %s49
    %p51 = scmp.eq.s32.totalorder %s50, 0
    %s53 = sadd.s32 %s52, 1
    %s54 = scalar_select %p51, %s52, %s53
    %p57 = pneg %p51
    %p58 = scmp.eq.s32.totalorder %s12, 1
    %p59 = por %p57, %p58
    %p60 = scmp.ne.s32.totalorder %s52, %s55
    %p61 = scmp.eq.s32.totalorder %s12, 0
    %p62 = por %p60, %p61
    %p63 = scmp.ne.s32.totalorder %s52, %s55
    %p64 = scmp.eq.s32.totalorder %s17, 1
    %p65 = por %p63, %p64
    %p66 = scmp.ne.s32.totalorder %s55, %s56
    %p67 = scmp.eq.s32.totalorder %s17, 0
    %p68 = por %p66, %p67
    %p69 = scmp.ne.s32.totalorder %s55, %s56
    %p70 = scmp.eq.s32.totalorder %s18, 1
    %p71 = por %p69, %p70
    %p73 = scmp.ne.s32.totalorder %s56, %s72
    %p74 = scmp.eq.s32.totalorder %s18, 0
    %p75 = por %p73, %p74
    %s76 = ssub.s32 %s22, %s33
    %s77 = ssub.s32 %s21, %s37
    %s78 = sor.u32 %s76, %s77
    %p79 = scmp.eq.s32.totalorder %s78, 0
    %s81 = sadd.s32 %s80, 1
    %s82 = scalar_select %p79, %s80, %s81
    %p85 = pneg %p79
    %p86 = scmp.eq.s32.totalorder %s12, 1
    %p87 = por %p85, %p86
    %p88 = scmp.ne.s32.totalorder %s80, %s83
    %p89 = scmp.eq.s32.totalorder %s12, 0
    %p90 = por %p88, %p89
    %p91 = scmp.ne.s32.totalorder %s80, %s83
    %p92 = scmp.eq.s32.totalorder %s17, 1
    %p93 = por %p91, %p92
    %p94 = scmp.ne.s32.totalorder %s83, %s84
    %p95 = scmp.eq.s32.totalorder %s17, 0
    %p96 = por %p94, %p95
    %p97 = scmp.ne.s32.totalorder %s83, %s84
    %p98 = scmp.eq.s32.totalorder %s18, 1
    %p99 = por %p97, %p98
    %p101 = scmp.ne.s32.totalorder %s84, %s100
    %p102 = scmp.eq.s32.totalorder %s18, 0
    %p103 = por %p101, %p102
    %s104 = ssub.s32 %s21, %s37
    %p105 = scmp.eq.s32.totalorder %s104, 0
    %s107 = sadd.s32 %s106, 1
    %s108 = scalar_select %p105, %s106, %s107
    %p111 = pneg %p105
    %p112 = scmp.eq.s32.totalorder %s12, 1
    %p113 = por %p111, %p112
    %p114 = scmp.ne.s32.totalorder %s106, %s109
    %p115 = scmp.eq.s32.totalorder %s12, 0
    %p116 = por %p114, %p115
    %p117 = scmp.ne.s32.totalorder %s106, %s109
    %p118 = scmp.eq.s32.totalorder %s17, 1
    %p119 = por %p117, %p118
    %p120 = scmp.ne.s32.totalorder %s109, %s110
    %p121 = scmp.eq.s32.totalorder %s17, 0
    %p122 = por %p120, %p121
    %p123 = scmp.ne.s32.totalorder %s109, %s110
    %p124 = scmp.eq.s32.totalorder %s18, 1
    %p125 = por %p123, %p124
    %p127 = scmp.ne.s32.totalorder %s110, %s126
    %p128 = scmp.eq.s32.totalorder %s18, 0
    %p129 = por %p127, %p128
    %s130 = ssub.s32 %s19, %s45
    %s131 = ssub.s32 %s21, %s37
    %s132 = sor.u32 %s130, %s131
    %p133 = scmp.eq.s32.totalorder %s132, 0
    %s135 = sadd.s32 %s134, 1
    %s136 = scalar_select %p133, %s134, %s135
    %p139 = pneg %p133
    %p140 = scmp.eq.s32.totalorder %s12, 1
    %p141 = por %p139, %p140
    %p142 = scmp.ne.s32.totalorder %s134, %s137
    %p143 = scmp.eq.s32.totalorder %s12, 0
    %p144 = por %p142, %p143
    %p145 = scmp.ne.s32.totalorder %s134, %s137
    %p146 = scmp.eq.s32.totalorder %s17, 1
    %p147 = por %p145, %p146
    %p148 = scmp.ne.s32.totalorder %s137, %s138
    %p149 = scmp.eq.s32.totalorder %s17, 0
    %p150 = por %p148, %p149
    %p151 = scmp.ne.s32.totalorder %s137, %s138
    %p152 = scmp.eq.s32.totalorder %s18, 1
    %p153 = por %p151, %p152
    %p155 = scmp.ne.s32.totalorder %s138, %s154
    %p156 = scmp.eq.s32.totalorder %s18, 0
    %p157 = por %p155, %p156
    %s158 = ssub.s32 %s19, %s45
    %s159 = ssub.s32 %s21, %s37
    %s160 = sor.u32 %s158, %s159
    %p161 = scmp.eq.s32.totalorder %s160, 0
    %s163 = sadd.s32 %s162, 1
    %s164 = scalar_select %p161, %s162, %s163
    %p167 = pneg %p161
    %p168 = scmp.eq.s32.totalorder %s12, 1
    %p169 = por %p167, %p168
    %p170 = scmp.ne.s32.totalorder %s162, %s165
    %p171 = scmp.eq.s32.totalorder %s12, 0
    %p172 = por %p170, %p171
    %p173 = scmp.ne.s32.totalorder %s162, %s165
    %p174 = scmp.eq.s32.totalorder %s17, 1
    %p175 = por %p173, %p174
    %p176 = scmp.ne.s32.totalorder %s165, %s166
    %p177 = scmp.eq.s32.totalorder %s17, 0
    %p178 = por %p176, %p177
    %p179 = scmp.ne.s32.totalorder %s165, %s166
    %p180 = scmp.eq.s32.totalorder %s18, 1
    %p181 = por %p179, %p180
    %p183 = scmp.ne.s32.totalorder %s166, %s182
    %p184 = scmp.eq.s32.totalorder %s18, 0
    %p185 = por %p183, %p184
    %s186 = ssub.s32 %s19, %s45
    %s187 = ssub.s32 %s20, %s41
    %s188 = sor.u32 %s186, %s187
    %s189 = ssub.s32 %s21, %s37
    %s190 = sor.u32 %s188, %s189
    %p191 = scmp.eq.s32.totalorder %s190, 0
    %s193 = sadd.s32 %s192, 1
    %s194 = scalar_select %p191, %s192, %s193
    %p197 = pneg %p191
    %p198 = scmp.eq.s32.totalorder %s12, 1
    %p199 = por %p197, %p198
    %p200 = scmp.ne.s32.totalorder %s192, %s195
    %p201 = scmp.eq.s32.totalorder %s12, 0
    %p202 = por %p200, %p201
    %p203 = scmp.ne.s32.totalorder %s192, %s195
    %p204 = scmp.eq.s32.totalorder %s17, 1
    %p205 = por %p203, %p204
    %p206 = scmp.ne.s32.totalorder %s195, %s196
    %p207 = scmp.eq.s32.totalorder %s17, 0
    %p208 = por %p206, %p207
    %p209 = scmp.ne.s32.totalorder %s195, %s196
    %p210 = scmp.eq.s32.totalorder %s18, 1
    %p211 = por %p209, %p210
    %p213 = scmp.ne.s32.totalorder %s196, %s212
    %p214 = scmp.eq.s32.totalorder %s18, 0
    %p215 = por %p213, %p214
    %s216 = ssub.s32 %s19, %s45
    %s217 = ssub.s32 %s20, %s41
    %s218 = sor.u32 %s216, %s217
    %s219 = ssub.s32 %s21, %s37
    %s220 = sor.u32 %s218, %s219
    %p221 = scmp.eq.s32.totalorder %s220, 0
    %s223 = sadd.s32 %s222, 1
    %s224 = scalar_select %p221, %s222, %s223
    %p227 = pneg %p221
    %p228 = scmp.eq.s32.totalorder %s12, 1
    %p229 = por %p227, %p228
    %p230 = scmp.ne.s32.totalorder %s222, %s225
    %p231 = scmp.eq.s32.totalorder %s12, 0
    %p232 = por %p230, %p231
    %p233 = scmp.ne.s32.totalorder %s222, %s225
    %p234 = scmp.eq.s32.totalorder %s17, 1
    %p235 = por %p233, %p234
    %p236 = scmp.ne.s32.totalorder %s225, %s226
    %p237 = scmp.eq.s32.totalorder %s17, 0
    %p238 = por %p236, %p237
    %p239 = scmp.ne.s32.totalorder %s225, %s226
    %p240 = scmp.eq.s32.totalorder %s18, 1
    %p241 = por %p239, %p240
    %p243 = scmp.ne.s32.totalorder %s226, %s242
    %p244 = scmp.eq.s32.totalorder %s18, 0
    %p245 = por %p243, %p244
    %p246 = scmp.le.s32.totalorder 1, %s12
    %p247 = scmp.lt.s32.totalorder %s12, 3
    %p248 = pnand %p246, %p247
    %p249 = pneg %p248
    // Predicated region
    $region9: #{dit_model.38} parent=5 // pred_check
      _
    $region10: #{dit_model.38} parent=5 // pred_check_branch
      %251 = sbr.rel (%p248) target = $region12
    $region11: #{dit_model.38} parent=5 // pred_region
      %s252 = ssub.s32 %s12, 1
      // Predicated region
      $region13: #{dit_model.38} parent=11 // pred_check
        %p253 = pneg %p96
      $region14: #{dit_model.38} parent=11 // pred_check_branch
        %255 = sbr.rel (%p253) target = $region16
      $region15: #{dit_model.38} parent=11 // pred_region
        %s256 = smul.u32 16, %s26
        %p257 = scmp.lt.s32.totalorder %s256, 15
        %s258 = scalar_select %p257, %s256, 15
        %p259 = scmp.lt.s32.totalorder %s25, 0
        %s260 = scalar_select %p259, %s25, 0
        %s261 = sadd.s32 %s260, %s258
        %s262 = smul.addr %s261, 8
        %s263 = scalar_lea.vmem %s1, %s262
        %s264 = smul.u32 16, %s26
      $region16: #{dit_model.38} parent=11 // pred_fallthru
        _
      // Predicated region
      $region17: #{dit_model.38} parent=11 // pred_check
        %p265 = pneg %p122
      $region18: #{dit_model.38} parent=11 // pred_check_branch
        %267 = sbr.rel (%p265) target = $region20
      $region19: #{dit_model.38} parent=11 // pred_region
        %p268 = scmp.lt.s32.totalorder %s25, 0
        %s269 = scalar_select %p268, %s25, 0
        %s270 = scalar_lea.vmem %s2, %s269
      $region20: #{dit_model.38} parent=11 // pred_fallthru
        _
    $region12: #{dit_model.38} parent=5 // pred_fallthru
      _
    %p271 = scmp.lt.s32.totalorder %s12, 2
    // Predicated region
    $region21: #{dit_model.38} parent=5 // pred_check
      %p272 = pneg %p271
    $region22: #{dit_model.38} parent=5 // pred_check_branch
      %274 = sbr.rel (%p272) target = $region24
    $region23: #{dit_model.38} parent=5 // pred_region
      // Predicated region
      $region25: #{dit_model.38} parent=23 // pred_check
        %p275 = pneg %p62
      $region26: #{dit_model.38} parent=23 // pred_check_branch
        %277 = sbr.rel (%p275) target = $region28
      $region27: #{dit_model.38} parent=23 // pred_region
        %p278 = scmp.lt.s32.totalorder %s19, 1
        %s279 = scalar_select %p278, %s19, 1
        %p280 = scmp.lt.s32.totalorder %s20, 0
        %s281 = scalar_select %p280, %s20, 0
        %p282 = scmp.lt.s32.totalorder %s22, 0
        %s283 = scalar_select %p282, %s22, 0
        %s284 = sadd.s32 %s283, %s281
        %s285 = sadd.s32 %s284, %s279
        %s286 = smul.addr %s285, 8
        %s287 = scalar_lea.vmem %s0, %s286
      $region28: #{dit_model.38} parent=23 // pred_fallthru
        _
      // Predicated region
      $region29: #{dit_model.38} parent=23 // pred_check
        %p288 = pneg %p144
      $region30: #{dit_model.38} parent=23 // pred_check_branch
        %290 = sbr.rel (%p288) target = $region32
      $region31: #{dit_model.38} parent=23 // pred_region
        %p291 = scmp.lt.s32.totalorder %s19, 1
        %s292 = scalar_select %p291, %s19, 1
        %p293 = scmp.lt.s32.totalorder %s21, 0
        %s294 = scalar_select %p293, %s21, 0
        %s295 = sadd.s32 %s294, %s292
        %s296 = scalar_lea.vmem %s3, %s295
      $region32: #{dit_model.38} parent=23 // pred_fallthru
        _
      // Predicated region
      $region33: #{dit_model.38} parent=23 // pred_check
        %p297 = pneg %p172
      $region34: #{dit_model.38} parent=23 // pred_check_branch
        %299 = sbr.rel (%p297) target = $region36
      $region35: #{dit_model.38} parent=23 // pred_region
        %p300 = scmp.lt.s32.totalorder %s19, 1
        %s301 = scalar_select %p300, %s19, 1
        %p302 = scmp.lt.s32.totalorder %s21, 0
        %s303 = scalar_select %p302, %s21, 0
        %s304 = sadd.s32 %s303, %s301
        %s305 = scalar_lea.vmem %s4, %s304
      $region36: #{dit_model.38} parent=23 // pred_fallthru
        _
      // Predicated region
      $region37: #{dit_model.38} parent=23 // pred_check
        %p306 = pneg %p202
      $region38: #{dit_model.38} parent=23 // pred_check_branch
        %308 = sbr.rel (%p306) target = $region40
      $region39: #{dit_model.38} parent=23 // pred_region
        %p309 = scmp.lt.s32.totalorder %s19, 1
        %s310 = scalar_select %p309, %s19, 1
        %p311 = scmp.lt.s32.totalorder %s20, 0
        %s312 = scalar_select %p311, %s20, 0
        %p313 = scmp.lt.s32.totalorder %s21, 0
        %s314 = scalar_select %p313, %s21, 0
        %s315 = sadd.s32 %s314, %s312
        %s316 = sadd.s32 %s315, %s310
        %s317 = smul.addr %s316, 8
        %s318 = scalar_lea.vmem %s5, %s317
      $region40: #{dit_model.38} parent=23 // pred_fallthru
        _
    $region24: #{dit_model.38} parent=5 // pred_fallthru
      _
    %p319 = scmp.le.s32.totalorder 1, %s12
    %p320 = scmp.lt.s32.totalorder %s12, 3
    %p321 = pnand %p319, %p320
    %p322 = pneg %p321
    // Predicated region
    $region41: #{dit_model.38} parent=5 // pred_check
      _
    $region42: #{dit_model.38} parent=5 // pred_check_branch
      %324 = sbr.rel (%p321) target = $region44
    $region43: #{dit_model.38} parent=5 // pred_region
      %s325 = ssub.s32 %s12, 1
      %p326 = scmp.lt.s32.totalorder %s23, 1
      %s327 = scalar_select %p326, %s23, 1
      %p328 = scmp.lt.s32.totalorder %s24, 0
      %s329 = scalar_select %p328, %s24, 0
      %p330 = scmp.lt.s32.totalorder %s26, 0
      %s331 = scalar_select %p330, %s26, 0
      %s332 = sadd.s32 %s331, %s329
      %s333 = sadd.s32 %s332, %s327
      %s334 = smul.addr %s333, 8
      %s335 = scalar_lea.vmem %s0, %s334
      %p336 = pneg %p68
      %p337 = pneg %p65
      %s338 = smul.u32 16, %s26
      %p339 = scmp.lt.s32.totalorder %s338, 15
      %s340 = scalar_select %p339, %s338, 15
      %p341 = scmp.lt.s32.totalorder %s25, 0
      %s342 = scalar_select %p341, %s25, 0
      %s343 = sadd.s32 %s342, %s340
      %s344 = smul.addr %s343, 8
      %s345 = scalar_lea.vmem %s1, %s344
      %p346 = pneg %p96
      %p347 = pneg %p93
      %p348 = scmp.lt.s32.totalorder %s25, 0
      %s349 = scalar_select %p348, %s25, 0
      %s350 = scalar_lea.vmem %s2, %s349
      %p351 = pneg %p122
      %p352 = pneg %p119
      %p353 = scmp.lt.s32.totalorder %s23, 1
      %s354 = scalar_select %p353, %s23, 1
      %p355 = scmp.lt.s32.totalorder %s25, 0
      %s356 = scalar_select %p355, %s25, 0
      %s357 = sadd.s32 %s356, %s354
      %s358 = scalar_lea.vmem %s3, %s357
      %p359 = pneg %p150
      %p360 = pneg %p147
      %p361 = scmp.lt.s32.totalorder %s23, 1
      %s362 = scalar_select %p361, %s23, 1
      %p363 = scmp.lt.s32.totalorder %s25, 0
      %s364 = scalar_select %p363, %s25, 0
      %s365 = sadd.s32 %s364, %s362
      %s366 = scalar_lea.vmem %s4, %s365
      %p367 = pneg %p178
      %p368 = pneg %p175
      %p369 = scmp.lt.s32.totalorder %s23, 1
      %s370 = scalar_select %p369, %s23, 1
      %p371 = scmp.lt.s32.totalorder %s24, 0
      %s372 = scalar_select %p371, %s24, 0
      %p373 = scmp.lt.s32.totalorder %s25, 0
      %s374 = scalar_select %p373, %s25, 0
      %s375 = sadd.s32 %s374, %s372
      %s376 = sadd.s32 %s375, %s370
      %s377 = smul.addr %s376, 8
      %s378 = scalar_lea.vmem %s5, %s377
      %p379 = pneg %p208
      %p380 = pneg %p205
      %p381 = pneg %p238
      %p382 = pneg %p235
      %p383 = scmp.lt.s32.totalorder %s23, 1
      %s384 = scalar_select %p383, %s23, 1
      %p385 = scmp.lt.s32.totalorder %s24, 0
      %s386 = scalar_select %p385, %s24, 0
      %p387 = scmp.lt.s32.totalorder %s25, 0
      %s388 = scalar_select %p387, %s25, 0
      %s389 = sadd.s32 %s388, %s386
      %s390 = sadd.s32 %s389, %s384
      %s391 = smul.addr %s390, 8
      %s392 = scalar_lea.vmem %s6, %s391
      %p393 = scmp.lt.s32.totalorder %s23, 1
      %s394 = scalar_select %p393, %s23, 1
      %p395 = scmp.lt.s32.totalorder %s24, 0
      %s396 = scalar_select %p395, %s24, 0
      %p397 = scmp.lt.s32.totalorder %s26, 0
      %s398 = scalar_select %p397, %s26, 0
      %s399 = sadd.s32 %s398, %s396
      %s400 = sadd.s32 %s399, %s394
      %s401 = smul.addr %s400, 8
      %s402 = scalar_lea.vmem %s0, %s401
      %s403 = smul.u32 16, %s26
      %p404 = scmp.lt.s32.totalorder %s403, 15
      %s405 = scalar_select %p404, %s403, 15
      %p406 = scmp.lt.s32.totalorder %s25, 0
      %s407 = scalar_select %p406, %s25, 0
      %s408 = sadd.s32 %s407, %s405
      %s409 = smul.addr %s408, 8
      %s410 = scalar_lea.vmem %s1, %s409
      %s411 = smul.u32 16, %s26
      %p412 = scmp.lt.s32.totalorder %s25, 0
      %s413 = scalar_select %p412, %s25, 0
      %s414 = scalar_lea.vmem %s2, %s413
      %p415 = scmp.lt.s32.totalorder %s23, 1
      %s416 = scalar_select %p415, %s23, 1
      %p417 = scmp.lt.s32.totalorder %s25, 0
      %s418 = scalar_select %p417, %s25, 0
      %s419 = sadd.s32 %s418, %s416
      %s420 = scalar_lea.vmem %s3, %s419
      %p421 = scmp.lt.s32.totalorder %s23, 1
      %s422 = scalar_select %p421, %s23, 1
      %p423 = scmp.lt.s32.totalorder %s25, 0
      %s424 = scalar_select %p423, %s25, 0
      %s425 = sadd.s32 %s424, %s422
      %s426 = scalar_lea.vmem %s4, %s425
      %p427 = scmp.lt.s32.totalorder %s23, 1
      %s428 = scalar_select %p427, %s23, 1
      %p429 = scmp.lt.s32.totalorder %s24, 0
      %s430 = scalar_select %p429, %s24, 0
      %p431 = scmp.lt.s32.totalorder %s25, 0
      %s432 = scalar_select %p431, %s25, 0
      %s433 = sadd.s32 %s432, %s430
      %s434 = sadd.s32 %s433, %s428
      %s435 = smul.addr %s434, 8
      %s436 = scalar_lea.vmem %s5, %s435
      %p437 = scmp.lt.s32.totalorder %s23, 1
      %s438 = scalar_select %p437, %s23, 1
      %p439 = scmp.lt.s32.totalorder %s24, 0
      %s440 = scalar_select %p439, %s24, 0
      %p441 = scmp.lt.s32.totalorder %s25, 0
      %s442 = scalar_select %p441, %s25, 0
      %s443 = sadd.s32 %s442, %s440
      %s444 = sadd.s32 %s443, %s438
      %s445 = smul.addr %s444, 8
      %s446 = scalar_lea.vmem %s6, %s445
      %p448 = scmp.eq.s32.totalorder %s26, 0
      // Predicated region
      $region45: #{dit_model.38} parent=43 // pred_check
        %p449 = pneg %p448
      $region46: #{dit_model.38} parent=43 // pred_check_branch
        %451 = sbr.rel (%p449) target = $region48
      $region47: #{dit_model.38} parent=43 // pred_region
        %vm452 = vcmask 261120
        %453 = vst.msk [vmem:[#allocation2] sm:$0xff] %vm452, 0.0
      $region48: #{dit_model.38} parent=43 // pred_fallthru
        _
      %v454 = vld [vmem:[#allocation2] sm:$0xff]
      %v455 = vld [vmem:[%s402] sm:$0xff]
      %v456 = vpack.c.bf16 %v455, %v455
      %v457 = vld [vmem:[%s410] sm:$0xff]
      %v458 = vld [vmem:[%s410 + $0x8] sm:$0xff]
      %v459 = vld [vmem:[%s410 + $0x10] sm:$0xff]
      %v460 = vld [vmem:[%s410 + $0x18] sm:$0xff]
      %v461 = vld [vmem:[%s410 + $0x20] sm:$0xff]
      %v462 = vld [vmem:[%s410 + $0x28] sm:$0xff]
      %v463 = vld [vmem:[%s410 + $0x30] sm:$0xff]
      %v464 = vld [vmem:[%s410 + $0x38] sm:$0xff]
      %v465 = vld [vmem:[%s410 + $0x40] sm:$0xff]
      %v466 = vld [vmem:[%s410 + $0x48] sm:$0xff]
      %v467 = vld [vmem:[%s410 + $0x50] sm:$0xff]
      %v468 = vld [vmem:[%s410 + $0x58] sm:$0xff]
      %v469 = vld [vmem:[%s410 + $0x60] sm:$0xff]
      %v470 = vld [vmem:[%s410 + $0x68] sm:$0xff]
      %v471 = vld [vmem:[%s410 + $0x70] sm:$0xff]
      %v472 = vld [vmem:[%s410 + $0x78] sm:$0xff]
      %v473 = vpack.c.bf16 %v458, %v457
      %v474 = vpack.c.bf16 %v460, %v459
      %v475 = vpack.c.bf16 %v462, %v461
      %v476 = vpack.c.bf16 %v464, %v463
      %v477 = vpack.c.bf16 %v466, %v465
      %v478 = vpack.c.bf16 %v468, %v467
      %v479 = vpack.c.bf16 %v470, %v469
      %v480 = vpack.c.bf16 %v472, %v471
      %481 = vmatprep.subr.bf16.mxu0 0
      %482 = vmatpush1.bf16.msra.mxu0 %v473
      %483 = vmatprep.subr.bf16.mxu0 0
      %484 = vmatpush1.bf16.msra.mxu0 %v474
      %485 = vmatprep.subr.bf16.mxu0 0
      %486 = vmatpush1.bf16.msra.mxu0 %v475
      %487 = vmatprep.subr.bf16.mxu0 0
      %488 = vmatpush1.bf16.msra.mxu0 %v476
      %489 = vmatprep.subr.bf16.mxu0 0
      %490 = vmatpush1.bf16.msra.mxu0 %v477
      %491 = vmatprep.subr.bf16.mxu0 0
      %492 = vmatpush1.bf16.msra.mxu0 %v478
      %493 = vmatprep.subr.bf16.mxu0 0
      %494 = vmatpush1.bf16.msra.mxu0 %v479
      %495 = vmatprep.subr.bf16.mxu0 0
      %496 = vmatpush1.bf16.msra.mxu0 %v480
      %497 = vmatprep.subr.bf16.mxu0 0
      %498 = vmatpush1.bf16.msra.mxu0 0
      %499 = vmatprep.subr.bf16.mxu0 0
      %500 = vmatpush1.bf16.msra.mxu0 0
      %501 = vmatprep.subr.bf16.mxu0 0
      %502 = vmatpush1.bf16.msra.mxu0 0
      %503 = vmatprep.subr.bf16.mxu0 0
      %504 = vmatpush1.bf16.msra.mxu0 0
      %505 = vmatprep.subr.bf16.mxu0 0
      %506 = vmatpush1.bf16.msra.mxu0 0
      %507 = vmatprep.subr.bf16.mxu0 0
      %508 = vmatpush1.bf16.msra.mxu0 0
      %509 = vmatprep.subr.bf16.mxu0 0
      %510 = vmatpush1.bf16.msra.mxu0 0
      %511 = vmatprep.subr.bf16.mxu0 0
      %512 = vmatpush1.bf16.msra.mxu0 0
      %513 = vmatprep.mubr.bf16.mxu0 0
      %514 = vmatmul.mubr.bf16.gmra.mrb[0].mxu0 %v456
      %v515 = vpop.f32.mrb[0].mxu0
      %v516 = vadd.f32 0.0, %v515
      %v517 = vpop.f32.mrb[0].mxu0
      %v518 = vpop.f32.mrb[0].mxu0
      %v519 = vpop.f32.mrb[0].mxu0
      %520 = vdwg.mxu0
      %v521 = vadd.f32 %v454, %v516
      %vm522 = vcmask 261120
      %523 = vst.msk [vmem:[#allocation2] sm:$0xff] %vm522, %v521
      // Predicated region
      $region49: #{dit_model.38} parent=43 // pred_check
        %p524 = pneg %p448
      $region50: #{dit_model.38} parent=43 // pred_check_branch
        %526 = sbr.rel (%p524) target = $region52
      $region51: #{dit_model.38} parent=43 // pred_region
        %v527 = vld [vmem:[#allocation2] sm:$0xff]
        %v528 = vld [vmem:[%s414] sm:$0x1]
        %v530 = vlaneseq
        %v531 = vshrl.u32 %v530, 7
        %v532 = vsub.s32 0, %v531
        %v533 = vrot.slane %v528, %v532
        %v535 = vadd.f32 %v527, %v533
        %v536 = vld [vmem:[%s420] sm:$0x1]
        %v537 = vadd.f32 %v536, 1.0
        %v539 = vlaneseq
        %v540 = vshrl.u32 %v539, 7
        %v541 = vsub.s32 0, %v540
        %v542 = vrot.slane %v537, %v541
        %v544 = vmul.f32 %v535, %v542
        %v545 = vld [vmem:[%s426] sm:$0x1]
        %v547 = vlaneseq
        %v548 = vshrl.u32 %v547, 7
        %v549 = vsub.s32 0, %v548
        %v550 = vrot.slane %v545, %v549
        %v552 = vadd.f32 %v544, %v550
        %v553 = vld [vmem:[%s436] sm:$0xff]
        %v554 = vadd.f32 %v552, %v553
        %555 = vst.msk [vmem:[%s446] sm:$0xff] %vm522, %v554
      $region52: #{dit_model.38} parent=43 // pred_fallthru
        _
      %p556 = scmp.lt.s32.totalorder %s23, 1
      %s557 = scalar_select %p556, %s23, 1
      %p558 = scmp.lt.s32.totalorder %s24, 0
      %s559 = scalar_select %p558, %s24, 0
      %p560 = scmp.lt.s32.totalorder %s25, 0
      %s561 = scalar_select %p560, %s25, 0
      %s562 = sadd.s32 %s561, %s559
      %s563 = sadd.s32 %s562, %s557
      %s564 = smul.addr %s563, 8
      %s565 = scalar_lea.vmem %s6, %s564
      // Predicated region
      $region53: #{dit_model.38} parent=43 // pred_check
        %p566 = pneg %p235
      $region54: #{dit_model.38} parent=43 // pred_check_branch
        %568 = sbr.rel (%p566) target = $region56
      $region55: #{dit_model.38} parent=43 // pred_region
        _
      $region56: #{dit_model.38} parent=43 // pred_fallthru
        _
    $region44: #{dit_model.38} parent=5 // pred_fallthru
      _
    %p569 = scmp.le.s32.totalorder 2, %s12
    // Predicated region
    $region57: #{dit_model.38} parent=5 // pred_check
      %p570 = pneg %p569
    $region58: #{dit_model.38} parent=5 // pred_check_branch
      %572 = sbr.rel (%p570) target = $region60
    $region59: #{dit_model.38} parent=5 // pred_region
      %s573 = ssub.s32 %s12, 2
      // Predicated region
      $region61: #{dit_model.38} parent=59 // pred_check
        %p574 = pneg %p241
      $region62: #{dit_model.38} parent=59 // pred_check_branch
        %576 = sbr.rel (%p574) target = $region64
      $region63: #{dit_model.38} parent=59 // pred_region
        %p577 = scmp.lt.s32.totalorder %s27, 1
        %s578 = scalar_select %p577, %s27, 1
        %p579 = scmp.lt.s32.totalorder %s28, 0
        %s580 = scalar_select %p579, %s28, 0
        %p581 = scmp.lt.s32.totalorder %s29, 0
        %s582 = scalar_select %p581, %s29, 0
        %s583 = sadd.s32 %s582, %s580
        %s584 = sadd.s32 %s583, %s578
        %s585 = smul.addr %s584, 8
        %s586 = scalar_lea.vmem %s6, %s585
      $region64: #{dit_model.38} parent=59 // pred_fallthru
        _
    $region60: #{dit_model.38} parent=5 // pred_fallthru
      _
  $region6: #{dit_model.38} parent=0 // loop_footer
    %s16 = sadd.s32 1, %s12
  $region7: #{dit_model.38} parent=0 // loop_footer_branch
    %11 = sbr.rel target = $region3
  $region8: #{dit_model.38} parent=0 // loop_exit
    _

// kernel: dit_model.49
$region0: #{dit_model.49}
  #allocation0 [shape = 'u32[]', space=smem, size = 0x4, offset = 0x4, fixed_abs, tag = 'smem constant byte address 0x4 - core index']
  #allocation1 [shape = 'u32[144,128]{1,0:T(1,128)}', space=vmem, size = 0x12000, scoped, tag = 'internal scratch']
  %s0 = inlined_call_operand.vmem [shape: f32[2,16,32], index: 0, kind: input, shape index: {}]
  %s1 = inlined_call_operand.vmem [shape: f32[2,1,32], index: 1, kind: input, shape index: {}]
  %s2 = inlined_call_operand.vmem [shape: f32[2,1,32], index: 2, kind: input, shape index: {}]
  %s3 = inlined_call_operand.hbm [shape: f32[2,16,32], index: 3, kind: output, shape index: {}]
  %s4 = sld [smem:[#allocation0]]
  $region45: #{dit_model.49} parent=0
    _
  %s6 = ssub.s32 1, %s4
  %s7 = scalar_select 0, %s6, %s4
  $region1: #{dit_model.49} parent=0
    #allocation2 [shape = 'u8[16384]{0}', space=vmem, size = 0x4000, scoped, tag = 'output window, operand 0']
    #allocation3 [shape = 's32[2]{0}', space=sflag, size = 0x8, scoped, tag = 'scoped memory for dit_model.49']
    %8 = vsyncpa [#allocation3], 0
    %s9 = scalar_lea.sflag [#allocation3], 1
    %10 = vsyncpa %s9, 0
    loop: start=0, step=1, limit=4
    $region2: #{dit_model.49} parent=1 // loop_pre_header
      _
    $region3: #{dit_model.49} parent=1 // loop_header
      %s12 = sphi 0, %s16
      %p13 = scmp.ge.s32.totalorder %s12, 4
      %s19 = sphi 0, %s31
      %s20 = sphi 0, %s27
      %s21 = sphi 0, %s19
      %s22 = sphi 0, %s20
      %s23 = sphi 0, %s21
      %s24 = sphi 0, %s22
      %s36 = sphi 0, %s38
      %s39 = sphi 0, %s36
      %s40 = sphi 0, %s39
      %s56 = sphi 0, %s40
      %s62 = sphi 0, %s64
      %s65 = sphi 0, %s62
      %s66 = sphi 0, %s65
      %s82 = sphi 0, %s66
      %s88 = sphi 0, %s90
      %s91 = sphi 0, %s88
      %s92 = sphi 0, %s91
      %s108 = sphi 0, %s92
      %s116 = sphi 0, %s118
      %s119 = sphi 0, %s116
      %s120 = sphi 0, %s119
      %s136 = sphi 0, %s120
    $region4: #{dit_model.49} parent=1 // loop_header_branch
      %15 = sbr.rel (%p13) target = $region8
    $region5: #{dit_model.49} parent=1 // loop_body
      %s17 = ssub.s32 %s12, 1
      %s18 = ssub.s32 %s12, 2
      %s25 = sadd.s32 1, %s20
      %p26 = scmp.ge.s32.totalorder %s25, 1
      %s27 = scalar_select %p26, 0, %s25
      %s28 = sadd.s32 1, %s19
      %s29 = scalar_select %p26, %s28, %s19
      %p30 = scmp.ge.s32.totalorder %s29, 2
      %s31 = scalar_select %p30, 0, %s29
      %s32 = ssub.s32 %s19, %s31
      %s33 = ssub.s32 %s20, %s27
      %s34 = sor.u32 %s32, %s33
      %p35 = scmp.eq.s32.totalorder %s34, 0
      %s37 = sadd.s32 %s36, 1
      %s38 = scalar_select %p35, %s36, %s37
      %p41 = pneg %p35
      %p42 = scmp.eq.s32.totalorder %s12, 1
      %p43 = por %p41, %p42
      %p44 = scmp.ne.s32.totalorder %s36, %s39
      %p45 = scmp.eq.s32.totalorder %s12, 0
      %p46 = por %p44, %p45
      %p47 = scmp.ne.s32.totalorder %s36, %s39
      %p48 = scmp.eq.s32.totalorder %s17, 1
      %p49 = por %p47, %p48
      %p50 = scmp.ne.s32.totalorder %s39, %s40
      %p51 = scmp.eq.s32.totalorder %s17, 0
      %p52 = por %p50, %p51
      %p53 = scmp.ne.s32.totalorder %s39, %s40
      %p54 = scmp.eq.s32.totalorder %s18, 1
      %p55 = por %p53, %p54
      %p57 = scmp.ne.s32.totalorder %s40, %s56
      %p58 = scmp.eq.s32.totalorder %s18, 0
      %p59 = por %p57, %p58
      %s60 = ssub.s32 %s19, %s31
      %p61 = scmp.eq.s32.totalorder %s60, 0
      %s63 = sadd.s32 %s62, 1
      %s64 = scalar_select %p61, %s62, %s63
      %p67 = pneg %p61
      %p68 = scmp.eq.s32.totalorder %s12, 1
      %p69 = por %p67, %p68
      %p70 = scmp.ne.s32.totalorder %s62, %s65
      %p71 = scmp.eq.s32.totalorder %s12, 0
      %p72 = por %p70, %p71
      %p73 = scmp.ne.s32.totalorder %s62, %s65
      %p74 = scmp.eq.s32.totalorder %s17, 1
      %p75 = por %p73, %p74
      %p76 = scmp.ne.s32.totalorder %s65, %s66
      %p77 = scmp.eq.s32.totalorder %s17, 0
      %p78 = por %p76, %p77
      %p79 = scmp.ne.s32.totalorder %s65, %s66
      %p80 = scmp.eq.s32.totalorder %s18, 1
      %p81 = por %p79, %p80
      %p83 = scmp.ne.s32.totalorder %s66, %s82
      %p84 = scmp.eq.s32.totalorder %s18, 0
      %p85 = por %p83, %p84
      %s86 = ssub.s32 %s19, %s31
      %p87 = scmp.eq.s32.totalorder %s86, 0
      %s89 = sadd.s32 %s88, 1
      %s90 = scalar_select %p87, %s88, %s89
      %p93 = pneg %p87
      %p94 = scmp.eq.s32.totalorder %s12, 1
      %p95 = por %p93, %p94
      %p96 = scmp.ne.s32.totalorder %s88, %s91
      %p97 = scmp.eq.s32.totalorder %s12, 0
      %p98 = por %p96, %p97
      %p99 = scmp.ne.s32.totalorder %s88, %s91
      %p100 = scmp.eq.s32.totalorder %s17, 1
      %p101 = por %p99, %p100
      %p102 = scmp.ne.s32.totalorder %s91, %s92
      %p103 = scmp.eq.s32.totalorder %s17, 0
      %p104 = por %p102, %p103
      %p105 = scmp.ne.s32.totalorder %s91, %s92
      %p106 = scmp.eq.s32.totalorder %s18, 1
      %p107 = por %p105, %p106
      %p109 = scmp.ne.s32.totalorder %s92, %s108
      %p110 = scmp.eq.s32.totalorder %s18, 0
      %p111 = por %p109, %p110
      %s112 = ssub.s32 %s19, %s31
      %s113 = ssub.s32 %s20, %s27
      %s114 = sor.u32 %s112, %s113
      %p115 = scmp.eq.s32.totalorder %s114, 0
      %s117 = sadd.s32 %s116, 1
      %s118 = scalar_select %p115, %s116, %s117
      %p121 = pneg %p115
      %p122 = scmp.eq.s32.totalorder %s12, 1
      %p123 = por %p121, %p122
      %p124 = scmp.ne.s32.totalorder %s116, %s119
      %p125 = scmp.eq.s32.totalorder %s12, 0
      %p126 = por %p124, %p125
      %p127 = scmp.ne.s32.totalorder %s116, %s119
      %p128 = scmp.eq.s32.totalorder %s17, 1
      %p129 = por %p127, %p128
      %p130 = scmp.ne.s32.totalorder %s119, %s120
      %p131 = scmp.eq.s32.totalorder %s17, 0
      %p132 = por %p130, %p131
      %p133 = scmp.ne.s32.totalorder %s119, %s120
      %p134 = scmp.eq.s32.totalorder %s18, 1
      %p135 = por %p133, %p134
      %p137 = scmp.ne.s32.totalorder %s120, %s136
      %p138 = scmp.eq.s32.totalorder %s18, 0
      %p139 = por %p137, %p138
      %p140 = scmp.le.s32.totalorder 1, %s12
      %p141 = scmp.lt.s32.totalorder %s12, 3
      %p142 = pnand %p140, %p141
      %p143 = pneg %p142
      // Predicated region
      $region9: #{dit_model.49} parent=5 // pred_check
        _
      $region10: #{dit_model.49} parent=5 // pred_check_branch
        %145 = sbr.rel (%p142) target = $region12
      $region11: #{dit_model.49} parent=5 // pred_region
        %s146 = ssub.s32 %s12, 1
      $region12: #{dit_model.49} parent=5 // pred_fallthru
        _
      %p147 = scmp.lt.s32.totalorder %s12, 2
      // Predicated region
      $region13: #{dit_model.49} parent=5 // pred_check
        %p148 = pneg %p147
      $region14: #{dit_model.49} parent=5 // pred_check_branch
        %150 = sbr.rel (%p148) target = $region16
      $region15: #{dit_model.49} parent=5 // pred_region
        // Predicated region
        $region17: #{dit_model.49} parent=15 // pred_check
          %p151 = pneg %p46
        $region18: #{dit_model.49} parent=15 // pred_check_branch
          %153 = sbr.rel (%p151) target = $region20
        $region19: #{dit_model.49} parent=15 // pred_region
          %s154 = smul.u32 2, %s20
          %p155 = scmp.lt.s32.totalorder %s19, 1
          %s156 = scalar_select %p155, %s19, 1
          %p157 = scmp.lt.s32.totalorder %s154, 1
          %s158 = scalar_select %p157, %s154, 1
          %s159 = smul.addr %s156, 2
          %s160 = sadd.s32 %s158, %s159
          %s161 = smul.addr %s160, 8
          %s162 = scalar_lea.vmem %s0, %s161
          %s163 = smul.u32 2, %s20
        $region20: #{dit_model.49} parent=15 // pred_fallthru
          _
        // Predicated region
        $region21: #{dit_model.49} parent=15 // pred_check
          %p164 = pneg %p72
        $region22: #{dit_model.49} parent=15 // pred_check_branch
          %166 = sbr.rel (%p164) target = $region24
        $region23: #{dit_model.49} parent=15 // pred_region
          %p167 = scmp.lt.s32.totalorder %s19, 1
          %s168 = scalar_select %p167, %s19, 1
          %s169 = scalar_lea.vmem %s1, %s168
        $region24: #{dit_model.49} parent=15 // pred_fallthru
          _
        // Predicated region
        $region25: #{dit_model.49} parent=15 // pred_check
          %p170 = pneg %p98
        $region26: #{dit_model.49} parent=15 // pred_check_branch
          %172 = sbr.rel (%p170) target = $region28
        $region27: #{dit_model.49} parent=15 // pred_region
          %p173 = scmp.lt.s32.totalorder %s19, 1
          %s174 = scalar_select %p173, %s19, 1
          %s175 = scalar_lea.vmem %s2, %s174
        $region28: #{dit_model.49} parent=15 // pred_fallthru
          _
      $region16: #{dit_model.49} parent=5 // pred_fallthru
        _
      %p176 = scmp.le.s32.totalorder 1, %s12
      %p177 = scmp.lt.s32.totalorder %s12, 3
      %p178 = pnand %p176, %p177
      %p179 = pneg %p178
      // Predicated region
      $region29: #{dit_model.49} parent=5 // pred_check
        _
      $region30: #{dit_model.49} parent=5 // pred_check_branch
        %181 = sbr.rel (%p178) target = $region32
      $region31: #{dit_model.49} parent=5 // pred_region
        %s182 = ssub.s32 %s12, 1
        %s183 = smul.u32 2, %s22
        %p184 = scmp.lt.s32.totalorder %s21, 1
        %s185 = scalar_select %p184, %s21, 1
        %p186 = scmp.lt.s32.totalorder %s183, 1
        %s187 = scalar_select %p186, %s183, 1
        %s188 = smul.addr %s185, 2
        %s189 = sadd.s32 %s187, %s188
        %s190 = smul.addr %s189, 8
        %s191 = scalar_lea.vmem %s0, %s190
        %p192 = pneg %p52
        %p193 = pneg %p49
        %p194 = scmp.lt.s32.totalorder %s21, 1
        %s195 = scalar_select %p194, %s21, 1
        %s196 = scalar_lea.vmem %s1, %s195
        %p197 = pneg %p78
        %p198 = pneg %p75
        %p199 = scmp.lt.s32.totalorder %s21, 1
        %s200 = scalar_select %p199, %s21, 1
        %s201 = scalar_lea.vmem %s2, %s200
        %p202 = pneg %p104
        %p203 = pneg %p101
        %p204 = pneg %p132
        %p205 = pneg %p129
        %s206 = sand.u32 %s119, 1
        %s207 = scalar_lea.sflag [#allocation3], %s206
        %s208 = sand.u32 %s119, 1
        %s209 = smul.addr %s208, 16
        %s210 = scalar_lea.vmem [#allocation2], %s209
        %s211 = smul.u32 2, %s22
        %p212 = scmp.lt.s32.totalorder %s21, 1
        %s213 = scalar_select %p212, %s21, 1
        %p214 = scmp.lt.s32.totalorder %s211, 1
        %s215 = scalar_select %p214, %s211, 1
        %s216 = smul.addr %s213, 2
        %s217 = sadd.s32 %s215, %s216
        %s218 = smul.addr %s217, 8
        %s219 = scalar_lea.vmem %s0, %s218
        %s220 = smul.u32 2, %s22
        %p221 = scmp.lt.s32.totalorder %s21, 1
        %s222 = scalar_select %p221, %s21, 1
        %s223 = scalar_lea.vmem %s1, %s222
        %p224 = scmp.lt.s32.totalorder %s21, 1
        %s225 = scalar_select %p224, %s21, 1
        %s226 = scalar_lea.vmem %s2, %s225
        %s227 = smul.u32 2, %s22
        %v228 = vld [vmem:[%s219] sm:$0xff]
        %v229 = vld [vmem:[%s219 + $0x8] sm:$0xff]
        %vm230 = vcmask 261120
        %v231 = vsel %vm230, %v228, 0.0
        %232 = vadd.xlane.f32.xlu0 %v231
        %v233 = vpop.xlane.xlu0 %232
        %v234 = vsel %vm230, %v229, 0.0
        %235 = vadd.xlane.f32.xlu0 %v234
        %v236 = vpop.xlane.xlu0 %235
        %v237 = vrcp.pop 32.0
        %v238 = vmul.f32 %v233, %v237
        %v239 = vmul.f32 %v236, %v237
        %v240 = vsub.f32 %v228, %v238
        %v241 = vsub.f32 %v229, %v239
        %v242 = vmul.f32 %v240, %v240
        %v243 = vmul.f32 %v241, %v241
        %v244 = vsel %vm230, %v242, 0.0
        %245 = vadd.xlane.f32.xlu0 %v244
        %v246 = vpop.xlane.xlu0 %245
        %v247 = vsel %vm230, %v243, 0.0
        %248 = vadd.xlane.f32.xlu0 %v247
        %v249 = vpop.xlane.xlu0 %248
        %v250 = vmul.f32 %v246, %v237
        %v251 = vmul.f32 %v249, %v237
        %v252 = vadd.f32 %v250, 1e-05
        %v253 = vadd.f32 %v251, 1e-05
        %v254 = vrsqrt.pop %v252
        %v255 = vrsqrt.pop %v253
        %v256 = vmul.f32 %v240, %v254
        %v257 = vmul.f32 %v241, %v255
        %v258 = vld [vmem:[%s223] sm:$0x1]
        %v259 = vadd.f32 %v258, 1.0
        %v261 = vlaneseq
        %v262 = vshrl.u32 %v261, 7
        %v263 = vsub.s32 0, %v262
        %v264 = vrot.slane %v259, %v263
        %v266 = vmul.f32 %v256, %v264
        %v267 = vmul.f32 %v257, %v264
        %v268 = vld [vmem:[%s226] sm:$0x1]
        %v270 = vlaneseq
        %v271 = vshrl.u32 %v270, 7
        %v272 = vsub.s32 0, %v271
        %v273 = vrot.slane %v268, %v272
        %v275 = vadd.f32 %v266, %v273
        %v276 = vadd.f32 %v267, %v273
        %277 = vst.msk [vmem:[%s210] sm:$0xff] %vm230, %v275
        %278 = vst.msk [vmem:[%s210 + $0x8] sm:$0xff] %vm230, %v276
        %s279 = sand.u32 %s119, 1
        %s280 = scalar_lea.sflag [#allocation3], %s279
        %s281 = sand.u32 %s119, 1
        %s282 = smul.addr %s281, 16
        %s283 = scalar_lea.vmem [#allocation2], %s282
        // Predicated region
        $region33: #{dit_model.49} parent=31 // pred_check
          %p284 = pneg %p129
        $region34: #{dit_model.49} parent=31 // pred_check_branch
          %286 = sbr.rel (%p284) target = $region36
        $region35: #{dit_model.49} parent=31 // pred_region
          %s287 = smul.u32 2, %s22
          %s289 = ssub.s32 256, 256
          %290 = vsyncadd %s280, %s289
          %s291 = smul.addr %s21, 2
          %s292 = sadd.s32 %s287, %s291
          %s293 = smul.addr %s292, 128
          %s294 = scalar_lea.hbm %s3, %s293
          %s295 = sshll.u32 %s283, 4
          %s296 = int_to_ptr.vmem [resolvable:$true] %s295
          %301 = dma.vmem_to_hbm [thread:$0]  %s296, 256, %s294, %s280, 128, 128, 8
        $region36: #{dit_model.49} parent=31 // pred_fallthru
          _
      $region32: #{dit_model.49} parent=5 // pred_fallthru
        _
      %p302 = scmp.le.s32.totalorder 2, %s12
      // Predicated region
      $region37: #{dit_model.49} parent=5 // pred_check
        %p303 = pneg %p302
      $region38: #{dit_model.49} parent=5 // pred_check_branch
        %305 = sbr.rel (%p303) target = $region40
      $region39: #{dit_model.49} parent=5 // pred_region
        %s306 = ssub.s32 %s12, 2
        // Predicated region
        $region41: #{dit_model.49} parent=39 // pred_check
          %p307 = pneg %p135
        $region42: #{dit_model.49} parent=39 // pred_check_branch
          %309 = sbr.rel (%p307) target = $region44
        $region43: #{dit_model.49} parent=39 // pred_region
          %s310 = sand.u32 %s120, 1
          %s311 = scalar_lea.sflag [#allocation3], %s310
          %s312 = sand.u32 %s120, 1
          %s313 = smul.addr %s312, 16
          %s314 = scalar_lea.vmem [#allocation2], %s313
          %315 = dma.done %s311, 256
        $region44: #{dit_model.49} parent=39 // pred_fallthru
          _
      $region40: #{dit_model.49} parent=5 // pred_fallthru
        _
    $region6: #{dit_model.49} parent=1 // loop_footer
      %s16 = sadd.s32 1, %s12
    $region7: #{dit_model.49} parent=1 // loop_footer_branch
      %11 = sbr.rel target = $region3
    $region8: #{dit_model.49} parent=1 // loop_exit
      _
    %316 = vsyncpa [#allocation3], 1
    %s317 = scalar_lea.sflag [#allocation3], 1
    %318 = vsyncpa %s317, 1

</llo_original>
